<compile_context>
chip_gen: v7x
topology: tpu7x:2x2x1
jax: 0.10.0
libtpu: 0.0.40
codegen_flags: <defaults>
</compile_context>

<pallas_src>
import functools
import math

import jax
import jax.numpy as jnp
from jax.experimental import pallas as pl
from jax.experimental.pallas import tpu as pltpu

# ----------------------------- config ---------------------------------------
C1, C2, C3 = 64, 128, 256      # per-point shared MLP widths
CIN_PAD = 8                    # point channels padded 3 -> 8 for the MXU layer 1
H_HEAD = 128                   # head hidden width
OUT = 9                        # 3 (trans) + 6 (rot 6D)
OUT_PAD = 128                  # lane-dense padded output width (sliced to OUT outside)
OUT_ROWS = 8                   # sublane-dense output rows (row 0 is the real output)
MAX_TILE_N = 8192              # points per grid step (~20 MiB VMEM; fits v7x's 64 MiB)


def _round_up(x, m):
    return (x + m - 1) // m * m


def _fast_path():
    """True on chips with bf16 VALU + big MXU (v6e / v7x / newer): MXU layer 1 and
    bf16 epilogues.  False on v5e and older: f32 VPU layer 1 and f32 epilogues."""
    try:
        kind = jax.devices()[0].device_kind.lower()
    except Exception:
        return True
    return not any(v in kind for v in ("v2", "v3", "v4", "v5"))


# ----------------------------- kernel ----------------------------------------
def _est_kernel(x_ref, w1_ref, b1_ref, w2_ref, b2_ref, w3_ref, b3_ref,
                hw1_ref, hb1_ref, hw2_ref, hb2_ref, out_ref, acc_ref,
                *, n_points, tile_n, num_tiles, fast):
    """One (batch b, point-tile n) grid step of fused PointNet backbone + pose head.
    NOTE: relies on grid=(B, num_tiles) with the point-tile axis innermost (accumulator
    reset at n_idx == 0)."""
    n_idx = pl.program_id(1)
    cdt = jnp.bfloat16 if fast else jnp.float32   # epilogue compute dtype

    x = x_ref[0]                                  # (8, tile_n) f32, points lane-dense

    # ---- layer 1 (3 -> C1); channel dim is zero-padded to 8.
    if fast:
        # v6e/v7x: run the K=8 contraction on the (otherwise idle) MXU.
        h = jnp.dot(w1_ref[...].astype(jnp.bfloat16), x.astype(jnp.bfloat16),
                    preferred_element_type=jnp.float32)
    else:
        # v5e and older: no bf16 VALU; keep the K=3 contraction as f32 broadcast FMAs.
        w1 = w1_ref[...]
        h = (w1[:, 0:1] * x[0:1, :] + w1[:, 1:2] * x[1:2, :] + w1[:, 2:3] * x[2:3, :])
    h = jnp.maximum(h.astype(cdt) + b1_ref[...].astype(cdt), 0.0).astype(jnp.bfloat16)

    # ---- layers 2/3 on the MXU (bf16 operands, f32 accumulation); epilogues in cdt.
    h = jnp.dot(w2_ref[...], h, preferred_element_type=jnp.float32)
    h = jnp.maximum(h.astype(cdt) + b2_ref[...].astype(cdt), 0.0).astype(jnp.bfloat16)
    h = jnp.dot(w3_ref[...], h, preferred_element_type=jnp.float32)
    h = jnp.maximum(h.astype(cdt) + b3_ref[...].astype(cdt), 0.0)    # (C3, tile_n)

    # ---- per-tile lane-reduce (XLU) into a tiny (C3, 128) running-max accumulator.
    def _update(tile_max):
        tile_max = jnp.broadcast_to(tile_max.astype(jnp.float32), acc_ref.shape)

        @pl.when(n_idx == 0)
        def _init():
            acc_ref[...] = tile_max

        @pl.when(n_idx > 0)
        def _accumulate():
            acc_ref[...] = jnp.maximum(acc_ref[...], tile_max)

    tail = n_points - (num_tiles - 1) * tile_n    # static Python int
    if tail == tile_n:
        # point count divides evenly: no padded lanes anywhere
        _update(jnp.max(h, axis=1, keepdims=True))
    else:
        # only the last tile has zero-padded points; mask them to 0 before the max
        # (safe because activations are post-ReLU >= 0).  Other tiles pay nothing.
        @pl.when(n_idx < num_tiles - 1)
        def _full_tile():
            _update(jnp.max(h, axis=1, keepdims=True))

        @pl.when(n_idx == num_tiles - 1)
        def _tail_tile():
            lane = jax.lax.broadcasted_iota(jnp.int32, (1, tile_n), 1)
            hm = jnp.where(lane < tail, h, 0.0)
            _update(jnp.max(hm, axis=1, keepdims=True))

    # ---- last tile: fused head MLP (runs once per batch element).
    @pl.when(n_idx == num_tiles - 1)
    def _head():
        feat = acc_ref[:, 0:1]                                          # (C3, 1) f32
        # head layer 1 as broadcast-mul + sublane reduce (exact f32, no transpose)
        g = jnp.sum(feat * hw1_ref[...], axis=0, keepdims=True) + hb1_ref[...]
        g = jnp.maximum(g, 0.0)                                         # (1, H_HEAD)
        out = jnp.dot(g.astype(jnp.bfloat16), hw2_ref[...].astype(jnp.bfloat16),
                      preferred_element_type=jnp.float32) + hb2_ref[...]  # (1, OUT_PAD)
        out_ref[0] = jnp.broadcast_to(out, (OUT_ROWS, OUT_PAD))


# ----------------------------- wrapper ----------------------------------------
def _pose_head_raw(params, pc, max_tile_n=MAX_TILE_N):
    """pc: (B, N, 3) -> (B, OUT) raw head predictions via one fused Pallas kernel."""
    pc = pc.astype(jnp.float32)
    B, N, _ = pc.shape
    fast = _fast_path()

    # Fewest tiles that fit max_tile_n, sized to a multiple of 128 that minimises padding
    # (e.g. N=2500 -> one 2560-wide tile).
    num_tiles = max(1, math.ceil(N / max_tile_n))
    tile_n = _round_up(math.ceil(N / num_tiles), 128)
    num_tiles = math.ceil(N / tile_n)
    n_pad = num_tiles * tile_n

    # Single wrapper copy: channels-first transpose (points lane-dense) with zero fill of
    # both the channel pad (3->8, for the MXU layer 1) and the point pad (N->n_pad,
    # masked in-kernel).  The pad fuses with the transpose copy in XLA.
    x_t = jnp.transpose(pc, (0, 2, 1))                               # (B, 3, N)
    x_t = jnp.pad(x_t, ((0, 0), (0, CIN_PAD - 3), (0, n_pad - N)))   # (B, 8, n_pad)

    args = (x_t, params["w1"], params["b1"], params["w2"], params["b2"],
            params["w3"], params["b3"], params["hw1"], params["hb1"],
            params["hw2"], params["hb2"])

    kernel = functools.partial(_est_kernel, n_points=N, tile_n=tile_n,
                               num_tiles=num_tiles, fast=fast)

    # weights / biases: full-array blocks with constant index maps (fetched once)
    const_specs = [pl.BlockSpec(a.shape, lambda b, n, _nd=a.ndim: (0,) * _nd)
                   for a in args[1:]]

    out = pl.pallas_call(
        kernel,
        out_shape=jax.ShapeDtypeStruct((B, OUT_ROWS, OUT_PAD), jnp.float32),
        grid=(B, num_tiles),
        in_specs=[pl.BlockSpec((1, CIN_PAD, tile_n), lambda b, n: (b, 0, n))]
                 + const_specs,
        out_specs=pl.BlockSpec((1, OUT_ROWS, OUT_PAD), lambda b, n: (b, 0, 0)),
        scratch_shapes=[pltpu.VMEM((C3, 128), jnp.float32)],
        compiler_params=pltpu.CompilerParams(
            dimension_semantics=("parallel", "arbitrary"),
            vmem_limit_bytes=48 * 1024 * 1024),
    )(*args)
    return out[:, 0, :OUT]


def _est_raw_ref(params, pc):
    """Plain-JAX reference of the fused kernel math (used only for the self-test)."""
    fast = _fast_path()
    hi = jax.lax.Precision.HIGHEST
    cdt = jnp.bfloat16 if fast else jnp.float32
    x = pc.astype(jnp.float32)
    w1 = params["w1"][:, :3]
    if fast:
        h = jnp.einsum('ci,bni->bcn', w1.astype(jnp.bfloat16), x.astype(jnp.bfloat16),
                       preferred_element_type=jnp.float32)
    else:
        h = jnp.einsum('ci,bni->bcn', w1, x, precision=hi)
    h = jnp.maximum(h.astype(cdt) + params["b1"][None].astype(cdt), 0.0).astype(jnp.bfloat16)
    h = jnp.einsum('dc,bcn->bdn', params["w2"], h, preferred_element_type=jnp.float32)
    h = jnp.maximum(h.astype(cdt) + params["b2"][None].astype(cdt), 0.0).astype(jnp.bfloat16)
    h = jnp.einsum('dc,bcn->bdn', params["w3"], h, preferred_element_type=jnp.float32)
    h = jnp.maximum(h.astype(cdt) + params["b3"][None].astype(cdt), 0.0)
    feat = jnp.max(h, axis=-1).astype(jnp.float32)                   # (B, C3)
    g = jnp.maximum(jnp.matmul(feat, params["hw1"], precision=hi) + params["hb1"], 0.0)
    out = jnp.matmul(g.astype(jnp.bfloat16), params["hw2"].astype(jnp.bfloat16),
                     preferred_element_type=jnp.float32) + params["hb2"]
    return out[:, :OUT]


# ----------------------------- model glue -------------------------------------
def rot6d_to_matrix(x6):
    """(B, 6) -> (B, 3, 3) orthogonal, det = +1 (Gram-Schmidt, Zhou et al.)."""
    a1, a2 = x6[:, 0:3], x6[:, 3:6]
    b1 = a1 / (jnp.linalg.norm(a1, axis=-1, keepdims=True) + 1e-8)
    a2p = a2 - jnp.sum(b1 * a2, axis=-1, keepdims=True) * b1
    b2 = a2p / (jnp.linalg.norm(a2p, axis=-1, keepdims=True) + 1e-8)
    b3 = jnp.cross(b1, b2)
    return jnp.stack([b1, b2, b3], axis=-1)


@jax.jit
def est(params, pc):
    """Estimate (trans (B,3), rot (B,3,3)) from point cloud (B,N,3)."""
    pred = _pose_head_raw(params, pc)
    trans_pred = pred[:, :3]
    rot_pred = rot6d_to_matrix(pred[:, 3:])
    return trans_pred, rot_pred


@jax.jit
def forward(params, pc, trans, rot):
    """Returns (loss, metrics) matching the PyTorch forward contract."""
    trans_pred, rot_pred = est(params, pc)
    loss_trans = jnp.mean((trans_pred - trans) ** 2)
    loss_rot = jnp.mean((rot_pred - rot) ** 2)
    loss = loss_trans + loss_rot
    metric = {"loss": loss, "loss_trans": loss_trans, "loss_rot": loss_rot}
    return loss, metric


# ----------------------------- params -----------------------------------------
def init_params(key):
    """Weights stored directly in the kernel's layout: per-point layers as (C_out, C_in)
    with column biases (channels-first compute), head layers as (C_in, C_out) with row
    biases.  w1's channel dim and hw2/hb2's output dim are zero-padded to 8 / 128."""
    ks = jax.random.split(key, 10)
    s = 0.1
    w1 = s * jax.random.normal(ks[0], (C1, 3), jnp.float32)
    w1 = jnp.pad(w1, ((0, 0), (0, CIN_PAD - 3)))
    hw2 = s * jax.random.normal(ks[7], (H_HEAD, OUT), jnp.float32)
    hw2 = jnp.pad(hw2, ((0, 0), (0, OUT_PAD - OUT)))
    hb2 = jnp.pad(s * jax.random.normal(ks[9], (1, OUT), jnp.float32),
                  ((0, 0), (0, OUT_PAD - OUT)))
    return {
        "w1": w1,
        "b1": s * jax.random.normal(ks[1], (C1, 1), jnp.float32),
        "w2": (s * jax.random.normal(ks[2], (C2, C1), jnp.float32)).astype(jnp.bfloat16),
        "b2": s * jax.random.normal(ks[3], (C2, 1), jnp.float32),
        "w3": (s * jax.random.normal(ks[4], (C3, C2), jnp.float32)).astype(jnp.bfloat16),
        "b3": s * jax.random.normal(ks[5], (C3, 1), jnp.float32),
        "hw1": s * jax.random.normal(ks[6], (C3, H_HEAD), jnp.float32),
        "hb1": s * jax.random.normal(ks[8], (1, H_HEAD), jnp.float32),
        "hw2": hw2,
        "hb2": hb2,
    }


# ----------------------------- main --------------------------------------------
if __name__ == "__main__":
    key = jax.random.PRNGKey(0)
    kp, kpc, kt, kr = jax.random.split(key, 4)

    B, N = 2, 2500          # N not a 128-multiple: exercises the masked-tail path
    params = init_params(kp)
    pc = jax.random.normal(kpc, (B, N, 3), jnp.float32)
    trans_gt = jax.random.normal(kt, (B, 3), jnp.float32)
    rot_gt = rot6d_to_matrix(jax.random.normal(kr, (B, 6), jnp.float32))

    # forward: loss + metrics
    loss, metric = forward(params, pc, trans_gt, rot_gt)
    loss = jax.block_until_ready(loss)
    jax.block_until_ready(metric["loss_trans"])
    jax.block_until_ready(metric["loss_rot"])
    assert jnp.isfinite(loss)

    # est: shapes + rotation validity
    t_est, r_est = est(params, pc)
    jax.block_until_ready(t_est)
    jax.block_until_ready(r_est)
    assert t_est.shape == (B, 3) and r_est.shape == (B, 3, 3)
    rtr = jnp.einsum('bij,bik->bjk', r_est, r_est)
    assert jnp.max(jnp.abs(rtr - jnp.eye(3))) < 1e-3
    assert jnp.all(jnp.linalg.det(r_est) > 0.9)

    # kernel vs plain-JAX reference of the same math
    raw_ref = jax.block_until_ready(_est_raw_ref(params, pc))
    # single-tile path (N=2500 -> one 2560-wide tile, masked tail)
    raw_1 = jax.block_until_ready(_pose_head_raw(params, pc))
    assert jnp.allclose(raw_1, raw_ref, atol=2e-2, rtol=2e-2), float(
        jnp.max(jnp.abs(raw_1 - raw_ref)))
    # multi-tile path (3 tiles: exercises accumulator init/accumulate + masked tail)
    raw_3 = jax.block_until_ready(_pose_head_raw(params, pc, max_tile_n=1024))
    assert jnp.allclose(raw_3, raw_ref, atol=2e-2, rtol=2e-2), float(
        jnp.max(jnp.abs(raw_3 - raw_ref)))

    print("KERNEL_OK")
</pallas_src>

<mosaic_0001>
module attributes {stable_mosaic.version = 11 : i64} {
  func.func @_est_kernel(%arg0: i32, %arg1: i32, %arg2: memref<1x8x2560xf32, #tpu.memory_space<vmem>>, %arg3: memref<64x8xf32, #tpu.memory_space<vmem>>, %arg4: memref<64x1xf32, #tpu.memory_space<vmem>>, %arg5: memref<128x64xbf16, #tpu.memory_space<vmem>>, %arg6: memref<128x1xf32, #tpu.memory_space<vmem>>, %arg7: memref<256x128xbf16, #tpu.memory_space<vmem>>, %arg8: memref<256x1xf32, #tpu.memory_space<vmem>>, %arg9: memref<256x128xf32, #tpu.memory_space<vmem>>, %arg10: memref<1x128xf32, #tpu.memory_space<vmem>>, %arg11: memref<128x128xf32, #tpu.memory_space<vmem>>, %arg12: memref<1x128xf32, #tpu.memory_space<vmem>>, %arg13: memref<1x8x128xf32, #tpu.memory_space<vmem>>, %arg14: memref<256x128xf32, #tpu.memory_space<vmem>>) attributes {dimension_semantics = [#tpu.dimension_semantics<parallel>, #tpu.dimension_semantics<arbitrary>], iteration_bounds = array<i64: 2, 1>, scalar_prefetch = 0 : i64, scratch_operands = 1 : i64, tpu.core_type = #tpu.core_type<tc>, window_params = [{transform_indices = @transform_0, window_bounds = array<i64: 1, 8, 2560>}, {pipeline_mode = #tpu.pipeline_mode<synchronous>, transform_indices = @transform_1, window_bounds = array<i64: 64, 8>}, {pipeline_mode = #tpu.pipeline_mode<synchronous>, transform_indices = @transform_2, window_bounds = array<i64: 64, 1>}, {pipeline_mode = #tpu.pipeline_mode<synchronous>, transform_indices = @transform_3, window_bounds = array<i64: 128, 64>}, {pipeline_mode = #tpu.pipeline_mode<synchronous>, transform_indices = @transform_4, window_bounds = array<i64: 128, 1>}, {pipeline_mode = #tpu.pipeline_mode<synchronous>, transform_indices = @transform_5, window_bounds = array<i64: 256, 128>}, {pipeline_mode = #tpu.pipeline_mode<synchronous>, transform_indices = @transform_6, window_bounds = array<i64: 256, 1>}, {pipeline_mode = #tpu.pipeline_mode<synchronous>, transform_indices = @transform_7, window_bounds = array<i64: 256, 128>}, {pipeline_mode = #tpu.pipeline_mode<synchronous>, transform_indices = @transform_8, window_bounds = array<i64: 1, 128>}, {pipeline_mode = #tpu.pipeline_mode<synchronous>, transform_indices = @transform_9, window_bounds = array<i64: 128, 128>}, {pipeline_mode = #tpu.pipeline_mode<synchronous>, transform_indices = @transform_10, window_bounds = array<i64: 1, 128>}, {transform_indices = @transform_11, window_bounds = array<i64: 1, 8, 128>}]} {
    %c0 = arith.constant 0 : index
    %c0_0 = arith.constant 0 : index
    %c0_1 = arith.constant 0 : index
    %0 = vector.load %arg2[%c0, %c0_0, %c0_1] : memref<1x8x2560xf32, #tpu.memory_space<vmem>>, vector<1x8x2560xf32>
    %1 = vector.shape_cast %0 : vector<1x8x2560xf32> to vector<8x2560xf32>
    %c0_2 = arith.constant 0 : index
    %c0_3 = arith.constant 0 : index
    %2 = vector.load %arg3[%c0_2, %c0_3] : memref<64x8xf32, #tpu.memory_space<vmem>>, vector<64x8xf32>
    %3 = arith.truncf %2 : vector<64x8xf32> to vector<64x8xbf16>
    %4 = arith.truncf %1 : vector<8x2560xf32> to vector<8x2560xbf16>
    %cst = arith.constant dense<0.000000e+00> : vector<64x2560xf32>
    %5 = tpu.matmul %3, %4, %cst {dimension_numbers = #tpu.dot_dimension_numbers<[1], [0], [0], [1], [0, 0, 1, 1], [], []>} : vector<64x8xbf16>, vector<8x2560xbf16>, vector<64x2560xf32> -> vector<64x2560xf32>
    %6 = arith.truncf %5 : vector<64x2560xf32> to vector<64x2560xbf16>
    %c0_4 = arith.constant 0 : index
    %c0_5 = arith.constant 0 : index
    %7 = vector.load %arg4[%c0_4, %c0_5] : memref<64x1xf32, #tpu.memory_space<vmem>>, vector<64x1xf32>
    %8 = arith.truncf %7 : vector<64x1xf32> to vector<64x1xbf16>
    %9 = vector.broadcast %8 : vector<64x1xbf16> to vector<64x2560xbf16>
    %10 = arith.addf %6, %9 : vector<64x2560xbf16>
    %cst_6 = arith.constant 0.000000e+00 : bf16
    %11 = vector.broadcast %cst_6 : bf16 to vector<64x2560xbf16>
    %12 = arith.maximumf %10, %11 : vector<64x2560xbf16>
    %c0_7 = arith.constant 0 : index
    %c0_8 = arith.constant 0 : index
    %13 = vector.load %arg5[%c0_7, %c0_8] : memref<128x64xbf16, #tpu.memory_space<vmem>>, vector<128x64xbf16>
    %cst_9 = arith.constant dense<0.000000e+00> : vector<128x2560xf32>
    %14 = tpu.matmul %13, %12, %cst_9 {dimension_numbers = #tpu.dot_dimension_numbers<[1], [0], [0], [1], [0, 0, 1, 1], [], []>} : vector<128x64xbf16>, vector<64x2560xbf16>, vector<128x2560xf32> -> vector<128x2560xf32>
    %15 = arith.truncf %14 : vector<128x2560xf32> to vector<128x2560xbf16>
    %c0_10 = arith.constant 0 : index
    %c0_11 = arith.constant 0 : index
    %16 = vector.load %arg6[%c0_10, %c0_11] : memref<128x1xf32, #tpu.memory_space<vmem>>, vector<128x1xf32>
    %17 = arith.truncf %16 : vector<128x1xf32> to vector<128x1xbf16>
    %18 = vector.broadcast %17 : vector<128x1xbf16> to vector<128x2560xbf16>
    %19 = arith.addf %15, %18 : vector<128x2560xbf16>
    %cst_12 = arith.constant 0.000000e+00 : bf16
    %20 = vector.broadcast %cst_12 : bf16 to vector<128x2560xbf16>
    %21 = arith.maximumf %19, %20 : vector<128x2560xbf16>
    %c0_13 = arith.constant 0 : index
    %c0_14 = arith.constant 0 : index
    %22 = vector.load %arg7[%c0_13, %c0_14] : memref<256x128xbf16, #tpu.memory_space<vmem>>, vector<256x128xbf16>
    %cst_15 = arith.constant dense<0.000000e+00> : vector<256x2560xf32>
    %23 = tpu.matmul %22, %21, %cst_15 {dimension_numbers = #tpu.dot_dimension_numbers<[1], [0], [0], [1], [0, 0, 1, 1], [], []>} : vector<256x128xbf16>, vector<128x2560xbf16>, vector<256x2560xf32> -> vector<256x2560xf32>
    %24 = arith.truncf %23 : vector<256x2560xf32> to vector<256x2560xbf16>
    %c0_16 = arith.constant 0 : index
    %c0_17 = arith.constant 0 : index
    %25 = vector.load %arg8[%c0_16, %c0_17] : memref<256x1xf32, #tpu.memory_space<vmem>>, vector<256x1xf32>
    %26 = arith.truncf %25 : vector<256x1xf32> to vector<256x1xbf16>
    %27 = vector.broadcast %26 : vector<256x1xbf16> to vector<256x2560xbf16>
    %28 = arith.addf %24, %27 : vector<256x2560xbf16>
    %cst_18 = arith.constant 0.000000e+00 : bf16
    %29 = vector.broadcast %cst_18 : bf16 to vector<256x2560xbf16>
    %30 = arith.maximumf %28, %29 : vector<256x2560xbf16>
    %c0_i32 = arith.constant 0 : i32
    %31 = arith.cmpi slt, %arg1, %c0_i32 : i32
    %32 = arith.extui %31 : i1 to i32
    %c0_i32_19 = arith.constant 0 : i32
    %33 = arith.cmpi ne, %32, %c0_i32_19 : i32
    scf.if %33 {
      %cst_24 = arith.constant dense<0xFF80> : vector<256xbf16>
      %40 = vector.multi_reduction <maximumf>, %30, %cst_24 [1] : vector<256x2560xbf16> to vector<256xbf16>
      %41 = vector.shape_cast %40 : vector<256xbf16> to vector<256x1xbf16>
      %42 = arith.extf %41 : vector<256x1xbf16> to vector<256x1xf32>
      %43 = vector.shape_cast %42 : vector<256x1xf32> to vector<256x1xf32>
      %44 = vector.broadcast %43 : vector<256x1xf32> to vector<256x128xf32>
      %c0_i32_25 = arith.constant 0 : i32
      %45 = arith.cmpi eq, %arg1, %c0_i32_25 : i32
      %46 = arith.extui %45 : i1 to i32
      %c0_i32_26 = arith.constant 0 : i32
      %47 = arith.cmpi ne, %46, %c0_i32_26 : i32
      scf.if %47 {
        %c0_29 = arith.constant 0 : index
        %c0_30 = arith.constant 0 : index
        %51 = vector.load %arg14[%c0_29, %c0_30] : memref<256x128xf32, #tpu.memory_space<vmem>>, vector<256x128xf32>
        tpu.vector_store %arg14[%c0_29, %c0_30], %44 {strides = array<i32>} : memref<256x128xf32, #tpu.memory_space<vmem>>, vector<256x128xf32>,
      } else {
      }
      %c0_i32_27 = arith.constant 0 : i32
      %48 = arith.cmpi sgt, %arg1, %c0_i32_27 : i32
      %49 = arith.extui %48 : i1 to i32
      %c0_i32_28 = arith.constant 0 : i32
      %50 = arith.cmpi ne, %49, %c0_i32_28 : i32
      scf.if %50 {
        %c0_29 = arith.constant 0 : index
        %c0_30 = arith.constant 0 : index
        %51 = vector.load %arg14[%c0_29, %c0_30] : memref<256x128xf32, #tpu.memory_space<vmem>>, vector<256x128xf32>
        %52 = arith.maximumf %51, %44 : vector<256x128xf32>
        %c0_31 = arith.constant 0 : index
        %c0_32 = arith.constant 0 : index
        %53 = vector.load %arg14[%c0_31, %c0_32] : memref<256x128xf32, #tpu.memory_space<vmem>>, vector<256x128xf32>
        tpu.vector_store %arg14[%c0_31, %c0_32], %52 {strides = array<i32>} : memref<256x128xf32, #tpu.memory_space<vmem>>, vector<256x128xf32>,
      } else {
      }
    } else {
    }
    %c0_i32_20 = arith.constant 0 : i32
    %34 = arith.cmpi eq, %arg1, %c0_i32_20 : i32
    %35 = arith.extui %34 : i1 to i32
    %c0_i32_21 = arith.constant 0 : i32
    %36 = arith.cmpi ne, %35, %c0_i32_21 : i32
    scf.if %36 {
      %40 = tpu.iota {dimensions = array<i32: 1>} : vector<1x2560xi32>
      %c2500_i32 = arith.constant 2500 : i32
      %41 = vector.broadcast %c2500_i32 : i32 to vector<1x2560xi32>
      %42 = arith.cmpi slt, %40, %41 : vector<1x2560xi32>
      %cst_24 = arith.constant 0.000000e+00 : f32
      %43 = arith.truncf %cst_24 : f32 to bf16
      %44 = vector.shape_cast %42 : vector<1x2560xi1> to vector<1x2560xi1>
      %45 = vector.broadcast %44 : vector<1x2560xi1> to vector<256x2560xi1>
      %46 = vector.broadcast %43 : bf16 to vector<256x2560xbf16>
      %47 = arith.select %45, %30, %46 : vector<256x2560xi1>, vector<256x2560xbf16>
      %cst_25 = arith.constant dense<0xFF80> : vector<256xbf16>
      %48 = vector.multi_reduction <maximumf>, %47, %cst_25 [1] : vector<256x2560xbf16> to vector<256xbf16>
      %49 = vector.shape_cast %48 : vector<256xbf16> to vector<256x1xbf16>
      %50 = arith.extf %49 : vector<256x1xbf16> to vector<256x1xf32>
      %51 = vector.shape_cast %50 : vector<256x1xf32> to vector<256x1xf32>
      %52 = vector.broadcast %51 : vector<256x1xf32> to vector<256x128xf32>
      %c0_i32_26 = arith.constant 0 : i32
      %53 = arith.cmpi eq, %arg1, %c0_i32_26 : i32
      %54 = arith.extui %53 : i1 to i32
      %c0_i32_27 = arith.constant 0 : i32
      %55 = arith.cmpi ne, %54, %c0_i32_27 : i32
      scf.if %55 {
        %c0_30 = arith.constant 0 : index
        %c0_31 = arith.constant 0 : index
        %59 = vector.load %arg14[%c0_30, %c0_31] : memref<256x128xf32, #tpu.memory_space<vmem>>, vector<256x128xf32>
        tpu.vector_store %arg14[%c0_30, %c0_31], %52 {strides = array<i32>} : memref<256x128xf32, #tpu.memory_space<vmem>>, vector<256x128xf32>,
      } else {
      }
      %c0_i32_28 = arith.constant 0 : i32
      %56 = arith.cmpi sgt, %arg1, %c0_i32_28 : i32
      %57 = arith.extui %56 : i1 to i32
      %c0_i32_29 = arith.constant 0 : i32
      %58 = arith.cmpi ne, %57, %c0_i32_29 : i32
      scf.if %58 {
        %c0_30 = arith.constant 0 : index
        %c0_31 = arith.constant 0 : index
        %59 = vector.load %arg14[%c0_30, %c0_31] : memref<256x128xf32, #tpu.memory_space<vmem>>, vector<256x128xf32>
        %60 = arith.maximumf %59, %52 : vector<256x128xf32>
        %c0_32 = arith.constant 0 : index
        %c0_33 = arith.constant 0 : index
        %61 = vector.load %arg14[%c0_32, %c0_33] : memref<256x128xf32, #tpu.memory_space<vmem>>, vector<256x128xf32>
        tpu.vector_store %arg14[%c0_32, %c0_33], %60 {strides = array<i32>} : memref<256x128xf32, #tpu.memory_space<vmem>>, vector<256x128xf32>,
      } else {
      }
    } else {
    }
    %c0_i32_22 = arith.constant 0 : i32
    %37 = arith.cmpi eq, %arg1, %c0_i32_22 : i32
    %38 = arith.extui %37 : i1 to i32
    %c0_i32_23 = arith.constant 0 : i32
    %39 = arith.cmpi ne, %38, %c0_i32_23 : i32
    scf.if %39 {
      %c0_24 = arith.constant 0 : index
      %c0_25 = arith.constant 0 : index
      %40 = vector.load %arg14[%c0_24, %c0_25] : memref<256x128xf32, #tpu.memory_space<vmem>>, vector<256x1xf32>
      %c0_26 = arith.constant 0 : index
      %c0_27 = arith.constant 0 : index
      %41 = vector.load %arg9[%c0_26, %c0_27] : memref<256x128xf32, #tpu.memory_space<vmem>>, vector<256x128xf32>
      %42 = vector.broadcast %40 : vector<256x1xf32> to vector<256x128xf32>
      %43 = arith.mulf %42, %41 : vector<256x128xf32>
      %cst_28 = arith.constant dense<0.000000e+00> : vector<128xf32>
      %44 = vector.multi_reduction <add>, %43, %cst_28 [0] : vector<256x128xf32> to vector<128xf32>
      %45 = vector.shape_cast %44 : vector<128xf32> to vector<1x128xf32>
      %c0_29 = arith.constant 0 : index
      %c0_30 = arith.constant 0 : index
      %46 = vector.load %arg10[%c0_29, %c0_30] : memref<1x128xf32, #tpu.memory_space<vmem>>, vector<1x128xf32>
      %47 = arith.addf %45, %46 : vector<1x128xf32>
      %cst_31 = arith.constant 0.000000e+00 : f32
      %48 = vector.broadcast %cst_31 : f32 to vector<1x128xf32>
      %49 = arith.maximumf %47, %48 : vector<1x128xf32>
      %50 = arith.truncf %49 : vector<1x128xf32> to vector<1x128xbf16>
      %c0_32 = arith.constant 0 : index
      %c0_33 = arith.constant 0 : index
      %51 = vector.load %arg11[%c0_32, %c0_33] : memref<128x128xf32, #tpu.memory_space<vmem>>, vector<128x128xf32>
      %52 = arith.truncf %51 : vector<128x128xf32> to vector<128x128xbf16>
      %cst_34 = arith.constant dense<0.000000e+00> : vector<1x128xf32>
      %53 = tpu.matmul %50, %52, %cst_34 {dimension_numbers = #tpu.dot_dimension_numbers<[1], [0], [0], [1], [0, 0, 1, 1], [], []>} : vector<1x128xbf16>, vector<128x128xbf16>, vector<1x128xf32> -> vector<1x128xf32>
      %c0_35 = arith.constant 0 : index
      %c0_36 = arith.constant 0 : index
      %54 = vector.load %arg12[%c0_35, %c0_36] : memref<1x128xf32, #tpu.memory_space<vmem>>, vector<1x128xf32>
      %55 = arith.addf %53, %54 : vector<1x128xf32>
      %56 = vector.shape_cast %55 : vector<1x128xf32> to vector<1x128xf32>
      %57 = vector.broadcast %56 : vector<1x128xf32> to vector<8x128xf32>
      %c0_37 = arith.constant 0 : index
      %c0_38 = arith.constant 0 : index
      %c0_39 = arith.constant 0 : index
      %58 = vector.load %arg13[%c0_37, %c0_38, %c0_39] : memref<1x8x128xf32, #tpu.memory_space<vmem>>, vector<1x8x128xf32>
      %59 = vector.shape_cast %58 : vector<1x8x128xf32> to vector<8x128xf32>
      %60 = vector.shape_cast %57 : vector<8x128xf32> to vector<1x8x128xf32>
      tpu.vector_store %arg13[%c0_37, %c0_38, %c0_39], %60 {strides = array<i32>} : memref<1x8x128xf32, #tpu.memory_space<vmem>>, vector<1x8x128xf32>,
    } else {
    }
    return
  }
  func.func @transform_0(%arg0: i32, %arg1: i32) -> (i32, i32, i32) {
    %c0_i32 = arith.constant 0 : i32
    %c0_i32_0 = arith.constant 0 : i32
    return %arg0, %c0_i32, %arg1 : i32, i32, i32
  }
  func.func @transform_1(%arg0: i32, %arg1: i32) -> (i32, i32) {
    %c0_i32 = arith.constant 0 : i32
    %c0_i32_0 = arith.constant 0 : i32
    %c0_i32_1 = arith.constant 0 : i32
    return %c0_i32, %c0_i32_0 : i32, i32
  }
  func.func @transform_2(%arg0: i32, %arg1: i32) -> (i32, i32) {
    %c0_i32 = arith.constant 0 : i32
    %c0_i32_0 = arith.constant 0 : i32
    %c0_i32_1 = arith.constant 0 : i32
    return %c0_i32, %c0_i32_0 : i32, i32
  }
  func.func @transform_3(%arg0: i32, %arg1: i32) -> (i32, i32) {
    %c0_i32 = arith.constant 0 : i32
    %c0_i32_0 = arith.constant 0 : i32
    %c0_i32_1 = arith.constant 0 : i32
    return %c0_i32, %c0_i32_0 : i32, i32
  }
  func.func @transform_4(%arg0: i32, %arg1: i32) -> (i32, i32) {
    %c0_i32 = arith.constant 0 : i32
    %c0_i32_0 = arith.constant 0 : i32
    %c0_i32_1 = arith.constant 0 : i32
    return %c0_i32, %c0_i32_0 : i32, i32
  }
  func.func @transform_5(%arg0: i32, %arg1: i32) -> (i32, i32) {
    %c0_i32 = arith.constant 0 : i32
    %c0_i32_0 = arith.constant 0 : i32
    %c0_i32_1 = arith.constant 0 : i32
    return %c0_i32, %c0_i32_0 : i32, i32
  }
  func.func @transform_6(%arg0: i32, %arg1: i32) -> (i32, i32) {
    %c0_i32 = arith.constant 0 : i32
    %c0_i32_0 = arith.constant 0 : i32
    %c0_i32_1 = arith.constant 0 : i32
    return %c0_i32, %c0_i32_0 : i32, i32
  }
  func.func @transform_7(%arg0: i32, %arg1: i32) -> (i32, i32) {
    %c0_i32 = arith.constant 0 : i32
    %c0_i32_0 = arith.constant 0 : i32
    %c0_i32_1 = arith.constant 0 : i32
    return %c0_i32, %c0_i32_0 : i32, i32
  }
  func.func @transform_8(%arg0: i32, %arg1: i32) -> (i32, i32) {
    %c0_i32 = arith.constant 0 : i32
    %c0_i32_0 = arith.constant 0 : i32
    %c0_i32_1 = arith.constant 0 : i32
    return %c0_i32, %c0_i32_0 : i32, i32
  }
  func.func @transform_9(%arg0: i32, %arg1: i32) -> (i32, i32) {
    %c0_i32 = arith.constant 0 : i32
    %c0_i32_0 = arith.constant 0 : i32
    %c0_i32_1 = arith.constant 0 : i32
    return %c0_i32, %c0_i32_0 : i32, i32
  }
  func.func @transform_10(%arg0: i32, %arg1: i32) -> (i32, i32) {
    %c0_i32 = arith.constant 0 : i32
    %c0_i32_0 = arith.constant 0 : i32
    %c0_i32_1 = arith.constant 0 : i32
    return %c0_i32, %c0_i32_0 : i32, i32
  }
  func.func @transform_11(%arg0: i32, %arg1: i32) -> (i32, i32, i32) {
    %c0_i32 = arith.constant 0 : i32
    %c0_i32_0 = arith.constant 0 : i32
    %c0_i32_1 = arith.constant 0 : i32
    return %arg0, %c0_i32, %c0_i32_0 : i32, i32, i32
  }
}

</mosaic_0001>

<llo_original>
// kernel: est.1
$region0: #{est.1}
  #allocation0 [shape = 'u32[]', space=smem, size = 0x4, offset = 0x4, fixed_abs, tag = 'smem constant byte address 0x4 - core index']
  #allocation1 [shape = 'u32[144,128]{1,0:T(1,128)}', space=vmem, size = 0x12000, scoped, tag = 'internal scratch']
  #allocation2 [shape = 'f32[256,128]{1,0:T(8,128)}', space=vmem, size = 0x20000, scoped, tag = 'scratch operand']
  %s0 = inlined_call_operand.vmem [shape: f32[2,8,2560], index: 0, kind: input, shape index: {}]
  %s1 = inlined_call_operand.vmem [shape: f32[64,8], index: 1, kind: input, shape index: {}]
  %s2 = inlined_call_operand.vmem [shape: f32[64,1], index: 2, kind: input, shape index: {}]
  %s3 = inlined_call_operand.vmem [shape: bf16[128,64], index: 3, kind: input, shape index: {}]
  %s4 = inlined_call_operand.vmem [shape: f32[128,1], index: 4, kind: input, shape index: {}]
  %s5 = inlined_call_operand.vmem [shape: bf16[256,128], index: 5, kind: input, shape index: {}]
  %s6 = inlined_call_operand.vmem [shape: f32[256,1], index: 6, kind: input, shape index: {}]
  %s7 = inlined_call_operand.vmem [shape: f32[256,128], index: 7, kind: input, shape index: {}]
  %s8 = inlined_call_operand.vmem [shape: f32[1,128], index: 8, kind: input, shape index: {}]
  %s9 = inlined_call_operand.vmem [shape: f32[128,128], index: 9, kind: input, shape index: {}]
  %s10 = inlined_call_operand.vmem [shape: f32[1,128], index: 10, kind: input, shape index: {}]
  %s11 = inlined_call_operand.vmem [shape: f32[2,8,128], index: 11, kind: output, shape index: {}]
  %s12 = sld [smem:[#allocation0]]
  $region97: #{est.1} parent=0
    _
  %s14 = ssub.s32 1, %s12
  %s15 = scalar_select 0, %s14, %s12
  loop: start=0, step=1, limit=4
  $region2: #{est.1} parent=0 // loop_pre_header
    _
  $region3: #{est.1} parent=0 // loop_header
    %s17 = sphi 0, %s21
    %p18 = scmp.ge.s32.totalorder %s17, 4
    %s24 = sphi 0, %s36
    %s25 = sphi 0, %s32
    %s26 = sphi 0, %s24
    %s27 = sphi 0, %s25
    %s28 = sphi 0, %s26
    %s29 = sphi 0, %s27
    %s41 = sphi 0, %s43
    %s44 = sphi 0, %s41
    %s45 = sphi 0, %s44
    %s61 = sphi 0, %s45
    %s65 = sphi 0, %s65
    %s67 = sphi 0, %s65
    %s68 = sphi 0, %s67
    %s82 = sphi 0, %s68
    %s86 = sphi 0, %s86
    %s88 = sphi 0, %s86
    %s89 = sphi 0, %s88
    %s103 = sphi 0, %s89
    %s107 = sphi 0, %s107
    %s109 = sphi 0, %s107
    %s110 = sphi 0, %s109
    %s124 = sphi 0, %s110
    %s128 = sphi 0, %s128
    %s130 = sphi 0, %s128
    %s131 = sphi 0, %s130
    %s145 = sphi 0, %s131
    %s149 = sphi 0, %s149
    %s151 = sphi 0, %s149
    %s152 = sphi 0, %s151
    %s166 = sphi 0, %s152
    %s170 = sphi 0, %s170
    %s172 = sphi 0, %s170
    %s173 = sphi 0, %s172
    %s187 = sphi 0, %s173
    %s191 = sphi 0, %s191
    %s193 = sphi 0, %s191
    %s194 = sphi 0, %s193
    %s208 = sphi 0, %s194
    %s212 = sphi 0, %s212
    %s214 = sphi 0, %s212
    %s215 = sphi 0, %s214
    %s229 = sphi 0, %s215
    %s233 = sphi 0, %s233
    %s235 = sphi 0, %s233
    %s236 = sphi 0, %s235
    %s250 = sphi 0, %s236
    %s254 = sphi 0, %s254
    %s256 = sphi 0, %s254
    %s257 = sphi 0, %s256
    %s271 = sphi 0, %s257
    %s277 = sphi 0, %s279
    %s280 = sphi 0, %s277
    %s281 = sphi 0, %s280
    %s297 = sphi 0, %s281
  $region4: #{est.1} parent=0 // loop_header_branch
    %20 = sbr.rel (%p18) target = $region8
  $region5: #{est.1} parent=0 // loop_body
    %s22 = ssub.s32 %s17, 1
    %s23 = ssub.s32 %s17, 2
    %s30 = sadd.s32 1, %s25
    %p31 = scmp.ge.s32.totalorder %s30, 1
    %s32 = scalar_select %p31, 0, %s30
    %s33 = sadd.s32 1, %s24
    %s34 = scalar_select %p31, %s33, %s24
    %p35 = scmp.ge.s32.totalorder %s34, 2
    %s36 = scalar_select %p35, 0, %s34
    %s37 = ssub.s32 %s24, %s36
    %s38 = ssub.s32 %s25, %s32
    %s39 = sor.u32 %s37, %s38
    %p40 = scmp.eq.s32.totalorder %s39, 0
    %s42 = sadd.s32 %s41, 1
    %s43 = scalar_select %p40, %s41, %s42
    %p46 = pneg %p40
    %p47 = scmp.eq.s32.totalorder %s17, 1
    %p48 = por %p46, %p47
    %p49 = scmp.ne.s32.totalorder %s41, %s44
    %p50 = scmp.eq.s32.totalorder %s17, 0
    %p51 = por %p49, %p50
    %p52 = scmp.ne.s32.totalorder %s41, %s44
    %p53 = scmp.eq.s32.totalorder %s22, 1
    %p54 = por %p52, %p53
    %p55 = scmp.ne.s32.totalorder %s44, %s45
    %p56 = scmp.eq.s32.totalorder %s22, 0
    %p57 = por %p55, %p56
    %p58 = scmp.ne.s32.totalorder %s44, %s45
    %p59 = scmp.eq.s32.totalorder %s23, 1
    %p60 = por %p58, %p59
    %p62 = scmp.ne.s32.totalorder %s45, %s61
    %p63 = scmp.eq.s32.totalorder %s23, 0
    %p64 = por %p62, %p63
    %s66 = sadd.s32 %s65, 1
    %p69 = scmp.eq.s32.totalorder %s17, 1
    %p70 = scmp.ne.s32.totalorder %s65, %s67
    %p71 = scmp.eq.s32.totalorder %s17, 0
    %p72 = por %p70, %p71
    %p73 = scmp.ne.s32.totalorder %s65, %s67
    %p74 = scmp.eq.s32.totalorder %s22, 1
    %p75 = por %p73, %p74
    %p76 = scmp.ne.s32.totalorder %s67, %s68
    %p77 = scmp.eq.s32.totalorder %s22, 0
    %p78 = por %p76, %p77
    %p79 = scmp.ne.s32.totalorder %s67, %s68
    %p80 = scmp.eq.s32.totalorder %s23, 1
    %p81 = por %p79, %p80
    %p83 = scmp.ne.s32.totalorder %s68, %s82
    %p84 = scmp.eq.s32.totalorder %s23, 0
    %p85 = por %p83, %p84
    %s87 = sadd.s32 %s86, 1
    %p90 = scmp.eq.s32.totalorder %s17, 1
    %p91 = scmp.ne.s32.totalorder %s86, %s88
    %p92 = scmp.eq.s32.totalorder %s17, 0
    %p93 = por %p91, %p92
    %p94 = scmp.ne.s32.totalorder %s86, %s88
    %p95 = scmp.eq.s32.totalorder %s22, 1
    %p96 = por %p94, %p95
    %p97 = scmp.ne.s32.totalorder %s88, %s89
    %p98 = scmp.eq.s32.totalorder %s22, 0
    %p99 = por %p97, %p98
    %p100 = scmp.ne.s32.totalorder %s88, %s89
    %p101 = scmp.eq.s32.totalorder %s23, 1
    %p102 = por %p100, %p101
    %p104 = scmp.ne.s32.totalorder %s89, %s103
    %p105 = scmp.eq.s32.totalorder %s23, 0
    %p106 = por %p104, %p105
    %s108 = sadd.s32 %s107, 1
    %p111 = scmp.eq.s32.totalorder %s17, 1
    %p112 = scmp.ne.s32.totalorder %s107, %s109
    %p113 = scmp.eq.s32.totalorder %s17, 0
    %p114 = por %p112, %p113
    %p115 = scmp.ne.s32.totalorder %s107, %s109
    %p116 = scmp.eq.s32.totalorder %s22, 1
    %p117 = por %p115, %p116
    %p118 = scmp.ne.s32.totalorder %s109, %s110
    %p119 = scmp.eq.s32.totalorder %s22, 0
    %p120 = por %p118, %p119
    %p121 = scmp.ne.s32.totalorder %s109, %s110
    %p122 = scmp.eq.s32.totalorder %s23, 1
    %p123 = por %p121, %p122
    %p125 = scmp.ne.s32.totalorder %s110, %s124
    %p126 = scmp.eq.s32.totalorder %s23, 0
    %p127 = por %p125, %p126
    %s129 = sadd.s32 %s128, 1
    %p132 = scmp.eq.s32.totalorder %s17, 1
    %p133 = scmp.ne.s32.totalorder %s128, %s130
    %p134 = scmp.eq.s32.totalorder %s17, 0
    %p135 = por %p133, %p134
    %p136 = scmp.ne.s32.totalorder %s128, %s130
    %p137 = scmp.eq.s32.totalorder %s22, 1
    %p138 = por %p136, %p137
    %p139 = scmp.ne.s32.totalorder %s130, %s131
    %p140 = scmp.eq.s32.totalorder %s22, 0
    %p141 = por %p139, %p140
    %p142 = scmp.ne.s32.totalorder %s130, %s131
    %p143 = scmp.eq.s32.totalorder %s23, 1
    %p144 = por %p142, %p143
    %p146 = scmp.ne.s32.totalorder %s131, %s145
    %p147 = scmp.eq.s32.totalorder %s23, 0
    %p148 = por %p146, %p147
    %s150 = sadd.s32 %s149, 1
    %p153 = scmp.eq.s32.totalorder %s17, 1
    %p154 = scmp.ne.s32.totalorder %s149, %s151
    %p155 = scmp.eq.s32.totalorder %s17, 0
    %p156 = por %p154, %p155
    %p157 = scmp.ne.s32.totalorder %s149, %s151
    %p158 = scmp.eq.s32.totalorder %s22, 1
    %p159 = por %p157, %p158
    %p160 = scmp.ne.s32.totalorder %s151, %s152
    %p161 = scmp.eq.s32.totalorder %s22, 0
    %p162 = por %p160, %p161
    %p163 = scmp.ne.s32.totalorder %s151, %s152
    %p164 = scmp.eq.s32.totalorder %s23, 1
    %p165 = por %p163, %p164
    %p167 = scmp.ne.s32.totalorder %s152, %s166
    %p168 = scmp.eq.s32.totalorder %s23, 0
    %p169 = por %p167, %p168
    %s171 = sadd.s32 %s170, 1
    %p174 = scmp.eq.s32.totalorder %s17, 1
    %p175 = scmp.ne.s32.totalorder %s170, %s172
    %p176 = scmp.eq.s32.totalorder %s17, 0
    %p177 = por %p175, %p176
    %p178 = scmp.ne.s32.totalorder %s170, %s172
    %p179 = scmp.eq.s32.totalorder %s22, 1
    %p180 = por %p178, %p179
    %p181 = scmp.ne.s32.totalorder %s172, %s173
    %p182 = scmp.eq.s32.totalorder %s22, 0
    %p183 = por %p181, %p182
    %p184 = scmp.ne.s32.totalorder %s172, %s173
    %p185 = scmp.eq.s32.totalorder %s23, 1
    %p186 = por %p184, %p185
    %p188 = scmp.ne.s32.totalorder %s173, %s187
    %p189 = scmp.eq.s32.totalorder %s23, 0
    %p190 = por %p188, %p189
    %s192 = sadd.s32 %s191, 1
    %p195 = scmp.eq.s32.totalorder %s17, 1
    %p196 = scmp.ne.s32.totalorder %s191, %s193
    %p197 = scmp.eq.s32.totalorder %s17, 0
    %p198 = por %p196, %p197
    %p199 = scmp.ne.s32.totalorder %s191, %s193
    %p200 = scmp.eq.s32.totalorder %s22, 1
    %p201 = por %p199, %p200
    %p202 = scmp.ne.s32.totalorder %s193, %s194
    %p203 = scmp.eq.s32.totalorder %s22, 0
    %p204 = por %p202, %p203
    %p205 = scmp.ne.s32.totalorder %s193, %s194
    %p206 = scmp.eq.s32.totalorder %s23, 1
    %p207 = por %p205, %p206
    %p209 = scmp.ne.s32.totalorder %s194, %s208
    %p210 = scmp.eq.s32.totalorder %s23, 0
    %p211 = por %p209, %p210
    %s213 = sadd.s32 %s212, 1
    %p216 = scmp.eq.s32.totalorder %s17, 1
    %p217 = scmp.ne.s32.totalorder %s212, %s214
    %p218 = scmp.eq.s32.totalorder %s17, 0
    %p219 = por %p217, %p218
    %p220 = scmp.ne.s32.totalorder %s212, %s214
    %p221 = scmp.eq.s32.totalorder %s22, 1
    %p222 = por %p220, %p221
    %p223 = scmp.ne.s32.totalorder %s214, %s215
    %p224 = scmp.eq.s32.totalorder %s22, 0
    %p225 = por %p223, %p224
    %p226 = scmp.ne.s32.totalorder %s214, %s215
    %p227 = scmp.eq.s32.totalorder %s23, 1
    %p228 = por %p226, %p227
    %p230 = scmp.ne.s32.totalorder %s215, %s229
    %p231 = scmp.eq.s32.totalorder %s23, 0
    %p232 = por %p230, %p231
    %s234 = sadd.s32 %s233, 1
    %p237 = scmp.eq.s32.totalorder %s17, 1
    %p238 = scmp.ne.s32.totalorder %s233, %s235
    %p239 = scmp.eq.s32.totalorder %s17, 0
    %p240 = por %p238, %p239
    %p241 = scmp.ne.s32.totalorder %s233, %s235
    %p242 = scmp.eq.s32.totalorder %s22, 1
    %p243 = por %p241, %p242
    %p244 = scmp.ne.s32.totalorder %s235, %s236
    %p245 = scmp.eq.s32.totalorder %s22, 0
    %p246 = por %p244, %p245
    %p247 = scmp.ne.s32.totalorder %s235, %s236
    %p248 = scmp.eq.s32.totalorder %s23, 1
    %p249 = por %p247, %p248
    %p251 = scmp.ne.s32.totalorder %s236, %s250
    %p252 = scmp.eq.s32.totalorder %s23, 0
    %p253 = por %p251, %p252
    %s255 = sadd.s32 %s254, 1
    %p258 = scmp.eq.s32.totalorder %s17, 1
    %p259 = scmp.ne.s32.totalorder %s254, %s256
    %p260 = scmp.eq.s32.totalorder %s17, 0
    %p261 = por %p259, %p260
    %p262 = scmp.ne.s32.totalorder %s254, %s256
    %p263 = scmp.eq.s32.totalorder %s22, 1
    %p264 = por %p262, %p263
    %p265 = scmp.ne.s32.totalorder %s256, %s257
    %p266 = scmp.eq.s32.totalorder %s22, 0
    %p267 = por %p265, %p266
    %p268 = scmp.ne.s32.totalorder %s256, %s257
    %p269 = scmp.eq.s32.totalorder %s23, 1
    %p270 = por %p268, %p269
    %p272 = scmp.ne.s32.totalorder %s257, %s271
    %p273 = scmp.eq.s32.totalorder %s23, 0
    %p274 = por %p272, %p273
    %s275 = ssub.s32 %s24, %s36
    %p276 = scmp.eq.s32.totalorder %s275, 0
    %s278 = sadd.s32 %s277, 1
    %s279 = scalar_select %p276, %s277, %s278
    %p282 = pneg %p276
    %p283 = scmp.eq.s32.totalorder %s17, 1
    %p284 = por %p282, %p283
    %p285 = scmp.ne.s32.totalorder %s277, %s280
    %p286 = scmp.eq.s32.totalorder %s17, 0
    %p287 = por %p285, %p286
    %p288 = scmp.ne.s32.totalorder %s277, %s280
    %p289 = scmp.eq.s32.totalorder %s22, 1
    %p290 = por %p288, %p289
    %p291 = scmp.ne.s32.totalorder %s280, %s281
    %p292 = scmp.eq.s32.totalorder %s22, 0
    %p293 = por %p291, %p292
    %p294 = scmp.ne.s32.totalorder %s280, %s281
    %p295 = scmp.eq.s32.totalorder %s23, 1
    %p296 = por %p294, %p295
    %p298 = scmp.ne.s32.totalorder %s281, %s297
    %p299 = scmp.eq.s32.totalorder %s23, 0
    %p300 = por %p298, %p299
    %p301 = scmp.le.s32.totalorder 1, %s17
    %p302 = scmp.lt.s32.totalorder %s17, 3
    %p303 = pnand %p301, %p302
    %p304 = pneg %p303
    // Predicated region
    $region9: #{est.1} parent=5 // pred_check
      _
    $region10: #{est.1} parent=5 // pred_check_branch
      %306 = sbr.rel (%p303) target = $region12
    $region11: #{est.1} parent=5 // pred_region
      %s307 = ssub.s32 %s17, 1
      // Predicated region
      $region13: #{est.1} parent=11 // pred_check
        %p308 = pneg %p78
      $region14: #{est.1} parent=11 // pred_check_branch
        %310 = sbr.rel (%p308) target = $region16
      $region15: #{est.1} parent=11 // pred_region
        _
      $region16: #{est.1} parent=11 // pred_fallthru
        _
      // Predicated region
      $region17: #{est.1} parent=11 // pred_check
        %p311 = pneg %p99
      $region18: #{est.1} parent=11 // pred_check_branch
        %313 = sbr.rel (%p311) target = $region20
      $region19: #{est.1} parent=11 // pred_region
        _
      $region20: #{est.1} parent=11 // pred_fallthru
        _
      // Predicated region
      $region21: #{est.1} parent=11 // pred_check
        %p314 = pneg %p120
      $region22: #{est.1} parent=11 // pred_check_branch
        %316 = sbr.rel (%p314) target = $region24
      $region23: #{est.1} parent=11 // pred_region
        _
      $region24: #{est.1} parent=11 // pred_fallthru
        _
      // Predicated region
      $region25: #{est.1} parent=11 // pred_check
        %p317 = pneg %p141
      $region26: #{est.1} parent=11 // pred_check_branch
        %319 = sbr.rel (%p317) target = $region28
      $region27: #{est.1} parent=11 // pred_region
        _
      $region28: #{est.1} parent=11 // pred_fallthru
        _
      // Predicated region
      $region29: #{est.1} parent=11 // pred_check
        %p320 = pneg %p162
      $region30: #{est.1} parent=11 // pred_check_branch
        %322 = sbr.rel (%p320) target = $region32
      $region31: #{est.1} parent=11 // pred_region
        _
      $region32: #{est.1} parent=11 // pred_fallthru
        _
      // Predicated region
      $region33: #{est.1} parent=11 // pred_check
        %p323 = pneg %p183
      $region34: #{est.1} parent=11 // pred_check_branch
        %325 = sbr.rel (%p323) target = $region36
      $region35: #{est.1} parent=11 // pred_region
        _
      $region36: #{est.1} parent=11 // pred_fallthru
        _
      // Predicated region
      $region37: #{est.1} parent=11 // pred_check
        %p326 = pneg %p204
      $region38: #{est.1} parent=11 // pred_check_branch
        %328 = sbr.rel (%p326) target = $region40
      $region39: #{est.1} parent=11 // pred_region
        _
      $region40: #{est.1} parent=11 // pred_fallthru
        _
      // Predicated region
      $region41: #{est.1} parent=11 // pred_check
        %p329 = pneg %p225
      $region42: #{est.1} parent=11 // pred_check_branch
        %331 = sbr.rel (%p329) target = $region44
      $region43: #{est.1} parent=11 // pred_region
        _
      $region44: #{est.1} parent=11 // pred_fallthru
        _
      // Predicated region
      $region45: #{est.1} parent=11 // pred_check
        %p332 = pneg %p246
      $region46: #{est.1} parent=11 // pred_check_branch
        %334 = sbr.rel (%p332) target = $region48
      $region47: #{est.1} parent=11 // pred_region
        _
      $region48: #{est.1} parent=11 // pred_fallthru
        _
      // Predicated region
      $region49: #{est.1} parent=11 // pred_check
        %p335 = pneg %p267
      $region50: #{est.1} parent=11 // pred_check_branch
        %337 = sbr.rel (%p335) target = $region52
      $region51: #{est.1} parent=11 // pred_region
        _
      $region52: #{est.1} parent=11 // pred_fallthru
        _
    $region12: #{est.1} parent=5 // pred_fallthru
      _
    %p338 = scmp.lt.s32.totalorder %s17, 2
    // Predicated region
    $region53: #{est.1} parent=5 // pred_check
      %p339 = pneg %p338
    $region54: #{est.1} parent=5 // pred_check_branch
      %341 = sbr.rel (%p339) target = $region56
    $region55: #{est.1} parent=5 // pred_region
      // Predicated region
      $region57: #{est.1} parent=55 // pred_check
        %p342 = pneg %p51
      $region58: #{est.1} parent=55 // pred_check_branch
        %344 = sbr.rel (%p342) target = $region60
      $region59: #{est.1} parent=55 // pred_region
        %s345 = smul.u32 20, %s25
        %p346 = scmp.lt.s32.totalorder %s24, 1
        %s347 = scalar_select %p346, %s24, 1
        %p348 = scmp.lt.s32.totalorder %s345, 19
        %s349 = scalar_select %p348, %s345, 19
        %s350 = smul.addr %s347, 20
        %s351 = sadd.s32 %s349, %s350
        %s352 = smul.addr %s351, 8
        %s353 = scalar_lea.vmem %s0, %s352
        %s354 = smul.u32 20, %s25
      $region60: #{est.1} parent=55 // pred_fallthru
        _
    $region56: #{est.1} parent=5 // pred_fallthru
      _
    %p355 = scmp.le.s32.totalorder 1, %s17
    %p356 = scmp.lt.s32.totalorder %s17, 3
    %p357 = pnand %p355, %p356
    %p358 = pneg %p357
    // Predicated region
    $region61: #{est.1} parent=5 // pred_check
      _
    $region62: #{est.1} parent=5 // pred_check_branch
      %360 = sbr.rel (%p357) target = $region64
    $region63: #{est.1} parent=5 // pred_region
      %s361 = ssub.s32 %s17, 1
      %s362 = smul.u32 20, %s27
      %p363 = scmp.lt.s32.totalorder %s26, 1
      %s364 = scalar_select %p363, %s26, 1
      %p365 = scmp.lt.s32.totalorder %s362, 19
      %s366 = scalar_select %p365, %s362, 19
      %s367 = smul.addr %s364, 20
      %s368 = sadd.s32 %s366, %s367
      %s369 = smul.addr %s368, 8
      %s370 = scalar_lea.vmem %s0, %s369
      %p371 = pneg %p57
      %p372 = pneg %p54
      %p373 = pneg %p78
      %p374 = pneg %p75
      %p375 = pneg %p99
      %p376 = pneg %p96
      %p377 = pneg %p120
      %p378 = pneg %p117
      %p379 = pneg %p141
      %p380 = pneg %p138
      %p381 = pneg %p162
      %p382 = pneg %p159
      %p383 = pneg %p183
      %p384 = pneg %p180
      %p385 = pneg %p204
      %p386 = pneg %p201
      %p387 = pneg %p225
      %p388 = pneg %p222
      %p389 = pneg %p246
      %p390 = pneg %p243
      %p391 = pneg %p267
      %p392 = pneg %p264
      %p393 = pneg %p293
      %p394 = pneg %p290
      %p395 = scmp.lt.s32.totalorder %s26, 1
      %s396 = scalar_select %p395, %s26, 1
      %s397 = smul.addr %s396, 8
      %s398 = scalar_lea.vmem %s11, %s397
      %s399 = smul.u32 20, %s27
      %p400 = scmp.lt.s32.totalorder %s26, 1
      %s401 = scalar_select %p400, %s26, 1
      %p402 = scmp.lt.s32.totalorder %s399, 19
      %s403 = scalar_select %p402, %s399, 19
      %s404 = smul.addr %s401, 20
      %s405 = sadd.s32 %s403, %s404
      %s406 = smul.addr %s405, 8
      %s407 = scalar_lea.vmem %s0, %s406
      %s408 = smul.u32 20, %s27
      %p409 = scmp.lt.s32.totalorder %s26, 1
      %s410 = scalar_select %p409, %s26, 1
      %s411 = smul.addr %s410, 8
      %s412 = scalar_lea.vmem %s11, %s411
      %v416 = vld [vmem:[%s407] sm:$0xff]
      %v417 = vld [vmem:[%s407 + $0x8] sm:$0xff]
      %v418 = vld [vmem:[%s407 + $0x10] sm:$0xff]
      %v419 = vld [vmem:[%s407 + $0x18] sm:$0xff]
      %v420 = vld [vmem:[%s407 + $0x20] sm:$0xff]
      %v421 = vld [vmem:[%s407 + $0x28] sm:$0xff]
      %v422 = vld [vmem:[%s407 + $0x30] sm:$0xff]
      %v423 = vld [vmem:[%s407 + $0x38] sm:$0xff]
      %v424 = vld [vmem:[%s407 + $0x40] sm:$0xff]
      %v425 = vld [vmem:[%s407 + $0x48] sm:$0xff]
      %v426 = vld [vmem:[%s407 + $0x50] sm:$0xff]
      %v427 = vld [vmem:[%s407 + $0x58] sm:$0xff]
      %v428 = vld [vmem:[%s407 + $0x60] sm:$0xff]
      %v429 = vld [vmem:[%s407 + $0x68] sm:$0xff]
      %v430 = vld [vmem:[%s407 + $0x70] sm:$0xff]
      %v431 = vld [vmem:[%s407 + $0x78] sm:$0xff]
      %v432 = vld [vmem:[%s407 + $0x80] sm:$0xff]
      %v433 = vld [vmem:[%s407 + $0x88] sm:$0xff]
      %v434 = vld [vmem:[%s407 + $0x90] sm:$0xff]
      %v435 = vld [vmem:[%s407 + $0x98] sm:$0xff]
      %v436 = vld [vmem:[%s1] sm:$0xff]
      %v437 = vld [vmem:[%s1 + $0x8] sm:$0xff]
      %v438 = vld [vmem:[%s1 + $0x10] sm:$0xff]
      %v439 = vld [vmem:[%s1 + $0x18] sm:$0xff]
      %v440 = vld [vmem:[%s1 + $0x20] sm:$0xff]
      %v441 = vld [vmem:[%s1 + $0x28] sm:$0xff]
      %v442 = vld [vmem:[%s1 + $0x30] sm:$0xff]
      %v443 = vld [vmem:[%s1 + $0x38] sm:$0xff]
      %v444 = vpack.c.bf16 %v437, %v436
      %v445 = vpack.c.bf16 %v439, %v438
      %v446 = vpack.c.bf16 %v441, %v440
      %v447 = vpack.c.bf16 %v443, %v442
      %v448 = vpack.c.bf16 %v416, %v416
      %v449 = vpack.c.bf16 %v417, %v417
      %v450 = vpack.c.bf16 %v418, %v418
      %v451 = vpack.c.bf16 %v419, %v419
      %v452 = vpack.c.bf16 %v420, %v420
      %v453 = vpack.c.bf16 %v421, %v421
      %v454 = vpack.c.bf16 %v422, %v422
      %v455 = vpack.c.bf16 %v423, %v423
      %v456 = vpack.c.bf16 %v424, %v424
      %v457 = vpack.c.bf16 %v425, %v425
      %v458 = vpack.c.bf16 %v426, %v426
      %v459 = vpack.c.bf16 %v427, %v427
      %v460 = vpack.c.bf16 %v428, %v428
      %v461 = vpack.c.bf16 %v429, %v429
      %v462 = vpack.c.bf16 %v430, %v430
      %v463 = vpack.c.bf16 %v431, %v431
      %v464 = vpack.c.bf16 %v432, %v432
      %v465 = vpack.c.bf16 %v433, %v433
      %v466 = vpack.c.bf16 %v434, %v434
      %v467 = vpack.c.bf16 %v435, %v435
      %vm468 = vcmask 64512
      %v470 = vsel %vm468, %v444, 0
      %v473 = vsel %vm468, %v445, 0
      %v476 = vsel %vm468, %v446, 0
      %v479 = vsel %vm468, %v447, 0
      %vm481 = vcmask 1043456
      %v483 = vsel %vm481, %v448, 0
      %v486 = vsel %vm481, %v449, 0
      %v489 = vsel %vm481, %v450, 0
      %v492 = vsel %vm481, %v451, 0
      %v495 = vsel %vm481, %v452, 0
      %v498 = vsel %vm481, %v453, 0
      %v501 = vsel %vm481, %v454, 0
      %v504 = vsel %vm481, %v455, 0
      %v507 = vsel %vm481, %v456, 0
      %v510 = vsel %vm481, %v457, 0
      %v513 = vsel %vm481, %v458, 0
      %v516 = vsel %vm481, %v459, 0
      %v519 = vsel %vm481, %v460, 0
      %v522 = vsel %vm481, %v461, 0
      %v525 = vsel %vm481, %v462, 0
      %v528 = vsel %vm481, %v463, 0
      %v531 = vsel %vm481, %v464, 0
      %v534 = vsel %vm481, %v465, 0
      %v537 = vsel %vm481, %v466, 0
      %v540 = vsel %vm481, %v467, 0
      %542 = vmatprep.subr.bf16.mxu0 %v486
      %543 = vmatpush1.bf16.msra.mxu0 %v483
      %544 = vmatprep.subr.bf16.mxu0 0
      %545 = vmatpush1.bf16.msra.mxu0 0
      %546 = vmatprep.subr.bf16.mxu0 0
      %547 = vmatpush1.bf16.msra.mxu0 0
      %548 = vmatprep.subr.bf16.mxu0 0
      %549 = vmatpush1.bf16.msra.mxu0 0
      %550 = vmatprep.subr.bf16.mxu0 0
      %551 = vmatpush1.bf16.msra.mxu0 0
      %552 = vmatprep.subr.bf16.mxu0 0
      %553 = vmatpush1.bf16.msra.mxu0 0
      %554 = vmatprep.subr.bf16.mxu0 0
      %555 = vmatpush1.bf16.msra.mxu0 0
      %556 = vmatprep.subr.bf16.mxu0 0
      %557 = vmatpush1.bf16.msra.mxu0 0
      %558 = vmatprep.subr.bf16.mxu0 0
      %559 = vmatpush1.bf16.msra.mxu0 0
      %560 = vmatprep.subr.bf16.mxu0 0
      %561 = vmatpush1.bf16.msra.mxu0 0
      %562 = vmatprep.subr.bf16.mxu0 0
      %563 = vmatpush1.bf16.msra.mxu0 0
      %564 = vmatprep.subr.bf16.mxu0 0
      %565 = vmatpush1.bf16.msra.mxu0 0
      %566 = vmatprep.subr.bf16.mxu0 0
      %567 = vmatpush1.bf16.msra.mxu0 0
      %568 = vmatprep.subr.bf16.mxu0 0
      %569 = vmatpush1.bf16.msra.mxu0 0
      %570 = vmatprep.subr.bf16.mxu0 0
      %571 = vmatpush1.bf16.msra.mxu0 0
      %572 = vmatprep.subr.bf16.mxu0 0
      %573 = vmatpush1.bf16.msra.mxu0 0
      %574 = vmatprep.mubr.bf16.mxu0 0
      %575 = vmatmul.mubr.bf16.gmra.mrb[0].mxu0 %v470
      %v576 = vpop.f32.mrb[0].mxu0
      %v577 = vadd.f32 0.0, %v576
      %v578 = vpop.f32.mrb[0].mxu0
      %v579 = vadd.f32 0.0, %v578
      %v580 = vpop.f32.mrb[0].mxu0
      %v581 = vadd.f32 0.0, %v580
      %v582 = vpop.f32.mrb[0].mxu0
      %v583 = vadd.f32 0.0, %v582
      %584 = vmatprep.mubr.bf16.mxu0 0
      %585 = vmatmul.mubr.bf16.gmra.mrb[0].mxu0 %v473
      %v586 = vpop.f32.mrb[0].mxu0
      %v587 = vadd.f32 0.0, %v586
      %v588 = vpop.f32.mrb[0].mxu0
      %v589 = vadd.f32 0.0, %v588
      %v590 = vpop.f32.mrb[0].mxu0
      %v591 = vadd.f32 0.0, %v590
      %v592 = vpop.f32.mrb[0].mxu0
      %v593 = vadd.f32 0.0, %v592
      %594 = vmatprep.mubr.bf16.mxu0 0
      %595 = vmatmul.mubr.bf16.gmra.mrb[0].mxu0 %v476
      %v596 = vpop.f32.mrb[0].mxu0
      %v597 = vadd.f32 0.0, %v596
      %v598 = vpop.f32.mrb[0].mxu0
      %v599 = vadd.f32 0.0, %v598
      %v600 = vpop.f32.mrb[0].mxu0
      %v601 = vadd.f32 0.0, %v600
      %v602 = vpop.f32.mrb[0].mxu0
      %v603 = vadd.f32 0.0, %v602
      %604 = vmatprep.mubr.bf16.mxu0 0
      %605 = vmatmul.mubr.bf16.gmra.mrb[0].mxu0 %v479
      %v606 = vpop.f32.mrb[0].mxu0
      %v607 = vadd.f32 0.0, %v606
      %v608 = vpop.f32.mrb[0].mxu0
      %v609 = vadd.f32 0.0, %v608
      %v610 = vpop.f32.mrb[0].mxu0
      %v611 = vadd.f32 0.0, %v610
      %v612 = vpop.f32.mrb[0].mxu0
      %v613 = vadd.f32 0.0, %v612
      %614 = vdwg.mxu0
      %615 = vmatprep.subr.bf16.mxu0 %v492
      %616 = vmatpush1.bf16.msra.mxu0 %v489
      %617 = vmatprep.subr.bf16.mxu0 0
      %618 = vmatpush1.bf16.msra.mxu0 0
      %619 = vmatprep.subr.bf16.mxu0 0
      %620 = vmatpush1.bf16.msra.mxu0 0
      %621 = vmatprep.subr.bf16.mxu0 0
      %622 = vmatpush1.bf16.msra.mxu0 0
      %623 = vmatprep.subr.bf16.mxu0 0
      %624 = vmatpush1.bf16.msra.mxu0 0
      %625 = vmatprep.subr.bf16.mxu0 0
      %626 = vmatpush1.bf16.msra.mxu0 0
      %627 = vmatprep.subr.bf16.mxu0 0
      %628 = vmatpush1.bf16.msra.mxu0 0
      %629 = vmatprep.subr.bf16.mxu0 0
      %630 = vmatpush1.bf16.msra.mxu0 0
      %631 = vmatprep.subr.bf16.mxu0 0
      %632 = vmatpush1.bf16.msra.mxu0 0
      %633 = vmatprep.subr.bf16.mxu0 0
      %634 = vmatpush1.bf16.msra.mxu0 0
      %635 = vmatprep.subr.bf16.mxu0 0
      %636 = vmatpush1.bf16.msra.mxu0 0
      %637 = vmatprep.subr.bf16.mxu0 0
      %638 = vmatpush1.bf16.msra.mxu0 0
      %639 = vmatprep.subr.bf16.mxu0 0
      %640 = vmatpush1.bf16.msra.mxu0 0
      %641 = vmatprep.subr.bf16.mxu0 0
      %642 = vmatpush1.bf16.msra.mxu0 0
      %643 = vmatprep.subr.bf16.mxu0 0
      %644 = vmatpush1.bf16.msra.mxu0 0
      %645 = vmatprep.subr.bf16.mxu0 0
      %646 = vmatpush1.bf16.msra.mxu0 0
      %647 = vmatprep.mubr.bf16.mxu0 0
      %648 = vmatmul.mubr.bf16.gmra.mrb[0].mxu0 %v470
      %v649 = vpop.f32.mrb[0].mxu0
      %v650 = vadd.f32 0.0, %v649
      %v651 = vpop.f32.mrb[0].mxu0
      %v652 = vadd.f32 0.0, %v651
      %v653 = vpop.f32.mrb[0].mxu0
      %v654 = vadd.f32 0.0, %v653
      %v655 = vpop.f32.mrb[0].mxu0
      %v656 = vadd.f32 0.0, %v655
      %657 = vmatprep.mubr.bf16.mxu0 0
      %658 = vmatmul.mubr.bf16.gmra.mrb[0].mxu0 %v473
      %v659 = vpop.f32.mrb[0].mxu0
      %v660 = vadd.f32 0.0, %v659
      %v661 = vpop.f32.mrb[0].mxu0
      %v662 = vadd.f32 0.0, %v661
      %v663 = vpop.f32.mrb[0].mxu0
      %v664 = vadd.f32 0.0, %v663
      %v665 = vpop.f32.mrb[0].mxu0
      %v666 = vadd.f32 0.0, %v665
      %667 = vmatprep.mubr.bf16.mxu0 0
      %668 = vmatmul.mubr.bf16.gmra.mrb[0].mxu0 %v476
      %v669 = vpop.f32.mrb[0].mxu0
      %v670 = vadd.f32 0.0, %v669
      %v671 = vpop.f32.mrb[0].mxu0
      %v672 = vadd.f32 0.0, %v671
      %v673 = vpop.f32.mrb[0].mxu0
      %v674 = vadd.f32 0.0, %v673
      %v675 = vpop.f32.mrb[0].mxu0
      %v676 = vadd.f32 0.0, %v675
      %677 = vmatprep.mubr.bf16.mxu0 0
      %678 = vmatmul.mubr.bf16.gmra.mrb[0].mxu0 %v479
      %v679 = vpop.f32.mrb[0].mxu0
      %v680 = vadd.f32 0.0, %v679
      %v681 = vpop.f32.mrb[0].mxu0
      %v682 = vadd.f32 0.0, %v681
      %v683 = vpop.f32.mrb[0].mxu0
      %v684 = vadd.f32 0.0, %v683
      %v685 = vpop.f32.mrb[0].mxu0
      %v686 = vadd.f32 0.0, %v685
      %687 = vdwg.mxu0
      %688 = vmatprep.subr.bf16.mxu0 %v498
      %689 = vmatpush1.bf16.msra.mxu0 %v495
      %690 = vmatprep.subr.bf16.mxu0 0
      %691 = vmatpush1.bf16.msra.mxu0 0
      %692 = vmatprep.subr.bf16.mxu0 0
      %693 = vmatpush1.bf16.msra.mxu0 0
      %694 = vmatprep.subr.bf16.mxu0 0
      %695 = vmatpush1.bf16.msra.mxu0 0
      %696 = vmatprep.subr.bf16.mxu0 0
      %697 = vmatpush1.bf16.msra.mxu0 0
      %698 = vmatprep.subr.bf16.mxu0 0
      %699 = vmatpush1.bf16.msra.mxu0 0
      %700 = vmatprep.subr.bf16.mxu0 0
      %701 = vmatpush1.bf16.msra.mxu0 0
      %702 = vmatprep.subr.bf16.mxu0 0
      %703 = vmatpush1.bf16.msra.mxu0 0
      %704 = vmatprep.subr.bf16.mxu0 0
      %705 = vmatpush1.bf16.msra.mxu0 0
      %706 = vmatprep.subr.bf16.mxu0 0
      %707 = vmatpush1.bf16.msra.mxu0 0
      %708 = vmatprep.subr.bf16.mxu0 0
      %709 = vmatpush1.bf16.msra.mxu0 0
      %710 = vmatprep.subr.bf16.mxu0 0
      %711 = vmatpush1.bf16.msra.mxu0 0
      %712 = vmatprep.subr.bf16.mxu0 0
      %713 = vmatpush1.bf16.msra.mxu0 0
      %714 = vmatprep.subr.bf16.mxu0 0
      %715 = vmatpush1.bf16.msra.mxu0 0
      %716 = vmatprep.subr.bf16.mxu0 0
      %717 = vmatpush1.bf16.msra.mxu0 0
      %718 = vmatprep.subr.bf16.mxu0 0
      %719 = vmatpush1.bf16.msra.mxu0 0
      %720 = vmatprep.mubr.bf16.mxu0 0
      %721 = vmatmul.mubr.bf16.gmra.mrb[0].mxu0 %v470
      %v722 = vpop.f32.mrb[0].mxu0
      %v723 = vadd.f32 0.0, %v722
      %v724 = vpop.f32.mrb[0].mxu0
      %v725 = vadd.f32 0.0, %v724
      %v726 = vpop.f32.mrb[0].mxu0
      %v727 = vadd.f32 0.0, %v726
      %v728 = vpop.f32.mrb[0].mxu0
      %v729 = vadd.f32 0.0, %v728
      %730 = vmatprep.mubr.bf16.mxu0 0
      %731 = vmatmul.mubr.bf16.gmra.mrb[0].mxu0 %v473
      %v732 = vpop.f32.mrb[0].mxu0
      %v733 = vadd.f32 0.0, %v732
      %v734 = vpop.f32.mrb[0].mxu0
      %v735 = vadd.f32 0.0, %v734
      %v736 = vpop.f32.mrb[0].mxu0
      %v737 = vadd.f32 0.0, %v736
      %v738 = vpop.f32.mrb[0].mxu0
      %v739 = vadd.f32 0.0, %v738
      %740 = vmatprep.mubr.bf16.mxu0 0
      %741 = vmatmul.mubr.bf16.gmra.mrb[0].mxu0 %v476
      %v742 = vpop.f32.mrb[0].mxu0
      %v743 = vadd.f32 0.0, %v742
      %v744 = vpop.f32.mrb[0].mxu0
      %v745 = vadd.f32 0.0, %v744
      %v746 = vpop.f32.mrb[0].mxu0
      %v747 = vadd.f32 0.0, %v746
      %v748 = vpop.f32.mrb[0].mxu0
      %v749 = vadd.f32 0.0, %v748
      %750 = vmatprep.mubr.bf16.mxu0 0
      %751 = vmatmul.mubr.bf16.gmra.mrb[0].mxu0 %v479
      %v752 = vpop.f32.mrb[0].mxu0
      %v753 = vadd.f32 0.0, %v752
      %v754 = vpop.f32.mrb[0].mxu0
      %v755 = vadd.f32 0.0, %v754
      %v756 = vpop.f32.mrb[0].mxu0
      %v757 = vadd.f32 0.0, %v756
      %v758 = vpop.f32.mrb[0].mxu0
      %v759 = vadd.f32 0.0, %v758
      %760 = vdwg.mxu0
      %761 = vmatprep.subr.bf16.mxu0 %v504
      %762 = vmatpush1.bf16.msra.mxu0 %v501
      %763 = vmatprep.subr.bf16.mxu0 0
      %764 = vmatpush1.bf16.msra.mxu0 0
      %765 = vmatprep.subr.bf16.mxu0 0
      %766 = vmatpush1.bf16.msra.mxu0 0
      %767 = vmatprep.subr.bf16.mxu0 0
      %768 = vmatpush1.bf16.msra.mxu0 0
      %769 = vmatprep.subr.bf16.mxu0 0
      %770 = vmatpush1.bf16.msra.mxu0 0
      %771 = vmatprep.subr.bf16.mxu0 0
      %772 = vmatpush1.bf16.msra.mxu0 0
      %773 = vmatprep.subr.bf16.mxu0 0
      %774 = vmatpush1.bf16.msra.mxu0 0
      %775 = vmatprep.subr.bf16.mxu0 0
      %776 = vmatpush1.bf16.msra.mxu0 0
      %777 = vmatprep.subr.bf16.mxu0 0
      %778 = vmatpush1.bf16.msra.mxu0 0
      %779 = vmatprep.subr.bf16.mxu0 0
      %780 = vmatpush1.bf16.msra.mxu0 0
      %781 = vmatprep.subr.bf16.mxu0 0
      %782 = vmatpush1.bf16.msra.mxu0 0
      %783 = vmatprep.subr.bf16.mxu0 0
      %784 = vmatpush1.bf16.msra.mxu0 0
      %785 = vmatprep.subr.bf16.mxu0 0
      %786 = vmatpush1.bf16.msra.mxu0 0
      %787 = vmatprep.subr.bf16.mxu0 0
      %788 = vmatpush1.bf16.msra.mxu0 0
      %789 = vmatprep.subr.bf16.mxu0 0
      %790 = vmatpush1.bf16.msra.mxu0 0
      %791 = vmatprep.subr.bf16.mxu0 0
      %792 = vmatpush1.bf16.msra.mxu0 0
      %793 = vmatprep.mubr.bf16.mxu0 0
      %794 = vmatmul.mubr.bf16.gmra.mrb[0].mxu0 %v470
      %v795 = vpop.f32.mrb[0].mxu0
      %v796 = vadd.f32 0.0, %v795
      %v797 = vpop.f32.mrb[0].mxu0
      %v798 = vadd.f32 0.0, %v797
      %v799 = vpop.f32.mrb[0].mxu0
      %v800 = vadd.f32 0.0, %v799
      %v801 = vpop.f32.mrb[0].mxu0
      %v802 = vadd.f32 0.0, %v801
      %803 = vmatprep.mubr.bf16.mxu0 0
      %804 = vmatmul.mubr.bf16.gmra.mrb[0].mxu0 %v473
      %v805 = vpop.f32.mrb[0].mxu0
      %v806 = vadd.f32 0.0, %v805
      %v807 = vpop.f32.mrb[0].mxu0
      %v808 = vadd.f32 0.0, %v807
      %v809 = vpop.f32.mrb[0].mxu0
      %v810 = vadd.f32 0.0, %v809
      %v811 = vpop.f32.mrb[0].mxu0
      %v812 = vadd.f32 0.0, %v811
      %813 = vmatprep.mubr.bf16.mxu0 0
      %814 = vmatmul.mubr.bf16.gmra.mrb[0].mxu0 %v476
      %v815 = vpop.f32.mrb[0].mxu0
      %v816 = vadd.f32 0.0, %v815
      %v817 = vpop.f32.mrb[0].mxu0
      %v818 = vadd.f32 0.0, %v817
      %v819 = vpop.f32.mrb[0].mxu0
      %v820 = vadd.f32 0.0, %v819
      %v821 = vpop.f32.mrb[0].mxu0
      %v822 = vadd.f32 0.0, %v821
      %823 = vmatprep.mubr.bf16.mxu0 0
      %824 = vmatmul.mubr.bf16.gmra.mrb[0].mxu0 %v479
      %v825 = vpop.f32.mrb[0].mxu0
      %v826 = vadd.f32 0.0, %v825
      %v827 = vpop.f32.mrb[0].mxu0
      %v828 = vadd.f32 0.0, %v827
      %v829 = vpop.f32.mrb[0].mxu0
      %v830 = vadd.f32 0.0, %v829
      %v831 = vpop.f32.mrb[0].mxu0
      %v832 = vadd.f32 0.0, %v831
      %833 = vdwg.mxu0
      %834 = vmatprep.subr.bf16.mxu0 %v510
      %835 = vmatpush1.bf16.msra.mxu0 %v507
      %836 = vmatprep.subr.bf16.mxu0 0
      %837 = vmatpush1.bf16.msra.mxu0 0
      %838 = vmatprep.subr.bf16.mxu0 0
      %839 = vmatpush1.bf16.msra.mxu0 0
      %840 = vmatprep.subr.bf16.mxu0 0
      %841 = vmatpush1.bf16.msra.mxu0 0
      %842 = vmatprep.subr.bf16.mxu0 0
      %843 = vmatpush1.bf16.msra.mxu0 0
      %844 = vmatprep.subr.bf16.mxu0 0
      %845 = vmatpush1.bf16.msra.mxu0 0
      %846 = vmatprep.subr.bf16.mxu0 0
      %847 = vmatpush1.bf16.msra.mxu0 0
      %848 = vmatprep.subr.bf16.mxu0 0
      %849 = vmatpush1.bf16.msra.mxu0 0
      %850 = vmatprep.subr.bf16.mxu0 0
      %851 = vmatpush1.bf16.msra.mxu0 0
      %852 = vmatprep.subr.bf16.mxu0 0
      %853 = vmatpush1.bf16.msra.mxu0 0
      %854 = vmatprep.subr.bf16.mxu0 0
      %855 = vmatpush1.bf16.msra.mxu0 0
      %856 = vmatprep.subr.bf16.mxu0 0
      %857 = vmatpush1.bf16.msra.mxu0 0
      %858 = vmatprep.subr.bf16.mxu0 0
      %859 = vmatpush1.bf16.msra.mxu0 0
      %860 = vmatprep.subr.bf16.mxu0 0
      %861 = vmatpush1.bf16.msra.mxu0 0
      %862 = vmatprep.subr.bf16.mxu0 0
      %863 = vmatpush1.bf16.msra.mxu0 0
      %864 = vmatprep.subr.bf16.mxu0 0
      %865 = vmatpush1.bf16.msra.mxu0 0
      %866 = vmatprep.mubr.bf16.mxu0 0
      %867 = vmatmul.mubr.bf16.gmra.mrb[0].mxu0 %v470
      %v868 = vpop.f32.mrb[0].mxu0
      %v869 = vadd.f32 0.0, %v868
      %v870 = vpop.f32.mrb[0].mxu0
      %v871 = vadd.f32 0.0, %v870
      %v872 = vpop.f32.mrb[0].mxu0
      %v873 = vadd.f32 0.0, %v872
      %v874 = vpop.f32.mrb[0].mxu0
      %v875 = vadd.f32 0.0, %v874
      %876 = vmatprep.mubr.bf16.mxu0 0
      %877 = vmatmul.mubr.bf16.gmra.mrb[0].mxu0 %v473
      %v878 = vpop.f32.mrb[0].mxu0
      %v879 = vadd.f32 0.0, %v878
      %v880 = vpop.f32.mrb[0].mxu0
      %v881 = vadd.f32 0.0, %v880
      %v882 = vpop.f32.mrb[0].mxu0
      %v883 = vadd.f32 0.0, %v882
      %v884 = vpop.f32.mrb[0].mxu0
      %v885 = vadd.f32 0.0, %v884
      %886 = vmatprep.mubr.bf16.mxu0 0
      %887 = vmatmul.mubr.bf16.gmra.mrb[0].mxu0 %v476
      %v888 = vpop.f32.mrb[0].mxu0
      %v889 = vadd.f32 0.0, %v888
      %v890 = vpop.f32.mrb[0].mxu0
      %v891 = vadd.f32 0.0, %v890
      %v892 = vpop.f32.mrb[0].mxu0
      %v893 = vadd.f32 0.0, %v892
      %v894 = vpop.f32.mrb[0].mxu0
      %v895 = vadd.f32 0.0, %v894
      %896 = vmatprep.mubr.bf16.mxu0 0
      %897 = vmatmul.mubr.bf16.gmra.mrb[0].mxu0 %v479
      %v898 = vpop.f32.mrb[0].mxu0
      %v899 = vadd.f32 0.0, %v898
      %v900 = vpop.f32.mrb[0].mxu0
      %v901 = vadd.f32 0.0, %v900
      %v902 = vpop.f32.mrb[0].mxu0
      %v903 = vadd.f32 0.0, %v902
      %v904 = vpop.f32.mrb[0].mxu0
      %v905 = vadd.f32 0.0, %v904
      %906 = vdwg.mxu0
      %907 = vmatprep.subr.bf16.mxu0 %v516
      %908 = vmatpush1.bf16.msra.mxu0 %v513
      %909 = vmatprep.subr.bf16.mxu0 0
      %910 = vmatpush1.bf16.msra.mxu0 0
      %911 = vmatprep.subr.bf16.mxu0 0
      %912 = vmatpush1.bf16.msra.mxu0 0
      %913 = vmatprep.subr.bf16.mxu0 0
      %914 = vmatpush1.bf16.msra.mxu0 0
      %915 = vmatprep.subr.bf16.mxu0 0
      %916 = vmatpush1.bf16.msra.mxu0 0
      %917 = vmatprep.subr.bf16.mxu0 0
      %918 = vmatpush1.bf16.msra.mxu0 0
      %919 = vmatprep.subr.bf16.mxu0 0
      %920 = vmatpush1.bf16.msra.mxu0 0
      %921 = vmatprep.subr.bf16.mxu0 0
      %922 = vmatpush1.bf16.msra.mxu0 0
      %923 = vmatprep.subr.bf16.mxu0 0
      %924 = vmatpush1.bf16.msra.mxu0 0
      %925 = vmatprep.subr.bf16.mxu0 0
      %926 = vmatpush1.bf16.msra.mxu0 0
      %927 = vmatprep.subr.bf16.mxu0 0
      %928 = vmatpush1.bf16.msra.mxu0 0
      %929 = vmatprep.subr.bf16.mxu0 0
      %930 = vmatpush1.bf16.msra.mxu0 0
      %931 = vmatprep.subr.bf16.mxu0 0
      %932 = vmatpush1.bf16.msra.mxu0 0
      %933 = vmatprep.subr.bf16.mxu0 0
      %934 = vmatpush1.bf16.msra.mxu0 0
      %935 = vmatprep.subr.bf16.mxu0 0
      %936 = vmatpush1.bf16.msra.mxu0 0
      %937 = vmatprep.subr.bf16.mxu0 0
      %938 = vmatpush1.bf16.msra.mxu0 0
      %939 = vmatprep.mubr.bf16.mxu0 0
      %940 = vmatmul.mubr.bf16.gmra.mrb[0].mxu0 %v470
      %v941 = vpop.f32.mrb[0].mxu0
      %v942 = vadd.f32 0.0, %v941
      %v943 = vpop.f32.mrb[0].mxu0
      %v944 = vadd.f32 0.0, %v943
      %v945 = vpop.f32.mrb[0].mxu0
      %v946 = vadd.f32 0.0, %v945
      %v947 = vpop.f32.mrb[0].mxu0
      %v948 = vadd.f32 0.0, %v947
      %949 = vmatprep.mubr.bf16.mxu0 0
      %950 = vmatmul.mubr.bf16.gmra.mrb[0].mxu0 %v473
      %v951 = vpop.f32.mrb[0].mxu0
      %v952 = vadd.f32 0.0, %v951
      %v953 = vpop.f32.mrb[0].mxu0
      %v954 = vadd.f32 0.0, %v953
      %v955 = vpop.f32.mrb[0].mxu0
      %v956 = vadd.f32 0.0, %v955
      %v957 = vpop.f32.mrb[0].mxu0
      %v958 = vadd.f32 0.0, %v957
      %959 = vmatprep.mubr.bf16.mxu0 0
      %960 = vmatmul.mubr.bf16.gmra.mrb[0].mxu0 %v476
      %v961 = vpop.f32.mrb[0].mxu0
      %v962 = vadd.f32 0.0, %v961
      %v963 = vpop.f32.mrb[0].mxu0
      %v964 = vadd.f32 0.0, %v963
      %v965 = vpop.f32.mrb[0].mxu0
      %v966 = vadd.f32 0.0, %v965
      %v967 = vpop.f32.mrb[0].mxu0
      %v968 = vadd.f32 0.0, %v967
      %969 = vmatprep.mubr.bf16.mxu0 0
      %970 = vmatmul.mubr.bf16.gmra.mrb[0].mxu0 %v479
      %v971 = vpop.f32.mrb[0].mxu0
      %v972 = vadd.f32 0.0, %v971
      %v973 = vpop.f32.mrb[0].mxu0
      %v974 = vadd.f32 0.0, %v973
      %v975 = vpop.f32.mrb[0].mxu0
      %v976 = vadd.f32 0.0, %v975
      %v977 = vpop.f32.mrb[0].mxu0
      %v978 = vadd.f32 0.0, %v977
      %979 = vdwg.mxu0
      %980 = vmatprep.subr.bf16.mxu0 %v522
      %981 = vmatpush1.bf16.msra.mxu0 %v519
      %982 = vmatprep.subr.bf16.mxu0 0
      %983 = vmatpush1.bf16.msra.mxu0 0
      %984 = vmatprep.subr.bf16.mxu0 0
      %985 = vmatpush1.bf16.msra.mxu0 0
      %986 = vmatprep.subr.bf16.mxu0 0
      %987 = vmatpush1.bf16.msra.mxu0 0
      %988 = vmatprep.subr.bf16.mxu0 0
      %989 = vmatpush1.bf16.msra.mxu0 0
      %990 = vmatprep.subr.bf16.mxu0 0
      %991 = vmatpush1.bf16.msra.mxu0 0
      %992 = vmatprep.subr.bf16.mxu0 0
      %993 = vmatpush1.bf16.msra.mxu0 0
      %994 = vmatprep.subr.bf16.mxu0 0
      %995 = vmatpush1.bf16.msra.mxu0 0
      %996 = vmatprep.subr.bf16.mxu0 0
      %997 = vmatpush1.bf16.msra.mxu0 0
      %998 = vmatprep.subr.bf16.mxu0 0
      %999 = vmatpush1.bf16.msra.mxu0 0
      %1000 = vmatprep.subr.bf16.mxu0 0
      %1001 = vmatpush1.bf16.msra.mxu0 0
      %1002 = vmatprep.subr.bf16.mxu0 0
      %1003 = vmatpush1.bf16.msra.mxu0 0
      %1004 = vmatprep.subr.bf16.mxu0 0
      %1005 = vmatpush1.bf16.msra.mxu0 0
      %1006 = vmatprep.subr.bf16.mxu0 0
      %1007 = vmatpush1.bf16.msra.mxu0 0
      %1008 = vmatprep.subr.bf16.mxu0 0
      %1009 = vmatpush1.bf16.msra.mxu0 0
      %1010 = vmatprep.subr.bf16.mxu0 0
      %1011 = vmatpush1.bf16.msra.mxu0 0
      %1012 = vmatprep.mubr.bf16.mxu0 0
      %1013 = vmatmul.mubr.bf16.gmra.mrb[0].mxu0 %v470
      %v1014 = vpop.f32.mrb[0].mxu0
      %v1015 = vadd.f32 0.0, %v1014
      %v1016 = vpop.f32.mrb[0].mxu0
      %v1017 = vadd.f32 0.0, %v1016
      %v1018 = vpop.f32.mrb[0].mxu0
      %v1019 = vadd.f32 0.0, %v1018
      %v1020 = vpop.f32.mrb[0].mxu0
      %v1021 = vadd.f32 0.0, %v1020
      %1022 = vmatprep.mubr.bf16.mxu0 0
      %1023 = vmatmul.mubr.bf16.gmra.mrb[0].mxu0 %v473
      %v1024 = vpop.f32.mrb[0].mxu0
      %v1025 = vadd.f32 0.0, %v1024
      %v1026 = vpop.f32.mrb[0].mxu0
      %v1027 = vadd.f32 0.0, %v1026
      %v1028 = vpop.f32.mrb[0].mxu0
      %v1029 = vadd.f32 0.0, %v1028
      %v1030 = vpop.f32.mrb[0].mxu0
      %v1031 = vadd.f32 0.0, %v1030
      %1032 = vmatprep.mubr.bf16.mxu0 0
      %1033 = vmatmul.mubr.bf16.gmra.mrb[0].mxu0 %v476
      %v1034 = vpop.f32.mrb[0].mxu0
      %v1035 = vadd.f32 0.0, %v1034
      %v1036 = vpop.f32.mrb[0].mxu0
      %v1037 = vadd.f32 0.0, %v1036
      %v1038 = vpop.f32.mrb[0].mxu0
      %v1039 = vadd.f32 0.0, %v1038
      %v1040 = vpop.f32.mrb[0].mxu0
      %v1041 = vadd.f32 0.0, %v1040
      %1042 = vmatprep.mubr.bf16.mxu0 0
      %1043 = vmatmul.mubr.bf16.gmra.mrb[0].mxu0 %v479
      %v1044 = vpop.f32.mrb[0].mxu0
      %v1045 = vadd.f32 0.0, %v1044
      %v1046 = vpop.f32.mrb[0].mxu0
      %v1047 = vadd.f32 0.0, %v1046
      %v1048 = vpop.f32.mrb[0].mxu0
      %v1049 = vadd.f32 0.0, %v1048
      %v1050 = vpop.f32.mrb[0].mxu0
      %v1051 = vadd.f32 0.0, %v1050
      %1052 = vdwg.mxu0
      %1053 = vmatprep.subr.bf16.mxu0 %v528
      %1054 = vmatpush1.bf16.msra.mxu0 %v525
      %1055 = vmatprep.subr.bf16.mxu0 0
      %1056 = vmatpush1.bf16.msra.mxu0 0
      %1057 = vmatprep.subr.bf16.mxu0 0
      %1058 = vmatpush1.bf16.msra.mxu0 0
      %1059 = vmatprep.subr.bf16.mxu0 0
      %1060 = vmatpush1.bf16.msra.mxu0 0
      %1061 = vmatprep.subr.bf16.mxu0 0
      %1062 = vmatpush1.bf16.msra.mxu0 0
      %1063 = vmatprep.subr.bf16.mxu0 0
      %1064 = vmatpush1.bf16.msra.mxu0 0
      %1065 = vmatprep.subr.bf16.mxu0 0
      %1066 = vmatpush1.bf16.msra.mxu0 0
      %1067 = vmatprep.subr.bf16.mxu0 0
      %1068 = vmatpush1.bf16.msra.mxu0 0
      %1069 = vmatprep.subr.bf16.mxu0 0
      %1070 = vmatpush1.bf16.msra.mxu0 0
      %1071 = vmatprep.subr.bf16.mxu0 0
      %1072 = vmatpush1.bf16.msra.mxu0 0
      %1073 = vmatprep.subr.bf16.mxu0 0
      %1074 = vmatpush1.bf16.msra.mxu0 0
      %1075 = vmatprep.subr.bf16.mxu0 0
      %1076 = vmatpush1.bf16.msra.mxu0 0
      %1077 = vmatprep.subr.bf16.mxu0 0
      %1078 = vmatpush1.bf16.msra.mxu0 0
      %1079 = vmatprep.subr.bf16.mxu0 0
      %1080 = vmatpush1.bf16.msra.mxu0 0
      %1081 = vmatprep.subr.bf16.mxu0 0
      %1082 = vmatpush1.bf16.msra.mxu0 0
      %1083 = vmatprep.subr.bf16.mxu0 0
      %1084 = vmatpush1.bf16.msra.mxu0 0
      %1085 = vmatprep.mubr.bf16.mxu0 0
      %1086 = vmatmul.mubr.bf16.gmra.mrb[0].mxu0 %v470
      %v1087 = vpop.f32.mrb[0].mxu0
      %v1088 = vadd.f32 0.0, %v1087
      %v1089 = vpop.f32.mrb[0].mxu0
      %v1090 = vadd.f32 0.0, %v1089
      %v1091 = vpop.f32.mrb[0].mxu0
      %v1092 = vadd.f32 0.0, %v1091
      %v1093 = vpop.f32.mrb[0].mxu0
      %v1094 = vadd.f32 0.0, %v1093
      %1095 = vmatprep.mubr.bf16.mxu0 0
      %1096 = vmatmul.mubr.bf16.gmra.mrb[0].mxu0 %v473
      %v1097 = vpop.f32.mrb[0].mxu0
      %v1098 = vadd.f32 0.0, %v1097
      %v1099 = vpop.f32.mrb[0].mxu0
      %v1100 = vadd.f32 0.0, %v1099
      %v1101 = vpop.f32.mrb[0].mxu0
      %v1102 = vadd.f32 0.0, %v1101
      %v1103 = vpop.f32.mrb[0].mxu0
      %v1104 = vadd.f32 0.0, %v1103
      %1105 = vmatprep.mubr.bf16.mxu0 0
      %1106 = vmatmul.mubr.bf16.gmra.mrb[0].mxu0 %v476
      %v1107 = vpop.f32.mrb[0].mxu0
      %v1108 = vadd.f32 0.0, %v1107
      %v1109 = vpop.f32.mrb[0].mxu0
      %v1110 = vadd.f32 0.0, %v1109
      %v1111 = vpop.f32.mrb[0].mxu0
      %v1112 = vadd.f32 0.0, %v1111
      %v1113 = vpop.f32.mrb[0].mxu0
      %v1114 = vadd.f32 0.0, %v1113
      %1115 = vmatprep.mubr.bf16.mxu0 0
      %1116 = vmatmul.mubr.bf16.gmra.mrb[0].mxu0 %v479
      %v1117 = vpop.f32.mrb[0].mxu0
      %v1118 = vadd.f32 0.0, %v1117
      %v1119 = vpop.f32.mrb[0].mxu0
      %v1120 = vadd.f32 0.0, %v1119
      %v1121 = vpop.f32.mrb[0].mxu0
      %v1122 = vadd.f32 0.0, %v1121
      %v1123 = vpop.f32.mrb[0].mxu0
      %v1124 = vadd.f32 0.0, %v1123
      %1125 = vdwg.mxu0
      %1126 = vmatprep.subr.bf16.mxu0 %v534
      %1127 = vmatpush1.bf16.msra.mxu0 %v531
      %1128 = vmatprep.subr.bf16.mxu0 0
      %1129 = vmatpush1.bf16.msra.mxu0 0
      %1130 = vmatprep.subr.bf16.mxu0 0
      %1131 = vmatpush1.bf16.msra.mxu0 0
      %1132 = vmatprep.subr.bf16.mxu0 0
      %1133 = vmatpush1.bf16.msra.mxu0 0
      %1134 = vmatprep.subr.bf16.mxu0 0
      %1135 = vmatpush1.bf16.msra.mxu0 0
      %1136 = vmatprep.subr.bf16.mxu0 0
      %1137 = vmatpush1.bf16.msra.mxu0 0
      %1138 = vmatprep.subr.bf16.mxu0 0
      %1139 = vmatpush1.bf16.msra.mxu0 0
      %1140 = vmatprep.subr.bf16.mxu0 0
      %1141 = vmatpush1.bf16.msra.mxu0 0
      %1142 = vmatprep.subr.bf16.mxu0 0
      %1143 = vmatpush1.bf16.msra.mxu0 0
      %1144 = vmatprep.subr.bf16.mxu0 0
      %1145 = vmatpush1.bf16.msra.mxu0 0
      %1146 = vmatprep.subr.bf16.mxu0 0
      %1147 = vmatpush1.bf16.msra.mxu0 0
      %1148 = vmatprep.subr.bf16.mxu0 0
      %1149 = vmatpush1.bf16.msra.mxu0 0
      %1150 = vmatprep.subr.bf16.mxu0 0
      %1151 = vmatpush1.bf16.msra.mxu0 0
      %1152 = vmatprep.subr.bf16.mxu0 0
      %1153 = vmatpush1.bf16.msra.mxu0 0
      %1154 = vmatprep.subr.bf16.mxu0 0
      %1155 = vmatpush1.bf16.msra.mxu0 0
      %1156 = vmatprep.subr.bf16.mxu0 0
      %1157 = vmatpush1.bf16.msra.mxu0 0
      %1158 = vmatprep.mubr.bf16.mxu0 0
      %1159 = vmatmul.mubr.bf16.gmra.mrb[0].mxu0 %v470
      %v1160 = vpop.f32.mrb[0].mxu0
      %v1161 = vadd.f32 0.0, %v1160
      %v1162 = vpop.f32.mrb[0].mxu0
      %v1163 = vadd.f32 0.0, %v1162
      %v1164 = vpop.f32.mrb[0].mxu0
      %v1165 = vadd.f32 0.0, %v1164
      %v1166 = vpop.f32.mrb[0].mxu0
      %v1167 = vadd.f32 0.0, %v1166
      %1168 = vmatprep.mubr.bf16.mxu0 0
      %1169 = vmatmul.mubr.bf16.gmra.mrb[0].mxu0 %v473
      %v1170 = vpop.f32.mrb[0].mxu0
      %v1171 = vadd.f32 0.0, %v1170
      %v1172 = vpop.f32.mrb[0].mxu0
      %v1173 = vadd.f32 0.0, %v1172
      %v1174 = vpop.f32.mrb[0].mxu0
      %v1175 = vadd.f32 0.0, %v1174
      %v1176 = vpop.f32.mrb[0].mxu0
      %v1177 = vadd.f32 0.0, %v1176
      %1178 = vmatprep.mubr.bf16.mxu0 0
      %1179 = vmatmul.mubr.bf16.gmra.mrb[0].mxu0 %v476
      %v1180 = vpop.f32.mrb[0].mxu0
      %v1181 = vadd.f32 0.0, %v1180
      %v1182 = vpop.f32.mrb[0].mxu0
      %v1183 = vadd.f32 0.0, %v1182
      %v1184 = vpop.f32.mrb[0].mxu0
      %v1185 = vadd.f32 0.0, %v1184
      %v1186 = vpop.f32.mrb[0].mxu0
      %v1187 = vadd.f32 0.0, %v1186
      %1188 = vmatprep.mubr.bf16.mxu0 0
      %1189 = vmatmul.mubr.bf16.gmra.mrb[0].mxu0 %v479
      %v1190 = vpop.f32.mrb[0].mxu0
      %v1191 = vadd.f32 0.0, %v1190
      %v1192 = vpop.f32.mrb[0].mxu0
      %v1193 = vadd.f32 0.0, %v1192
      %v1194 = vpop.f32.mrb[0].mxu0
      %v1195 = vadd.f32 0.0, %v1194
      %v1196 = vpop.f32.mrb[0].mxu0
      %v1197 = vadd.f32 0.0, %v1196
      %1198 = vdwg.mxu0
      %1199 = vmatprep.subr.bf16.mxu0 %v540
      %1200 = vmatpush1.bf16.msra.mxu0 %v537
      %1201 = vmatprep.subr.bf16.mxu0 0
      %1202 = vmatpush1.bf16.msra.mxu0 0
      %1203 = vmatprep.subr.bf16.mxu0 0
      %1204 = vmatpush1.bf16.msra.mxu0 0
      %1205 = vmatprep.subr.bf16.mxu0 0
      %1206 = vmatpush1.bf16.msra.mxu0 0
      %1207 = vmatprep.subr.bf16.mxu0 0
      %1208 = vmatpush1.bf16.msra.mxu0 0
      %1209 = vmatprep.subr.bf16.mxu0 0
      %1210 = vmatpush1.bf16.msra.mxu0 0
      %1211 = vmatprep.subr.bf16.mxu0 0
      %1212 = vmatpush1.bf16.msra.mxu0 0
      %1213 = vmatprep.subr.bf16.mxu0 0
      %1214 = vmatpush1.bf16.msra.mxu0 0
      %1215 = vmatprep.subr.bf16.mxu0 0
      %1216 = vmatpush1.bf16.msra.mxu0 0
      %1217 = vmatprep.subr.bf16.mxu0 0
      %1218 = vmatpush1.bf16.msra.mxu0 0
      %1219 = vmatprep.subr.bf16.mxu0 0
      %1220 = vmatpush1.bf16.msra.mxu0 0
      %1221 = vmatprep.subr.bf16.mxu0 0
      %1222 = vmatpush1.bf16.msra.mxu0 0
      %1223 = vmatprep.subr.bf16.mxu0 0
      %1224 = vmatpush1.bf16.msra.mxu0 0
      %1225 = vmatprep.subr.bf16.mxu0 0
      %1226 = vmatpush1.bf16.msra.mxu0 0
      %1227 = vmatprep.subr.bf16.mxu0 0
      %1228 = vmatpush1.bf16.msra.mxu0 0
      %1229 = vmatprep.subr.bf16.mxu0 0
      %1230 = vmatpush1.bf16.msra.mxu0 0
      %1231 = vmatprep.mubr.bf16.mxu0 0
      %1232 = vmatmul.mubr.bf16.gmra.mrb[0].mxu0 %v470
      %v1233 = vpop.f32.mrb[0].mxu0
      %v1234 = vadd.f32 0.0, %v1233
      %v1235 = vpop.f32.mrb[0].mxu0
      %v1236 = vadd.f32 0.0, %v1235
      %v1237 = vpop.f32.mrb[0].mxu0
      %v1238 = vadd.f32 0.0, %v1237
      %v1239 = vpop.f32.mrb[0].mxu0
      %v1240 = vadd.f32 0.0, %v1239
      %1241 = vmatprep.mubr.bf16.mxu0 0
      %1242 = vmatmul.mubr.bf16.gmra.mrb[0].mxu0 %v473
      %v1243 = vpop.f32.mrb[0].mxu0
      %v1244 = vadd.f32 0.0, %v1243
      %v1245 = vpop.f32.mrb[0].mxu0
      %v1246 = vadd.f32 0.0, %v1245
      %v1247 = vpop.f32.mrb[0].mxu0
      %v1248 = vadd.f32 0.0, %v1247
      %v1249 = vpop.f32.mrb[0].mxu0
      %v1250 = vadd.f32 0.0, %v1249
      %1251 = vmatprep.mubr.bf16.mxu0 0
      %1252 = vmatmul.mubr.bf16.gmra.mrb[0].mxu0 %v476
      %v1253 = vpop.f32.mrb[0].mxu0
      %v1254 = vadd.f32 0.0, %v1253
      %v1255 = vpop.f32.mrb[0].mxu0
      %v1256 = vadd.f32 0.0, %v1255
      %v1257 = vpop.f32.mrb[0].mxu0
      %v1258 = vadd.f32 0.0, %v1257
      %v1259 = vpop.f32.mrb[0].mxu0
      %v1260 = vadd.f32 0.0, %v1259
      %1261 = vmatprep.mubr.bf16.mxu0 0
      %1262 = vmatmul.mubr.bf16.gmra.mrb[0].mxu0 %v479
      %v1263 = vpop.f32.mrb[0].mxu0
      %v1264 = vadd.f32 0.0, %v1263
      %v1265 = vpop.f32.mrb[0].mxu0
      %v1266 = vadd.f32 0.0, %v1265
      %v1267 = vpop.f32.mrb[0].mxu0
      %v1268 = vadd.f32 0.0, %v1267
      %v1269 = vpop.f32.mrb[0].mxu0
      %v1270 = vadd.f32 0.0, %v1269
      %1271 = vdwg.mxu0
      %v1272 = vpack.c.bf16 %v581, %v577
      %v1273 = vpack.c.bf16 %v583, %v579
      %v1274 = vpack.c.bf16 %v654, %v650
      %v1275 = vpack.c.bf16 %v656, %v652
      %v1276 = vpack.c.bf16 %v727, %v723
      %v1277 = vpack.c.bf16 %v729, %v725
      %v1278 = vpack.c.bf16 %v800, %v796
      %v1279 = vpack.c.bf16 %v802, %v798
      %v1280 = vpack.c.bf16 %v873, %v869
      %v1281 = vpack.c.bf16 %v875, %v871
      %v1282 = vpack.c.bf16 %v946, %v942
      %v1283 = vpack.c.bf16 %v948, %v944
      %v1284 = vpack.c.bf16 %v1019, %v1015
      %v1285 = vpack.c.bf16 %v1021, %v1017
      %v1286 = vpack.c.bf16 %v1092, %v1088
      %v1287 = vpack.c.bf16 %v1094, %v1090
      %v1288 = vpack.c.bf16 %v1165, %v1161
      %v1289 = vpack.c.bf16 %v1167, %v1163
      %v1290 = vpack.c.bf16 %v1238, %v1234
      %v1291 = vpack.c.bf16 %v1240, %v1236
      %v1292 = vpack.c.bf16 %v591, %v587
      %v1293 = vpack.c.bf16 %v593, %v589
      %v1294 = vpack.c.bf16 %v664, %v660
      %v1295 = vpack.c.bf16 %v666, %v662
      %v1296 = vpack.c.bf16 %v737, %v733
      %v1297 = vpack.c.bf16 %v739, %v735
      %v1298 = vpack.c.bf16 %v810, %v806
      %v1299 = vpack.c.bf16 %v812, %v808
      %v1300 = vpack.c.bf16 %v883, %v879
      %v1301 = vpack.c.bf16 %v885, %v881
      %v1302 = vpack.c.bf16 %v956, %v952
      %v1303 = vpack.c.bf16 %v958, %v954
      %v1304 = vpack.c.bf16 %v1029, %v1025
      %v1305 = vpack.c.bf16 %v1031, %v1027
      %v1306 = vpack.c.bf16 %v1102, %v1098
      %v1307 = vpack.c.bf16 %v1104, %v1100
      %v1308 = vpack.c.bf16 %v1175, %v1171
      %v1309 = vpack.c.bf16 %v1177, %v1173
      %v1310 = vpack.c.bf16 %v1248, %v1244
      %v1311 = vpack.c.bf16 %v1250, %v1246
      %v1312 = vpack.c.bf16 %v601, %v597
      %v1313 = vpack.c.bf16 %v603, %v599
      %v1314 = vpack.c.bf16 %v674, %v670
      %v1315 = vpack.c.bf16 %v676, %v672
      %v1316 = vpack.c.bf16 %v747, %v743
      %v1317 = vpack.c.bf16 %v749, %v745
      %v1318 = vpack.c.bf16 %v820, %v816
      %v1319 = vpack.c.bf16 %v822, %v818
      %v1320 = vpack.c.bf16 %v893, %v889
      %v1321 = vpack.c.bf16 %v895, %v891
      %v1322 = vpack.c.bf16 %v966, %v962
      %v1323 = vpack.c.bf16 %v968, %v964
      %v1324 = vpack.c.bf16 %v1039, %v1035
      %v1325 = vpack.c.bf16 %v1041, %v1037
      %v1326 = vpack.c.bf16 %v1112, %v1108
      %v1327 = vpack.c.bf16 %v1114, %v1110
      %v1328 = vpack.c.bf16 %v1185, %v1181
      %v1329 = vpack.c.bf16 %v1187, %v1183
      %v1330 = vpack.c.bf16 %v1258, %v1254
      %v1331 = vpack.c.bf16 %v1260, %v1256
      %v1332 = vpack.c.bf16 %v611, %v607
      %v1333 = vpack.c.bf16 %v613, %v609
      %v1334 = vpack.c.bf16 %v684, %v680
      %v1335 = vpack.c.bf16 %v686, %v682
      %v1336 = vpack.c.bf16 %v757, %v753
      %v1337 = vpack.c.bf16 %v759, %v755
      %v1338 = vpack.c.bf16 %v830, %v826
      %v1339 = vpack.c.bf16 %v832, %v828
      %v1340 = vpack.c.bf16 %v903, %v899
      %v1341 = vpack.c.bf16 %v905, %v901
      %v1342 = vpack.c.bf16 %v976, %v972
      %v1343 = vpack.c.bf16 %v978, %v974
      %v1344 = vpack.c.bf16 %v1049, %v1045
      %v1345 = vpack.c.bf16 %v1051, %v1047
      %v1346 = vpack.c.bf16 %v1122, %v1118
      %v1347 = vpack.c.bf16 %v1124, %v1120
      %v1348 = vpack.c.bf16 %v1195, %v1191
      %v1349 = vpack.c.bf16 %v1197, %v1193
      %v1350 = vpack.c.bf16 %v1268, %v1264
      %v1351 = vpack.c.bf16 %v1270, %v1266
      %v1352 = vld [vmem:[%s2] sm:$0xff]
      %v1353 = vld [vmem:[%s2 + $0x8] sm:$0xff]
      %v1354 = vld [vmem:[%s2 + $0x10] sm:$0xff]
      %v1355 = vld [vmem:[%s2 + $0x18] sm:$0xff]
      %v1356 = vld [vmem:[%s2 + $0x20] sm:$0xff]
      %v1357 = vld [vmem:[%s2 + $0x28] sm:$0xff]
      %v1358 = vld [vmem:[%s2 + $0x30] sm:$0xff]
      %v1359 = vld [vmem:[%s2 + $0x38] sm:$0xff]
      %v1360 = vpack.c.bf16 %v1353, %v1352
      %v1361 = vpack.c.bf16 %v1355, %v1354
      %v1362 = vpack.c.bf16 %v1357, %v1356
      %v1363 = vpack.c.bf16 %v1359, %v1358
      %1365 = vset.pattern.permute.xlu0 0
      %1366 = vperm.xlu0 %1365, %v1360
      %v1367 = vpop.permute.xlu0 %1366
      %1370 = vset.pattern.permute.xlu0 0
      %1371 = vperm.xlu0 %1370, %v1361
      %v1372 = vpop.permute.xlu0 %1371
      %1375 = vset.pattern.permute.xlu0 0
      %1376 = vperm.xlu0 %1375, %v1362
      %v1377 = vpop.permute.xlu0 %1376
      %1380 = vset.pattern.permute.xlu0 0
      %1381 = vperm.xlu0 %1380, %v1363
      %v1382 = vpop.permute.xlu0 %1381
      %v1384 = vadd.bf16 %v1272, %v1367
      %v1385 = vadd.bf16 %v1273, %v1367
      %v1386 = vadd.bf16 %v1274, %v1367
      %v1387 = vadd.bf16 %v1275, %v1367
      %v1388 = vadd.bf16 %v1276, %v1367
      %v1389 = vadd.bf16 %v1277, %v1367
      %v1390 = vadd.bf16 %v1278, %v1367
      %v1391 = vadd.bf16 %v1279, %v1367
      %v1392 = vadd.bf16 %v1280, %v1367
      %v1393 = vadd.bf16 %v1281, %v1367
      %v1394 = vadd.bf16 %v1282, %v1367
      %v1395 = vadd.bf16 %v1283, %v1367
      %v1396 = vadd.bf16 %v1284, %v1367
      %v1397 = vadd.bf16 %v1285, %v1367
      %v1398 = vadd.bf16 %v1286, %v1367
      %v1399 = vadd.bf16 %v1287, %v1367
      %v1400 = vadd.bf16 %v1288, %v1367
      %v1401 = vadd.bf16 %v1289, %v1367
      %v1402 = vadd.bf16 %v1290, %v1367
      %v1403 = vadd.bf16 %v1291, %v1367
      %v1404 = vadd.bf16 %v1292, %v1372
      %v1405 = vadd.bf16 %v1293, %v1372
      %v1406 = vadd.bf16 %v1294, %v1372
      %v1407 = vadd.bf16 %v1295, %v1372
      %v1408 = vadd.bf16 %v1296, %v1372
      %v1409 = vadd.bf16 %v1297, %v1372
      %v1410 = vadd.bf16 %v1298, %v1372
      %v1411 = vadd.bf16 %v1299, %v1372
      %v1412 = vadd.bf16 %v1300, %v1372
      %v1413 = vadd.bf16 %v1301, %v1372
      %v1414 = vadd.bf16 %v1302, %v1372
      %v1415 = vadd.bf16 %v1303, %v1372
      %v1416 = vadd.bf16 %v1304, %v1372
      %v1417 = vadd.bf16 %v1305, %v1372
      %v1418 = vadd.bf16 %v1306, %v1372
      %v1419 = vadd.bf16 %v1307, %v1372
      %v1420 = vadd.bf16 %v1308, %v1372
      %v1421 = vadd.bf16 %v1309, %v1372
      %v1422 = vadd.bf16 %v1310, %v1372
      %v1423 = vadd.bf16 %v1311, %v1372
      %v1424 = vadd.bf16 %v1312, %v1377
      %v1425 = vadd.bf16 %v1313, %v1377
      %v1426 = vadd.bf16 %v1314, %v1377
      %v1427 = vadd.bf16 %v1315, %v1377
      %v1428 = vadd.bf16 %v1316, %v1377
      %v1429 = vadd.bf16 %v1317, %v1377
      %v1430 = vadd.bf16 %v1318, %v1377
      %v1431 = vadd.bf16 %v1319, %v1377
      %v1432 = vadd.bf16 %v1320, %v1377
      %v1433 = vadd.bf16 %v1321, %v1377
      %v1434 = vadd.bf16 %v1322, %v1377
      %v1435 = vadd.bf16 %v1323, %v1377
      %v1436 = vadd.bf16 %v1324, %v1377
      %v1437 = vadd.bf16 %v1325, %v1377
      %v1438 = vadd.bf16 %v1326, %v1377
      %v1439 = vadd.bf16 %v1327, %v1377
      %v1440 = vadd.bf16 %v1328, %v1377
      %v1441 = vadd.bf16 %v1329, %v1377
      %v1442 = vadd.bf16 %v1330, %v1377
      %v1443 = vadd.bf16 %v1331, %v1377
      %v1444 = vadd.bf16 %v1332, %v1382
      %v1445 = vadd.bf16 %v1333, %v1382
      %v1446 = vadd.bf16 %v1334, %v1382
      %v1447 = vadd.bf16 %v1335, %v1382
      %v1448 = vadd.bf16 %v1336, %v1382
      %v1449 = vadd.bf16 %v1337, %v1382
      %v1450 = vadd.bf16 %v1338, %v1382
      %v1451 = vadd.bf16 %v1339, %v1382
      %v1452 = vadd.bf16 %v1340, %v1382
      %v1453 = vadd.bf16 %v1341, %v1382
      %v1454 = vadd.bf16 %v1342, %v1382
      %v1455 = vadd.bf16 %v1343, %v1382
      %v1456 = vadd.bf16 %v1344, %v1382
      %v1457 = vadd.bf16 %v1345, %v1382
      %v1458 = vadd.bf16 %v1346, %v1382
      %v1459 = vadd.bf16 %v1347, %v1382
      %v1460 = vadd.bf16 %v1348, %v1382
      %v1461 = vadd.bf16 %v1349, %v1382
      %v1462 = vadd.bf16 %v1350, %v1382
      %v1463 = vadd.bf16 %v1351, %v1382
      %v1464 = vmax.bf16 %v1384, 0
      %v1465 = vmax.bf16 %v1385, 0
      %v1466 = vmax.bf16 %v1386, 0
      %v1467 = vmax.bf16 %v1387, 0
      %v1468 = vmax.bf16 %v1388, 0
      %v1469 = vmax.bf16 %v1389, 0
      %v1470 = vmax.bf16 %v1390, 0
      %v1471 = vmax.bf16 %v1391, 0
      %v1472 = vmax.bf16 %v1392, 0
      %v1473 = vmax.bf16 %v1393, 0
      %v1474 = vmax.bf16 %v1394, 0
      %v1475 = vmax.bf16 %v1395, 0
      %v1476 = vmax.bf16 %v1396, 0
      %v1477 = vmax.bf16 %v1397, 0
      %v1478 = vmax.bf16 %v1398, 0
      %v1479 = vmax.bf16 %v1399, 0
      %v1480 = vmax.bf16 %v1400, 0
      %v1481 = vmax.bf16 %v1401, 0
      %v1482 = vmax.bf16 %v1402, 0
      %v1483 = vmax.bf16 %v1403, 0
      %v1484 = vmax.bf16 %v1404, 0
      %v1485 = vmax.bf16 %v1405, 0
      %v1486 = vmax.bf16 %v1406, 0
      %v1487 = vmax.bf16 %v1407, 0
      %v1488 = vmax.bf16 %v1408, 0
      %v1489 = vmax.bf16 %v1409, 0
      %v1490 = vmax.bf16 %v1410, 0
      %v1491 = vmax.bf16 %v1411, 0
      %v1492 = vmax.bf16 %v1412, 0
      %v1493 = vmax.bf16 %v1413, 0
      %v1494 = vmax.bf16 %v1414, 0
      %v1495 = vmax.bf16 %v1415, 0
      %v1496 = vmax.bf16 %v1416, 0
      %v1497 = vmax.bf16 %v1417, 0
      %v1498 = vmax.bf16 %v1418, 0
      %v1499 = vmax.bf16 %v1419, 0
      %v1500 = vmax.bf16 %v1420, 0
      %v1501 = vmax.bf16 %v1421, 0
      %v1502 = vmax.bf16 %v1422, 0
      %v1503 = vmax.bf16 %v1423, 0
      %v1504 = vmax.bf16 %v1424, 0
      %v1505 = vmax.bf16 %v1425, 0
      %v1506 = vmax.bf16 %v1426, 0
      %v1507 = vmax.bf16 %v1427, 0
      %v1508 = vmax.bf16 %v1428, 0
      %v1509 = vmax.bf16 %v1429, 0
      %v1510 = vmax.bf16 %v1430, 0
      %v1511 = vmax.bf16 %v1431, 0
      %v1512 = vmax.bf16 %v1432, 0
      %v1513 = vmax.bf16 %v1433, 0
      %v1514 = vmax.bf16 %v1434, 0
      %v1515 = vmax.bf16 %v1435, 0
      %v1516 = vmax.bf16 %v1436, 0
      %v1517 = vmax.bf16 %v1437, 0
      %v1518 = vmax.bf16 %v1438, 0
      %v1519 = vmax.bf16 %v1439, 0
      %v1520 = vmax.bf16 %v1440, 0
      %v1521 = vmax.bf16 %v1441, 0
      %v1522 = vmax.bf16 %v1442, 0
      %v1523 = vmax.bf16 %v1443, 0
      %v1524 = vmax.bf16 %v1444, 0
      %v1525 = vmax.bf16 %v1445, 0
      %v1526 = vmax.bf16 %v1446, 0
      %v1527 = vmax.bf16 %v1447, 0
      %v1528 = vmax.bf16 %v1448, 0
      %v1529 = vmax.bf16 %v1449, 0
      %v1530 = vmax.bf16 %v1450, 0
      %v1531 = vmax.bf16 %v1451, 0
      %v1532 = vmax.bf16 %v1452, 0
      %v1533 = vmax.bf16 %v1453, 0
      %v1534 = vmax.bf16 %v1454, 0
      %v1535 = vmax.bf16 %v1455, 0
      %v1536 = vmax.bf16 %v1456, 0
      %v1537 = vmax.bf16 %v1457, 0
      %v1538 = vmax.bf16 %v1458, 0
      %v1539 = vmax.bf16 %v1459, 0
      %v1540 = vmax.bf16 %v1460, 0
      %v1541 = vmax.bf16 %v1461, 0
      %v1542 = vmax.bf16 %v1462, 0
      %v1543 = vmax.bf16 %v1463, 0
      %v1544 = vld [vmem:[%s3] sm:$0xf]
      %v1545 = vld [vmem:[%s3 + $0x4] sm:$0xf]
      %v1546 = vld [vmem:[%s3 + $0x8] sm:$0xf]
      %v1547 = vld [vmem:[%s3 + $0xc] sm:$0xf]
      %v1548 = vld [vmem:[%s3 + $0x10] sm:$0xf]
      %v1549 = vld [vmem:[%s3 + $0x14] sm:$0xf]
      %v1550 = vld [vmem:[%s3 + $0x18] sm:$0xf]
      %v1551 = vld [vmem:[%s3 + $0x1c] sm:$0xf]
      %v1552 = vld [vmem:[%s3 + $0x20] sm:$0xf]
      %v1553 = vld [vmem:[%s3 + $0x24] sm:$0xf]
      %v1554 = vld [vmem:[%s3 + $0x28] sm:$0xf]
      %v1555 = vld [vmem:[%s3 + $0x2c] sm:$0xf]
      %v1556 = vld [vmem:[%s3 + $0x30] sm:$0xf]
      %v1557 = vld [vmem:[%s3 + $0x34] sm:$0xf]
      %v1558 = vld [vmem:[%s3 + $0x38] sm:$0xf]
      %v1559 = vld [vmem:[%s3 + $0x3c] sm:$0xf]
      %v1576 = vunpack.c.l.b16 %v1544
      %v1577 = vunpack.c.l.b16 %v1545
      %v1578 = vunpack.c.l.b16 %v1546
      %v1579 = vunpack.c.l.b16 %v1547
      %v1580 = vunpack.c.l.b16 %v1548
      %v1581 = vunpack.c.l.b16 %v1549
      %v1582 = vunpack.c.l.b16 %v1550
      %v1583 = vunpack.c.l.b16 %v1551
      %v1584 = vunpack.c.l.b16 %v1552
      %v1585 = vunpack.c.l.b16 %v1553
      %v1586 = vunpack.c.l.b16 %v1554
      %v1587 = vunpack.c.l.b16 %v1555
      %v1588 = vunpack.c.l.b16 %v1556
      %v1589 = vunpack.c.l.b16 %v1557
      %v1590 = vunpack.c.l.b16 %v1558
      %v1591 = vunpack.c.l.b16 %v1559
      %v1592 = vpack.c.b16 %v1577, %v1576
      %v1593 = vpack.c.b16 %v1579, %v1578
      %v1594 = vpack.c.b16 %v1581, %v1580
      %v1595 = vpack.c.b16 %v1583, %v1582
      %v1596 = vpack.c.b16 %v1585, %v1584
      %v1597 = vpack.c.b16 %v1587, %v1586
      %v1598 = vpack.c.b16 %v1589, %v1588
      %v1599 = vpack.c.b16 %v1591, %v1590
      %vm1600 = vcmask 523264
      %v1602 = vsel %vm1600, %v1592, 0
      %v1605 = vsel %vm1600, %v1593, 0
      %v1608 = vsel %vm1600, %v1594, 0
      %v1611 = vsel %vm1600, %v1595, 0
      %v1614 = vsel %vm1600, %v1596, 0
      %v1617 = vsel %vm1600, %v1597, 0
      %v1620 = vsel %vm1600, %v1598, 0
      %v1623 = vsel %vm1600, %v1599, 0
      %1625 = vmatprep.subr.bf16.mxu0 %v1465
      %1626 = vmatpush1.bf16.msra.mxu0 %v1464
      %1627 = vmatprep.subr.bf16.mxu0 %v1485
      %1628 = vmatpush1.bf16.msra.mxu0 %v1484
      %1629 = vmatprep.subr.bf16.mxu0 %v1505
      %1630 = vmatpush1.bf16.msra.mxu0 %v1504
      %1631 = vmatprep.subr.bf16.mxu0 %v1525
      %1632 = vmatpush1.bf16.msra.mxu0 %v1524
      %1633 = vmatprep.subr.bf16.mxu0 0
      %1634 = vmatpush1.bf16.msra.mxu0 0
      %1635 = vmatprep.subr.bf16.mxu0 0
      %1636 = vmatpush1.bf16.msra.mxu0 0
      %1637 = vmatprep.subr.bf16.mxu0 0
      %1638 = vmatpush1.bf16.msra.mxu0 0
      %1639 = vmatprep.subr.bf16.mxu0 0
      %1640 = vmatpush1.bf16.msra.mxu0 0
      %1641 = vmatprep.subr.bf16.mxu0 0
      %1642 = vmatpush1.bf16.msra.mxu0 0
      %1643 = vmatprep.subr.bf16.mxu0 0
      %1644 = vmatpush1.bf16.msra.mxu0 0
      %1645 = vmatprep.subr.bf16.mxu0 0
      %1646 = vmatpush1.bf16.msra.mxu0 0
      %1647 = vmatprep.subr.bf16.mxu0 0
      %1648 = vmatpush1.bf16.msra.mxu0 0
      %1649 = vmatprep.subr.bf16.mxu0 0
      %1650 = vmatpush1.bf16.msra.mxu0 0
      %1651 = vmatprep.subr.bf16.mxu0 0
      %1652 = vmatpush1.bf16.msra.mxu0 0
      %1653 = vmatprep.subr.bf16.mxu0 0
      %1654 = vmatpush1.bf16.msra.mxu0 0
      %1655 = vmatprep.subr.bf16.mxu0 0
      %1656 = vmatpush1.bf16.msra.mxu0 0
      %1657 = vmatprep.mubr.bf16.mxu0 0
      %1658 = vmatmul.mubr.bf16.gmra.mrb[0].mxu0 %v1602
      %v1659 = vpop.f32.mrb[0].mxu0
      %v1660 = vadd.f32 0.0, %v1659
      %v1661 = vpop.f32.mrb[0].mxu0
      %v1662 = vadd.f32 0.0, %v1661
      %v1663 = vpop.f32.mrb[0].mxu0
      %v1664 = vadd.f32 0.0, %v1663
      %v1665 = vpop.f32.mrb[0].mxu0
      %v1666 = vadd.f32 0.0, %v1665
      %1667 = vmatprep.mubr.bf16.mxu0 0
      %1668 = vmatmul.mubr.bf16.gmra.mrb[0].mxu0 %v1605
      %v1669 = vpop.f32.mrb[0].mxu0
      %v1670 = vadd.f32 0.0, %v1669
      %v1671 = vpop.f32.mrb[0].mxu0
      %v1672 = vadd.f32 0.0, %v1671
      %v1673 = vpop.f32.mrb[0].mxu0
      %v1674 = vadd.f32 0.0, %v1673
      %v1675 = vpop.f32.mrb[0].mxu0
      %v1676 = vadd.f32 0.0, %v1675
      %1677 = vmatprep.mubr.bf16.mxu0 0
      %1678 = vmatmul.mubr.bf16.gmra.mrb[0].mxu0 %v1608
      %v1679 = vpop.f32.mrb[0].mxu0
      %v1680 = vadd.f32 0.0, %v1679
      %v1681 = vpop.f32.mrb[0].mxu0
      %v1682 = vadd.f32 0.0, %v1681
      %v1683 = vpop.f32.mrb[0].mxu0
      %v1684 = vadd.f32 0.0, %v1683
      %v1685 = vpop.f32.mrb[0].mxu0
      %v1686 = vadd.f32 0.0, %v1685
      %1687 = vmatprep.mubr.bf16.mxu0 0
      %1688 = vmatmul.mubr.bf16.gmra.mrb[0].mxu0 %v1611
      %v1689 = vpop.f32.mrb[0].mxu0
      %v1690 = vadd.f32 0.0, %v1689
      %v1691 = vpop.f32.mrb[0].mxu0
      %v1692 = vadd.f32 0.0, %v1691
      %v1693 = vpop.f32.mrb[0].mxu0
      %v1694 = vadd.f32 0.0, %v1693
      %v1695 = vpop.f32.mrb[0].mxu0
      %v1696 = vadd.f32 0.0, %v1695
      %1697 = vmatprep.mubr.bf16.mxu0 0
      %1698 = vmatmul.mubr.bf16.gmra.mrb[0].mxu0 %v1614
      %v1699 = vpop.f32.mrb[0].mxu0
      %v1700 = vadd.f32 0.0, %v1699
      %v1701 = vpop.f32.mrb[0].mxu0
      %v1702 = vadd.f32 0.0, %v1701
      %v1703 = vpop.f32.mrb[0].mxu0
      %v1704 = vadd.f32 0.0, %v1703
      %v1705 = vpop.f32.mrb[0].mxu0
      %v1706 = vadd.f32 0.0, %v1705
      %1707 = vmatprep.mubr.bf16.mxu0 0
      %1708 = vmatmul.mubr.bf16.gmra.mrb[0].mxu0 %v1617
      %v1709 = vpop.f32.mrb[0].mxu0
      %v1710 = vadd.f32 0.0, %v1709
      %v1711 = vpop.f32.mrb[0].mxu0
      %v1712 = vadd.f32 0.0, %v1711
      %v1713 = vpop.f32.mrb[0].mxu0
      %v1714 = vadd.f32 0.0, %v1713
      %v1715 = vpop.f32.mrb[0].mxu0
      %v1716 = vadd.f32 0.0, %v1715
      %1717 = vmatprep.mubr.bf16.mxu0 0
      %1718 = vmatmul.mubr.bf16.gmra.mrb[0].mxu0 %v1620
      %v1719 = vpop.f32.mrb[0].mxu0
      %v1720 = vadd.f32 0.0, %v1719
      %v1721 = vpop.f32.mrb[0].mxu0
      %v1722 = vadd.f32 0.0, %v1721
      %v1723 = vpop.f32.mrb[0].mxu0
      %v1724 = vadd.f32 0.0, %v1723
      %v1725 = vpop.f32.mrb[0].mxu0
      %v1726 = vadd.f32 0.0, %v1725
      %1727 = vmatprep.mubr.bf16.mxu0 0
      %1728 = vmatmul.mubr.bf16.gmra.mrb[0].mxu0 %v1623
      %v1729 = vpop.f32.mrb[0].mxu0
      %v1730 = vadd.f32 0.0, %v1729
      %v1731 = vpop.f32.mrb[0].mxu0
      %v1732 = vadd.f32 0.0, %v1731
      %v1733 = vpop.f32.mrb[0].mxu0
      %v1734 = vadd.f32 0.0, %v1733
      %v1735 = vpop.f32.mrb[0].mxu0
      %v1736 = vadd.f32 0.0, %v1735
      %1737 = vdwg.mxu0
      %1738 = vmatprep.subr.bf16.mxu0 %v1467
      %1739 = vmatpush1.bf16.msra.mxu0 %v1466
      %1740 = vmatprep.subr.bf16.mxu0 %v1487
      %1741 = vmatpush1.bf16.msra.mxu0 %v1486
      %1742 = vmatprep.subr.bf16.mxu0 %v1507
      %1743 = vmatpush1.bf16.msra.mxu0 %v1506
      %1744 = vmatprep.subr.bf16.mxu0 %v1527
      %1745 = vmatpush1.bf16.msra.mxu0 %v1526
      %1746 = vmatprep.subr.bf16.mxu0 0
      %1747 = vmatpush1.bf16.msra.mxu0 0
      %1748 = vmatprep.subr.bf16.mxu0 0
      %1749 = vmatpush1.bf16.msra.mxu0 0
      %1750 = vmatprep.subr.bf16.mxu0 0
      %1751 = vmatpush1.bf16.msra.mxu0 0
      %1752 = vmatprep.subr.bf16.mxu0 0
      %1753 = vmatpush1.bf16.msra.mxu0 0
      %1754 = vmatprep.subr.bf16.mxu0 0
      %1755 = vmatpush1.bf16.msra.mxu0 0
      %1756 = vmatprep.subr.bf16.mxu0 0
      %1757 = vmatpush1.bf16.msra.mxu0 0
      %1758 = vmatprep.subr.bf16.mxu0 0
      %1759 = vmatpush1.bf16.msra.mxu0 0
      %1760 = vmatprep.subr.bf16.mxu0 0
      %1761 = vmatpush1.bf16.msra.mxu0 0
      %1762 = vmatprep.subr.bf16.mxu0 0
      %1763 = vmatpush1.bf16.msra.mxu0 0
      %1764 = vmatprep.subr.bf16.mxu0 0
      %1765 = vmatpush1.bf16.msra.mxu0 0
      %1766 = vmatprep.subr.bf16.mxu0 0
      %1767 = vmatpush1.bf16.msra.mxu0 0
      %1768 = vmatprep.subr.bf16.mxu0 0
      %1769 = vmatpush1.bf16.msra.mxu0 0
      %1770 = vmatprep.mubr.bf16.mxu0 0
      %1771 = vmatmul.mubr.bf16.gmra.mrb[0].mxu0 %v1602
      %v1772 = vpop.f32.mrb[0].mxu0
      %v1773 = vadd.f32 0.0, %v1772
      %v1774 = vpop.f32.mrb[0].mxu0
      %v1775 = vadd.f32 0.0, %v1774
      %v1776 = vpop.f32.mrb[0].mxu0
      %v1777 = vadd.f32 0.0, %v1776
      %v1778 = vpop.f32.mrb[0].mxu0
      %v1779 = vadd.f32 0.0, %v1778
      %1780 = vmatprep.mubr.bf16.mxu0 0
      %1781 = vmatmul.mubr.bf16.gmra.mrb[0].mxu0 %v1605
      %v1782 = vpop.f32.mrb[0].mxu0
      %v1783 = vadd.f32 0.0, %v1782
      %v1784 = vpop.f32.mrb[0].mxu0
      %v1785 = vadd.f32 0.0, %v1784
      %v1786 = vpop.f32.mrb[0].mxu0
      %v1787 = vadd.f32 0.0, %v1786
      %v1788 = vpop.f32.mrb[0].mxu0
      %v1789 = vadd.f32 0.0, %v1788
      %1790 = vmatprep.mubr.bf16.mxu0 0
      %1791 = vmatmul.mubr.bf16.gmra.mrb[0].mxu0 %v1608
      %v1792 = vpop.f32.mrb[0].mxu0
      %v1793 = vadd.f32 0.0, %v1792
      %v1794 = vpop.f32.mrb[0].mxu0
      %v1795 = vadd.f32 0.0, %v1794
      %v1796 = vpop.f32.mrb[0].mxu0
      %v1797 = vadd.f32 0.0, %v1796
      %v1798 = vpop.f32.mrb[0].mxu0
      %v1799 = vadd.f32 0.0, %v1798
      %1800 = vmatprep.mubr.bf16.mxu0 0
      %1801 = vmatmul.mubr.bf16.gmra.mrb[0].mxu0 %v1611
      %v1802 = vpop.f32.mrb[0].mxu0
      %v1803 = vadd.f32 0.0, %v1802
      %v1804 = vpop.f32.mrb[0].mxu0
      %v1805 = vadd.f32 0.0, %v1804
      %v1806 = vpop.f32.mrb[0].mxu0
      %v1807 = vadd.f32 0.0, %v1806
      %v1808 = vpop.f32.mrb[0].mxu0
      %v1809 = vadd.f32 0.0, %v1808
      %1810 = vmatprep.mubr.bf16.mxu0 0
      %1811 = vmatmul.mubr.bf16.gmra.mrb[0].mxu0 %v1614
      %v1812 = vpop.f32.mrb[0].mxu0
      %v1813 = vadd.f32 0.0, %v1812
      %v1814 = vpop.f32.mrb[0].mxu0
      %v1815 = vadd.f32 0.0, %v1814
      %v1816 = vpop.f32.mrb[0].mxu0
      %v1817 = vadd.f32 0.0, %v1816
      %v1818 = vpop.f32.mrb[0].mxu0
      %v1819 = vadd.f32 0.0, %v1818
      %1820 = vmatprep.mubr.bf16.mxu0 0
      %1821 = vmatmul.mubr.bf16.gmra.mrb[0].mxu0 %v1617
      %v1822 = vpop.f32.mrb[0].mxu0
      %v1823 = vadd.f32 0.0, %v1822
      %v1824 = vpop.f32.mrb[0].mxu0
      %v1825 = vadd.f32 0.0, %v1824
      %v1826 = vpop.f32.mrb[0].mxu0
      %v1827 = vadd.f32 0.0, %v1826
      %v1828 = vpop.f32.mrb[0].mxu0
      %v1829 = vadd.f32 0.0, %v1828
      %1830 = vmatprep.mubr.bf16.mxu0 0
      %1831 = vmatmul.mubr.bf16.gmra.mrb[0].mxu0 %v1620
      %v1832 = vpop.f32.mrb[0].mxu0
      %v1833 = vadd.f32 0.0, %v1832
      %v1834 = vpop.f32.mrb[0].mxu0
      %v1835 = vadd.f32 0.0, %v1834
      %v1836 = vpop.f32.mrb[0].mxu0
      %v1837 = vadd.f32 0.0, %v1836
      %v1838 = vpop.f32.mrb[0].mxu0
      %v1839 = vadd.f32 0.0, %v1838
      %1840 = vmatprep.mubr.bf16.mxu0 0
      %1841 = vmatmul.mubr.bf16.gmra.mrb[0].mxu0 %v1623
      %v1842 = vpop.f32.mrb[0].mxu0
      %v1843 = vadd.f32 0.0, %v1842
      %v1844 = vpop.f32.mrb[0].mxu0
      %v1845 = vadd.f32 0.0, %v1844
      %v1846 = vpop.f32.mrb[0].mxu0
      %v1847 = vadd.f32 0.0, %v1846
      %v1848 = vpop.f32.mrb[0].mxu0
      %v1849 = vadd.f32 0.0, %v1848
      %1850 = vdwg.mxu0
      %1851 = vmatprep.subr.bf16.mxu0 %v1469
      %1852 = vmatpush1.bf16.msra.mxu0 %v1468
      %1853 = vmatprep.subr.bf16.mxu0 %v1489
      %1854 = vmatpush1.bf16.msra.mxu0 %v1488
      %1855 = vmatprep.subr.bf16.mxu0 %v1509
      %1856 = vmatpush1.bf16.msra.mxu0 %v1508
      %1857 = vmatprep.subr.bf16.mxu0 %v1529
      %1858 = vmatpush1.bf16.msra.mxu0 %v1528
      %1859 = vmatprep.subr.bf16.mxu0 0
      %1860 = vmatpush1.bf16.msra.mxu0 0
      %1861 = vmatprep.subr.bf16.mxu0 0
      %1862 = vmatpush1.bf16.msra.mxu0 0
      %1863 = vmatprep.subr.bf16.mxu0 0
      %1864 = vmatpush1.bf16.msra.mxu0 0
      %1865 = vmatprep.subr.bf16.mxu0 0
      %1866 = vmatpush1.bf16.msra.mxu0 0
      %1867 = vmatprep.subr.bf16.mxu0 0
      %1868 = vmatpush1.bf16.msra.mxu0 0
      %1869 = vmatprep.subr.bf16.mxu0 0
      %1870 = vmatpush1.bf16.msra.mxu0 0
      %1871 = vmatprep.subr.bf16.mxu0 0
      %1872 = vmatpush1.bf16.msra.mxu0 0
      %1873 = vmatprep.subr.bf16.mxu0 0
      %1874 = vmatpush1.bf16.msra.mxu0 0
      %1875 = vmatprep.subr.bf16.mxu0 0
      %1876 = vmatpush1.bf16.msra.mxu0 0
      %1877 = vmatprep.subr.bf16.mxu0 0
      %1878 = vmatpush1.bf16.msra.mxu0 0
      %1879 = vmatprep.subr.bf16.mxu0 0
      %1880 = vmatpush1.bf16.msra.mxu0 0
      %1881 = vmatprep.subr.bf16.mxu0 0
      %1882 = vmatpush1.bf16.msra.mxu0 0
      %1883 = vmatprep.mubr.bf16.mxu0 0
      %1884 = vmatmul.mubr.bf16.gmra.mrb[0].mxu0 %v1602
      %v1885 = vpop.f32.mrb[0].mxu0
      %v1886 = vadd.f32 0.0, %v1885
      %v1887 = vpop.f32.mrb[0].mxu0
      %v1888 = vadd.f32 0.0, %v1887
      %v1889 = vpop.f32.mrb[0].mxu0
      %v1890 = vadd.f32 0.0, %v1889
      %v1891 = vpop.f32.mrb[0].mxu0
      %v1892 = vadd.f32 0.0, %v1891
      %1893 = vmatprep.mubr.bf16.mxu0 0
      %1894 = vmatmul.mubr.bf16.gmra.mrb[0].mxu0 %v1605
      %v1895 = vpop.f32.mrb[0].mxu0
      %v1896 = vadd.f32 0.0, %v1895
      %v1897 = vpop.f32.mrb[0].mxu0
      %v1898 = vadd.f32 0.0, %v1897
      %v1899 = vpop.f32.mrb[0].mxu0
      %v1900 = vadd.f32 0.0, %v1899
      %v1901 = vpop.f32.mrb[0].mxu0
      %v1902 = vadd.f32 0.0, %v1901
      %1903 = vmatprep.mubr.bf16.mxu0 0
      %1904 = vmatmul.mubr.bf16.gmra.mrb[0].mxu0 %v1608
      %v1905 = vpop.f32.mrb[0].mxu0
      %v1906 = vadd.f32 0.0, %v1905
      %v1907 = vpop.f32.mrb[0].mxu0
      %v1908 = vadd.f32 0.0, %v1907
      %v1909 = vpop.f32.mrb[0].mxu0
      %v1910 = vadd.f32 0.0, %v1909
      %v1911 = vpop.f32.mrb[0].mxu0
      %v1912 = vadd.f32 0.0, %v1911
      %1913 = vmatprep.mubr.bf16.mxu0 0
      %1914 = vmatmul.mubr.bf16.gmra.mrb[0].mxu0 %v1611
      %v1915 = vpop.f32.mrb[0].mxu0
      %v1916 = vadd.f32 0.0, %v1915
      %v1917 = vpop.f32.mrb[0].mxu0
      %v1918 = vadd.f32 0.0, %v1917
      %v1919 = vpop.f32.mrb[0].mxu0
      %v1920 = vadd.f32 0.0, %v1919
      %v1921 = vpop.f32.mrb[0].mxu0
      %v1922 = vadd.f32 0.0, %v1921
      %1923 = vmatprep.mubr.bf16.mxu0 0
      %1924 = vmatmul.mubr.bf16.gmra.mrb[0].mxu0 %v1614
      %v1925 = vpop.f32.mrb[0].mxu0
      %v1926 = vadd.f32 0.0, %v1925
      %v1927 = vpop.f32.mrb[0].mxu0
      %v1928 = vadd.f32 0.0, %v1927
      %v1929 = vpop.f32.mrb[0].mxu0
      %v1930 = vadd.f32 0.0, %v1929
      %v1931 = vpop.f32.mrb[0].mxu0
      %v1932 = vadd.f32 0.0, %v1931
      %1933 = vmatprep.mubr.bf16.mxu0 0
      %1934 = vmatmul.mubr.bf16.gmra.mrb[0].mxu0 %v1617
      %v1935 = vpop.f32.mrb[0].mxu0
      %v1936 = vadd.f32 0.0, %v1935
      %v1937 = vpop.f32.mrb[0].mxu0
      %v1938 = vadd.f32 0.0, %v1937
      %v1939 = vpop.f32.mrb[0].mxu0
      %v1940 = vadd.f32 0.0, %v1939
      %v1941 = vpop.f32.mrb[0].mxu0
      %v1942 = vadd.f32 0.0, %v1941
      %1943 = vmatprep.mubr.bf16.mxu0 0
      %1944 = vmatmul.mubr.bf16.gmra.mrb[0].mxu0 %v1620
      %v1945 = vpop.f32.mrb[0].mxu0
      %v1946 = vadd.f32 0.0, %v1945
      %v1947 = vpop.f32.mrb[0].mxu0
      %v1948 = vadd.f32 0.0, %v1947
      %v1949 = vpop.f32.mrb[0].mxu0
      %v1950 = vadd.f32 0.0, %v1949
      %v1951 = vpop.f32.mrb[0].mxu0
      %v1952 = vadd.f32 0.0, %v1951
      %1953 = vmatprep.mubr.bf16.mxu0 0
      %1954 = vmatmul.mubr.bf16.gmra.mrb[0].mxu0 %v1623
      %v1955 = vpop.f32.mrb[0].mxu0
      %v1956 = vadd.f32 0.0, %v1955
      %v1957 = vpop.f32.mrb[0].mxu0
      %v1958 = vadd.f32 0.0, %v1957
      %v1959 = vpop.f32.mrb[0].mxu0
      %v1960 = vadd.f32 0.0, %v1959
      %v1961 = vpop.f32.mrb[0].mxu0
      %v1962 = vadd.f32 0.0, %v1961
      %1963 = vdwg.mxu0
      %1964 = vmatprep.subr.bf16.mxu0 %v1471
      %1965 = vmatpush1.bf16.msra.mxu0 %v1470
      %1966 = vmatprep.subr.bf16.mxu0 %v1491
      %1967 = vmatpush1.bf16.msra.mxu0 %v1490
      %1968 = vmatprep.subr.bf16.mxu0 %v1511
      %1969 = vmatpush1.bf16.msra.mxu0 %v1510
      %1970 = vmatprep.subr.bf16.mxu0 %v1531
      %1971 = vmatpush1.bf16.msra.mxu0 %v1530
      %1972 = vmatprep.subr.bf16.mxu0 0
      %1973 = vmatpush1.bf16.msra.mxu0 0
      %1974 = vmatprep.subr.bf16.mxu0 0
      %1975 = vmatpush1.bf16.msra.mxu0 0
      %1976 = vmatprep.subr.bf16.mxu0 0
      %1977 = vmatpush1.bf16.msra.mxu0 0
      %1978 = vmatprep.subr.bf16.mxu0 0
      %1979 = vmatpush1.bf16.msra.mxu0 0
      %1980 = vmatprep.subr.bf16.mxu0 0
      %1981 = vmatpush1.bf16.msra.mxu0 0
      %1982 = vmatprep.subr.bf16.mxu0 0
      %1983 = vmatpush1.bf16.msra.mxu0 0
      %1984 = vmatprep.subr.bf16.mxu0 0
      %1985 = vmatpush1.bf16.msra.mxu0 0
      %1986 = vmatprep.subr.bf16.mxu0 0
      %1987 = vmatpush1.bf16.msra.mxu0 0
      %1988 = vmatprep.subr.bf16.mxu0 0
      %1989 = vmatpush1.bf16.msra.mxu0 0
      %1990 = vmatprep.subr.bf16.mxu0 0
      %1991 = vmatpush1.bf16.msra.mxu0 0
      %1992 = vmatprep.subr.bf16.mxu0 0
      %1993 = vmatpush1.bf16.msra.mxu0 0
      %1994 = vmatprep.subr.bf16.mxu0 0
      %1995 = vmatpush1.bf16.msra.mxu0 0
      %1996 = vmatprep.mubr.bf16.mxu0 0
      %1997 = vmatmul.mubr.bf16.gmra.mrb[0].mxu0 %v1602
      %v1998 = vpop.f32.mrb[0].mxu0
      %v1999 = vadd.f32 0.0, %v1998
      %v2000 = vpop.f32.mrb[0].mxu0
      %v2001 = vadd.f32 0.0, %v2000
      %v2002 = vpop.f32.mrb[0].mxu0
      %v2003 = vadd.f32 0.0, %v2002
      %v2004 = vpop.f32.mrb[0].mxu0
      %v2005 = vadd.f32 0.0, %v2004
      %2006 = vmatprep.mubr.bf16.mxu0 0
      %2007 = vmatmul.mubr.bf16.gmra.mrb[0].mxu0 %v1605
      %v2008 = vpop.f32.mrb[0].mxu0
      %v2009 = vadd.f32 0.0, %v2008
      %v2010 = vpop.f32.mrb[0].mxu0
      %v2011 = vadd.f32 0.0, %v2010
      %v2012 = vpop.f32.mrb[0].mxu0
      %v2013 = vadd.f32 0.0, %v2012
      %v2014 = vpop.f32.mrb[0].mxu0
      %v2015 = vadd.f32 0.0, %v2014
      %2016 = vmatprep.mubr.bf16.mxu0 0
      %2017 = vmatmul.mubr.bf16.gmra.mrb[0].mxu0 %v1608
      %v2018 = vpop.f32.mrb[0].mxu0
      %v2019 = vadd.f32 0.0, %v2018
      %v2020 = vpop.f32.mrb[0].mxu0
      %v2021 = vadd.f32 0.0, %v2020
      %v2022 = vpop.f32.mrb[0].mxu0
      %v2023 = vadd.f32 0.0, %v2022
      %v2024 = vpop.f32.mrb[0].mxu0
      %v2025 = vadd.f32 0.0, %v2024
      %2026 = vmatprep.mubr.bf16.mxu0 0
      %2027 = vmatmul.mubr.bf16.gmra.mrb[0].mxu0 %v1611
      %v2028 = vpop.f32.mrb[0].mxu0
      %v2029 = vadd.f32 0.0, %v2028
      %v2030 = vpop.f32.mrb[0].mxu0
      %v2031 = vadd.f32 0.0, %v2030
      %v2032 = vpop.f32.mrb[0].mxu0
      %v2033 = vadd.f32 0.0, %v2032
      %v2034 = vpop.f32.mrb[0].mxu0
      %v2035 = vadd.f32 0.0, %v2034
      %2036 = vmatprep.mubr.bf16.mxu0 0
      %2037 = vmatmul.mubr.bf16.gmra.mrb[0].mxu0 %v1614
      %v2038 = vpop.f32.mrb[0].mxu0
      %v2039 = vadd.f32 0.0, %v2038
      %v2040 = vpop.f32.mrb[0].mxu0
      %v2041 = vadd.f32 0.0, %v2040
      %v2042 = vpop.f32.mrb[0].mxu0
      %v2043 = vadd.f32 0.0, %v2042
      %v2044 = vpop.f32.mrb[0].mxu0
      %v2045 = vadd.f32 0.0, %v2044
      %2046 = vmatprep.mubr.bf16.mxu0 0
      %2047 = vmatmul.mubr.bf16.gmra.mrb[0].mxu0 %v1617
      %v2048 = vpop.f32.mrb[0].mxu0
      %v2049 = vadd.f32 0.0, %v2048
      %v2050 = vpop.f32.mrb[0].mxu0
      %v2051 = vadd.f32 0.0, %v2050
      %v2052 = vpop.f32.mrb[0].mxu0
      %v2053 = vadd.f32 0.0, %v2052
      %v2054 = vpop.f32.mrb[0].mxu0
      %v2055 = vadd.f32 0.0, %v2054
      %2056 = vmatprep.mubr.bf16.mxu0 0
      %2057 = vmatmul.mubr.bf16.gmra.mrb[0].mxu0 %v1620
      %v2058 = vpop.f32.mrb[0].mxu0
      %v2059 = vadd.f32 0.0, %v2058
      %v2060 = vpop.f32.mrb[0].mxu0
      %v2061 = vadd.f32 0.0, %v2060
      %v2062 = vpop.f32.mrb[0].mxu0
      %v2063 = vadd.f32 0.0, %v2062
      %v2064 = vpop.f32.mrb[0].mxu0
      %v2065 = vadd.f32 0.0, %v2064
      %2066 = vmatprep.mubr.bf16.mxu0 0
      %2067 = vmatmul.mubr.bf16.gmra.mrb[0].mxu0 %v1623
      %v2068 = vpop.f32.mrb[0].mxu0
      %v2069 = vadd.f32 0.0, %v2068
      %v2070 = vpop.f32.mrb[0].mxu0
      %v2071 = vadd.f32 0.0, %v2070
      %v2072 = vpop.f32.mrb[0].mxu0
      %v2073 = vadd.f32 0.0, %v2072
      %v2074 = vpop.f32.mrb[0].mxu0
      %v2075 = vadd.f32 0.0, %v2074
      %2076 = vdwg.mxu0
      %2077 = vmatprep.subr.bf16.mxu0 %v1473
      %2078 = vmatpush1.bf16.msra.mxu0 %v1472
      %2079 = vmatprep.subr.bf16.mxu0 %v1493
      %2080 = vmatpush1.bf16.msra.mxu0 %v1492
      %2081 = vmatprep.subr.bf16.mxu0 %v1513
      %2082 = vmatpush1.bf16.msra.mxu0 %v1512
      %2083 = vmatprep.subr.bf16.mxu0 %v1533
      %2084 = vmatpush1.bf16.msra.mxu0 %v1532
      %2085 = vmatprep.subr.bf16.mxu0 0
      %2086 = vmatpush1.bf16.msra.mxu0 0
      %2087 = vmatprep.subr.bf16.mxu0 0
      %2088 = vmatpush1.bf16.msra.mxu0 0
      %2089 = vmatprep.subr.bf16.mxu0 0
      %2090 = vmatpush1.bf16.msra.mxu0 0
      %2091 = vmatprep.subr.bf16.mxu0 0
      %2092 = vmatpush1.bf16.msra.mxu0 0
      %2093 = vmatprep.subr.bf16.mxu0 0
      %2094 = vmatpush1.bf16.msra.mxu0 0
      %2095 = vmatprep.subr.bf16.mxu0 0
      %2096 = vmatpush1.bf16.msra.mxu0 0
      %2097 = vmatprep.subr.bf16.mxu0 0
      %2098 = vmatpush1.bf16.msra.mxu0 0
      %2099 = vmatprep.subr.bf16.mxu0 0
      %2100 = vmatpush1.bf16.msra.mxu0 0
      %2101 = vmatprep.subr.bf16.mxu0 0
      %2102 = vmatpush1.bf16.msra.mxu0 0
      %2103 = vmatprep.subr.bf16.mxu0 0
      %2104 = vmatpush1.bf16.msra.mxu0 0
      %2105 = vmatprep.subr.bf16.mxu0 0
      %2106 = vmatpush1.bf16.msra.mxu0 0
      %2107 = vmatprep.subr.bf16.mxu0 0
      %2108 = vmatpush1.bf16.msra.mxu0 0
      %2109 = vmatprep.mubr.bf16.mxu0 0
      %2110 = vmatmul.mubr.bf16.gmra.mrb[0].mxu0 %v1602
      %v2111 = vpop.f32.mrb[0].mxu0
      %v2112 = vadd.f32 0.0, %v2111
      %v2113 = vpop.f32.mrb[0].mxu0
      %v2114 = vadd.f32 0.0, %v2113
      %v2115 = vpop.f32.mrb[0].mxu0
      %v2116 = vadd.f32 0.0, %v2115
      %v2117 = vpop.f32.mrb[0].mxu0
      %v2118 = vadd.f32 0.0, %v2117
      %2119 = vmatprep.mubr.bf16.mxu0 0
      %2120 = vmatmul.mubr.bf16.gmra.mrb[0].mxu0 %v1605
      %v2121 = vpop.f32.mrb[0].mxu0
      %v2122 = vadd.f32 0.0, %v2121
      %v2123 = vpop.f32.mrb[0].mxu0
      %v2124 = vadd.f32 0.0, %v2123
      %v2125 = vpop.f32.mrb[0].mxu0
      %v2126 = vadd.f32 0.0, %v2125
      %v2127 = vpop.f32.mrb[0].mxu0
      %v2128 = vadd.f32 0.0, %v2127
      %2129 = vmatprep.mubr.bf16.mxu0 0
      %2130 = vmatmul.mubr.bf16.gmra.mrb[0].mxu0 %v1608
      %v2131 = vpop.f32.mrb[0].mxu0
      %v2132 = vadd.f32 0.0, %v2131
      %v2133 = vpop.f32.mrb[0].mxu0
      %v2134 = vadd.f32 0.0, %v2133
      %v2135 = vpop.f32.mrb[0].mxu0
      %v2136 = vadd.f32 0.0, %v2135
      %v2137 = vpop.f32.mrb[0].mxu0
      %v2138 = vadd.f32 0.0, %v2137
      %2139 = vmatprep.mubr.bf16.mxu0 0
      %2140 = vmatmul.mubr.bf16.gmra.mrb[0].mxu0 %v1611
      %v2141 = vpop.f32.mrb[0].mxu0
      %v2142 = vadd.f32 0.0, %v2141
      %v2143 = vpop.f32.mrb[0].mxu0
      %v2144 = vadd.f32 0.0, %v2143
      %v2145 = vpop.f32.mrb[0].mxu0
      %v2146 = vadd.f32 0.0, %v2145
      %v2147 = vpop.f32.mrb[0].mxu0
      %v2148 = vadd.f32 0.0, %v2147
      %2149 = vmatprep.mubr.bf16.mxu0 0
      %2150 = vmatmul.mubr.bf16.gmra.mrb[0].mxu0 %v1614
      %v2151 = vpop.f32.mrb[0].mxu0
      %v2152 = vadd.f32 0.0, %v2151
      %v2153 = vpop.f32.mrb[0].mxu0
      %v2154 = vadd.f32 0.0, %v2153
      %v2155 = vpop.f32.mrb[0].mxu0
      %v2156 = vadd.f32 0.0, %v2155
      %v2157 = vpop.f32.mrb[0].mxu0
      %v2158 = vadd.f32 0.0, %v2157
      %2159 = vmatprep.mubr.bf16.mxu0 0
      %2160 = vmatmul.mubr.bf16.gmra.mrb[0].mxu0 %v1617
      %v2161 = vpop.f32.mrb[0].mxu0
      %v2162 = vadd.f32 0.0, %v2161
      %v2163 = vpop.f32.mrb[0].mxu0
      %v2164 = vadd.f32 0.0, %v2163
      %v2165 = vpop.f32.mrb[0].mxu0
      %v2166 = vadd.f32 0.0, %v2165
      %v2167 = vpop.f32.mrb[0].mxu0
      %v2168 = vadd.f32 0.0, %v2167
      %2169 = vmatprep.mubr.bf16.mxu0 0
      %2170 = vmatmul.mubr.bf16.gmra.mrb[0].mxu0 %v1620
      %v2171 = vpop.f32.mrb[0].mxu0
      %v2172 = vadd.f32 0.0, %v2171
      %v2173 = vpop.f32.mrb[0].mxu0
      %v2174 = vadd.f32 0.0, %v2173
      %v2175 = vpop.f32.mrb[0].mxu0
      %v2176 = vadd.f32 0.0, %v2175
      %v2177 = vpop.f32.mrb[0].mxu0
      %v2178 = vadd.f32 0.0, %v2177
      %2179 = vmatprep.mubr.bf16.mxu0 0
      %2180 = vmatmul.mubr.bf16.gmra.mrb[0].mxu0 %v1623
      %v2181 = vpop.f32.mrb[0].mxu0
      %v2182 = vadd.f32 0.0, %v2181
      %v2183 = vpop.f32.mrb[0].mxu0
      %v2184 = vadd.f32 0.0, %v2183
      %v2185 = vpop.f32.mrb[0].mxu0
      %v2186 = vadd.f32 0.0, %v2185
      %v2187 = vpop.f32.mrb[0].mxu0
      %v2188 = vadd.f32 0.0, %v2187
      %2189 = vdwg.mxu0
      %2190 = vmatprep.subr.bf16.mxu0 %v1475
      %2191 = vmatpush1.bf16.msra.mxu0 %v1474
      %2192 = vmatprep.subr.bf16.mxu0 %v1495
      %2193 = vmatpush1.bf16.msra.mxu0 %v1494
      %2194 = vmatprep.subr.bf16.mxu0 %v1515
      %2195 = vmatpush1.bf16.msra.mxu0 %v1514
      %2196 = vmatprep.subr.bf16.mxu0 %v1535
      %2197 = vmatpush1.bf16.msra.mxu0 %v1534
      %2198 = vmatprep.subr.bf16.mxu0 0
      %2199 = vmatpush1.bf16.msra.mxu0 0
      %2200 = vmatprep.subr.bf16.mxu0 0
      %2201 = vmatpush1.bf16.msra.mxu0 0
      %2202 = vmatprep.subr.bf16.mxu0 0
      %2203 = vmatpush1.bf16.msra.mxu0 0
      %2204 = vmatprep.subr.bf16.mxu0 0
      %2205 = vmatpush1.bf16.msra.mxu0 0
      %2206 = vmatprep.subr.bf16.mxu0 0
      %2207 = vmatpush1.bf16.msra.mxu0 0
      %2208 = vmatprep.subr.bf16.mxu0 0
      %2209 = vmatpush1.bf16.msra.mxu0 0
      %2210 = vmatprep.subr.bf16.mxu0 0
      %2211 = vmatpush1.bf16.msra.mxu0 0
      %2212 = vmatprep.subr.bf16.mxu0 0
      %2213 = vmatpush1.bf16.msra.mxu0 0
      %2214 = vmatprep.subr.bf16.mxu0 0
      %2215 = vmatpush1.bf16.msra.mxu0 0
      %2216 = vmatprep.subr.bf16.mxu0 0
      %2217 = vmatpush1.bf16.msra.mxu0 0
      %2218 = vmatprep.subr.bf16.mxu0 0
      %2219 = vmatpush1.bf16.msra.mxu0 0
      %2220 = vmatprep.subr.bf16.mxu0 0
      %2221 = vmatpush1.bf16.msra.mxu0 0
      %2222 = vmatprep.mubr.bf16.mxu0 0
      %2223 = vmatmul.mubr.bf16.gmra.mrb[0].mxu0 %v1602
      %v2224 = vpop.f32.mrb[0].mxu0
      %v2225 = vadd.f32 0.0, %v2224
      %v2226 = vpop.f32.mrb[0].mxu0
      %v2227 = vadd.f32 0.0, %v2226
      %v2228 = vpop.f32.mrb[0].mxu0
      %v2229 = vadd.f32 0.0, %v2228
      %v2230 = vpop.f32.mrb[0].mxu0
      %v2231 = vadd.f32 0.0, %v2230
      %2232 = vmatprep.mubr.bf16.mxu0 0
      %2233 = vmatmul.mubr.bf16.gmra.mrb[0].mxu0 %v1605
      %v2234 = vpop.f32.mrb[0].mxu0
      %v2235 = vadd.f32 0.0, %v2234
      %v2236 = vpop.f32.mrb[0].mxu0
      %v2237 = vadd.f32 0.0, %v2236
      %v2238 = vpop.f32.mrb[0].mxu0
      %v2239 = vadd.f32 0.0, %v2238
      %v2240 = vpop.f32.mrb[0].mxu0
      %v2241 = vadd.f32 0.0, %v2240
      %2242 = vmatprep.mubr.bf16.mxu0 0
      %2243 = vmatmul.mubr.bf16.gmra.mrb[0].mxu0 %v1608
      %v2244 = vpop.f32.mrb[0].mxu0
      %v2245 = vadd.f32 0.0, %v2244
      %v2246 = vpop.f32.mrb[0].mxu0
      %v2247 = vadd.f32 0.0, %v2246
      %v2248 = vpop.f32.mrb[0].mxu0
      %v2249 = vadd.f32 0.0, %v2248
      %v2250 = vpop.f32.mrb[0].mxu0
      %v2251 = vadd.f32 0.0, %v2250
      %2252 = vmatprep.mubr.bf16.mxu0 0
      %2253 = vmatmul.mubr.bf16.gmra.mrb[0].mxu0 %v1611
      %v2254 = vpop.f32.mrb[0].mxu0
      %v2255 = vadd.f32 0.0, %v2254
      %v2256 = vpop.f32.mrb[0].mxu0
      %v2257 = vadd.f32 0.0, %v2256
      %v2258 = vpop.f32.mrb[0].mxu0
      %v2259 = vadd.f32 0.0, %v2258
      %v2260 = vpop.f32.mrb[0].mxu0
      %v2261 = vadd.f32 0.0, %v2260
      %2262 = vmatprep.mubr.bf16.mxu0 0
      %2263 = vmatmul.mubr.bf16.gmra.mrb[0].mxu0 %v1614
      %v2264 = vpop.f32.mrb[0].mxu0
      %v2265 = vadd.f32 0.0, %v2264
      %v2266 = vpop.f32.mrb[0].mxu0
      %v2267 = vadd.f32 0.0, %v2266
      %v2268 = vpop.f32.mrb[0].mxu0
      %v2269 = vadd.f32 0.0, %v2268
      %v2270 = vpop.f32.mrb[0].mxu0
      %v2271 = vadd.f32 0.0, %v2270
      %2272 = vmatprep.mubr.bf16.mxu0 0
      %2273 = vmatmul.mubr.bf16.gmra.mrb[0].mxu0 %v1617
      %v2274 = vpop.f32.mrb[0].mxu0
      %v2275 = vadd.f32 0.0, %v2274
      %v2276 = vpop.f32.mrb[0].mxu0
      %v2277 = vadd.f32 0.0, %v2276
      %v2278 = vpop.f32.mrb[0].mxu0
      %v2279 = vadd.f32 0.0, %v2278
      %v2280 = vpop.f32.mrb[0].mxu0
      %v2281 = vadd.f32 0.0, %v2280
      %2282 = vmatprep.mubr.bf16.mxu0 0
      %2283 = vmatmul.mubr.bf16.gmra.mrb[0].mxu0 %v1620
      %v2284 = vpop.f32.mrb[0].mxu0
      %v2285 = vadd.f32 0.0, %v2284
      %v2286 = vpop.f32.mrb[0].mxu0
      %v2287 = vadd.f32 0.0, %v2286
      %v2288 = vpop.f32.mrb[0].mxu0
      %v2289 = vadd.f32 0.0, %v2288
      %v2290 = vpop.f32.mrb[0].mxu0
      %v2291 = vadd.f32 0.0, %v2290
      %2292 = vmatprep.mubr.bf16.mxu0 0
      %2293 = vmatmul.mubr.bf16.gmra.mrb[0].mxu0 %v1623
      %v2294 = vpop.f32.mrb[0].mxu0
      %v2295 = vadd.f32 0.0, %v2294
      %v2296 = vpop.f32.mrb[0].mxu0
      %v2297 = vadd.f32 0.0, %v2296
      %v2298 = vpop.f32.mrb[0].mxu0
      %v2299 = vadd.f32 0.0, %v2298
      %v2300 = vpop.f32.mrb[0].mxu0
      %v2301 = vadd.f32 0.0, %v2300
      %2302 = vdwg.mxu0
      %2303 = vmatprep.subr.bf16.mxu0 %v1477
      %2304 = vmatpush1.bf16.msra.mxu0 %v1476
      %2305 = vmatprep.subr.bf16.mxu0 %v1497
      %2306 = vmatpush1.bf16.msra.mxu0 %v1496
      %2307 = vmatprep.subr.bf16.mxu0 %v1517
      %2308 = vmatpush1.bf16.msra.mxu0 %v1516
      %2309 = vmatprep.subr.bf16.mxu0 %v1537
      %2310 = vmatpush1.bf16.msra.mxu0 %v1536
      %2311 = vmatprep.subr.bf16.mxu0 0
      %2312 = vmatpush1.bf16.msra.mxu0 0
      %2313 = vmatprep.subr.bf16.mxu0 0
      %2314 = vmatpush1.bf16.msra.mxu0 0
      %2315 = vmatprep.subr.bf16.mxu0 0
      %2316 = vmatpush1.bf16.msra.mxu0 0
      %2317 = vmatprep.subr.bf16.mxu0 0
      %2318 = vmatpush1.bf16.msra.mxu0 0
      %2319 = vmatprep.subr.bf16.mxu0 0
      %2320 = vmatpush1.bf16.msra.mxu0 0
      %2321 = vmatprep.subr.bf16.mxu0 0
      %2322 = vmatpush1.bf16.msra.mxu0 0
      %2323 = vmatprep.subr.bf16.mxu0 0
      %2324 = vmatpush1.bf16.msra.mxu0 0
      %2325 = vmatprep.subr.bf16.mxu0 0
      %2326 = vmatpush1.bf16.msra.mxu0 0
      %2327 = vmatprep.subr.bf16.mxu0 0
      %2328 = vmatpush1.bf16.msra.mxu0 0
      %2329 = vmatprep.subr.bf16.mxu0 0
      %2330 = vmatpush1.bf16.msra.mxu0 0
      %2331 = vmatprep.subr.bf16.mxu0 0
      %2332 = vmatpush1.bf16.msra.mxu0 0
      %2333 = vmatprep.subr.bf16.mxu0 0
      %2334 = vmatpush1.bf16.msra.mxu0 0
      %2335 = vmatprep.mubr.bf16.mxu0 0
      %2336 = vmatmul.mubr.bf16.gmra.mrb[0].mxu0 %v1602
      %v2337 = vpop.f32.mrb[0].mxu0
      %v2338 = vadd.f32 0.0, %v2337
      %v2339 = vpop.f32.mrb[0].mxu0
      %v2340 = vadd.f32 0.0, %v2339
      %v2341 = vpop.f32.mrb[0].mxu0
      %v2342 = vadd.f32 0.0, %v2341
      %v2343 = vpop.f32.mrb[0].mxu0
      %v2344 = vadd.f32 0.0, %v2343
      %2345 = vmatprep.mubr.bf16.mxu0 0
      %2346 = vmatmul.mubr.bf16.gmra.mrb[0].mxu0 %v1605
      %v2347 = vpop.f32.mrb[0].mxu0
      %v2348 = vadd.f32 0.0, %v2347
      %v2349 = vpop.f32.mrb[0].mxu0
      %v2350 = vadd.f32 0.0, %v2349
      %v2351 = vpop.f32.mrb[0].mxu0
      %v2352 = vadd.f32 0.0, %v2351
      %v2353 = vpop.f32.mrb[0].mxu0
      %v2354 = vadd.f32 0.0, %v2353
      %2355 = vmatprep.mubr.bf16.mxu0 0
      %2356 = vmatmul.mubr.bf16.gmra.mrb[0].mxu0 %v1608
      %v2357 = vpop.f32.mrb[0].mxu0
      %v2358 = vadd.f32 0.0, %v2357
      %v2359 = vpop.f32.mrb[0].mxu0
      %v2360 = vadd.f32 0.0, %v2359
      %v2361 = vpop.f32.mrb[0].mxu0
      %v2362 = vadd.f32 0.0, %v2361
      %v2363 = vpop.f32.mrb[0].mxu0
      %v2364 = vadd.f32 0.0, %v2363
      %2365 = vmatprep.mubr.bf16.mxu0 0
      %2366 = vmatmul.mubr.bf16.gmra.mrb[0].mxu0 %v1611
      %v2367 = vpop.f32.mrb[0].mxu0
      %v2368 = vadd.f32 0.0, %v2367
      %v2369 = vpop.f32.mrb[0].mxu0
      %v2370 = vadd.f32 0.0, %v2369
      %v2371 = vpop.f32.mrb[0].mxu0
      %v2372 = vadd.f32 0.0, %v2371
      %v2373 = vpop.f32.mrb[0].mxu0
      %v2374 = vadd.f32 0.0, %v2373
      %2375 = vmatprep.mubr.bf16.mxu0 0
      %2376 = vmatmul.mubr.bf16.gmra.mrb[0].mxu0 %v1614
      %v2377 = vpop.f32.mrb[0].mxu0
      %v2378 = vadd.f32 0.0, %v2377
      %v2379 = vpop.f32.mrb[0].mxu0
      %v2380 = vadd.f32 0.0, %v2379
      %v2381 = vpop.f32.mrb[0].mxu0
      %v2382 = vadd.f32 0.0, %v2381
      %v2383 = vpop.f32.mrb[0].mxu0
      %v2384 = vadd.f32 0.0, %v2383
      %2385 = vmatprep.mubr.bf16.mxu0 0
      %2386 = vmatmul.mubr.bf16.gmra.mrb[0].mxu0 %v1617
      %v2387 = vpop.f32.mrb[0].mxu0
      %v2388 = vadd.f32 0.0, %v2387
      %v2389 = vpop.f32.mrb[0].mxu0
      %v2390 = vadd.f32 0.0, %v2389
      %v2391 = vpop.f32.mrb[0].mxu0
      %v2392 = vadd.f32 0.0, %v2391
      %v2393 = vpop.f32.mrb[0].mxu0
      %v2394 = vadd.f32 0.0, %v2393
      %2395 = vmatprep.mubr.bf16.mxu0 0
      %2396 = vmatmul.mubr.bf16.gmra.mrb[0].mxu0 %v1620
      %v2397 = vpop.f32.mrb[0].mxu0
      %v2398 = vadd.f32 0.0, %v2397
      %v2399 = vpop.f32.mrb[0].mxu0
      %v2400 = vadd.f32 0.0, %v2399
      %v2401 = vpop.f32.mrb[0].mxu0
      %v2402 = vadd.f32 0.0, %v2401
      %v2403 = vpop.f32.mrb[0].mxu0
      %v2404 = vadd.f32 0.0, %v2403
      %2405 = vmatprep.mubr.bf16.mxu0 0
      %2406 = vmatmul.mubr.bf16.gmra.mrb[0].mxu0 %v1623
      %v2407 = vpop.f32.mrb[0].mxu0
      %v2408 = vadd.f32 0.0, %v2407
      %v2409 = vpop.f32.mrb[0].mxu0
      %v2410 = vadd.f32 0.0, %v2409
      %v2411 = vpop.f32.mrb[0].mxu0
      %v2412 = vadd.f32 0.0, %v2411
      %v2413 = vpop.f32.mrb[0].mxu0
      %v2414 = vadd.f32 0.0, %v2413
      %2415 = vdwg.mxu0
      %2416 = vmatprep.subr.bf16.mxu0 %v1479
      %2417 = vmatpush1.bf16.msra.mxu0 %v1478
      %2418 = vmatprep.subr.bf16.mxu0 %v1499
      %2419 = vmatpush1.bf16.msra.mxu0 %v1498
      %2420 = vmatprep.subr.bf16.mxu0 %v1519
      %2421 = vmatpush1.bf16.msra.mxu0 %v1518
      %2422 = vmatprep.subr.bf16.mxu0 %v1539
      %2423 = vmatpush1.bf16.msra.mxu0 %v1538
      %2424 = vmatprep.subr.bf16.mxu0 0
      %2425 = vmatpush1.bf16.msra.mxu0 0
      %2426 = vmatprep.subr.bf16.mxu0 0
      %2427 = vmatpush1.bf16.msra.mxu0 0
      %2428 = vmatprep.subr.bf16.mxu0 0
      %2429 = vmatpush1.bf16.msra.mxu0 0
      %2430 = vmatprep.subr.bf16.mxu0 0
      %2431 = vmatpush1.bf16.msra.mxu0 0
      %2432 = vmatprep.subr.bf16.mxu0 0
      %2433 = vmatpush1.bf16.msra.mxu0 0
      %2434 = vmatprep.subr.bf16.mxu0 0
      %2435 = vmatpush1.bf16.msra.mxu0 0
      %2436 = vmatprep.subr.bf16.mxu0 0
      %2437 = vmatpush1.bf16.msra.mxu0 0
      %2438 = vmatprep.subr.bf16.mxu0 0
      %2439 = vmatpush1.bf16.msra.mxu0 0
      %2440 = vmatprep.subr.bf16.mxu0 0
      %2441 = vmatpush1.bf16.msra.mxu0 0
      %2442 = vmatprep.subr.bf16.mxu0 0
      %2443 = vmatpush1.bf16.msra.mxu0 0
      %2444 = vmatprep.subr.bf16.mxu0 0
      %2445 = vmatpush1.bf16.msra.mxu0 0
      %2446 = vmatprep.subr.bf16.mxu0 0
      %2447 = vmatpush1.bf16.msra.mxu0 0
      %2448 = vmatprep.mubr.bf16.mxu0 0
      %2449 = vmatmul.mubr.bf16.gmra.mrb[0].mxu0 %v1602
      %v2450 = vpop.f32.mrb[0].mxu0
      %v2451 = vadd.f32 0.0, %v2450
      %v2452 = vpop.f32.mrb[0].mxu0
      %v2453 = vadd.f32 0.0, %v2452
      %v2454 = vpop.f32.mrb[0].mxu0
      %v2455 = vadd.f32 0.0, %v2454
      %v2456 = vpop.f32.mrb[0].mxu0
      %v2457 = vadd.f32 0.0, %v2456
      %2458 = vmatprep.mubr.bf16.mxu0 0
      %2459 = vmatmul.mubr.bf16.gmra.mrb[0].mxu0 %v1605
      %v2460 = vpop.f32.mrb[0].mxu0
      %v2461 = vadd.f32 0.0, %v2460
      %v2462 = vpop.f32.mrb[0].mxu0
      %v2463 = vadd.f32 0.0, %v2462
      %v2464 = vpop.f32.mrb[0].mxu0
      %v2465 = vadd.f32 0.0, %v2464
      %v2466 = vpop.f32.mrb[0].mxu0
      %v2467 = vadd.f32 0.0, %v2466
      %2468 = vmatprep.mubr.bf16.mxu0 0
      %2469 = vmatmul.mubr.bf16.gmra.mrb[0].mxu0 %v1608
      %v2470 = vpop.f32.mrb[0].mxu0
      %v2471 = vadd.f32 0.0, %v2470
      %v2472 = vpop.f32.mrb[0].mxu0
      %v2473 = vadd.f32 0.0, %v2472
      %v2474 = vpop.f32.mrb[0].mxu0
      %v2475 = vadd.f32 0.0, %v2474
      %v2476 = vpop.f32.mrb[0].mxu0
      %v2477 = vadd.f32 0.0, %v2476
      %2478 = vmatprep.mubr.bf16.mxu0 0
      %2479 = vmatmul.mubr.bf16.gmra.mrb[0].mxu0 %v1611
      %v2480 = vpop.f32.mrb[0].mxu0
      %v2481 = vadd.f32 0.0, %v2480
      %v2482 = vpop.f32.mrb[0].mxu0
      %v2483 = vadd.f32 0.0, %v2482
      %v2484 = vpop.f32.mrb[0].mxu0
      %v2485 = vadd.f32 0.0, %v2484
      %v2486 = vpop.f32.mrb[0].mxu0
      %v2487 = vadd.f32 0.0, %v2486
      %2488 = vmatprep.mubr.bf16.mxu0 0
      %2489 = vmatmul.mubr.bf16.gmra.mrb[0].mxu0 %v1614
      %v2490 = vpop.f32.mrb[0].mxu0
      %v2491 = vadd.f32 0.0, %v2490
      %v2492 = vpop.f32.mrb[0].mxu0
      %v2493 = vadd.f32 0.0, %v2492
      %v2494 = vpop.f32.mrb[0].mxu0
      %v2495 = vadd.f32 0.0, %v2494
      %v2496 = vpop.f32.mrb[0].mxu0
      %v2497 = vadd.f32 0.0, %v2496
      %2498 = vmatprep.mubr.bf16.mxu0 0
      %2499 = vmatmul.mubr.bf16.gmra.mrb[0].mxu0 %v1617
      %v2500 = vpop.f32.mrb[0].mxu0
      %v2501 = vadd.f32 0.0, %v2500
      %v2502 = vpop.f32.mrb[0].mxu0
      %v2503 = vadd.f32 0.0, %v2502
      %v2504 = vpop.f32.mrb[0].mxu0
      %v2505 = vadd.f32 0.0, %v2504
      %v2506 = vpop.f32.mrb[0].mxu0
      %v2507 = vadd.f32 0.0, %v2506
      %2508 = vmatprep.mubr.bf16.mxu0 0
      %2509 = vmatmul.mubr.bf16.gmra.mrb[0].mxu0 %v1620
      %v2510 = vpop.f32.mrb[0].mxu0
      %v2511 = vadd.f32 0.0, %v2510
      %v2512 = vpop.f32.mrb[0].mxu0
      %v2513 = vadd.f32 0.0, %v2512
      %v2514 = vpop.f32.mrb[0].mxu0
      %v2515 = vadd.f32 0.0, %v2514
      %v2516 = vpop.f32.mrb[0].mxu0
      %v2517 = vadd.f32 0.0, %v2516
      %2518 = vmatprep.mubr.bf16.mxu0 0
      %2519 = vmatmul.mubr.bf16.gmra.mrb[0].mxu0 %v1623
      %v2520 = vpop.f32.mrb[0].mxu0
      %v2521 = vadd.f32 0.0, %v2520
      %v2522 = vpop.f32.mrb[0].mxu0
      %v2523 = vadd.f32 0.0, %v2522
      %v2524 = vpop.f32.mrb[0].mxu0
      %v2525 = vadd.f32 0.0, %v2524
      %v2526 = vpop.f32.mrb[0].mxu0
      %v2527 = vadd.f32 0.0, %v2526
      %2528 = vdwg.mxu0
      %2529 = vmatprep.subr.bf16.mxu0 %v1481
      %2530 = vmatpush1.bf16.msra.mxu0 %v1480
      %2531 = vmatprep.subr.bf16.mxu0 %v1501
      %2532 = vmatpush1.bf16.msra.mxu0 %v1500
      %2533 = vmatprep.subr.bf16.mxu0 %v1521
      %2534 = vmatpush1.bf16.msra.mxu0 %v1520
      %2535 = vmatprep.subr.bf16.mxu0 %v1541
      %2536 = vmatpush1.bf16.msra.mxu0 %v1540
      %2537 = vmatprep.subr.bf16.mxu0 0
      %2538 = vmatpush1.bf16.msra.mxu0 0
      %2539 = vmatprep.subr.bf16.mxu0 0
      %2540 = vmatpush1.bf16.msra.mxu0 0
      %2541 = vmatprep.subr.bf16.mxu0 0
      %2542 = vmatpush1.bf16.msra.mxu0 0
      %2543 = vmatprep.subr.bf16.mxu0 0
      %2544 = vmatpush1.bf16.msra.mxu0 0
      %2545 = vmatprep.subr.bf16.mxu0 0
      %2546 = vmatpush1.bf16.msra.mxu0 0
      %2547 = vmatprep.subr.bf16.mxu0 0
      %2548 = vmatpush1.bf16.msra.mxu0 0
      %2549 = vmatprep.subr.bf16.mxu0 0
      %2550 = vmatpush1.bf16.msra.mxu0 0
      %2551 = vmatprep.subr.bf16.mxu0 0
      %2552 = vmatpush1.bf16.msra.mxu0 0
      %2553 = vmatprep.subr.bf16.mxu0 0
      %2554 = vmatpush1.bf16.msra.mxu0 0
      %2555 = vmatprep.subr.bf16.mxu0 0
      %2556 = vmatpush1.bf16.msra.mxu0 0
      %2557 = vmatprep.subr.bf16.mxu0 0
      %2558 = vmatpush1.bf16.msra.mxu0 0
      %2559 = vmatprep.subr.bf16.mxu0 0
      %2560 = vmatpush1.bf16.msra.mxu0 0
      %2561 = vmatprep.mubr.bf16.mxu0 0
      %2562 = vmatmul.mubr.bf16.gmra.mrb[0].mxu0 %v1602
      %v2563 = vpop.f32.mrb[0].mxu0
      %v2564 = vadd.f32 0.0, %v2563
      %v2565 = vpop.f32.mrb[0].mxu0
      %v2566 = vadd.f32 0.0, %v2565
      %v2567 = vpop.f32.mrb[0].mxu0
      %v2568 = vadd.f32 0.0, %v2567
      %v2569 = vpop.f32.mrb[0].mxu0
      %v2570 = vadd.f32 0.0, %v2569
      %2571 = vmatprep.mubr.bf16.mxu0 0
      %2572 = vmatmul.mubr.bf16.gmra.mrb[0].mxu0 %v1605
      %v2573 = vpop.f32.mrb[0].mxu0
      %v2574 = vadd.f32 0.0, %v2573
      %v2575 = vpop.f32.mrb[0].mxu0
      %v2576 = vadd.f32 0.0, %v2575
      %v2577 = vpop.f32.mrb[0].mxu0
      %v2578 = vadd.f32 0.0, %v2577
      %v2579 = vpop.f32.mrb[0].mxu0
      %v2580 = vadd.f32 0.0, %v2579
      %2581 = vmatprep.mubr.bf16.mxu0 0
      %2582 = vmatmul.mubr.bf16.gmra.mrb[0].mxu0 %v1608
      %v2583 = vpop.f32.mrb[0].mxu0
      %v2584 = vadd.f32 0.0, %v2583
      %v2585 = vpop.f32.mrb[0].mxu0
      %v2586 = vadd.f32 0.0, %v2585
      %v2587 = vpop.f32.mrb[0].mxu0
      %v2588 = vadd.f32 0.0, %v2587
      %v2589 = vpop.f32.mrb[0].mxu0
      %v2590 = vadd.f32 0.0, %v2589
      %2591 = vmatprep.mubr.bf16.mxu0 0
      %2592 = vmatmul.mubr.bf16.gmra.mrb[0].mxu0 %v1611
      %v2593 = vpop.f32.mrb[0].mxu0
      %v2594 = vadd.f32 0.0, %v2593
      %v2595 = vpop.f32.mrb[0].mxu0
      %v2596 = vadd.f32 0.0, %v2595
      %v2597 = vpop.f32.mrb[0].mxu0
      %v2598 = vadd.f32 0.0, %v2597
      %v2599 = vpop.f32.mrb[0].mxu0
      %v2600 = vadd.f32 0.0, %v2599
      %2601 = vmatprep.mubr.bf16.mxu0 0
      %2602 = vmatmul.mubr.bf16.gmra.mrb[0].mxu0 %v1614
      %v2603 = vpop.f32.mrb[0].mxu0
      %v2604 = vadd.f32 0.0, %v2603
      %v2605 = vpop.f32.mrb[0].mxu0
      %v2606 = vadd.f32 0.0, %v2605
      %v2607 = vpop.f32.mrb[0].mxu0
      %v2608 = vadd.f32 0.0, %v2607
      %v2609 = vpop.f32.mrb[0].mxu0
      %v2610 = vadd.f32 0.0, %v2609
      %2611 = vmatprep.mubr.bf16.mxu0 0
      %2612 = vmatmul.mubr.bf16.gmra.mrb[0].mxu0 %v1617
      %v2613 = vpop.f32.mrb[0].mxu0
      %v2614 = vadd.f32 0.0, %v2613
      %v2615 = vpop.f32.mrb[0].mxu0
      %v2616 = vadd.f32 0.0, %v2615
      %v2617 = vpop.f32.mrb[0].mxu0
      %v2618 = vadd.f32 0.0, %v2617
      %v2619 = vpop.f32.mrb[0].mxu0
      %v2620 = vadd.f32 0.0, %v2619
      %2621 = vmatprep.mubr.bf16.mxu0 0
      %2622 = vmatmul.mubr.bf16.gmra.mrb[0].mxu0 %v1620
      %v2623 = vpop.f32.mrb[0].mxu0
      %v2624 = vadd.f32 0.0, %v2623
      %v2625 = vpop.f32.mrb[0].mxu0
      %v2626 = vadd.f32 0.0, %v2625
      %v2627 = vpop.f32.mrb[0].mxu0
      %v2628 = vadd.f32 0.0, %v2627
      %v2629 = vpop.f32.mrb[0].mxu0
      %v2630 = vadd.f32 0.0, %v2629
      %2631 = vmatprep.mubr.bf16.mxu0 0
      %2632 = vmatmul.mubr.bf16.gmra.mrb[0].mxu0 %v1623
      %v2633 = vpop.f32.mrb[0].mxu0
      %v2634 = vadd.f32 0.0, %v2633
      %v2635 = vpop.f32.mrb[0].mxu0
      %v2636 = vadd.f32 0.0, %v2635
      %v2637 = vpop.f32.mrb[0].mxu0
      %v2638 = vadd.f32 0.0, %v2637
      %v2639 = vpop.f32.mrb[0].mxu0
      %v2640 = vadd.f32 0.0, %v2639
      %2641 = vdwg.mxu0
      %2642 = vmatprep.subr.bf16.mxu0 %v1483
      %2643 = vmatpush1.bf16.msra.mxu0 %v1482
      %2644 = vmatprep.subr.bf16.mxu0 %v1503
      %2645 = vmatpush1.bf16.msra.mxu0 %v1502
      %2646 = vmatprep.subr.bf16.mxu0 %v1523
      %2647 = vmatpush1.bf16.msra.mxu0 %v1522
      %2648 = vmatprep.subr.bf16.mxu0 %v1543
      %2649 = vmatpush1.bf16.msra.mxu0 %v1542
      %2650 = vmatprep.subr.bf16.mxu0 0
      %2651 = vmatpush1.bf16.msra.mxu0 0
      %2652 = vmatprep.subr.bf16.mxu0 0
      %2653 = vmatpush1.bf16.msra.mxu0 0
      %2654 = vmatprep.subr.bf16.mxu0 0
      %2655 = vmatpush1.bf16.msra.mxu0 0
      %2656 = vmatprep.subr.bf16.mxu0 0
      %2657 = vmatpush1.bf16.msra.mxu0 0
      %2658 = vmatprep.subr.bf16.mxu0 0
      %2659 = vmatpush1.bf16.msra.mxu0 0
      %2660 = vmatprep.subr.bf16.mxu0 0
      %2661 = vmatpush1.bf16.msra.mxu0 0
      %2662 = vmatprep.subr.bf16.mxu0 0
      %2663 = vmatpush1.bf16.msra.mxu0 0
      %2664 = vmatprep.subr.bf16.mxu0 0
      %2665 = vmatpush1.bf16.msra.mxu0 0
      %2666 = vmatprep.subr.bf16.mxu0 0
      %2667 = vmatpush1.bf16.msra.mxu0 0
      %2668 = vmatprep.subr.bf16.mxu0 0
      %2669 = vmatpush1.bf16.msra.mxu0 0
      %2670 = vmatprep.subr.bf16.mxu0 0
      %2671 = vmatpush1.bf16.msra.mxu0 0
      %2672 = vmatprep.subr.bf16.mxu0 0
      %2673 = vmatpush1.bf16.msra.mxu0 0
      %2674 = vmatprep.mubr.bf16.mxu0 0
      %2675 = vmatmul.mubr.bf16.gmra.mrb[0].mxu0 %v1602
      %v2676 = vpop.f32.mrb[0].mxu0
      %v2677 = vadd.f32 0.0, %v2676
      %v2678 = vpop.f32.mrb[0].mxu0
      %v2679 = vadd.f32 0.0, %v2678
      %v2680 = vpop.f32.mrb[0].mxu0
      %v2681 = vadd.f32 0.0, %v2680
      %v2682 = vpop.f32.mrb[0].mxu0
      %v2683 = vadd.f32 0.0, %v2682
      %2684 = vmatprep.mubr.bf16.mxu0 0
      %2685 = vmatmul.mubr.bf16.gmra.mrb[0].mxu0 %v1605
      %v2686 = vpop.f32.mrb[0].mxu0
      %v2687 = vadd.f32 0.0, %v2686
      %v2688 = vpop.f32.mrb[0].mxu0
      %v2689 = vadd.f32 0.0, %v2688
      %v2690 = vpop.f32.mrb[0].mxu0
      %v2691 = vadd.f32 0.0, %v2690
      %v2692 = vpop.f32.mrb[0].mxu0
      %v2693 = vadd.f32 0.0, %v2692
      %2694 = vmatprep.mubr.bf16.mxu0 0
      %2695 = vmatmul.mubr.bf16.gmra.mrb[0].mxu0 %v1608
      %v2696 = vpop.f32.mrb[0].mxu0
      %v2697 = vadd.f32 0.0, %v2696
      %v2698 = vpop.f32.mrb[0].mxu0
      %v2699 = vadd.f32 0.0, %v2698
      %v2700 = vpop.f32.mrb[0].mxu0
      %v2701 = vadd.f32 0.0, %v2700
      %v2702 = vpop.f32.mrb[0].mxu0
      %v2703 = vadd.f32 0.0, %v2702
      %2704 = vmatprep.mubr.bf16.mxu0 0
      %2705 = vmatmul.mubr.bf16.gmra.mrb[0].mxu0 %v1611
      %v2706 = vpop.f32.mrb[0].mxu0
      %v2707 = vadd.f32 0.0, %v2706
      %v2708 = vpop.f32.mrb[0].mxu0
      %v2709 = vadd.f32 0.0, %v2708
      %v2710 = vpop.f32.mrb[0].mxu0
      %v2711 = vadd.f32 0.0, %v2710
      %v2712 = vpop.f32.mrb[0].mxu0
      %v2713 = vadd.f32 0.0, %v2712
      %2714 = vmatprep.mubr.bf16.mxu0 0
      %2715 = vmatmul.mubr.bf16.gmra.mrb[0].mxu0 %v1614
      %v2716 = vpop.f32.mrb[0].mxu0
      %v2717 = vadd.f32 0.0, %v2716
      %v2718 = vpop.f32.mrb[0].mxu0
      %v2719 = vadd.f32 0.0, %v2718
      %v2720 = vpop.f32.mrb[0].mxu0
      %v2721 = vadd.f32 0.0, %v2720
      %v2722 = vpop.f32.mrb[0].mxu0
      %v2723 = vadd.f32 0.0, %v2722
      %2724 = vmatprep.mubr.bf16.mxu0 0
      %2725 = vmatmul.mubr.bf16.gmra.mrb[0].mxu0 %v1617
      %v2726 = vpop.f32.mrb[0].mxu0
      %v2727 = vadd.f32 0.0, %v2726
      %v2728 = vpop.f32.mrb[0].mxu0
      %v2729 = vadd.f32 0.0, %v2728
      %v2730 = vpop.f32.mrb[0].mxu0
      %v2731 = vadd.f32 0.0, %v2730
      %v2732 = vpop.f32.mrb[0].mxu0
      %v2733 = vadd.f32 0.0, %v2732
      %2734 = vmatprep.mubr.bf16.mxu0 0
      %2735 = vmatmul.mubr.bf16.gmra.mrb[0].mxu0 %v1620
      %v2736 = vpop.f32.mrb[0].mxu0
      %v2737 = vadd.f32 0.0, %v2736
      %v2738 = vpop.f32.mrb[0].mxu0
      %v2739 = vadd.f32 0.0, %v2738
      %v2740 = vpop.f32.mrb[0].mxu0
      %v2741 = vadd.f32 0.0, %v2740
      %v2742 = vpop.f32.mrb[0].mxu0
      %v2743 = vadd.f32 0.0, %v2742
      %2744 = vmatprep.mubr.bf16.mxu0 0
      %2745 = vmatmul.mubr.bf16.gmra.mrb[0].mxu0 %v1623
      %v2746 = vpop.f32.mrb[0].mxu0
      %v2747 = vadd.f32 0.0, %v2746
      %v2748 = vpop.f32.mrb[0].mxu0
      %v2749 = vadd.f32 0.0, %v2748
      %v2750 = vpop.f32.mrb[0].mxu0
      %v2751 = vadd.f32 0.0, %v2750
      %v2752 = vpop.f32.mrb[0].mxu0
      %v2753 = vadd.f32 0.0, %v2752
      %2754 = vdwg.mxu0
      %v2755 = vpack.c.bf16 %v1664, %v1660
      %v2756 = vpack.c.bf16 %v1666, %v1662
      %v2757 = vpack.c.bf16 %v1777, %v1773
      %v2758 = vpack.c.bf16 %v1779, %v1775
      %v2759 = vpack.c.bf16 %v1890, %v1886
      %v2760 = vpack.c.bf16 %v1892, %v1888
      %v2761 = vpack.c.bf16 %v2003, %v1999
      %v2762 = vpack.c.bf16 %v2005, %v2001
      %v2763 = vpack.c.bf16 %v2116, %v2112
      %v2764 = vpack.c.bf16 %v2118, %v2114
      %v2765 = vpack.c.bf16 %v2229, %v2225
      %v2766 = vpack.c.bf16 %v2231, %v2227
      %v2767 = vpack.c.bf16 %v2342, %v2338
      %v2768 = vpack.c.bf16 %v2344, %v2340
      %v2769 = vpack.c.bf16 %v2455, %v2451
      %v2770 = vpack.c.bf16 %v2457, %v2453
      %v2771 = vpack.c.bf16 %v2568, %v2564
      %v2772 = vpack.c.bf16 %v2570, %v2566
      %v2773 = vpack.c.bf16 %v2681, %v2677
      %v2774 = vpack.c.bf16 %v2683, %v2679
      %v2775 = vpack.c.bf16 %v1674, %v1670
      %v2776 = vpack.c.bf16 %v1676, %v1672
      %v2777 = vpack.c.bf16 %v1787, %v1783
      %v2778 = vpack.c.bf16 %v1789, %v1785
      %v2779 = vpack.c.bf16 %v1900, %v1896
      %v2780 = vpack.c.bf16 %v1902, %v1898
      %v2781 = vpack.c.bf16 %v2013, %v2009
      %v2782 = vpack.c.bf16 %v2015, %v2011
      %v2783 = vpack.c.bf16 %v2126, %v2122
      %v2784 = vpack.c.bf16 %v2128, %v2124
      %v2785 = vpack.c.bf16 %v2239, %v2235
      %v2786 = vpack.c.bf16 %v2241, %v2237
      %v2787 = vpack.c.bf16 %v2352, %v2348
      %v2788 = vpack.c.bf16 %v2354, %v2350
      %v2789 = vpack.c.bf16 %v2465, %v2461
      %v2790 = vpack.c.bf16 %v2467, %v2463
      %v2791 = vpack.c.bf16 %v2578, %v2574
      %v2792 = vpack.c.bf16 %v2580, %v2576
      %v2793 = vpack.c.bf16 %v2691, %v2687
      %v2794 = vpack.c.bf16 %v2693, %v2689
      %v2795 = vpack.c.bf16 %v1684, %v1680
      %v2796 = vpack.c.bf16 %v1686, %v1682
      %v2797 = vpack.c.bf16 %v1797, %v1793
      %v2798 = vpack.c.bf16 %v1799, %v1795
      %v2799 = vpack.c.bf16 %v1910, %v1906
      %v2800 = vpack.c.bf16 %v1912, %v1908
      %v2801 = vpack.c.bf16 %v2023, %v2019
      %v2802 = vpack.c.bf16 %v2025, %v2021
      %v2803 = vpack.c.bf16 %v2136, %v2132
      %v2804 = vpack.c.bf16 %v2138, %v2134
      %v2805 = vpack.c.bf16 %v2249, %v2245
      %v2806 = vpack.c.bf16 %v2251, %v2247
      %v2807 = vpack.c.bf16 %v2362, %v2358
      %v2808 = vpack.c.bf16 %v2364, %v2360
      %v2809 = vpack.c.bf16 %v2475, %v2471
      %v2810 = vpack.c.bf16 %v2477, %v2473
      %v2811 = vpack.c.bf16 %v2588, %v2584
      %v2812 = vpack.c.bf16 %v2590, %v2586
      %v2813 = vpack.c.bf16 %v2701, %v2697
      %v2814 = vpack.c.bf16 %v2703, %v2699
      %v2815 = vpack.c.bf16 %v1694, %v1690
      %v2816 = vpack.c.bf16 %v1696, %v1692
      %v2817 = vpack.c.bf16 %v1807, %v1803
      %v2818 = vpack.c.bf16 %v1809, %v1805
      %v2819 = vpack.c.bf16 %v1920, %v1916
      %v2820 = vpack.c.bf16 %v1922, %v1918
      %v2821 = vpack.c.bf16 %v2033, %v2029
      %v2822 = vpack.c.bf16 %v2035, %v2031
      %v2823 = vpack.c.bf16 %v2146, %v2142
      %v2824 = vpack.c.bf16 %v2148, %v2144
      %v2825 = vpack.c.bf16 %v2259, %v2255
      %v2826 = vpack.c.bf16 %v2261, %v2257
      %v2827 = vpack.c.bf16 %v2372, %v2368
      %v2828 = vpack.c.bf16 %v2374, %v2370
      %v2829 = vpack.c.bf16 %v2485, %v2481
      %v2830 = vpack.c.bf16 %v2487, %v2483
      %v2831 = vpack.c.bf16 %v2598, %v2594
      %v2832 = vpack.c.bf16 %v2600, %v2596
      %v2833 = vpack.c.bf16 %v2711, %v2707
      %v2834 = vpack.c.bf16 %v2713, %v2709
      %v2835 = vpack.c.bf16 %v1704, %v1700
      %v2836 = vpack.c.bf16 %v1706, %v1702
      %v2837 = vpack.c.bf16 %v1817, %v1813
      %v2838 = vpack.c.bf16 %v1819, %v1815
      %v2839 = vpack.c.bf16 %v1930, %v1926
      %v2840 = vpack.c.bf16 %v1932, %v1928
      %v2841 = vpack.c.bf16 %v2043, %v2039
      %v2842 = vpack.c.bf16 %v2045, %v2041
      %v2843 = vpack.c.bf16 %v2156, %v2152
      %v2844 = vpack.c.bf16 %v2158, %v2154
      %v2845 = vpack.c.bf16 %v2269, %v2265
      %v2846 = vpack.c.bf16 %v2271, %v2267
      %v2847 = vpack.c.bf16 %v2382, %v2378
      %v2848 = vpack.c.bf16 %v2384, %v2380
      %v2849 = vpack.c.bf16 %v2495, %v2491
      %v2850 = vpack.c.bf16 %v2497, %v2493
      %v2851 = vpack.c.bf16 %v2608, %v2604
      %v2852 = vpack.c.bf16 %v2610, %v2606
      %v2853 = vpack.c.bf16 %v2721, %v2717
      %v2854 = vpack.c.bf16 %v2723, %v2719
      %v2855 = vpack.c.bf16 %v1714, %v1710
      %v2856 = vpack.c.bf16 %v1716, %v1712
      %v2857 = vpack.c.bf16 %v1827, %v1823
      %v2858 = vpack.c.bf16 %v1829, %v1825
      %v2859 = vpack.c.bf16 %v1940, %v1936
      %v2860 = vpack.c.bf16 %v1942, %v1938
      %v2861 = vpack.c.bf16 %v2053, %v2049
      %v2862 = vpack.c.bf16 %v2055, %v2051
      %v2863 = vpack.c.bf16 %v2166, %v2162
      %v2864 = vpack.c.bf16 %v2168, %v2164
      %v2865 = vpack.c.bf16 %v2279, %v2275
      %v2866 = vpack.c.bf16 %v2281, %v2277
      %v2867 = vpack.c.bf16 %v2392, %v2388
      %v2868 = vpack.c.bf16 %v2394, %v2390
      %v2869 = vpack.c.bf16 %v2505, %v2501
      %v2870 = vpack.c.bf16 %v2507, %v2503
      %v2871 = vpack.c.bf16 %v2618, %v2614
      %v2872 = vpack.c.bf16 %v2620, %v2616
      %v2873 = vpack.c.bf16 %v2731, %v2727
      %v2874 = vpack.c.bf16 %v2733, %v2729
      %v2875 = vpack.c.bf16 %v1724, %v1720
      %v2876 = vpack.c.bf16 %v1726, %v1722
      %v2877 = vpack.c.bf16 %v1837, %v1833
      %v2878 = vpack.c.bf16 %v1839, %v1835
      %v2879 = vpack.c.bf16 %v1950, %v1946
      %v2880 = vpack.c.bf16 %v1952, %v1948
      %v2881 = vpack.c.bf16 %v2063, %v2059
      %v2882 = vpack.c.bf16 %v2065, %v2061
      %v2883 = vpack.c.bf16 %v2176, %v2172
      %v2884 = vpack.c.bf16 %v2178, %v2174
      %v2885 = vpack.c.bf16 %v2289, %v2285
      %v2886 = vpack.c.bf16 %v2291, %v2287
      %v2887 = vpack.c.bf16 %v2402, %v2398
      %v2888 = vpack.c.bf16 %v2404, %v2400
      %v2889 = vpack.c.bf16 %v2515, %v2511
      %v2890 = vpack.c.bf16 %v2517, %v2513
      %v2891 = vpack.c.bf16 %v2628, %v2624
      %v2892 = vpack.c.bf16 %v2630, %v2626
      %v2893 = vpack.c.bf16 %v2741, %v2737
      %v2894 = vpack.c.bf16 %v2743, %v2739
      %v2895 = vpack.c.bf16 %v1734, %v1730
      %v2896 = vpack.c.bf16 %v1736, %v1732
      %v2897 = vpack.c.bf16 %v1847, %v1843
      %v2898 = vpack.c.bf16 %v1849, %v1845
      %v2899 = vpack.c.bf16 %v1960, %v1956
      %v2900 = vpack.c.bf16 %v1962, %v1958
      %v2901 = vpack.c.bf16 %v2073, %v2069
      %v2902 = vpack.c.bf16 %v2075, %v2071
      %v2903 = vpack.c.bf16 %v2186, %v2182
      %v2904 = vpack.c.bf16 %v2188, %v2184
      %v2905 = vpack.c.bf16 %v2299, %v2295
      %v2906 = vpack.c.bf16 %v2301, %v2297
      %v2907 = vpack.c.bf16 %v2412, %v2408
      %v2908 = vpack.c.bf16 %v2414, %v2410
      %v2909 = vpack.c.bf16 %v2525, %v2521
      %v2910 = vpack.c.bf16 %v2527, %v2523
      %v2911 = vpack.c.bf16 %v2638, %v2634
      %v2912 = vpack.c.bf16 %v2640, %v2636
      %v2913 = vpack.c.bf16 %v2751, %v2747
      %v2914 = vpack.c.bf16 %v2753, %v2749
      %v2915 = vld [vmem:[%s4] sm:$0xff]
      %v2916 = vld [vmem:[%s4 + $0x8] sm:$0xff]
      %v2917 = vld [vmem:[%s4 + $0x10] sm:$0xff]
      %v2918 = vld [vmem:[%s4 + $0x18] sm:$0xff]
      %v2919 = vld [vmem:[%s4 + $0x20] sm:$0xff]
      %v2920 = vld [vmem:[%s4 + $0x28] sm:$0xff]
      %v2921 = vld [vmem:[%s4 + $0x30] sm:$0xff]
      %v2922 = vld [vmem:[%s4 + $0x38] sm:$0xff]
      %v2923 = vld [vmem:[%s4 + $0x40] sm:$0xff]
      %v2924 = vld [vmem:[%s4 + $0x48] sm:$0xff]
      %v2925 = vld [vmem:[%s4 + $0x50] sm:$0xff]
      %v2926 = vld [vmem:[%s4 + $0x58] sm:$0xff]
      %v2927 = vld [vmem:[%s4 + $0x60] sm:$0xff]
      %v2928 = vld [vmem:[%s4 + $0x68] sm:$0xff]
      %v2929 = vld [vmem:[%s4 + $0x70] sm:$0xff]
      %v2930 = vld [vmem:[%s4 + $0x78] sm:$0xff]
      %v2931 = vpack.c.bf16 %v2916, %v2915
      %v2932 = vpack.c.bf16 %v2918, %v2917
      %v2933 = vpack.c.bf16 %v2920, %v2919
      %v2934 = vpack.c.bf16 %v2922, %v2921
      %v2935 = vpack.c.bf16 %v2924, %v2923
      %v2936 = vpack.c.bf16 %v2926, %v2925
      %v2937 = vpack.c.bf16 %v2928, %v2927
      %v2938 = vpack.c.bf16 %v2930, %v2929
      %2940 = vset.pattern.permute.xlu0 0
      %2941 = vperm.xlu0 %2940, %v2931
      %v2942 = vpop.permute.xlu0 %2941
      %2945 = vset.pattern.permute.xlu0 0
      %2946 = vperm.xlu0 %2945, %v2932
      %v2947 = vpop.permute.xlu0 %2946
      %2950 = vset.pattern.permute.xlu0 0
      %2951 = vperm.xlu0 %2950, %v2933
      %v2952 = vpop.permute.xlu0 %2951
      %2955 = vset.pattern.permute.xlu0 0
      %2956 = vperm.xlu0 %2955, %v2934
      %v2957 = vpop.permute.xlu0 %2956
      %2960 = vset.pattern.permute.xlu0 0
      %2961 = vperm.xlu0 %2960, %v2935
      %v2962 = vpop.permute.xlu0 %2961
      %2965 = vset.pattern.permute.xlu0 0
      %2966 = vperm.xlu0 %2965, %v2936
      %v2967 = vpop.permute.xlu0 %2966
      %2970 = vset.pattern.permute.xlu0 0
      %2971 = vperm.xlu0 %2970, %v2937
      %v2972 = vpop.permute.xlu0 %2971
      %2975 = vset.pattern.permute.xlu0 0
      %2976 = vperm.xlu0 %2975, %v2938
      %v2977 = vpop.permute.xlu0 %2976
      %v2979 = vadd.bf16 %v2755, %v2942
      %v2980 = vadd.bf16 %v2756, %v2942
      %v2981 = vadd.bf16 %v2757, %v2942
      %v2982 = vadd.bf16 %v2758, %v2942
      %v2983 = vadd.bf16 %v2759, %v2942
      %v2984 = vadd.bf16 %v2760, %v2942
      %v2985 = vadd.bf16 %v2761, %v2942
      %v2986 = vadd.bf16 %v2762, %v2942
      %v2987 = vadd.bf16 %v2763, %v2942
      %v2988 = vadd.bf16 %v2764, %v2942
      %v2989 = vadd.bf16 %v2765, %v2942
      %v2990 = vadd.bf16 %v2766, %v2942
      %v2991 = vadd.bf16 %v2767, %v2942
      %v2992 = vadd.bf16 %v2768, %v2942
      %v2993 = vadd.bf16 %v2769, %v2942
      %v2994 = vadd.bf16 %v2770, %v2942
      %v2995 = vadd.bf16 %v2771, %v2942
      %v2996 = vadd.bf16 %v2772, %v2942
      %v2997 = vadd.bf16 %v2773, %v2942
      %v2998 = vadd.bf16 %v2774, %v2942
      %v2999 = vadd.bf16 %v2775, %v2947
      %v3000 = vadd.bf16 %v2776, %v2947
      %v3001 = vadd.bf16 %v2777, %v2947
      %v3002 = vadd.bf16 %v2778, %v2947
      %v3003 = vadd.bf16 %v2779, %v2947
      %v3004 = vadd.bf16 %v2780, %v2947
      %v3005 = vadd.bf16 %v2781, %v2947
      %v3006 = vadd.bf16 %v2782, %v2947
      %v3007 = vadd.bf16 %v2783, %v2947
      %v3008 = vadd.bf16 %v2784, %v2947
      %v3009 = vadd.bf16 %v2785, %v2947
      %v3010 = vadd.bf16 %v2786, %v2947
      %v3011 = vadd.bf16 %v2787, %v2947
      %v3012 = vadd.bf16 %v2788, %v2947
      %v3013 = vadd.bf16 %v2789, %v2947
      %v3014 = vadd.bf16 %v2790, %v2947
      %v3015 = vadd.bf16 %v2791, %v2947
      %v3016 = vadd.bf16 %v2792, %v2947
      %v3017 = vadd.bf16 %v2793, %v2947
      %v3018 = vadd.bf16 %v2794, %v2947
      %v3019 = vadd.bf16 %v2795, %v2952
      %v3020 = vadd.bf16 %v2796, %v2952
      %v3021 = vadd.bf16 %v2797, %v2952
      %v3022 = vadd.bf16 %v2798, %v2952
      %v3023 = vadd.bf16 %v2799, %v2952
      %v3024 = vadd.bf16 %v2800, %v2952
      %v3025 = vadd.bf16 %v2801, %v2952
      %v3026 = vadd.bf16 %v2802, %v2952
      %v3027 = vadd.bf16 %v2803, %v2952
      %v3028 = vadd.bf16 %v2804, %v2952
      %v3029 = vadd.bf16 %v2805, %v2952
      %v3030 = vadd.bf16 %v2806, %v2952
      %v3031 = vadd.bf16 %v2807, %v2952
      %v3032 = vadd.bf16 %v2808, %v2952
      %v3033 = vadd.bf16 %v2809, %v2952
      %v3034 = vadd.bf16 %v2810, %v2952
      %v3035 = vadd.bf16 %v2811, %v2952
      %v3036 = vadd.bf16 %v2812, %v2952
      %v3037 = vadd.bf16 %v2813, %v2952
      %v3038 = vadd.bf16 %v2814, %v2952
      %v3039 = vadd.bf16 %v2815, %v2957
      %v3040 = vadd.bf16 %v2816, %v2957
      %v3041 = vadd.bf16 %v2817, %v2957
      %v3042 = vadd.bf16 %v2818, %v2957
      %v3043 = vadd.bf16 %v2819, %v2957
      %v3044 = vadd.bf16 %v2820, %v2957
      %v3045 = vadd.bf16 %v2821, %v2957
      %v3046 = vadd.bf16 %v2822, %v2957
      %v3047 = vadd.bf16 %v2823, %v2957
      %v3048 = vadd.bf16 %v2824, %v2957
      %v3049 = vadd.bf16 %v2825, %v2957
      %v3050 = vadd.bf16 %v2826, %v2957
      %v3051 = vadd.bf16 %v2827, %v2957
      %v3052 = vadd.bf16 %v2828, %v2957
      %v3053 = vadd.bf16 %v2829, %v2957
      %v3054 = vadd.bf16 %v2830, %v2957
      %v3055 = vadd.bf16 %v2831, %v2957
      %v3056 = vadd.bf16 %v2832, %v2957
      %v3057 = vadd.bf16 %v2833, %v2957
      %v3058 = vadd.bf16 %v2834, %v2957
      %v3059 = vadd.bf16 %v2835, %v2962
      %v3060 = vadd.bf16 %v2836, %v2962
      %v3061 = vadd.bf16 %v2837, %v2962
      %v3062 = vadd.bf16 %v2838, %v2962
      %v3063 = vadd.bf16 %v2839, %v2962
      %v3064 = vadd.bf16 %v2840, %v2962
      %v3065 = vadd.bf16 %v2841, %v2962
      %v3066 = vadd.bf16 %v2842, %v2962
      %v3067 = vadd.bf16 %v2843, %v2962
      %v3068 = vadd.bf16 %v2844, %v2962
      %v3069 = vadd.bf16 %v2845, %v2962
      %v3070 = vadd.bf16 %v2846, %v2962
      %v3071 = vadd.bf16 %v2847, %v2962
      %v3072 = vadd.bf16 %v2848, %v2962
      %v3073 = vadd.bf16 %v2849, %v2962
      %v3074 = vadd.bf16 %v2850, %v2962
      %v3075 = vadd.bf16 %v2851, %v2962
      %v3076 = vadd.bf16 %v2852, %v2962
      %v3077 = vadd.bf16 %v2853, %v2962
      %v3078 = vadd.bf16 %v2854, %v2962
      %v3079 = vadd.bf16 %v2855, %v2967
      %v3080 = vadd.bf16 %v2856, %v2967
      %v3081 = vadd.bf16 %v2857, %v2967
      %v3082 = vadd.bf16 %v2858, %v2967
      %v3083 = vadd.bf16 %v2859, %v2967
      %v3084 = vadd.bf16 %v2860, %v2967
      %v3085 = vadd.bf16 %v2861, %v2967
      %v3086 = vadd.bf16 %v2862, %v2967
      %v3087 = vadd.bf16 %v2863, %v2967
      %v3088 = vadd.bf16 %v2864, %v2967
      %v3089 = vadd.bf16 %v2865, %v2967
      %v3090 = vadd.bf16 %v2866, %v2967
      %v3091 = vadd.bf16 %v2867, %v2967
      %v3092 = vadd.bf16 %v2868, %v2967
      %v3093 = vadd.bf16 %v2869, %v2967
      %v3094 = vadd.bf16 %v2870, %v2967
      %v3095 = vadd.bf16 %v2871, %v2967
      %v3096 = vadd.bf16 %v2872, %v2967
      %v3097 = vadd.bf16 %v2873, %v2967
      %v3098 = vadd.bf16 %v2874, %v2967
      %v3099 = vadd.bf16 %v2875, %v2972
      %v3100 = vadd.bf16 %v2876, %v2972
      %v3101 = vadd.bf16 %v2877, %v2972
      %v3102 = vadd.bf16 %v2878, %v2972
      %v3103 = vadd.bf16 %v2879, %v2972
      %v3104 = vadd.bf16 %v2880, %v2972
      %v3105 = vadd.bf16 %v2881, %v2972
      %v3106 = vadd.bf16 %v2882, %v2972
      %v3107 = vadd.bf16 %v2883, %v2972
      %v3108 = vadd.bf16 %v2884, %v2972
      %v3109 = vadd.bf16 %v2885, %v2972
      %v3110 = vadd.bf16 %v2886, %v2972
      %v3111 = vadd.bf16 %v2887, %v2972
      %v3112 = vadd.bf16 %v2888, %v2972
      %v3113 = vadd.bf16 %v2889, %v2972
      %v3114 = vadd.bf16 %v2890, %v2972
      %v3115 = vadd.bf16 %v2891, %v2972
      %v3116 = vadd.bf16 %v2892, %v2972
      %v3117 = vadd.bf16 %v2893, %v2972
      %v3118 = vadd.bf16 %v2894, %v2972
      %v3119 = vadd.bf16 %v2895, %v2977
      %v3120 = vadd.bf16 %v2896, %v2977
      %v3121 = vadd.bf16 %v2897, %v2977
      %v3122 = vadd.bf16 %v2898, %v2977
      %v3123 = vadd.bf16 %v2899, %v2977
      %v3124 = vadd.bf16 %v2900, %v2977
      %v3125 = vadd.bf16 %v2901, %v2977
      %v3126 = vadd.bf16 %v2902, %v2977
      %v3127 = vadd.bf16 %v2903, %v2977
      %v3128 = vadd.bf16 %v2904, %v2977
      %v3129 = vadd.bf16 %v2905, %v2977
      %v3130 = vadd.bf16 %v2906, %v2977
      %v3131 = vadd.bf16 %v2907, %v2977
      %v3132 = vadd.bf16 %v2908, %v2977
      %v3133 = vadd.bf16 %v2909, %v2977
      %v3134 = vadd.bf16 %v2910, %v2977
      %v3135 = vadd.bf16 %v2911, %v2977
      %v3136 = vadd.bf16 %v2912, %v2977
      %v3137 = vadd.bf16 %v2913, %v2977
      %v3138 = vadd.bf16 %v2914, %v2977
      %v3139 = vmax.bf16 %v2979, 0
      %v3140 = vmax.bf16 %v2980, 0
      %v3141 = vmax.bf16 %v2981, 0
      %v3142 = vmax.bf16 %v2982, 0
      %v3143 = vmax.bf16 %v2983, 0
      %v3144 = vmax.bf16 %v2984, 0
      %v3145 = vmax.bf16 %v2985, 0
      %v3146 = vmax.bf16 %v2986, 0
      %v3147 = vmax.bf16 %v2987, 0
      %v3148 = vmax.bf16 %v2988, 0
      %v3149 = vmax.bf16 %v2989, 0
      %v3150 = vmax.bf16 %v2990, 0
      %v3151 = vmax.bf16 %v2991, 0
      %v3152 = vmax.bf16 %v2992, 0
      %v3153 = vmax.bf16 %v2993, 0
      %v3154 = vmax.bf16 %v2994, 0
      %v3155 = vmax.bf16 %v2995, 0
      %v3156 = vmax.bf16 %v2996, 0
      %v3157 = vmax.bf16 %v2997, 0
      %v3158 = vmax.bf16 %v2998, 0
      %v3159 = vmax.bf16 %v2999, 0
      %v3160 = vmax.bf16 %v3000, 0
      %v3161 = vmax.bf16 %v3001, 0
      %v3162 = vmax.bf16 %v3002, 0
      %v3163 = vmax.bf16 %v3003, 0
      %v3164 = vmax.bf16 %v3004, 0
      %v3165 = vmax.bf16 %v3005, 0
      %v3166 = vmax.bf16 %v3006, 0
      %v3167 = vmax.bf16 %v3007, 0
      %v3168 = vmax.bf16 %v3008, 0
      %v3169 = vmax.bf16 %v3009, 0
      %v3170 = vmax.bf16 %v3010, 0
      %v3171 = vmax.bf16 %v3011, 0
      %v3172 = vmax.bf16 %v3012, 0
      %v3173 = vmax.bf16 %v3013, 0
      %v3174 = vmax.bf16 %v3014, 0
      %v3175 = vmax.bf16 %v3015, 0
      %v3176 = vmax.bf16 %v3016, 0
      %v3177 = vmax.bf16 %v3017, 0
      %v3178 = vmax.bf16 %v3018, 0
      %v3179 = vmax.bf16 %v3019, 0
      %v3180 = vmax.bf16 %v3020, 0
      %v3181 = vmax.bf16 %v3021, 0
      %v3182 = vmax.bf16 %v3022, 0
      %v3183 = vmax.bf16 %v3023, 0
      %v3184 = vmax.bf16 %v3024, 0
      %v3185 = vmax.bf16 %v3025, 0
      %v3186 = vmax.bf16 %v3026, 0
      %v3187 = vmax.bf16 %v3027, 0
      %v3188 = vmax.bf16 %v3028, 0
      %v3189 = vmax.bf16 %v3029, 0
      %v3190 = vmax.bf16 %v3030, 0
      %v3191 = vmax.bf16 %v3031, 0
      %v3192 = vmax.bf16 %v3032, 0
      %v3193 = vmax.bf16 %v3033, 0
      %v3194 = vmax.bf16 %v3034, 0
      %v3195 = vmax.bf16 %v3035, 0
      %v3196 = vmax.bf16 %v3036, 0
      %v3197 = vmax.bf16 %v3037, 0
      %v3198 = vmax.bf16 %v3038, 0
      %v3199 = vmax.bf16 %v3039, 0
      %v3200 = vmax.bf16 %v3040, 0
      %v3201 = vmax.bf16 %v3041, 0
      %v3202 = vmax.bf16 %v3042, 0
      %v3203 = vmax.bf16 %v3043, 0
      %v3204 = vmax.bf16 %v3044, 0
      %v3205 = vmax.bf16 %v3045, 0
      %v3206 = vmax.bf16 %v3046, 0
      %v3207 = vmax.bf16 %v3047, 0
      %v3208 = vmax.bf16 %v3048, 0
      %v3209 = vmax.bf16 %v3049, 0
      %v3210 = vmax.bf16 %v3050, 0
      %v3211 = vmax.bf16 %v3051, 0
      %v3212 = vmax.bf16 %v3052, 0
      %v3213 = vmax.bf16 %v3053, 0
      %v3214 = vmax.bf16 %v3054, 0
      %v3215 = vmax.bf16 %v3055, 0
      %v3216 = vmax.bf16 %v3056, 0
      %v3217 = vmax.bf16 %v3057, 0
      %v3218 = vmax.bf16 %v3058, 0
      %v3219 = vmax.bf16 %v3059, 0
      %v3220 = vmax.bf16 %v3060, 0
      %v3221 = vmax.bf16 %v3061, 0
      %v3222 = vmax.bf16 %v3062, 0
      %v3223 = vmax.bf16 %v3063, 0
      %v3224 = vmax.bf16 %v3064, 0
      %v3225 = vmax.bf16 %v3065, 0
      %v3226 = vmax.bf16 %v3066, 0
      %v3227 = vmax.bf16 %v3067, 0
      %v3228 = vmax.bf16 %v3068, 0
      %v3229 = vmax.bf16 %v3069, 0
      %v3230 = vmax.bf16 %v3070, 0
      %v3231 = vmax.bf16 %v3071, 0
      %v3232 = vmax.bf16 %v3072, 0
      %v3233 = vmax.bf16 %v3073, 0
      %v3234 = vmax.bf16 %v3074, 0
      %v3235 = vmax.bf16 %v3075, 0
      %v3236 = vmax.bf16 %v3076, 0
      %v3237 = vmax.bf16 %v3077, 0
      %v3238 = vmax.bf16 %v3078, 0
      %v3239 = vmax.bf16 %v3079, 0
      %v3240 = vmax.bf16 %v3080, 0
      %v3241 = vmax.bf16 %v3081, 0
      %v3242 = vmax.bf16 %v3082, 0
      %v3243 = vmax.bf16 %v3083, 0
      %v3244 = vmax.bf16 %v3084, 0
      %v3245 = vmax.bf16 %v3085, 0
      %v3246 = vmax.bf16 %v3086, 0
      %v3247 = vmax.bf16 %v3087, 0
      %v3248 = vmax.bf16 %v3088, 0
      %v3249 = vmax.bf16 %v3089, 0
      %v3250 = vmax.bf16 %v3090, 0
      %v3251 = vmax.bf16 %v3091, 0
      %v3252 = vmax.bf16 %v3092, 0
      %v3253 = vmax.bf16 %v3093, 0
      %v3254 = vmax.bf16 %v3094, 0
      %v3255 = vmax.bf16 %v3095, 0
      %v3256 = vmax.bf16 %v3096, 0
      %v3257 = vmax.bf16 %v3097, 0
      %v3258 = vmax.bf16 %v3098, 0
      %v3259 = vmax.bf16 %v3099, 0
      %v3260 = vmax.bf16 %v3100, 0
      %v3261 = vmax.bf16 %v3101, 0
      %v3262 = vmax.bf16 %v3102, 0
      %v3263 = vmax.bf16 %v3103, 0
      %v3264 = vmax.bf16 %v3104, 0
      %v3265 = vmax.bf16 %v3105, 0
      %v3266 = vmax.bf16 %v3106, 0
      %v3267 = vmax.bf16 %v3107, 0
      %v3268 = vmax.bf16 %v3108, 0
      %v3269 = vmax.bf16 %v3109, 0
      %v3270 = vmax.bf16 %v3110, 0
      %v3271 = vmax.bf16 %v3111, 0
      %v3272 = vmax.bf16 %v3112, 0
      %v3273 = vmax.bf16 %v3113, 0
      %v3274 = vmax.bf16 %v3114, 0
      %v3275 = vmax.bf16 %v3115, 0
      %v3276 = vmax.bf16 %v3116, 0
      %v3277 = vmax.bf16 %v3117, 0
      %v3278 = vmax.bf16 %v3118, 0
      %v3279 = vmax.bf16 %v3119, 0
      %v3280 = vmax.bf16 %v3120, 0
      %v3281 = vmax.bf16 %v3121, 0
      %v3282 = vmax.bf16 %v3122, 0
      %v3283 = vmax.bf16 %v3123, 0
      %v3284 = vmax.bf16 %v3124, 0
      %v3285 = vmax.bf16 %v3125, 0
      %v3286 = vmax.bf16 %v3126, 0
      %v3287 = vmax.bf16 %v3127, 0
      %v3288 = vmax.bf16 %v3128, 0
      %v3289 = vmax.bf16 %v3129, 0
      %v3290 = vmax.bf16 %v3130, 0
      %v3291 = vmax.bf16 %v3131, 0
      %v3292 = vmax.bf16 %v3132, 0
      %v3293 = vmax.bf16 %v3133, 0
      %v3294 = vmax.bf16 %v3134, 0
      %v3295 = vmax.bf16 %v3135, 0
      %v3296 = vmax.bf16 %v3136, 0
      %v3297 = vmax.bf16 %v3137, 0
      %v3298 = vmax.bf16 %v3138, 0
      %v3299 = vld [vmem:[%s5] sm:$0xf]
      %v3300 = vld [vmem:[%s5 + $0x4] sm:$0xf]
      %v3301 = vld [vmem:[%s5 + $0x8] sm:$0xf]
      %v3302 = vld [vmem:[%s5 + $0xc] sm:$0xf]
      %v3303 = vld [vmem:[%s5 + $0x10] sm:$0xf]
      %v3304 = vld [vmem:[%s5 + $0x14] sm:$0xf]
      %v3305 = vld [vmem:[%s5 + $0x18] sm:$0xf]
      %v3306 = vld [vmem:[%s5 + $0x1c] sm:$0xf]
      %v3307 = vld [vmem:[%s5 + $0x20] sm:$0xf]
      %v3308 = vld [vmem:[%s5 + $0x24] sm:$0xf]
      %v3309 = vld [vmem:[%s5 + $0x28] sm:$0xf]
      %v3310 = vld [vmem:[%s5 + $0x2c] sm:$0xf]
      %v3311 = vld [vmem:[%s5 + $0x30] sm:$0xf]
      %v3312 = vld [vmem:[%s5 + $0x34] sm:$0xf]
      %v3313 = vld [vmem:[%s5 + $0x38] sm:$0xf]
      %v3314 = vld [vmem:[%s5 + $0x3c] sm:$0xf]
      %v3315 = vld [vmem:[%s5 + $0x40] sm:$0xf]
      %v3316 = vld [vmem:[%s5 + $0x44] sm:$0xf]
      %v3317 = vld [vmem:[%s5 + $0x48] sm:$0xf]
      %v3318 = vld [vmem:[%s5 + $0x4c] sm:$0xf]
      %v3319 = vld [vmem:[%s5 + $0x50] sm:$0xf]
      %v3320 = vld [vmem:[%s5 + $0x54] sm:$0xf]
      %v3321 = vld [vmem:[%s5 + $0x58] sm:$0xf]
      %v3322 = vld [vmem:[%s5 + $0x5c] sm:$0xf]
      %v3323 = vld [vmem:[%s5 + $0x60] sm:$0xf]
      %v3324 = vld [vmem:[%s5 + $0x64] sm:$0xf]
      %v3325 = vld [vmem:[%s5 + $0x68] sm:$0xf]
      %v3326 = vld [vmem:[%s5 + $0x6c] sm:$0xf]
      %v3327 = vld [vmem:[%s5 + $0x70] sm:$0xf]
      %v3328 = vld [vmem:[%s5 + $0x74] sm:$0xf]
      %v3329 = vld [vmem:[%s5 + $0x78] sm:$0xf]
      %v3330 = vld [vmem:[%s5 + $0x7c] sm:$0xf]
      %v3363 = vunpack.c.l.b16 %v3299
      %v3364 = vunpack.c.l.b16 %v3300
      %v3365 = vunpack.c.l.b16 %v3301
      %v3366 = vunpack.c.l.b16 %v3302
      %v3367 = vunpack.c.l.b16 %v3303
      %v3368 = vunpack.c.l.b16 %v3304
      %v3369 = vunpack.c.l.b16 %v3305
      %v3370 = vunpack.c.l.b16 %v3306
      %v3371 = vunpack.c.l.b16 %v3307
      %v3372 = vunpack.c.l.b16 %v3308
      %v3373 = vunpack.c.l.b16 %v3309
      %v3374 = vunpack.c.l.b16 %v3310
      %v3375 = vunpack.c.l.b16 %v3311
      %v3376 = vunpack.c.l.b16 %v3312
      %v3377 = vunpack.c.l.b16 %v3313
      %v3378 = vunpack.c.l.b16 %v3314
      %v3379 = vunpack.c.l.b16 %v3315
      %v3380 = vunpack.c.l.b16 %v3316
      %v3381 = vunpack.c.l.b16 %v3317
      %v3382 = vunpack.c.l.b16 %v3318
      %v3383 = vunpack.c.l.b16 %v3319
      %v3384 = vunpack.c.l.b16 %v3320
      %v3385 = vunpack.c.l.b16 %v3321
      %v3386 = vunpack.c.l.b16 %v3322
      %v3387 = vunpack.c.l.b16 %v3323
      %v3388 = vunpack.c.l.b16 %v3324
      %v3389 = vunpack.c.l.b16 %v3325
      %v3390 = vunpack.c.l.b16 %v3326
      %v3391 = vunpack.c.l.b16 %v3327
      %v3392 = vunpack.c.l.b16 %v3328
      %v3393 = vunpack.c.l.b16 %v3329
      %v3394 = vunpack.c.l.b16 %v3330
      %v3395 = vpack.c.b16 %v3364, %v3363
      %v3396 = vpack.c.b16 %v3366, %v3365
      %v3397 = vpack.c.b16 %v3368, %v3367
      %v3398 = vpack.c.b16 %v3370, %v3369
      %v3399 = vpack.c.b16 %v3372, %v3371
      %v3400 = vpack.c.b16 %v3374, %v3373
      %v3401 = vpack.c.b16 %v3376, %v3375
      %v3402 = vpack.c.b16 %v3378, %v3377
      %v3403 = vpack.c.b16 %v3380, %v3379
      %v3404 = vpack.c.b16 %v3382, %v3381
      %v3405 = vpack.c.b16 %v3384, %v3383
      %v3406 = vpack.c.b16 %v3386, %v3385
      %v3407 = vpack.c.b16 %v3388, %v3387
      %v3408 = vpack.c.b16 %v3390, %v3389
      %v3409 = vpack.c.b16 %v3392, %v3391
      %v3410 = vpack.c.b16 %v3394, %v3393
      %3427 = vmatprep.subr.bf16.mxu0 %v3140
      %3428 = vmatpush1.bf16.msra.mxu0 %v3139
      %3429 = vmatprep.subr.bf16.mxu0 %v3160
      %3430 = vmatpush1.bf16.msra.mxu0 %v3159
      %3431 = vmatprep.subr.bf16.mxu0 %v3180
      %3432 = vmatpush1.bf16.msra.mxu0 %v3179
      %3433 = vmatprep.subr.bf16.mxu0 %v3200
      %3434 = vmatpush1.bf16.msra.mxu0 %v3199
      %3435 = vmatprep.subr.bf16.mxu0 %v3220
      %3436 = vmatpush1.bf16.msra.mxu0 %v3219
      %3437 = vmatprep.subr.bf16.mxu0 %v3240
      %3438 = vmatpush1.bf16.msra.mxu0 %v3239
      %3439 = vmatprep.subr.bf16.mxu0 %v3260
      %3440 = vmatpush1.bf16.msra.mxu0 %v3259
      %3441 = vmatprep.subr.bf16.mxu0 %v3280
      %3442 = vmatpush1.bf16.msra.mxu0 %v3279
      %3443 = vmatprep.subr.bf16.mxu0 0
      %3444 = vmatpush1.bf16.msra.mxu0 0
      %3445 = vmatprep.subr.bf16.mxu0 0
      %3446 = vmatpush1.bf16.msra.mxu0 0
      %3447 = vmatprep.subr.bf16.mxu0 0
      %3448 = vmatpush1.bf16.msra.mxu0 0
      %3449 = vmatprep.subr.bf16.mxu0 0
      %3450 = vmatpush1.bf16.msra.mxu0 0
      %3451 = vmatprep.subr.bf16.mxu0 0
      %3452 = vmatpush1.bf16.msra.mxu0 0
      %3453 = vmatprep.subr.bf16.mxu0 0
      %3454 = vmatpush1.bf16.msra.mxu0 0
      %3455 = vmatprep.subr.bf16.mxu0 0
      %3456 = vmatpush1.bf16.msra.mxu0 0
      %3457 = vmatprep.subr.bf16.mxu0 0
      %3458 = vmatpush1.bf16.msra.mxu0 0
      %3459 = vmatprep.mubr.bf16.mxu0 0
      %3460 = vmatmul.mubr.bf16.gmra.mrb[0].mxu0 %v3395
      %v3461 = vpop.f32.mrb[0].mxu0
      %v3462 = vadd.f32 0.0, %v3461
      %v3463 = vpop.f32.mrb[0].mxu0
      %v3464 = vadd.f32 0.0, %v3463
      %v3465 = vpop.f32.mrb[0].mxu0
      %v3466 = vadd.f32 0.0, %v3465
      %v3467 = vpop.f32.mrb[0].mxu0
      %v3468 = vadd.f32 0.0, %v3467
      %3469 = vmatprep.mubr.bf16.mxu0 0
      %3470 = vmatmul.mubr.bf16.gmra.mrb[0].mxu0 %v3396
      %v3471 = vpop.f32.mrb[0].mxu0
      %v3472 = vadd.f32 0.0, %v3471
      %v3473 = vpop.f32.mrb[0].mxu0
      %v3474 = vadd.f32 0.0, %v3473
      %v3475 = vpop.f32.mrb[0].mxu0
      %v3476 = vadd.f32 0.0, %v3475
      %v3477 = vpop.f32.mrb[0].mxu0
      %v3478 = vadd.f32 0.0, %v3477
      %3479 = vmatprep.mubr.bf16.mxu0 0
      %3480 = vmatmul.mubr.bf16.gmra.mrb[0].mxu0 %v3397
      %v3481 = vpop.f32.mrb[0].mxu0
      %v3482 = vadd.f32 0.0, %v3481
      %v3483 = vpop.f32.mrb[0].mxu0
      %v3484 = vadd.f32 0.0, %v3483
      %v3485 = vpop.f32.mrb[0].mxu0
      %v3486 = vadd.f32 0.0, %v3485
      %v3487 = vpop.f32.mrb[0].mxu0
      %v3488 = vadd.f32 0.0, %v3487
      %3489 = vmatprep.mubr.bf16.mxu0 0
      %3490 = vmatmul.mubr.bf16.gmra.mrb[0].mxu0 %v3398
      %v3491 = vpop.f32.mrb[0].mxu0
      %v3492 = vadd.f32 0.0, %v3491
      %v3493 = vpop.f32.mrb[0].mxu0
      %v3494 = vadd.f32 0.0, %v3493
      %v3495 = vpop.f32.mrb[0].mxu0
      %v3496 = vadd.f32 0.0, %v3495
      %v3497 = vpop.f32.mrb[0].mxu0
      %v3498 = vadd.f32 0.0, %v3497
      %3499 = vmatprep.mubr.bf16.mxu0 0
      %3500 = vmatmul.mubr.bf16.gmra.mrb[0].mxu0 %v3399
      %v3501 = vpop.f32.mrb[0].mxu0
      %v3502 = vadd.f32 0.0, %v3501
      %v3503 = vpop.f32.mrb[0].mxu0
      %v3504 = vadd.f32 0.0, %v3503
      %v3505 = vpop.f32.mrb[0].mxu0
      %v3506 = vadd.f32 0.0, %v3505
      %v3507 = vpop.f32.mrb[0].mxu0
      %v3508 = vadd.f32 0.0, %v3507
      %3509 = vmatprep.mubr.bf16.mxu0 0
      %3510 = vmatmul.mubr.bf16.gmra.mrb[0].mxu0 %v3400
      %v3511 = vpop.f32.mrb[0].mxu0
      %v3512 = vadd.f32 0.0, %v3511
      %v3513 = vpop.f32.mrb[0].mxu0
      %v3514 = vadd.f32 0.0, %v3513
      %v3515 = vpop.f32.mrb[0].mxu0
      %v3516 = vadd.f32 0.0, %v3515
      %v3517 = vpop.f32.mrb[0].mxu0
      %v3518 = vadd.f32 0.0, %v3517
      %3519 = vmatprep.mubr.bf16.mxu0 0
      %3520 = vmatmul.mubr.bf16.gmra.mrb[0].mxu0 %v3401
      %v3521 = vpop.f32.mrb[0].mxu0
      %v3522 = vadd.f32 0.0, %v3521
      %v3523 = vpop.f32.mrb[0].mxu0
      %v3524 = vadd.f32 0.0, %v3523
      %v3525 = vpop.f32.mrb[0].mxu0
      %v3526 = vadd.f32 0.0, %v3525
      %v3527 = vpop.f32.mrb[0].mxu0
      %v3528 = vadd.f32 0.0, %v3527
      %3529 = vmatprep.mubr.bf16.mxu0 0
      %3530 = vmatmul.mubr.bf16.gmra.mrb[0].mxu0 %v3402
      %v3531 = vpop.f32.mrb[0].mxu0
      %v3532 = vadd.f32 0.0, %v3531
      %v3533 = vpop.f32.mrb[0].mxu0
      %v3534 = vadd.f32 0.0, %v3533
      %v3535 = vpop.f32.mrb[0].mxu0
      %v3536 = vadd.f32 0.0, %v3535
      %v3537 = vpop.f32.mrb[0].mxu0
      %v3538 = vadd.f32 0.0, %v3537
      %3539 = vmatprep.mubr.bf16.mxu0 0
      %3540 = vmatmul.mubr.bf16.gmra.mrb[0].mxu0 %v3403
      %v3541 = vpop.f32.mrb[0].mxu0
      %v3542 = vadd.f32 0.0, %v3541
      %v3543 = vpop.f32.mrb[0].mxu0
      %v3544 = vadd.f32 0.0, %v3543
      %v3545 = vpop.f32.mrb[0].mxu0
      %v3546 = vadd.f32 0.0, %v3545
      %v3547 = vpop.f32.mrb[0].mxu0
      %v3548 = vadd.f32 0.0, %v3547
      %3549 = vmatprep.mubr.bf16.mxu0 0
      %3550 = vmatmul.mubr.bf16.gmra.mrb[0].mxu0 %v3404
      %v3551 = vpop.f32.mrb[0].mxu0
      %v3552 = vadd.f32 0.0, %v3551
      %v3553 = vpop.f32.mrb[0].mxu0
      %v3554 = vadd.f32 0.0, %v3553
      %v3555 = vpop.f32.mrb[0].mxu0
      %v3556 = vadd.f32 0.0, %v3555
      %v3557 = vpop.f32.mrb[0].mxu0
      %v3558 = vadd.f32 0.0, %v3557
      %3559 = vmatprep.mubr.bf16.mxu0 0
      %3560 = vmatmul.mubr.bf16.gmra.mrb[0].mxu0 %v3405
      %v3561 = vpop.f32.mrb[0].mxu0
      %v3562 = vadd.f32 0.0, %v3561
      %v3563 = vpop.f32.mrb[0].mxu0
      %v3564 = vadd.f32 0.0, %v3563
      %v3565 = vpop.f32.mrb[0].mxu0
      %v3566 = vadd.f32 0.0, %v3565
      %v3567 = vpop.f32.mrb[0].mxu0
      %v3568 = vadd.f32 0.0, %v3567
      %3569 = vmatprep.mubr.bf16.mxu0 0
      %3570 = vmatmul.mubr.bf16.gmra.mrb[0].mxu0 %v3406
      %v3571 = vpop.f32.mrb[0].mxu0
      %v3572 = vadd.f32 0.0, %v3571
      %v3573 = vpop.f32.mrb[0].mxu0
      %v3574 = vadd.f32 0.0, %v3573
      %v3575 = vpop.f32.mrb[0].mxu0
      %v3576 = vadd.f32 0.0, %v3575
      %v3577 = vpop.f32.mrb[0].mxu0
      %v3578 = vadd.f32 0.0, %v3577
      %3579 = vmatprep.mubr.bf16.mxu0 0
      %3580 = vmatmul.mubr.bf16.gmra.mrb[0].mxu0 %v3407
      %v3581 = vpop.f32.mrb[0].mxu0
      %v3582 = vadd.f32 0.0, %v3581
      %v3583 = vpop.f32.mrb[0].mxu0
      %v3584 = vadd.f32 0.0, %v3583
      %v3585 = vpop.f32.mrb[0].mxu0
      %v3586 = vadd.f32 0.0, %v3585
      %v3587 = vpop.f32.mrb[0].mxu0
      %v3588 = vadd.f32 0.0, %v3587
      %3589 = vmatprep.mubr.bf16.mxu0 0
      %3590 = vmatmul.mubr.bf16.gmra.mrb[0].mxu0 %v3408
      %v3591 = vpop.f32.mrb[0].mxu0
      %v3592 = vadd.f32 0.0, %v3591
      %v3593 = vpop.f32.mrb[0].mxu0
      %v3594 = vadd.f32 0.0, %v3593
      %v3595 = vpop.f32.mrb[0].mxu0
      %v3596 = vadd.f32 0.0, %v3595
      %v3597 = vpop.f32.mrb[0].mxu0
      %v3598 = vadd.f32 0.0, %v3597
      %3599 = vmatprep.mubr.bf16.mxu0 0
      %3600 = vmatmul.mubr.bf16.gmra.mrb[0].mxu0 %v3409
      %v3601 = vpop.f32.mrb[0].mxu0
      %v3602 = vadd.f32 0.0, %v3601
      %v3603 = vpop.f32.mrb[0].mxu0
      %v3604 = vadd.f32 0.0, %v3603
      %v3605 = vpop.f32.mrb[0].mxu0
      %v3606 = vadd.f32 0.0, %v3605
      %v3607 = vpop.f32.mrb[0].mxu0
      %v3608 = vadd.f32 0.0, %v3607
      %3609 = vmatprep.mubr.bf16.mxu0 0
      %3610 = vmatmul.mubr.bf16.gmra.mrb[0].mxu0 %v3410
      %v3611 = vpop.f32.mrb[0].mxu0
      %v3612 = vadd.f32 0.0, %v3611
      %v3613 = vpop.f32.mrb[0].mxu0
      %v3614 = vadd.f32 0.0, %v3613
      %v3615 = vpop.f32.mrb[0].mxu0
      %v3616 = vadd.f32 0.0, %v3615
      %v3617 = vpop.f32.mrb[0].mxu0
      %v3618 = vadd.f32 0.0, %v3617
      %3619 = vdwg.mxu0
      %3620 = vmatprep.subr.bf16.mxu0 %v3142
      %3621 = vmatpush1.bf16.msra.mxu0 %v3141
      %3622 = vmatprep.subr.bf16.mxu0 %v3162
      %3623 = vmatpush1.bf16.msra.mxu0 %v3161
      %3624 = vmatprep.subr.bf16.mxu0 %v3182
      %3625 = vmatpush1.bf16.msra.mxu0 %v3181
      %3626 = vmatprep.subr.bf16.mxu0 %v3202
      %3627 = vmatpush1.bf16.msra.mxu0 %v3201
      %3628 = vmatprep.subr.bf16.mxu0 %v3222
      %3629 = vmatpush1.bf16.msra.mxu0 %v3221
      %3630 = vmatprep.subr.bf16.mxu0 %v3242
      %3631 = vmatpush1.bf16.msra.mxu0 %v3241
      %3632 = vmatprep.subr.bf16.mxu0 %v3262
      %3633 = vmatpush1.bf16.msra.mxu0 %v3261
      %3634 = vmatprep.subr.bf16.mxu0 %v3282
      %3635 = vmatpush1.bf16.msra.mxu0 %v3281
      %3636 = vmatprep.subr.bf16.mxu0 0
      %3637 = vmatpush1.bf16.msra.mxu0 0
      %3638 = vmatprep.subr.bf16.mxu0 0
      %3639 = vmatpush1.bf16.msra.mxu0 0
      %3640 = vmatprep.subr.bf16.mxu0 0
      %3641 = vmatpush1.bf16.msra.mxu0 0
      %3642 = vmatprep.subr.bf16.mxu0 0
      %3643 = vmatpush1.bf16.msra.mxu0 0
      %3644 = vmatprep.subr.bf16.mxu0 0
      %3645 = vmatpush1.bf16.msra.mxu0 0
      %3646 = vmatprep.subr.bf16.mxu0 0
      %3647 = vmatpush1.bf16.msra.mxu0 0
      %3648 = vmatprep.subr.bf16.mxu0 0
      %3649 = vmatpush1.bf16.msra.mxu0 0
      %3650 = vmatprep.subr.bf16.mxu0 0
      %3651 = vmatpush1.bf16.msra.mxu0 0
      %3652 = vmatprep.mubr.bf16.mxu0 0
      %3653 = vmatmul.mubr.bf16.gmra.mrb[0].mxu0 %v3395
      %v3654 = vpop.f32.mrb[0].mxu0
      %v3655 = vadd.f32 0.0, %v3654
      %v3656 = vpop.f32.mrb[0].mxu0
      %v3657 = vadd.f32 0.0, %v3656
      %v3658 = vpop.f32.mrb[0].mxu0
      %v3659 = vadd.f32 0.0, %v3658
      %v3660 = vpop.f32.mrb[0].mxu0
      %v3661 = vadd.f32 0.0, %v3660
      %3662 = vmatprep.mubr.bf16.mxu0 0
      %3663 = vmatmul.mubr.bf16.gmra.mrb[0].mxu0 %v3396
      %v3664 = vpop.f32.mrb[0].mxu0
      %v3665 = vadd.f32 0.0, %v3664
      %v3666 = vpop.f32.mrb[0].mxu0
      %v3667 = vadd.f32 0.0, %v3666
      %v3668 = vpop.f32.mrb[0].mxu0
      %v3669 = vadd.f32 0.0, %v3668
      %v3670 = vpop.f32.mrb[0].mxu0
      %v3671 = vadd.f32 0.0, %v3670
      %3672 = vmatprep.mubr.bf16.mxu0 0
      %3673 = vmatmul.mubr.bf16.gmra.mrb[0].mxu0 %v3397
      %v3674 = vpop.f32.mrb[0].mxu0
      %v3675 = vadd.f32 0.0, %v3674
      %v3676 = vpop.f32.mrb[0].mxu0
      %v3677 = vadd.f32 0.0, %v3676
      %v3678 = vpop.f32.mrb[0].mxu0
      %v3679 = vadd.f32 0.0, %v3678
      %v3680 = vpop.f32.mrb[0].mxu0
      %v3681 = vadd.f32 0.0, %v3680
      %3682 = vmatprep.mubr.bf16.mxu0 0
      %3683 = vmatmul.mubr.bf16.gmra.mrb[0].mxu0 %v3398
      %v3684 = vpop.f32.mrb[0].mxu0
      %v3685 = vadd.f32 0.0, %v3684
      %v3686 = vpop.f32.mrb[0].mxu0
      %v3687 = vadd.f32 0.0, %v3686
      %v3688 = vpop.f32.mrb[0].mxu0
      %v3689 = vadd.f32 0.0, %v3688
      %v3690 = vpop.f32.mrb[0].mxu0
      %v3691 = vadd.f32 0.0, %v3690
      %3692 = vmatprep.mubr.bf16.mxu0 0
      %3693 = vmatmul.mubr.bf16.gmra.mrb[0].mxu0 %v3399
      %v3694 = vpop.f32.mrb[0].mxu0
      %v3695 = vadd.f32 0.0, %v3694
      %v3696 = vpop.f32.mrb[0].mxu0
      %v3697 = vadd.f32 0.0, %v3696
      %v3698 = vpop.f32.mrb[0].mxu0
      %v3699 = vadd.f32 0.0, %v3698
      %v3700 = vpop.f32.mrb[0].mxu0
      %v3701 = vadd.f32 0.0, %v3700
      %3702 = vmatprep.mubr.bf16.mxu0 0
      %3703 = vmatmul.mubr.bf16.gmra.mrb[0].mxu0 %v3400
      %v3704 = vpop.f32.mrb[0].mxu0
      %v3705 = vadd.f32 0.0, %v3704
      %v3706 = vpop.f32.mrb[0].mxu0
      %v3707 = vadd.f32 0.0, %v3706
      %v3708 = vpop.f32.mrb[0].mxu0
      %v3709 = vadd.f32 0.0, %v3708
      %v3710 = vpop.f32.mrb[0].mxu0
      %v3711 = vadd.f32 0.0, %v3710
      %3712 = vmatprep.mubr.bf16.mxu0 0
      %3713 = vmatmul.mubr.bf16.gmra.mrb[0].mxu0 %v3401
      %v3714 = vpop.f32.mrb[0].mxu0
      %v3715 = vadd.f32 0.0, %v3714
      %v3716 = vpop.f32.mrb[0].mxu0
      %v3717 = vadd.f32 0.0, %v3716
      %v3718 = vpop.f32.mrb[0].mxu0
      %v3719 = vadd.f32 0.0, %v3718
      %v3720 = vpop.f32.mrb[0].mxu0
      %v3721 = vadd.f32 0.0, %v3720
      %3722 = vmatprep.mubr.bf16.mxu0 0
      %3723 = vmatmul.mubr.bf16.gmra.mrb[0].mxu0 %v3402
      %v3724 = vpop.f32.mrb[0].mxu0
      %v3725 = vadd.f32 0.0, %v3724
      %v3726 = vpop.f32.mrb[0].mxu0
      %v3727 = vadd.f32 0.0, %v3726
      %v3728 = vpop.f32.mrb[0].mxu0
      %v3729 = vadd.f32 0.0, %v3728
      %v3730 = vpop.f32.mrb[0].mxu0
      %v3731 = vadd.f32 0.0, %v3730
      %3732 = vmatprep.mubr.bf16.mxu0 0
      %3733 = vmatmul.mubr.bf16.gmra.mrb[0].mxu0 %v3403
      %v3734 = vpop.f32.mrb[0].mxu0
      %v3735 = vadd.f32 0.0, %v3734
      %v3736 = vpop.f32.mrb[0].mxu0
      %v3737 = vadd.f32 0.0, %v3736
      %v3738 = vpop.f32.mrb[0].mxu0
      %v3739 = vadd.f32 0.0, %v3738
      %v3740 = vpop.f32.mrb[0].mxu0
      %v3741 = vadd.f32 0.0, %v3740
      %3742 = vmatprep.mubr.bf16.mxu0 0
      %3743 = vmatmul.mubr.bf16.gmra.mrb[0].mxu0 %v3404
      %v3744 = vpop.f32.mrb[0].mxu0
      %v3745 = vadd.f32 0.0, %v3744
      %v3746 = vpop.f32.mrb[0].mxu0
      %v3747 = vadd.f32 0.0, %v3746
      %v3748 = vpop.f32.mrb[0].mxu0
      %v3749 = vadd.f32 0.0, %v3748
      %v3750 = vpop.f32.mrb[0].mxu0
      %v3751 = vadd.f32 0.0, %v3750
      %3752 = vmatprep.mubr.bf16.mxu0 0
      %3753 = vmatmul.mubr.bf16.gmra.mrb[0].mxu0 %v3405
      %v3754 = vpop.f32.mrb[0].mxu0
      %v3755 = vadd.f32 0.0, %v3754
      %v3756 = vpop.f32.mrb[0].mxu0
      %v3757 = vadd.f32 0.0, %v3756
      %v3758 = vpop.f32.mrb[0].mxu0
      %v3759 = vadd.f32 0.0, %v3758
      %v3760 = vpop.f32.mrb[0].mxu0
      %v3761 = vadd.f32 0.0, %v3760
      %3762 = vmatprep.mubr.bf16.mxu0 0
      %3763 = vmatmul.mubr.bf16.gmra.mrb[0].mxu0 %v3406
      %v3764 = vpop.f32.mrb[0].mxu0
      %v3765 = vadd.f32 0.0, %v3764
      %v3766 = vpop.f32.mrb[0].mxu0
      %v3767 = vadd.f32 0.0, %v3766
      %v3768 = vpop.f32.mrb[0].mxu0
      %v3769 = vadd.f32 0.0, %v3768
      %v3770 = vpop.f32.mrb[0].mxu0
      %v3771 = vadd.f32 0.0, %v3770
      %3772 = vmatprep.mubr.bf16.mxu0 0
      %3773 = vmatmul.mubr.bf16.gmra.mrb[0].mxu0 %v3407
      %v3774 = vpop.f32.mrb[0].mxu0
      %v3775 = vadd.f32 0.0, %v3774
      %v3776 = vpop.f32.mrb[0].mxu0
      %v3777 = vadd.f32 0.0, %v3776
      %v3778 = vpop.f32.mrb[0].mxu0
      %v3779 = vadd.f32 0.0, %v3778
      %v3780 = vpop.f32.mrb[0].mxu0
      %v3781 = vadd.f32 0.0, %v3780
      %3782 = vmatprep.mubr.bf16.mxu0 0
      %3783 = vmatmul.mubr.bf16.gmra.mrb[0].mxu0 %v3408
      %v3784 = vpop.f32.mrb[0].mxu0
      %v3785 = vadd.f32 0.0, %v3784
      %v3786 = vpop.f32.mrb[0].mxu0
      %v3787 = vadd.f32 0.0, %v3786
      %v3788 = vpop.f32.mrb[0].mxu0
      %v3789 = vadd.f32 0.0, %v3788
      %v3790 = vpop.f32.mrb[0].mxu0
      %v3791 = vadd.f32 0.0, %v3790
      %3792 = vmatprep.mubr.bf16.mxu0 0
      %3793 = vmatmul.mubr.bf16.gmra.mrb[0].mxu0 %v3409
      %v3794 = vpop.f32.mrb[0].mxu0
      %v3795 = vadd.f32 0.0, %v3794
      %v3796 = vpop.f32.mrb[0].mxu0
      %v3797 = vadd.f32 0.0, %v3796
      %v3798 = vpop.f32.mrb[0].mxu0
      %v3799 = vadd.f32 0.0, %v3798
      %v3800 = vpop.f32.mrb[0].mxu0
      %v3801 = vadd.f32 0.0, %v3800
      %3802 = vmatprep.mubr.bf16.mxu0 0
      %3803 = vmatmul.mubr.bf16.gmra.mrb[0].mxu0 %v3410
      %v3804 = vpop.f32.mrb[0].mxu0
      %v3805 = vadd.f32 0.0, %v3804
      %v3806 = vpop.f32.mrb[0].mxu0
      %v3807 = vadd.f32 0.0, %v3806
      %v3808 = vpop.f32.mrb[0].mxu0
      %v3809 = vadd.f32 0.0, %v3808
      %v3810 = vpop.f32.mrb[0].mxu0
      %v3811 = vadd.f32 0.0, %v3810
      %3812 = vdwg.mxu0
      %3813 = vmatprep.subr.bf16.mxu0 %v3144
      %3814 = vmatpush1.bf16.msra.mxu0 %v3143
      %3815 = vmatprep.subr.bf16.mxu0 %v3164
      %3816 = vmatpush1.bf16.msra.mxu0 %v3163
      %3817 = vmatprep.subr.bf16.mxu0 %v3184
      %3818 = vmatpush1.bf16.msra.mxu0 %v3183
      %3819 = vmatprep.subr.bf16.mxu0 %v3204
      %3820 = vmatpush1.bf16.msra.mxu0 %v3203
      %3821 = vmatprep.subr.bf16.mxu0 %v3224
      %3822 = vmatpush1.bf16.msra.mxu0 %v3223
      %3823 = vmatprep.subr.bf16.mxu0 %v3244
      %3824 = vmatpush1.bf16.msra.mxu0 %v3243
      %3825 = vmatprep.subr.bf16.mxu0 %v3264
      %3826 = vmatpush1.bf16.msra.mxu0 %v3263
      %3827 = vmatprep.subr.bf16.mxu0 %v3284
      %3828 = vmatpush1.bf16.msra.mxu0 %v3283
      %3829 = vmatprep.subr.bf16.mxu0 0
      %3830 = vmatpush1.bf16.msra.mxu0 0
      %3831 = vmatprep.subr.bf16.mxu0 0
      %3832 = vmatpush1.bf16.msra.mxu0 0
      %3833 = vmatprep.subr.bf16.mxu0 0
      %3834 = vmatpush1.bf16.msra.mxu0 0
      %3835 = vmatprep.subr.bf16.mxu0 0
      %3836 = vmatpush1.bf16.msra.mxu0 0
      %3837 = vmatprep.subr.bf16.mxu0 0
      %3838 = vmatpush1.bf16.msra.mxu0 0
      %3839 = vmatprep.subr.bf16.mxu0 0
      %3840 = vmatpush1.bf16.msra.mxu0 0
      %3841 = vmatprep.subr.bf16.mxu0 0
      %3842 = vmatpush1.bf16.msra.mxu0 0
      %3843 = vmatprep.subr.bf16.mxu0 0
      %3844 = vmatpush1.bf16.msra.mxu0 0
      %3845 = vmatprep.mubr.bf16.mxu0 0
      %3846 = vmatmul.mubr.bf16.gmra.mrb[0].mxu0 %v3395
      %v3847 = vpop.f32.mrb[0].mxu0
      %v3848 = vadd.f32 0.0, %v3847
      %v3849 = vpop.f32.mrb[0].mxu0
      %v3850 = vadd.f32 0.0, %v3849
      %v3851 = vpop.f32.mrb[0].mxu0
      %v3852 = vadd.f32 0.0, %v3851
      %v3853 = vpop.f32.mrb[0].mxu0
      %v3854 = vadd.f32 0.0, %v3853
      %3855 = vmatprep.mubr.bf16.mxu0 0
      %3856 = vmatmul.mubr.bf16.gmra.mrb[0].mxu0 %v3396
      %v3857 = vpop.f32.mrb[0].mxu0
      %v3858 = vadd.f32 0.0, %v3857
      %v3859 = vpop.f32.mrb[0].mxu0
      %v3860 = vadd.f32 0.0, %v3859
      %v3861 = vpop.f32.mrb[0].mxu0
      %v3862 = vadd.f32 0.0, %v3861
      %v3863 = vpop.f32.mrb[0].mxu0
      %v3864 = vadd.f32 0.0, %v3863
      %3865 = vmatprep.mubr.bf16.mxu0 0
      %3866 = vmatmul.mubr.bf16.gmra.mrb[0].mxu0 %v3397
      %v3867 = vpop.f32.mrb[0].mxu0
      %v3868 = vadd.f32 0.0, %v3867
      %v3869 = vpop.f32.mrb[0].mxu0
      %v3870 = vadd.f32 0.0, %v3869
      %v3871 = vpop.f32.mrb[0].mxu0
      %v3872 = vadd.f32 0.0, %v3871
      %v3873 = vpop.f32.mrb[0].mxu0
      %v3874 = vadd.f32 0.0, %v3873
      %3875 = vmatprep.mubr.bf16.mxu0 0
      %3876 = vmatmul.mubr.bf16.gmra.mrb[0].mxu0 %v3398
      %v3877 = vpop.f32.mrb[0].mxu0
      %v3878 = vadd.f32 0.0, %v3877
      %v3879 = vpop.f32.mrb[0].mxu0
      %v3880 = vadd.f32 0.0, %v3879
      %v3881 = vpop.f32.mrb[0].mxu0
      %v3882 = vadd.f32 0.0, %v3881
      %v3883 = vpop.f32.mrb[0].mxu0
      %v3884 = vadd.f32 0.0, %v3883
      %3885 = vmatprep.mubr.bf16.mxu0 0
      %3886 = vmatmul.mubr.bf16.gmra.mrb[0].mxu0 %v3399
      %v3887 = vpop.f32.mrb[0].mxu0
      %v3888 = vadd.f32 0.0, %v3887
      %v3889 = vpop.f32.mrb[0].mxu0
      %v3890 = vadd.f32 0.0, %v3889
      %v3891 = vpop.f32.mrb[0].mxu0
      %v3892 = vadd.f32 0.0, %v3891
      %v3893 = vpop.f32.mrb[0].mxu0
      %v3894 = vadd.f32 0.0, %v3893
      %3895 = vmatprep.mubr.bf16.mxu0 0
      %3896 = vmatmul.mubr.bf16.gmra.mrb[0].mxu0 %v3400
      %v3897 = vpop.f32.mrb[0].mxu0
      %v3898 = vadd.f32 0.0, %v3897
      %v3899 = vpop.f32.mrb[0].mxu0
      %v3900 = vadd.f32 0.0, %v3899
      %v3901 = vpop.f32.mrb[0].mxu0
      %v3902 = vadd.f32 0.0, %v3901
      %v3903 = vpop.f32.mrb[0].mxu0
      %v3904 = vadd.f32 0.0, %v3903
      %3905 = vmatprep.mubr.bf16.mxu0 0
      %3906 = vmatmul.mubr.bf16.gmra.mrb[0].mxu0 %v3401
      %v3907 = vpop.f32.mrb[0].mxu0
      %v3908 = vadd.f32 0.0, %v3907
      %v3909 = vpop.f32.mrb[0].mxu0
      %v3910 = vadd.f32 0.0, %v3909
      %v3911 = vpop.f32.mrb[0].mxu0
      %v3912 = vadd.f32 0.0, %v3911
      %v3913 = vpop.f32.mrb[0].mxu0
      %v3914 = vadd.f32 0.0, %v3913
      %3915 = vmatprep.mubr.bf16.mxu0 0
      %3916 = vmatmul.mubr.bf16.gmra.mrb[0].mxu0 %v3402
      %v3917 = vpop.f32.mrb[0].mxu0
      %v3918 = vadd.f32 0.0, %v3917
      %v3919 = vpop.f32.mrb[0].mxu0
      %v3920 = vadd.f32 0.0, %v3919
      %v3921 = vpop.f32.mrb[0].mxu0
      %v3922 = vadd.f32 0.0, %v3921
      %v3923 = vpop.f32.mrb[0].mxu0
      %v3924 = vadd.f32 0.0, %v3923
      %3925 = vmatprep.mubr.bf16.mxu0 0
      %3926 = vmatmul.mubr.bf16.gmra.mrb[0].mxu0 %v3403
      %v3927 = vpop.f32.mrb[0].mxu0
      %v3928 = vadd.f32 0.0, %v3927
      %v3929 = vpop.f32.mrb[0].mxu0
      %v3930 = vadd.f32 0.0, %v3929
      %v3931 = vpop.f32.mrb[0].mxu0
      %v3932 = vadd.f32 0.0, %v3931
      %v3933 = vpop.f32.mrb[0].mxu0
      %v3934 = vadd.f32 0.0, %v3933
      %3935 = vmatprep.mubr.bf16.mxu0 0
      %3936 = vmatmul.mubr.bf16.gmra.mrb[0].mxu0 %v3404
      %v3937 = vpop.f32.mrb[0].mxu0
      %v3938 = vadd.f32 0.0, %v3937
      %v3939 = vpop.f32.mrb[0].mxu0
      %v3940 = vadd.f32 0.0, %v3939
      %v3941 = vpop.f32.mrb[0].mxu0
      %v3942 = vadd.f32 0.0, %v3941
      %v3943 = vpop.f32.mrb[0].mxu0
      %v3944 = vadd.f32 0.0, %v3943
      %3945 = vmatprep.mubr.bf16.mxu0 0
      %3946 = vmatmul.mubr.bf16.gmra.mrb[0].mxu0 %v3405
      %v3947 = vpop.f32.mrb[0].mxu0
      %v3948 = vadd.f32 0.0, %v3947
      %v3949 = vpop.f32.mrb[0].mxu0
      %v3950 = vadd.f32 0.0, %v3949
      %v3951 = vpop.f32.mrb[0].mxu0
      %v3952 = vadd.f32 0.0, %v3951
      %v3953 = vpop.f32.mrb[0].mxu0
      %v3954 = vadd.f32 0.0, %v3953
      %3955 = vmatprep.mubr.bf16.mxu0 0
      %3956 = vmatmul.mubr.bf16.gmra.mrb[0].mxu0 %v3406
      %v3957 = vpop.f32.mrb[0].mxu0
      %v3958 = vadd.f32 0.0, %v3957
      %v3959 = vpop.f32.mrb[0].mxu0
      %v3960 = vadd.f32 0.0, %v3959
      %v3961 = vpop.f32.mrb[0].mxu0
      %v3962 = vadd.f32 0.0, %v3961
      %v3963 = vpop.f32.mrb[0].mxu0
      %v3964 = vadd.f32 0.0, %v3963
      %3965 = vmatprep.mubr.bf16.mxu0 0
      %3966 = vmatmul.mubr.bf16.gmra.mrb[0].mxu0 %v3407
      %v3967 = vpop.f32.mrb[0].mxu0
      %v3968 = vadd.f32 0.0, %v3967
      %v3969 = vpop.f32.mrb[0].mxu0
      %v3970 = vadd.f32 0.0, %v3969
      %v3971 = vpop.f32.mrb[0].mxu0
      %v3972 = vadd.f32 0.0, %v3971
      %v3973 = vpop.f32.mrb[0].mxu0
      %v3974 = vadd.f32 0.0, %v3973
      %3975 = vmatprep.mubr.bf16.mxu0 0
      %3976 = vmatmul.mubr.bf16.gmra.mrb[0].mxu0 %v3408
      %v3977 = vpop.f32.mrb[0].mxu0
      %v3978 = vadd.f32 0.0, %v3977
      %v3979 = vpop.f32.mrb[0].mxu0
      %v3980 = vadd.f32 0.0, %v3979
      %v3981 = vpop.f32.mrb[0].mxu0
      %v3982 = vadd.f32 0.0, %v3981
      %v3983 = vpop.f32.mrb[0].mxu0
      %v3984 = vadd.f32 0.0, %v3983
      %3985 = vmatprep.mubr.bf16.mxu0 0
      %3986 = vmatmul.mubr.bf16.gmra.mrb[0].mxu0 %v3409
      %v3987 = vpop.f32.mrb[0].mxu0
      %v3988 = vadd.f32 0.0, %v3987
      %v3989 = vpop.f32.mrb[0].mxu0
      %v3990 = vadd.f32 0.0, %v3989
      %v3991 = vpop.f32.mrb[0].mxu0
      %v3992 = vadd.f32 0.0, %v3991
      %v3993 = vpop.f32.mrb[0].mxu0
      %v3994 = vadd.f32 0.0, %v3993
      %3995 = vmatprep.mubr.bf16.mxu0 0
      %3996 = vmatmul.mubr.bf16.gmra.mrb[0].mxu0 %v3410
      %v3997 = vpop.f32.mrb[0].mxu0
      %v3998 = vadd.f32 0.0, %v3997
      %v3999 = vpop.f32.mrb[0].mxu0
      %v4000 = vadd.f32 0.0, %v3999
      %v4001 = vpop.f32.mrb[0].mxu0
      %v4002 = vadd.f32 0.0, %v4001
      %v4003 = vpop.f32.mrb[0].mxu0
      %v4004 = vadd.f32 0.0, %v4003
      %4005 = vdwg.mxu0
      %4006 = vmatprep.subr.bf16.mxu0 %v3146
      %4007 = vmatpush1.bf16.msra.mxu0 %v3145
      %4008 = vmatprep.subr.bf16.mxu0 %v3166
      %4009 = vmatpush1.bf16.msra.mxu0 %v3165
      %4010 = vmatprep.subr.bf16.mxu0 %v3186
      %4011 = vmatpush1.bf16.msra.mxu0 %v3185
      %4012 = vmatprep.subr.bf16.mxu0 %v3206
      %4013 = vmatpush1.bf16.msra.mxu0 %v3205
      %4014 = vmatprep.subr.bf16.mxu0 %v3226
      %4015 = vmatpush1.bf16.msra.mxu0 %v3225
      %4016 = vmatprep.subr.bf16.mxu0 %v3246
      %4017 = vmatpush1.bf16.msra.mxu0 %v3245
      %4018 = vmatprep.subr.bf16.mxu0 %v3266
      %4019 = vmatpush1.bf16.msra.mxu0 %v3265
      %4020 = vmatprep.subr.bf16.mxu0 %v3286
      %4021 = vmatpush1.bf16.msra.mxu0 %v3285
      %4022 = vmatprep.subr.bf16.mxu0 0
      %4023 = vmatpush1.bf16.msra.mxu0 0
      %4024 = vmatprep.subr.bf16.mxu0 0
      %4025 = vmatpush1.bf16.msra.mxu0 0
      %4026 = vmatprep.subr.bf16.mxu0 0
      %4027 = vmatpush1.bf16.msra.mxu0 0
      %4028 = vmatprep.subr.bf16.mxu0 0
      %4029 = vmatpush1.bf16.msra.mxu0 0
      %4030 = vmatprep.subr.bf16.mxu0 0
      %4031 = vmatpush1.bf16.msra.mxu0 0
      %4032 = vmatprep.subr.bf16.mxu0 0
      %4033 = vmatpush1.bf16.msra.mxu0 0
      %4034 = vmatprep.subr.bf16.mxu0 0
      %4035 = vmatpush1.bf16.msra.mxu0 0
      %4036 = vmatprep.subr.bf16.mxu0 0
      %4037 = vmatpush1.bf16.msra.mxu0 0
      %4038 = vmatprep.mubr.bf16.mxu0 0
      %4039 = vmatmul.mubr.bf16.gmra.mrb[0].mxu0 %v3395
      %v4040 = vpop.f32.mrb[0].mxu0
      %v4041 = vadd.f32 0.0, %v4040
      %v4042 = vpop.f32.mrb[0].mxu0
      %v4043 = vadd.f32 0.0, %v4042
      %v4044 = vpop.f32.mrb[0].mxu0
      %v4045 = vadd.f32 0.0, %v4044
      %v4046 = vpop.f32.mrb[0].mxu0
      %v4047 = vadd.f32 0.0, %v4046
      %4048 = vmatprep.mubr.bf16.mxu0 0
      %4049 = vmatmul.mubr.bf16.gmra.mrb[0].mxu0 %v3396
      %v4050 = vpop.f32.mrb[0].mxu0
      %v4051 = vadd.f32 0.0, %v4050
      %v4052 = vpop.f32.mrb[0].mxu0
      %v4053 = vadd.f32 0.0, %v4052
      %v4054 = vpop.f32.mrb[0].mxu0
      %v4055 = vadd.f32 0.0, %v4054
      %v4056 = vpop.f32.mrb[0].mxu0
      %v4057 = vadd.f32 0.0, %v4056
      %4058 = vmatprep.mubr.bf16.mxu0 0
      %4059 = vmatmul.mubr.bf16.gmra.mrb[0].mxu0 %v3397
      %v4060 = vpop.f32.mrb[0].mxu0
      %v4061 = vadd.f32 0.0, %v4060
      %v4062 = vpop.f32.mrb[0].mxu0
      %v4063 = vadd.f32 0.0, %v4062
      %v4064 = vpop.f32.mrb[0].mxu0
      %v4065 = vadd.f32 0.0, %v4064
      %v4066 = vpop.f32.mrb[0].mxu0
      %v4067 = vadd.f32 0.0, %v4066
      %4068 = vmatprep.mubr.bf16.mxu0 0
      %4069 = vmatmul.mubr.bf16.gmra.mrb[0].mxu0 %v3398
      %v4070 = vpop.f32.mrb[0].mxu0
      %v4071 = vadd.f32 0.0, %v4070
      %v4072 = vpop.f32.mrb[0].mxu0
      %v4073 = vadd.f32 0.0, %v4072
      %v4074 = vpop.f32.mrb[0].mxu0
      %v4075 = vadd.f32 0.0, %v4074
      %v4076 = vpop.f32.mrb[0].mxu0
      %v4077 = vadd.f32 0.0, %v4076
      %4078 = vmatprep.mubr.bf16.mxu0 0
      %4079 = vmatmul.mubr.bf16.gmra.mrb[0].mxu0 %v3399
      %v4080 = vpop.f32.mrb[0].mxu0
      %v4081 = vadd.f32 0.0, %v4080
      %v4082 = vpop.f32.mrb[0].mxu0
      %v4083 = vadd.f32 0.0, %v4082
      %v4084 = vpop.f32.mrb[0].mxu0
      %v4085 = vadd.f32 0.0, %v4084
      %v4086 = vpop.f32.mrb[0].mxu0
      %v4087 = vadd.f32 0.0, %v4086
      %4088 = vmatprep.mubr.bf16.mxu0 0
      %4089 = vmatmul.mubr.bf16.gmra.mrb[0].mxu0 %v3400
      %v4090 = vpop.f32.mrb[0].mxu0
      %v4091 = vadd.f32 0.0, %v4090
      %v4092 = vpop.f32.mrb[0].mxu0
      %v4093 = vadd.f32 0.0, %v4092
      %v4094 = vpop.f32.mrb[0].mxu0
      %v4095 = vadd.f32 0.0, %v4094
      %v4096 = vpop.f32.mrb[0].mxu0
      %v4097 = vadd.f32 0.0, %v4096
      %4098 = vmatprep.mubr.bf16.mxu0 0
      %4099 = vmatmul.mubr.bf16.gmra.mrb[0].mxu0 %v3401
      %v4100 = vpop.f32.mrb[0].mxu0
      %v4101 = vadd.f32 0.0, %v4100
      %v4102 = vpop.f32.mrb[0].mxu0
      %v4103 = vadd.f32 0.0, %v4102
      %v4104 = vpop.f32.mrb[0].mxu0
      %v4105 = vadd.f32 0.0, %v4104
      %v4106 = vpop.f32.mrb[0].mxu0
      %v4107 = vadd.f32 0.0, %v4106
      %4108 = vmatprep.mubr.bf16.mxu0 0
      %4109 = vmatmul.mubr.bf16.gmra.mrb[0].mxu0 %v3402
      %v4110 = vpop.f32.mrb[0].mxu0
      %v4111 = vadd.f32 0.0, %v4110
      %v4112 = vpop.f32.mrb[0].mxu0
      %v4113 = vadd.f32 0.0, %v4112
      %v4114 = vpop.f32.mrb[0].mxu0
      %v4115 = vadd.f32 0.0, %v4114
      %v4116 = vpop.f32.mrb[0].mxu0
      %v4117 = vadd.f32 0.0, %v4116
      %4118 = vmatprep.mubr.bf16.mxu0 0
      %4119 = vmatmul.mubr.bf16.gmra.mrb[0].mxu0 %v3403
      %v4120 = vpop.f32.mrb[0].mxu0
      %v4121 = vadd.f32 0.0, %v4120
      %v4122 = vpop.f32.mrb[0].mxu0
      %v4123 = vadd.f32 0.0, %v4122
      %v4124 = vpop.f32.mrb[0].mxu0
      %v4125 = vadd.f32 0.0, %v4124
      %v4126 = vpop.f32.mrb[0].mxu0
      %v4127 = vadd.f32 0.0, %v4126
      %4128 = vmatprep.mubr.bf16.mxu0 0
      %4129 = vmatmul.mubr.bf16.gmra.mrb[0].mxu0 %v3404
      %v4130 = vpop.f32.mrb[0].mxu0
      %v4131 = vadd.f32 0.0, %v4130
      %v4132 = vpop.f32.mrb[0].mxu0
      %v4133 = vadd.f32 0.0, %v4132
      %v4134 = vpop.f32.mrb[0].mxu0
      %v4135 = vadd.f32 0.0, %v4134
      %v4136 = vpop.f32.mrb[0].mxu0
      %v4137 = vadd.f32 0.0, %v4136
      %4138 = vmatprep.mubr.bf16.mxu0 0
      %4139 = vmatmul.mubr.bf16.gmra.mrb[0].mxu0 %v3405
      %v4140 = vpop.f32.mrb[0].mxu0
      %v4141 = vadd.f32 0.0, %v4140
      %v4142 = vpop.f32.mrb[0].mxu0
      %v4143 = vadd.f32 0.0, %v4142
      %v4144 = vpop.f32.mrb[0].mxu0
      %v4145 = vadd.f32 0.0, %v4144
      %v4146 = vpop.f32.mrb[0].mxu0
      %v4147 = vadd.f32 0.0, %v4146
      %4148 = vmatprep.mubr.bf16.mxu0 0
      %4149 = vmatmul.mubr.bf16.gmra.mrb[0].mxu0 %v3406
      %v4150 = vpop.f32.mrb[0].mxu0
      %v4151 = vadd.f32 0.0, %v4150
      %v4152 = vpop.f32.mrb[0].mxu0
      %v4153 = vadd.f32 0.0, %v4152
      %v4154 = vpop.f32.mrb[0].mxu0
      %v4155 = vadd.f32 0.0, %v4154
      %v4156 = vpop.f32.mrb[0].mxu0
      %v4157 = vadd.f32 0.0, %v4156
      %4158 = vmatprep.mubr.bf16.mxu0 0
      %4159 = vmatmul.mubr.bf16.gmra.mrb[0].mxu0 %v3407
      %v4160 = vpop.f32.mrb[0].mxu0
      %v4161 = vadd.f32 0.0, %v4160
      %v4162 = vpop.f32.mrb[0].mxu0
      %v4163 = vadd.f32 0.0, %v4162
      %v4164 = vpop.f32.mrb[0].mxu0
      %v4165 = vadd.f32 0.0, %v4164
      %v4166 = vpop.f32.mrb[0].mxu0
      %v4167 = vadd.f32 0.0, %v4166
      %4168 = vmatprep.mubr.bf16.mxu0 0
      %4169 = vmatmul.mubr.bf16.gmra.mrb[0].mxu0 %v3408
      %v4170 = vpop.f32.mrb[0].mxu0
      %v4171 = vadd.f32 0.0, %v4170
      %v4172 = vpop.f32.mrb[0].mxu0
      %v4173 = vadd.f32 0.0, %v4172
      %v4174 = vpop.f32.mrb[0].mxu0
      %v4175 = vadd.f32 0.0, %v4174
      %v4176 = vpop.f32.mrb[0].mxu0
      %v4177 = vadd.f32 0.0, %v4176
      %4178 = vmatprep.mubr.bf16.mxu0 0
      %4179 = vmatmul.mubr.bf16.gmra.mrb[0].mxu0 %v3409
      %v4180 = vpop.f32.mrb[0].mxu0
      %v4181 = vadd.f32 0.0, %v4180
      %v4182 = vpop.f32.mrb[0].mxu0
      %v4183 = vadd.f32 0.0, %v4182
      %v4184 = vpop.f32.mrb[0].mxu0
      %v4185 = vadd.f32 0.0, %v4184
      %v4186 = vpop.f32.mrb[0].mxu0
      %v4187 = vadd.f32 0.0, %v4186
      %4188 = vmatprep.mubr.bf16.mxu0 0
      %4189 = vmatmul.mubr.bf16.gmra.mrb[0].mxu0 %v3410
      %v4190 = vpop.f32.mrb[0].mxu0
      %v4191 = vadd.f32 0.0, %v4190
      %v4192 = vpop.f32.mrb[0].mxu0
      %v4193 = vadd.f32 0.0, %v4192
      %v4194 = vpop.f32.mrb[0].mxu0
      %v4195 = vadd.f32 0.0, %v4194
      %v4196 = vpop.f32.mrb[0].mxu0
      %v4197 = vadd.f32 0.0, %v4196
      %4198 = vdwg.mxu0
      %4199 = vmatprep.subr.bf16.mxu0 %v3148
      %4200 = vmatpush1.bf16.msra.mxu0 %v3147
      %4201 = vmatprep.subr.bf16.mxu0 %v3168
      %4202 = vmatpush1.bf16.msra.mxu0 %v3167
      %4203 = vmatprep.subr.bf16.mxu0 %v3188
      %4204 = vmatpush1.bf16.msra.mxu0 %v3187
      %4205 = vmatprep.subr.bf16.mxu0 %v3208
      %4206 = vmatpush1.bf16.msra.mxu0 %v3207
      %4207 = vmatprep.subr.bf16.mxu0 %v3228
      %4208 = vmatpush1.bf16.msra.mxu0 %v3227
      %4209 = vmatprep.subr.bf16.mxu0 %v3248
      %4210 = vmatpush1.bf16.msra.mxu0 %v3247
      %4211 = vmatprep.subr.bf16.mxu0 %v3268
      %4212 = vmatpush1.bf16.msra.mxu0 %v3267
      %4213 = vmatprep.subr.bf16.mxu0 %v3288
      %4214 = vmatpush1.bf16.msra.mxu0 %v3287
      %4215 = vmatprep.subr.bf16.mxu0 0
      %4216 = vmatpush1.bf16.msra.mxu0 0
      %4217 = vmatprep.subr.bf16.mxu0 0
      %4218 = vmatpush1.bf16.msra.mxu0 0
      %4219 = vmatprep.subr.bf16.mxu0 0
      %4220 = vmatpush1.bf16.msra.mxu0 0
      %4221 = vmatprep.subr.bf16.mxu0 0
      %4222 = vmatpush1.bf16.msra.mxu0 0
      %4223 = vmatprep.subr.bf16.mxu0 0
      %4224 = vmatpush1.bf16.msra.mxu0 0
      %4225 = vmatprep.subr.bf16.mxu0 0
      %4226 = vmatpush1.bf16.msra.mxu0 0
      %4227 = vmatprep.subr.bf16.mxu0 0
      %4228 = vmatpush1.bf16.msra.mxu0 0
      %4229 = vmatprep.subr.bf16.mxu0 0
      %4230 = vmatpush1.bf16.msra.mxu0 0
      %4231 = vmatprep.mubr.bf16.mxu0 0
      %4232 = vmatmul.mubr.bf16.gmra.mrb[0].mxu0 %v3395
      %v4233 = vpop.f32.mrb[0].mxu0
      %v4234 = vadd.f32 0.0, %v4233
      %v4235 = vpop.f32.mrb[0].mxu0
      %v4236 = vadd.f32 0.0, %v4235
      %v4237 = vpop.f32.mrb[0].mxu0
      %v4238 = vadd.f32 0.0, %v4237
      %v4239 = vpop.f32.mrb[0].mxu0
      %v4240 = vadd.f32 0.0, %v4239
      %4241 = vmatprep.mubr.bf16.mxu0 0
      %4242 = vmatmul.mubr.bf16.gmra.mrb[0].mxu0 %v3396
      %v4243 = vpop.f32.mrb[0].mxu0
      %v4244 = vadd.f32 0.0, %v4243
      %v4245 = vpop.f32.mrb[0].mxu0
      %v4246 = vadd.f32 0.0, %v4245
      %v4247 = vpop.f32.mrb[0].mxu0
      %v4248 = vadd.f32 0.0, %v4247
      %v4249 = vpop.f32.mrb[0].mxu0
      %v4250 = vadd.f32 0.0, %v4249
      %4251 = vmatprep.mubr.bf16.mxu0 0
      %4252 = vmatmul.mubr.bf16.gmra.mrb[0].mxu0 %v3397
      %v4253 = vpop.f32.mrb[0].mxu0
      %v4254 = vadd.f32 0.0, %v4253
      %v4255 = vpop.f32.mrb[0].mxu0
      %v4256 = vadd.f32 0.0, %v4255
      %v4257 = vpop.f32.mrb[0].mxu0
      %v4258 = vadd.f32 0.0, %v4257
      %v4259 = vpop.f32.mrb[0].mxu0
      %v4260 = vadd.f32 0.0, %v4259
      %4261 = vmatprep.mubr.bf16.mxu0 0
      %4262 = vmatmul.mubr.bf16.gmra.mrb[0].mxu0 %v3398
      %v4263 = vpop.f32.mrb[0].mxu0
      %v4264 = vadd.f32 0.0, %v4263
      %v4265 = vpop.f32.mrb[0].mxu0
      %v4266 = vadd.f32 0.0, %v4265
      %v4267 = vpop.f32.mrb[0].mxu0
      %v4268 = vadd.f32 0.0, %v4267
      %v4269 = vpop.f32.mrb[0].mxu0
      %v4270 = vadd.f32 0.0, %v4269
      %4271 = vmatprep.mubr.bf16.mxu0 0
      %4272 = vmatmul.mubr.bf16.gmra.mrb[0].mxu0 %v3399
      %v4273 = vpop.f32.mrb[0].mxu0
      %v4274 = vadd.f32 0.0, %v4273
      %v4275 = vpop.f32.mrb[0].mxu0
      %v4276 = vadd.f32 0.0, %v4275
      %v4277 = vpop.f32.mrb[0].mxu0
      %v4278 = vadd.f32 0.0, %v4277
      %v4279 = vpop.f32.mrb[0].mxu0
      %v4280 = vadd.f32 0.0, %v4279
      %4281 = vmatprep.mubr.bf16.mxu0 0
      %4282 = vmatmul.mubr.bf16.gmra.mrb[0].mxu0 %v3400
      %v4283 = vpop.f32.mrb[0].mxu0
      %v4284 = vadd.f32 0.0, %v4283
      %v4285 = vpop.f32.mrb[0].mxu0
      %v4286 = vadd.f32 0.0, %v4285
      %v4287 = vpop.f32.mrb[0].mxu0
      %v4288 = vadd.f32 0.0, %v4287
      %v4289 = vpop.f32.mrb[0].mxu0
      %v4290 = vadd.f32 0.0, %v4289
      %4291 = vmatprep.mubr.bf16.mxu0 0
      %4292 = vmatmul.mubr.bf16.gmra.mrb[0].mxu0 %v3401
      %v4293 = vpop.f32.mrb[0].mxu0
      %v4294 = vadd.f32 0.0, %v4293
      %v4295 = vpop.f32.mrb[0].mxu0
      %v4296 = vadd.f32 0.0, %v4295
      %v4297 = vpop.f32.mrb[0].mxu0
      %v4298 = vadd.f32 0.0, %v4297
      %v4299 = vpop.f32.mrb[0].mxu0
      %v4300 = vadd.f32 0.0, %v4299
      %4301 = vmatprep.mubr.bf16.mxu0 0
      %4302 = vmatmul.mubr.bf16.gmra.mrb[0].mxu0 %v3402
      %v4303 = vpop.f32.mrb[0].mxu0
      %v4304 = vadd.f32 0.0, %v4303
      %v4305 = vpop.f32.mrb[0].mxu0
      %v4306 = vadd.f32 0.0, %v4305
      %v4307 = vpop.f32.mrb[0].mxu0
      %v4308 = vadd.f32 0.0, %v4307
      %v4309 = vpop.f32.mrb[0].mxu0
      %v4310 = vadd.f32 0.0, %v4309
      %4311 = vmatprep.mubr.bf16.mxu0 0
      %4312 = vmatmul.mubr.bf16.gmra.mrb[0].mxu0 %v3403
      %v4313 = vpop.f32.mrb[0].mxu0
      %v4314 = vadd.f32 0.0, %v4313
      %v4315 = vpop.f32.mrb[0].mxu0
      %v4316 = vadd.f32 0.0, %v4315
      %v4317 = vpop.f32.mrb[0].mxu0
      %v4318 = vadd.f32 0.0, %v4317
      %v4319 = vpop.f32.mrb[0].mxu0
      %v4320 = vadd.f32 0.0, %v4319
      %4321 = vmatprep.mubr.bf16.mxu0 0
      %4322 = vmatmul.mubr.bf16.gmra.mrb[0].mxu0 %v3404
      %v4323 = vpop.f32.mrb[0].mxu0
      %v4324 = vadd.f32 0.0, %v4323
      %v4325 = vpop.f32.mrb[0].mxu0
      %v4326 = vadd.f32 0.0, %v4325
      %v4327 = vpop.f32.mrb[0].mxu0
      %v4328 = vadd.f32 0.0, %v4327
      %v4329 = vpop.f32.mrb[0].mxu0
      %v4330 = vadd.f32 0.0, %v4329
      %4331 = vmatprep.mubr.bf16.mxu0 0
      %4332 = vmatmul.mubr.bf16.gmra.mrb[0].mxu0 %v3405
      %v4333 = vpop.f32.mrb[0].mxu0
      %v4334 = vadd.f32 0.0, %v4333
      %v4335 = vpop.f32.mrb[0].mxu0
      %v4336 = vadd.f32 0.0, %v4335
      %v4337 = vpop.f32.mrb[0].mxu0
      %v4338 = vadd.f32 0.0, %v4337
      %v4339 = vpop.f32.mrb[0].mxu0
      %v4340 = vadd.f32 0.0, %v4339
      %4341 = vmatprep.mubr.bf16.mxu0 0
      %4342 = vmatmul.mubr.bf16.gmra.mrb[0].mxu0 %v3406
      %v4343 = vpop.f32.mrb[0].mxu0
      %v4344 = vadd.f32 0.0, %v4343
      %v4345 = vpop.f32.mrb[0].mxu0
      %v4346 = vadd.f32 0.0, %v4345
      %v4347 = vpop.f32.mrb[0].mxu0
      %v4348 = vadd.f32 0.0, %v4347
      %v4349 = vpop.f32.mrb[0].mxu0
      %v4350 = vadd.f32 0.0, %v4349
      %4351 = vmatprep.mubr.bf16.mxu0 0
      %4352 = vmatmul.mubr.bf16.gmra.mrb[0].mxu0 %v3407
      %v4353 = vpop.f32.mrb[0].mxu0
      %v4354 = vadd.f32 0.0, %v4353
      %v4355 = vpop.f32.mrb[0].mxu0
      %v4356 = vadd.f32 0.0, %v4355
      %v4357 = vpop.f32.mrb[0].mxu0
      %v4358 = vadd.f32 0.0, %v4357
      %v4359 = vpop.f32.mrb[0].mxu0
      %v4360 = vadd.f32 0.0, %v4359
      %4361 = vmatprep.mubr.bf16.mxu0 0
      %4362 = vmatmul.mubr.bf16.gmra.mrb[0].mxu0 %v3408
      %v4363 = vpop.f32.mrb[0].mxu0
      %v4364 = vadd.f32 0.0, %v4363
      %v4365 = vpop.f32.mrb[0].mxu0
      %v4366 = vadd.f32 0.0, %v4365
      %v4367 = vpop.f32.mrb[0].mxu0
      %v4368 = vadd.f32 0.0, %v4367
      %v4369 = vpop.f32.mrb[0].mxu0
      %v4370 = vadd.f32 0.0, %v4369
      %4371 = vmatprep.mubr.bf16.mxu0 0
      %4372 = vmatmul.mubr.bf16.gmra.mrb[0].mxu0 %v3409
      %v4373 = vpop.f32.mrb[0].mxu0
      %v4374 = vadd.f32 0.0, %v4373
      %v4375 = vpop.f32.mrb[0].mxu0
      %v4376 = vadd.f32 0.0, %v4375
      %v4377 = vpop.f32.mrb[0].mxu0
      %v4378 = vadd.f32 0.0, %v4377
      %v4379 = vpop.f32.mrb[0].mxu0
      %v4380 = vadd.f32 0.0, %v4379
      %4381 = vmatprep.mubr.bf16.mxu0 0
      %4382 = vmatmul.mubr.bf16.gmra.mrb[0].mxu0 %v3410
      %v4383 = vpop.f32.mrb[0].mxu0
      %v4384 = vadd.f32 0.0, %v4383
      %v4385 = vpop.f32.mrb[0].mxu0
      %v4386 = vadd.f32 0.0, %v4385
      %v4387 = vpop.f32.mrb[0].mxu0
      %v4388 = vadd.f32 0.0, %v4387
      %v4389 = vpop.f32.mrb[0].mxu0
      %v4390 = vadd.f32 0.0, %v4389
      %4391 = vdwg.mxu0
      %4392 = vmatprep.subr.bf16.mxu0 %v3150
      %4393 = vmatpush1.bf16.msra.mxu0 %v3149
      %4394 = vmatprep.subr.bf16.mxu0 %v3170
      %4395 = vmatpush1.bf16.msra.mxu0 %v3169
      %4396 = vmatprep.subr.bf16.mxu0 %v3190
      %4397 = vmatpush1.bf16.msra.mxu0 %v3189
      %4398 = vmatprep.subr.bf16.mxu0 %v3210
      %4399 = vmatpush1.bf16.msra.mxu0 %v3209
      %4400 = vmatprep.subr.bf16.mxu0 %v3230
      %4401 = vmatpush1.bf16.msra.mxu0 %v3229
      %4402 = vmatprep.subr.bf16.mxu0 %v3250
      %4403 = vmatpush1.bf16.msra.mxu0 %v3249
      %4404 = vmatprep.subr.bf16.mxu0 %v3270
      %4405 = vmatpush1.bf16.msra.mxu0 %v3269
      %4406 = vmatprep.subr.bf16.mxu0 %v3290
      %4407 = vmatpush1.bf16.msra.mxu0 %v3289
      %4408 = vmatprep.subr.bf16.mxu0 0
      %4409 = vmatpush1.bf16.msra.mxu0 0
      %4410 = vmatprep.subr.bf16.mxu0 0
      %4411 = vmatpush1.bf16.msra.mxu0 0
      %4412 = vmatprep.subr.bf16.mxu0 0
      %4413 = vmatpush1.bf16.msra.mxu0 0
      %4414 = vmatprep.subr.bf16.mxu0 0
      %4415 = vmatpush1.bf16.msra.mxu0 0
      %4416 = vmatprep.subr.bf16.mxu0 0
      %4417 = vmatpush1.bf16.msra.mxu0 0
      %4418 = vmatprep.subr.bf16.mxu0 0
      %4419 = vmatpush1.bf16.msra.mxu0 0
      %4420 = vmatprep.subr.bf16.mxu0 0
      %4421 = vmatpush1.bf16.msra.mxu0 0
      %4422 = vmatprep.subr.bf16.mxu0 0
      %4423 = vmatpush1.bf16.msra.mxu0 0
      %4424 = vmatprep.mubr.bf16.mxu0 0
      %4425 = vmatmul.mubr.bf16.gmra.mrb[0].mxu0 %v3395
      %v4426 = vpop.f32.mrb[0].mxu0
      %v4427 = vadd.f32 0.0, %v4426
      %v4428 = vpop.f32.mrb[0].mxu0
      %v4429 = vadd.f32 0.0, %v4428
      %v4430 = vpop.f32.mrb[0].mxu0
      %v4431 = vadd.f32 0.0, %v4430
      %v4432 = vpop.f32.mrb[0].mxu0
      %v4433 = vadd.f32 0.0, %v4432
      %4434 = vmatprep.mubr.bf16.mxu0 0
      %4435 = vmatmul.mubr.bf16.gmra.mrb[0].mxu0 %v3396
      %v4436 = vpop.f32.mrb[0].mxu0
      %v4437 = vadd.f32 0.0, %v4436
      %v4438 = vpop.f32.mrb[0].mxu0
      %v4439 = vadd.f32 0.0, %v4438
      %v4440 = vpop.f32.mrb[0].mxu0
      %v4441 = vadd.f32 0.0, %v4440
      %v4442 = vpop.f32.mrb[0].mxu0
      %v4443 = vadd.f32 0.0, %v4442
      %4444 = vmatprep.mubr.bf16.mxu0 0
      %4445 = vmatmul.mubr.bf16.gmra.mrb[0].mxu0 %v3397
      %v4446 = vpop.f32.mrb[0].mxu0
      %v4447 = vadd.f32 0.0, %v4446
      %v4448 = vpop.f32.mrb[0].mxu0
      %v4449 = vadd.f32 0.0, %v4448
      %v4450 = vpop.f32.mrb[0].mxu0
      %v4451 = vadd.f32 0.0, %v4450
      %v4452 = vpop.f32.mrb[0].mxu0
      %v4453 = vadd.f32 0.0, %v4452
      %4454 = vmatprep.mubr.bf16.mxu0 0
      %4455 = vmatmul.mubr.bf16.gmra.mrb[0].mxu0 %v3398
      %v4456 = vpop.f32.mrb[0].mxu0
      %v4457 = vadd.f32 0.0, %v4456
      %v4458 = vpop.f32.mrb[0].mxu0
      %v4459 = vadd.f32 0.0, %v4458
      %v4460 = vpop.f32.mrb[0].mxu0
      %v4461 = vadd.f32 0.0, %v4460
      %v4462 = vpop.f32.mrb[0].mxu0
      %v4463 = vadd.f32 0.0, %v4462
      %4464 = vmatprep.mubr.bf16.mxu0 0
      %4465 = vmatmul.mubr.bf16.gmra.mrb[0].mxu0 %v3399
      %v4466 = vpop.f32.mrb[0].mxu0
      %v4467 = vadd.f32 0.0, %v4466
      %v4468 = vpop.f32.mrb[0].mxu0
      %v4469 = vadd.f32 0.0, %v4468
      %v4470 = vpop.f32.mrb[0].mxu0
      %v4471 = vadd.f32 0.0, %v4470
      %v4472 = vpop.f32.mrb[0].mxu0
      %v4473 = vadd.f32 0.0, %v4472
      %4474 = vmatprep.mubr.bf16.mxu0 0
      %4475 = vmatmul.mubr.bf16.gmra.mrb[0].mxu0 %v3400
      %v4476 = vpop.f32.mrb[0].mxu0
      %v4477 = vadd.f32 0.0, %v4476
      %v4478 = vpop.f32.mrb[0].mxu0
      %v4479 = vadd.f32 0.0, %v4478
      %v4480 = vpop.f32.mrb[0].mxu0
      %v4481 = vadd.f32 0.0, %v4480
      %v4482 = vpop.f32.mrb[0].mxu0
      %v4483 = vadd.f32 0.0, %v4482
      %4484 = vmatprep.mubr.bf16.mxu0 0
      %4485 = vmatmul.mubr.bf16.gmra.mrb[0].mxu0 %v3401
      %v4486 = vpop.f32.mrb[0].mxu0
      %v4487 = vadd.f32 0.0, %v4486
      %v4488 = vpop.f32.mrb[0].mxu0
      %v4489 = vadd.f32 0.0, %v4488
      %v4490 = vpop.f32.mrb[0].mxu0
      %v4491 = vadd.f32 0.0, %v4490
      %v4492 = vpop.f32.mrb[0].mxu0
      %v4493 = vadd.f32 0.0, %v4492
      %4494 = vmatprep.mubr.bf16.mxu0 0
      %4495 = vmatmul.mubr.bf16.gmra.mrb[0].mxu0 %v3402
      %v4496 = vpop.f32.mrb[0].mxu0
      %v4497 = vadd.f32 0.0, %v4496
      %v4498 = vpop.f32.mrb[0].mxu0
      %v4499 = vadd.f32 0.0, %v4498
      %v4500 = vpop.f32.mrb[0].mxu0
      %v4501 = vadd.f32 0.0, %v4500
      %v4502 = vpop.f32.mrb[0].mxu0
      %v4503 = vadd.f32 0.0, %v4502
      %4504 = vmatprep.mubr.bf16.mxu0 0
      %4505 = vmatmul.mubr.bf16.gmra.mrb[0].mxu0 %v3403
      %v4506 = vpop.f32.mrb[0].mxu0
      %v4507 = vadd.f32 0.0, %v4506
      %v4508 = vpop.f32.mrb[0].mxu0
      %v4509 = vadd.f32 0.0, %v4508
      %v4510 = vpop.f32.mrb[0].mxu0
      %v4511 = vadd.f32 0.0, %v4510
      %v4512 = vpop.f32.mrb[0].mxu0
      %v4513 = vadd.f32 0.0, %v4512
      %4514 = vmatprep.mubr.bf16.mxu0 0
      %4515 = vmatmul.mubr.bf16.gmra.mrb[0].mxu0 %v3404
      %v4516 = vpop.f32.mrb[0].mxu0
      %v4517 = vadd.f32 0.0, %v4516
      %v4518 = vpop.f32.mrb[0].mxu0
      %v4519 = vadd.f32 0.0, %v4518
      %v4520 = vpop.f32.mrb[0].mxu0
      %v4521 = vadd.f32 0.0, %v4520
      %v4522 = vpop.f32.mrb[0].mxu0
      %v4523 = vadd.f32 0.0, %v4522
      %4524 = vmatprep.mubr.bf16.mxu0 0
      %4525 = vmatmul.mubr.bf16.gmra.mrb[0].mxu0 %v3405
      %v4526 = vpop.f32.mrb[0].mxu0
      %v4527 = vadd.f32 0.0, %v4526
      %v4528 = vpop.f32.mrb[0].mxu0
      %v4529 = vadd.f32 0.0, %v4528
      %v4530 = vpop.f32.mrb[0].mxu0
      %v4531 = vadd.f32 0.0, %v4530
      %v4532 = vpop.f32.mrb[0].mxu0
      %v4533 = vadd.f32 0.0, %v4532
      %4534 = vmatprep.mubr.bf16.mxu0 0
      %4535 = vmatmul.mubr.bf16.gmra.mrb[0].mxu0 %v3406
      %v4536 = vpop.f32.mrb[0].mxu0
      %v4537 = vadd.f32 0.0, %v4536
      %v4538 = vpop.f32.mrb[0].mxu0
      %v4539 = vadd.f32 0.0, %v4538
      %v4540 = vpop.f32.mrb[0].mxu0
      %v4541 = vadd.f32 0.0, %v4540
      %v4542 = vpop.f32.mrb[0].mxu0
      %v4543 = vadd.f32 0.0, %v4542
      %4544 = vmatprep.mubr.bf16.mxu0 0
      %4545 = vmatmul.mubr.bf16.gmra.mrb[0].mxu0 %v3407
      %v4546 = vpop.f32.mrb[0].mxu0
      %v4547 = vadd.f32 0.0, %v4546
      %v4548 = vpop.f32.mrb[0].mxu0
      %v4549 = vadd.f32 0.0, %v4548
      %v4550 = vpop.f32.mrb[0].mxu0
      %v4551 = vadd.f32 0.0, %v4550
      %v4552 = vpop.f32.mrb[0].mxu0
      %v4553 = vadd.f32 0.0, %v4552
      %4554 = vmatprep.mubr.bf16.mxu0 0
      %4555 = vmatmul.mubr.bf16.gmra.mrb[0].mxu0 %v3408
      %v4556 = vpop.f32.mrb[0].mxu0
      %v4557 = vadd.f32 0.0, %v4556
      %v4558 = vpop.f32.mrb[0].mxu0
      %v4559 = vadd.f32 0.0, %v4558
      %v4560 = vpop.f32.mrb[0].mxu0
      %v4561 = vadd.f32 0.0, %v4560
      %v4562 = vpop.f32.mrb[0].mxu0
      %v4563 = vadd.f32 0.0, %v4562
      %4564 = vmatprep.mubr.bf16.mxu0 0
      %4565 = vmatmul.mubr.bf16.gmra.mrb[0].mxu0 %v3409
      %v4566 = vpop.f32.mrb[0].mxu0
      %v4567 = vadd.f32 0.0, %v4566
      %v4568 = vpop.f32.mrb[0].mxu0
      %v4569 = vadd.f32 0.0, %v4568
      %v4570 = vpop.f32.mrb[0].mxu0
      %v4571 = vadd.f32 0.0, %v4570
      %v4572 = vpop.f32.mrb[0].mxu0
      %v4573 = vadd.f32 0.0, %v4572
      %4574 = vmatprep.mubr.bf16.mxu0 0
      %4575 = vmatmul.mubr.bf16.gmra.mrb[0].mxu0 %v3410
      %v4576 = vpop.f32.mrb[0].mxu0
      %v4577 = vadd.f32 0.0, %v4576
      %v4578 = vpop.f32.mrb[0].mxu0
      %v4579 = vadd.f32 0.0, %v4578
      %v4580 = vpop.f32.mrb[0].mxu0
      %v4581 = vadd.f32 0.0, %v4580
      %v4582 = vpop.f32.mrb[0].mxu0
      %v4583 = vadd.f32 0.0, %v4582
      %4584 = vdwg.mxu0
      %4585 = vmatprep.subr.bf16.mxu0 %v3152
      %4586 = vmatpush1.bf16.msra.mxu0 %v3151
      %4587 = vmatprep.subr.bf16.mxu0 %v3172
      %4588 = vmatpush1.bf16.msra.mxu0 %v3171
      %4589 = vmatprep.subr.bf16.mxu0 %v3192
      %4590 = vmatpush1.bf16.msra.mxu0 %v3191
      %4591 = vmatprep.subr.bf16.mxu0 %v3212
      %4592 = vmatpush1.bf16.msra.mxu0 %v3211
      %4593 = vmatprep.subr.bf16.mxu0 %v3232
      %4594 = vmatpush1.bf16.msra.mxu0 %v3231
      %4595 = vmatprep.subr.bf16.mxu0 %v3252
      %4596 = vmatpush1.bf16.msra.mxu0 %v3251
      %4597 = vmatprep.subr.bf16.mxu0 %v3272
      %4598 = vmatpush1.bf16.msra.mxu0 %v3271
      %4599 = vmatprep.subr.bf16.mxu0 %v3292
      %4600 = vmatpush1.bf16.msra.mxu0 %v3291
      %4601 = vmatprep.subr.bf16.mxu0 0
      %4602 = vmatpush1.bf16.msra.mxu0 0
      %4603 = vmatprep.subr.bf16.mxu0 0
      %4604 = vmatpush1.bf16.msra.mxu0 0
      %4605 = vmatprep.subr.bf16.mxu0 0
      %4606 = vmatpush1.bf16.msra.mxu0 0
      %4607 = vmatprep.subr.bf16.mxu0 0
      %4608 = vmatpush1.bf16.msra.mxu0 0
      %4609 = vmatprep.subr.bf16.mxu0 0
      %4610 = vmatpush1.bf16.msra.mxu0 0
      %4611 = vmatprep.subr.bf16.mxu0 0
      %4612 = vmatpush1.bf16.msra.mxu0 0
      %4613 = vmatprep.subr.bf16.mxu0 0
      %4614 = vmatpush1.bf16.msra.mxu0 0
      %4615 = vmatprep.subr.bf16.mxu0 0
      %4616 = vmatpush1.bf16.msra.mxu0 0
      %4617 = vmatprep.mubr.bf16.mxu0 0
      %4618 = vmatmul.mubr.bf16.gmra.mrb[0].mxu0 %v3395
      %v4619 = vpop.f32.mrb[0].mxu0
      %v4620 = vadd.f32 0.0, %v4619
      %v4621 = vpop.f32.mrb[0].mxu0
      %v4622 = vadd.f32 0.0, %v4621
      %v4623 = vpop.f32.mrb[0].mxu0
      %v4624 = vadd.f32 0.0, %v4623
      %v4625 = vpop.f32.mrb[0].mxu0
      %v4626 = vadd.f32 0.0, %v4625
      %4627 = vmatprep.mubr.bf16.mxu0 0
      %4628 = vmatmul.mubr.bf16.gmra.mrb[0].mxu0 %v3396
      %v4629 = vpop.f32.mrb[0].mxu0
      %v4630 = vadd.f32 0.0, %v4629
      %v4631 = vpop.f32.mrb[0].mxu0
      %v4632 = vadd.f32 0.0, %v4631
      %v4633 = vpop.f32.mrb[0].mxu0
      %v4634 = vadd.f32 0.0, %v4633
      %v4635 = vpop.f32.mrb[0].mxu0
      %v4636 = vadd.f32 0.0, %v4635
      %4637 = vmatprep.mubr.bf16.mxu0 0
      %4638 = vmatmul.mubr.bf16.gmra.mrb[0].mxu0 %v3397
      %v4639 = vpop.f32.mrb[0].mxu0
      %v4640 = vadd.f32 0.0, %v4639
      %v4641 = vpop.f32.mrb[0].mxu0
      %v4642 = vadd.f32 0.0, %v4641
      %v4643 = vpop.f32.mrb[0].mxu0
      %v4644 = vadd.f32 0.0, %v4643
      %v4645 = vpop.f32.mrb[0].mxu0
      %v4646 = vadd.f32 0.0, %v4645
      %4647 = vmatprep.mubr.bf16.mxu0 0
      %4648 = vmatmul.mubr.bf16.gmra.mrb[0].mxu0 %v3398
      %v4649 = vpop.f32.mrb[0].mxu0
      %v4650 = vadd.f32 0.0, %v4649
      %v4651 = vpop.f32.mrb[0].mxu0
      %v4652 = vadd.f32 0.0, %v4651
      %v4653 = vpop.f32.mrb[0].mxu0
      %v4654 = vadd.f32 0.0, %v4653
      %v4655 = vpop.f32.mrb[0].mxu0
      %v4656 = vadd.f32 0.0, %v4655
      %4657 = vmatprep.mubr.bf16.mxu0 0
      %4658 = vmatmul.mubr.bf16.gmra.mrb[0].mxu0 %v3399
      %v4659 = vpop.f32.mrb[0].mxu0
      %v4660 = vadd.f32 0.0, %v4659
      %v4661 = vpop.f32.mrb[0].mxu0
      %v4662 = vadd.f32 0.0, %v4661
      %v4663 = vpop.f32.mrb[0].mxu0
      %v4664 = vadd.f32 0.0, %v4663
      %v4665 = vpop.f32.mrb[0].mxu0
      %v4666 = vadd.f32 0.0, %v4665
      %4667 = vmatprep.mubr.bf16.mxu0 0
      %4668 = vmatmul.mubr.bf16.gmra.mrb[0].mxu0 %v3400
      %v4669 = vpop.f32.mrb[0].mxu0
      %v4670 = vadd.f32 0.0, %v4669
      %v4671 = vpop.f32.mrb[0].mxu0
      %v4672 = vadd.f32 0.0, %v4671
      %v4673 = vpop.f32.mrb[0].mxu0
      %v4674 = vadd.f32 0.0, %v4673
      %v4675 = vpop.f32.mrb[0].mxu0
      %v4676 = vadd.f32 0.0, %v4675
      %4677 = vmatprep.mubr.bf16.mxu0 0
      %4678 = vmatmul.mubr.bf16.gmra.mrb[0].mxu0 %v3401
      %v4679 = vpop.f32.mrb[0].mxu0
      %v4680 = vadd.f32 0.0, %v4679
      %v4681 = vpop.f32.mrb[0].mxu0
      %v4682 = vadd.f32 0.0, %v4681
      %v4683 = vpop.f32.mrb[0].mxu0
      %v4684 = vadd.f32 0.0, %v4683
      %v4685 = vpop.f32.mrb[0].mxu0
      %v4686 = vadd.f32 0.0, %v4685
      %4687 = vmatprep.mubr.bf16.mxu0 0
      %4688 = vmatmul.mubr.bf16.gmra.mrb[0].mxu0 %v3402
      %v4689 = vpop.f32.mrb[0].mxu0
      %v4690 = vadd.f32 0.0, %v4689
      %v4691 = vpop.f32.mrb[0].mxu0
      %v4692 = vadd.f32 0.0, %v4691
      %v4693 = vpop.f32.mrb[0].mxu0
      %v4694 = vadd.f32 0.0, %v4693
      %v4695 = vpop.f32.mrb[0].mxu0
      %v4696 = vadd.f32 0.0, %v4695
      %4697 = vmatprep.mubr.bf16.mxu0 0
      %4698 = vmatmul.mubr.bf16.gmra.mrb[0].mxu0 %v3403
      %v4699 = vpop.f32.mrb[0].mxu0
      %v4700 = vadd.f32 0.0, %v4699
      %v4701 = vpop.f32.mrb[0].mxu0
      %v4702 = vadd.f32 0.0, %v4701
      %v4703 = vpop.f32.mrb[0].mxu0
      %v4704 = vadd.f32 0.0, %v4703
      %v4705 = vpop.f32.mrb[0].mxu0
      %v4706 = vadd.f32 0.0, %v4705
      %4707 = vmatprep.mubr.bf16.mxu0 0
      %4708 = vmatmul.mubr.bf16.gmra.mrb[0].mxu0 %v3404
      %v4709 = vpop.f32.mrb[0].mxu0
      %v4710 = vadd.f32 0.0, %v4709
      %v4711 = vpop.f32.mrb[0].mxu0
      %v4712 = vadd.f32 0.0, %v4711
      %v4713 = vpop.f32.mrb[0].mxu0
      %v4714 = vadd.f32 0.0, %v4713
      %v4715 = vpop.f32.mrb[0].mxu0
      %v4716 = vadd.f32 0.0, %v4715
      %4717 = vmatprep.mubr.bf16.mxu0 0
      %4718 = vmatmul.mubr.bf16.gmra.mrb[0].mxu0 %v3405
      %v4719 = vpop.f32.mrb[0].mxu0
      %v4720 = vadd.f32 0.0, %v4719
      %v4721 = vpop.f32.mrb[0].mxu0
      %v4722 = vadd.f32 0.0, %v4721
      %v4723 = vpop.f32.mrb[0].mxu0
      %v4724 = vadd.f32 0.0, %v4723
      %v4725 = vpop.f32.mrb[0].mxu0
      %v4726 = vadd.f32 0.0, %v4725
      %4727 = vmatprep.mubr.bf16.mxu0 0
      %4728 = vmatmul.mubr.bf16.gmra.mrb[0].mxu0 %v3406
      %v4729 = vpop.f32.mrb[0].mxu0
      %v4730 = vadd.f32 0.0, %v4729
      %v4731 = vpop.f32.mrb[0].mxu0
      %v4732 = vadd.f32 0.0, %v4731
      %v4733 = vpop.f32.mrb[0].mxu0
      %v4734 = vadd.f32 0.0, %v4733
      %v4735 = vpop.f32.mrb[0].mxu0
      %v4736 = vadd.f32 0.0, %v4735
      %4737 = vmatprep.mubr.bf16.mxu0 0
      %4738 = vmatmul.mubr.bf16.gmra.mrb[0].mxu0 %v3407
      %v4739 = vpop.f32.mrb[0].mxu0
      %v4740 = vadd.f32 0.0, %v4739
      %v4741 = vpop.f32.mrb[0].mxu0
      %v4742 = vadd.f32 0.0, %v4741
      %v4743 = vpop.f32.mrb[0].mxu0
      %v4744 = vadd.f32 0.0, %v4743
      %v4745 = vpop.f32.mrb[0].mxu0
      %v4746 = vadd.f32 0.0, %v4745
      %4747 = vmatprep.mubr.bf16.mxu0 0
      %4748 = vmatmul.mubr.bf16.gmra.mrb[0].mxu0 %v3408
      %v4749 = vpop.f32.mrb[0].mxu0
      %v4750 = vadd.f32 0.0, %v4749
      %v4751 = vpop.f32.mrb[0].mxu0
      %v4752 = vadd.f32 0.0, %v4751
      %v4753 = vpop.f32.mrb[0].mxu0
      %v4754 = vadd.f32 0.0, %v4753
      %v4755 = vpop.f32.mrb[0].mxu0
      %v4756 = vadd.f32 0.0, %v4755
      %4757 = vmatprep.mubr.bf16.mxu0 0
      %4758 = vmatmul.mubr.bf16.gmra.mrb[0].mxu0 %v3409
      %v4759 = vpop.f32.mrb[0].mxu0
      %v4760 = vadd.f32 0.0, %v4759
      %v4761 = vpop.f32.mrb[0].mxu0
      %v4762 = vadd.f32 0.0, %v4761
      %v4763 = vpop.f32.mrb[0].mxu0
      %v4764 = vadd.f32 0.0, %v4763
      %v4765 = vpop.f32.mrb[0].mxu0
      %v4766 = vadd.f32 0.0, %v4765
      %4767 = vmatprep.mubr.bf16.mxu0 0
      %4768 = vmatmul.mubr.bf16.gmra.mrb[0].mxu0 %v3410
      %v4769 = vpop.f32.mrb[0].mxu0
      %v4770 = vadd.f32 0.0, %v4769
      %v4771 = vpop.f32.mrb[0].mxu0
      %v4772 = vadd.f32 0.0, %v4771
      %v4773 = vpop.f32.mrb[0].mxu0
      %v4774 = vadd.f32 0.0, %v4773
      %v4775 = vpop.f32.mrb[0].mxu0
      %v4776 = vadd.f32 0.0, %v4775
      %4777 = vdwg.mxu0
      %4778 = vmatprep.subr.bf16.mxu0 %v3154
      %4779 = vmatpush1.bf16.msra.mxu0 %v3153
      %4780 = vmatprep.subr.bf16.mxu0 %v3174
      %4781 = vmatpush1.bf16.msra.mxu0 %v3173
      %4782 = vmatprep.subr.bf16.mxu0 %v3194
      %4783 = vmatpush1.bf16.msra.mxu0 %v3193
      %4784 = vmatprep.subr.bf16.mxu0 %v3214
      %4785 = vmatpush1.bf16.msra.mxu0 %v3213
      %4786 = vmatprep.subr.bf16.mxu0 %v3234
      %4787 = vmatpush1.bf16.msra.mxu0 %v3233
      %4788 = vmatprep.subr.bf16.mxu0 %v3254
      %4789 = vmatpush1.bf16.msra.mxu0 %v3253
      %4790 = vmatprep.subr.bf16.mxu0 %v3274
      %4791 = vmatpush1.bf16.msra.mxu0 %v3273
      %4792 = vmatprep.subr.bf16.mxu0 %v3294
      %4793 = vmatpush1.bf16.msra.mxu0 %v3293
      %4794 = vmatprep.subr.bf16.mxu0 0
      %4795 = vmatpush1.bf16.msra.mxu0 0
      %4796 = vmatprep.subr.bf16.mxu0 0
      %4797 = vmatpush1.bf16.msra.mxu0 0
      %4798 = vmatprep.subr.bf16.mxu0 0
      %4799 = vmatpush1.bf16.msra.mxu0 0
      %4800 = vmatprep.subr.bf16.mxu0 0
      %4801 = vmatpush1.bf16.msra.mxu0 0
      %4802 = vmatprep.subr.bf16.mxu0 0
      %4803 = vmatpush1.bf16.msra.mxu0 0
      %4804 = vmatprep.subr.bf16.mxu0 0
      %4805 = vmatpush1.bf16.msra.mxu0 0
      %4806 = vmatprep.subr.bf16.mxu0 0
      %4807 = vmatpush1.bf16.msra.mxu0 0
      %4808 = vmatprep.subr.bf16.mxu0 0
      %4809 = vmatpush1.bf16.msra.mxu0 0
      %4810 = vmatprep.mubr.bf16.mxu0 0
      %4811 = vmatmul.mubr.bf16.gmra.mrb[0].mxu0 %v3395
      %v4812 = vpop.f32.mrb[0].mxu0
      %v4813 = vadd.f32 0.0, %v4812
      %v4814 = vpop.f32.mrb[0].mxu0
      %v4815 = vadd.f32 0.0, %v4814
      %v4816 = vpop.f32.mrb[0].mxu0
      %v4817 = vadd.f32 0.0, %v4816
      %v4818 = vpop.f32.mrb[0].mxu0
      %v4819 = vadd.f32 0.0, %v4818
      %4820 = vmatprep.mubr.bf16.mxu0 0
      %4821 = vmatmul.mubr.bf16.gmra.mrb[0].mxu0 %v3396
      %v4822 = vpop.f32.mrb[0].mxu0
      %v4823 = vadd.f32 0.0, %v4822
      %v4824 = vpop.f32.mrb[0].mxu0
      %v4825 = vadd.f32 0.0, %v4824
      %v4826 = vpop.f32.mrb[0].mxu0
      %v4827 = vadd.f32 0.0, %v4826
      %v4828 = vpop.f32.mrb[0].mxu0
      %v4829 = vadd.f32 0.0, %v4828
      %4830 = vmatprep.mubr.bf16.mxu0 0
      %4831 = vmatmul.mubr.bf16.gmra.mrb[0].mxu0 %v3397
      %v4832 = vpop.f32.mrb[0].mxu0
      %v4833 = vadd.f32 0.0, %v4832
      %v4834 = vpop.f32.mrb[0].mxu0
      %v4835 = vadd.f32 0.0, %v4834
      %v4836 = vpop.f32.mrb[0].mxu0
      %v4837 = vadd.f32 0.0, %v4836
      %v4838 = vpop.f32.mrb[0].mxu0
      %v4839 = vadd.f32 0.0, %v4838
      %4840 = vmatprep.mubr.bf16.mxu0 0
      %4841 = vmatmul.mubr.bf16.gmra.mrb[0].mxu0 %v3398
      %v4842 = vpop.f32.mrb[0].mxu0
      %v4843 = vadd.f32 0.0, %v4842
      %v4844 = vpop.f32.mrb[0].mxu0
      %v4845 = vadd.f32 0.0, %v4844
      %v4846 = vpop.f32.mrb[0].mxu0
      %v4847 = vadd.f32 0.0, %v4846
      %v4848 = vpop.f32.mrb[0].mxu0
      %v4849 = vadd.f32 0.0, %v4848
      %4850 = vmatprep.mubr.bf16.mxu0 0
      %4851 = vmatmul.mubr.bf16.gmra.mrb[0].mxu0 %v3399
      %v4852 = vpop.f32.mrb[0].mxu0
      %v4853 = vadd.f32 0.0, %v4852
      %v4854 = vpop.f32.mrb[0].mxu0
      %v4855 = vadd.f32 0.0, %v4854
      %v4856 = vpop.f32.mrb[0].mxu0
      %v4857 = vadd.f32 0.0, %v4856
      %v4858 = vpop.f32.mrb[0].mxu0
      %v4859 = vadd.f32 0.0, %v4858
      %4860 = vmatprep.mubr.bf16.mxu0 0
      %4861 = vmatmul.mubr.bf16.gmra.mrb[0].mxu0 %v3400
      %v4862 = vpop.f32.mrb[0].mxu0
      %v4863 = vadd.f32 0.0, %v4862
      %v4864 = vpop.f32.mrb[0].mxu0
      %v4865 = vadd.f32 0.0, %v4864
      %v4866 = vpop.f32.mrb[0].mxu0
      %v4867 = vadd.f32 0.0, %v4866
      %v4868 = vpop.f32.mrb[0].mxu0
      %v4869 = vadd.f32 0.0, %v4868
      %4870 = vmatprep.mubr.bf16.mxu0 0
      %4871 = vmatmul.mubr.bf16.gmra.mrb[0].mxu0 %v3401
      %v4872 = vpop.f32.mrb[0].mxu0
      %v4873 = vadd.f32 0.0, %v4872
      %v4874 = vpop.f32.mrb[0].mxu0
      %v4875 = vadd.f32 0.0, %v4874
      %v4876 = vpop.f32.mrb[0].mxu0
      %v4877 = vadd.f32 0.0, %v4876
      %v4878 = vpop.f32.mrb[0].mxu0
      %v4879 = vadd.f32 0.0, %v4878
      %4880 = vmatprep.mubr.bf16.mxu0 0
      %4881 = vmatmul.mubr.bf16.gmra.mrb[0].mxu0 %v3402
      %v4882 = vpop.f32.mrb[0].mxu0
      %v4883 = vadd.f32 0.0, %v4882
      %v4884 = vpop.f32.mrb[0].mxu0
      %v4885 = vadd.f32 0.0, %v4884
      %v4886 = vpop.f32.mrb[0].mxu0
      %v4887 = vadd.f32 0.0, %v4886
      %v4888 = vpop.f32.mrb[0].mxu0
      %v4889 = vadd.f32 0.0, %v4888
      %4890 = vmatprep.mubr.bf16.mxu0 0
      %4891 = vmatmul.mubr.bf16.gmra.mrb[0].mxu0 %v3403
      %v4892 = vpop.f32.mrb[0].mxu0
      %v4893 = vadd.f32 0.0, %v4892
      %v4894 = vpop.f32.mrb[0].mxu0
      %v4895 = vadd.f32 0.0, %v4894
      %v4896 = vpop.f32.mrb[0].mxu0
      %v4897 = vadd.f32 0.0, %v4896
      %v4898 = vpop.f32.mrb[0].mxu0
      %v4899 = vadd.f32 0.0, %v4898
      %4900 = vmatprep.mubr.bf16.mxu0 0
      %4901 = vmatmul.mubr.bf16.gmra.mrb[0].mxu0 %v3404
      %v4902 = vpop.f32.mrb[0].mxu0
      %v4903 = vadd.f32 0.0, %v4902
      %v4904 = vpop.f32.mrb[0].mxu0
      %v4905 = vadd.f32 0.0, %v4904
      %v4906 = vpop.f32.mrb[0].mxu0
      %v4907 = vadd.f32 0.0, %v4906
      %v4908 = vpop.f32.mrb[0].mxu0
      %v4909 = vadd.f32 0.0, %v4908
      %4910 = vmatprep.mubr.bf16.mxu0 0
      %4911 = vmatmul.mubr.bf16.gmra.mrb[0].mxu0 %v3405
      %v4912 = vpop.f32.mrb[0].mxu0
      %v4913 = vadd.f32 0.0, %v4912
      %v4914 = vpop.f32.mrb[0].mxu0
      %v4915 = vadd.f32 0.0, %v4914
      %v4916 = vpop.f32.mrb[0].mxu0
      %v4917 = vadd.f32 0.0, %v4916
      %v4918 = vpop.f32.mrb[0].mxu0
      %v4919 = vadd.f32 0.0, %v4918
      %4920 = vmatprep.mubr.bf16.mxu0 0
      %4921 = vmatmul.mubr.bf16.gmra.mrb[0].mxu0 %v3406
      %v4922 = vpop.f32.mrb[0].mxu0
      %v4923 = vadd.f32 0.0, %v4922
      %v4924 = vpop.f32.mrb[0].mxu0
      %v4925 = vadd.f32 0.0, %v4924
      %v4926 = vpop.f32.mrb[0].mxu0
      %v4927 = vadd.f32 0.0, %v4926
      %v4928 = vpop.f32.mrb[0].mxu0
      %v4929 = vadd.f32 0.0, %v4928
      %4930 = vmatprep.mubr.bf16.mxu0 0
      %4931 = vmatmul.mubr.bf16.gmra.mrb[0].mxu0 %v3407
      %v4932 = vpop.f32.mrb[0].mxu0
      %v4933 = vadd.f32 0.0, %v4932
      %v4934 = vpop.f32.mrb[0].mxu0
      %v4935 = vadd.f32 0.0, %v4934
      %v4936 = vpop.f32.mrb[0].mxu0
      %v4937 = vadd.f32 0.0, %v4936
      %v4938 = vpop.f32.mrb[0].mxu0
      %v4939 = vadd.f32 0.0, %v4938
      %4940 = vmatprep.mubr.bf16.mxu0 0
      %4941 = vmatmul.mubr.bf16.gmra.mrb[0].mxu0 %v3408
      %v4942 = vpop.f32.mrb[0].mxu0
      %v4943 = vadd.f32 0.0, %v4942
      %v4944 = vpop.f32.mrb[0].mxu0
      %v4945 = vadd.f32 0.0, %v4944
      %v4946 = vpop.f32.mrb[0].mxu0
      %v4947 = vadd.f32 0.0, %v4946
      %v4948 = vpop.f32.mrb[0].mxu0
      %v4949 = vadd.f32 0.0, %v4948
      %4950 = vmatprep.mubr.bf16.mxu0 0
      %4951 = vmatmul.mubr.bf16.gmra.mrb[0].mxu0 %v3409
      %v4952 = vpop.f32.mrb[0].mxu0
      %v4953 = vadd.f32 0.0, %v4952
      %v4954 = vpop.f32.mrb[0].mxu0
      %v4955 = vadd.f32 0.0, %v4954
      %v4956 = vpop.f32.mrb[0].mxu0
      %v4957 = vadd.f32 0.0, %v4956
      %v4958 = vpop.f32.mrb[0].mxu0
      %v4959 = vadd.f32 0.0, %v4958
      %4960 = vmatprep.mubr.bf16.mxu0 0
      %4961 = vmatmul.mubr.bf16.gmra.mrb[0].mxu0 %v3410
      %v4962 = vpop.f32.mrb[0].mxu0
      %v4963 = vadd.f32 0.0, %v4962
      %v4964 = vpop.f32.mrb[0].mxu0
      %v4965 = vadd.f32 0.0, %v4964
      %v4966 = vpop.f32.mrb[0].mxu0
      %v4967 = vadd.f32 0.0, %v4966
      %v4968 = vpop.f32.mrb[0].mxu0
      %v4969 = vadd.f32 0.0, %v4968
      %4970 = vdwg.mxu0
      %4971 = vmatprep.subr.bf16.mxu0 %v3156
      %4972 = vmatpush1.bf16.msra.mxu0 %v3155
      %4973 = vmatprep.subr.bf16.mxu0 %v3176
      %4974 = vmatpush1.bf16.msra.mxu0 %v3175
      %4975 = vmatprep.subr.bf16.mxu0 %v3196
      %4976 = vmatpush1.bf16.msra.mxu0 %v3195
      %4977 = vmatprep.subr.bf16.mxu0 %v3216
      %4978 = vmatpush1.bf16.msra.mxu0 %v3215
      %4979 = vmatprep.subr.bf16.mxu0 %v3236
      %4980 = vmatpush1.bf16.msra.mxu0 %v3235
      %4981 = vmatprep.subr.bf16.mxu0 %v3256
      %4982 = vmatpush1.bf16.msra.mxu0 %v3255
      %4983 = vmatprep.subr.bf16.mxu0 %v3276
      %4984 = vmatpush1.bf16.msra.mxu0 %v3275
      %4985 = vmatprep.subr.bf16.mxu0 %v3296
      %4986 = vmatpush1.bf16.msra.mxu0 %v3295
      %4987 = vmatprep.subr.bf16.mxu0 0
      %4988 = vmatpush1.bf16.msra.mxu0 0
      %4989 = vmatprep.subr.bf16.mxu0 0
      %4990 = vmatpush1.bf16.msra.mxu0 0
      %4991 = vmatprep.subr.bf16.mxu0 0
      %4992 = vmatpush1.bf16.msra.mxu0 0
      %4993 = vmatprep.subr.bf16.mxu0 0
      %4994 = vmatpush1.bf16.msra.mxu0 0
      %4995 = vmatprep.subr.bf16.mxu0 0
      %4996 = vmatpush1.bf16.msra.mxu0 0
      %4997 = vmatprep.subr.bf16.mxu0 0
      %4998 = vmatpush1.bf16.msra.mxu0 0
      %4999 = vmatprep.subr.bf16.mxu0 0
      %5000 = vmatpush1.bf16.msra.mxu0 0
      %5001 = vmatprep.subr.bf16.mxu0 0
      %5002 = vmatpush1.bf16.msra.mxu0 0
      %5003 = vmatprep.mubr.bf16.mxu0 0
      %5004 = vmatmul.mubr.bf16.gmra.mrb[0].mxu0 %v3395
      %v5005 = vpop.f32.mrb[0].mxu0
      %v5006 = vadd.f32 0.0, %v5005
      %v5007 = vpop.f32.mrb[0].mxu0
      %v5008 = vadd.f32 0.0, %v5007
      %v5009 = vpop.f32.mrb[0].mxu0
      %v5010 = vadd.f32 0.0, %v5009
      %v5011 = vpop.f32.mrb[0].mxu0
      %v5012 = vadd.f32 0.0, %v5011
      %5013 = vmatprep.mubr.bf16.mxu0 0
      %5014 = vmatmul.mubr.bf16.gmra.mrb[0].mxu0 %v3396
      %v5015 = vpop.f32.mrb[0].mxu0
      %v5016 = vadd.f32 0.0, %v5015
      %v5017 = vpop.f32.mrb[0].mxu0
      %v5018 = vadd.f32 0.0, %v5017
      %v5019 = vpop.f32.mrb[0].mxu0
      %v5020 = vadd.f32 0.0, %v5019
      %v5021 = vpop.f32.mrb[0].mxu0
      %v5022 = vadd.f32 0.0, %v5021
      %5023 = vmatprep.mubr.bf16.mxu0 0
      %5024 = vmatmul.mubr.bf16.gmra.mrb[0].mxu0 %v3397
      %v5025 = vpop.f32.mrb[0].mxu0
      %v5026 = vadd.f32 0.0, %v5025
      %v5027 = vpop.f32.mrb[0].mxu0
      %v5028 = vadd.f32 0.0, %v5027
      %v5029 = vpop.f32.mrb[0].mxu0
      %v5030 = vadd.f32 0.0, %v5029
      %v5031 = vpop.f32.mrb[0].mxu0
      %v5032 = vadd.f32 0.0, %v5031
      %5033 = vmatprep.mubr.bf16.mxu0 0
      %5034 = vmatmul.mubr.bf16.gmra.mrb[0].mxu0 %v3398
      %v5035 = vpop.f32.mrb[0].mxu0
      %v5036 = vadd.f32 0.0, %v5035
      %v5037 = vpop.f32.mrb[0].mxu0
      %v5038 = vadd.f32 0.0, %v5037
      %v5039 = vpop.f32.mrb[0].mxu0
      %v5040 = vadd.f32 0.0, %v5039
      %v5041 = vpop.f32.mrb[0].mxu0
      %v5042 = vadd.f32 0.0, %v5041
      %5043 = vmatprep.mubr.bf16.mxu0 0
      %5044 = vmatmul.mubr.bf16.gmra.mrb[0].mxu0 %v3399
      %v5045 = vpop.f32.mrb[0].mxu0
      %v5046 = vadd.f32 0.0, %v5045
      %v5047 = vpop.f32.mrb[0].mxu0
      %v5048 = vadd.f32 0.0, %v5047
      %v5049 = vpop.f32.mrb[0].mxu0
      %v5050 = vadd.f32 0.0, %v5049
      %v5051 = vpop.f32.mrb[0].mxu0
      %v5052 = vadd.f32 0.0, %v5051
      %5053 = vmatprep.mubr.bf16.mxu0 0
      %5054 = vmatmul.mubr.bf16.gmra.mrb[0].mxu0 %v3400
      %v5055 = vpop.f32.mrb[0].mxu0
      %v5056 = vadd.f32 0.0, %v5055
      %v5057 = vpop.f32.mrb[0].mxu0
      %v5058 = vadd.f32 0.0, %v5057
      %v5059 = vpop.f32.mrb[0].mxu0
      %v5060 = vadd.f32 0.0, %v5059
      %v5061 = vpop.f32.mrb[0].mxu0
      %v5062 = vadd.f32 0.0, %v5061
      %5063 = vmatprep.mubr.bf16.mxu0 0
      %5064 = vmatmul.mubr.bf16.gmra.mrb[0].mxu0 %v3401
      %v5065 = vpop.f32.mrb[0].mxu0
      %v5066 = vadd.f32 0.0, %v5065
      %v5067 = vpop.f32.mrb[0].mxu0
      %v5068 = vadd.f32 0.0, %v5067
      %v5069 = vpop.f32.mrb[0].mxu0
      %v5070 = vadd.f32 0.0, %v5069
      %v5071 = vpop.f32.mrb[0].mxu0
      %v5072 = vadd.f32 0.0, %v5071
      %5073 = vmatprep.mubr.bf16.mxu0 0
      %5074 = vmatmul.mubr.bf16.gmra.mrb[0].mxu0 %v3402
      %v5075 = vpop.f32.mrb[0].mxu0
      %v5076 = vadd.f32 0.0, %v5075
      %v5077 = vpop.f32.mrb[0].mxu0
      %v5078 = vadd.f32 0.0, %v5077
      %v5079 = vpop.f32.mrb[0].mxu0
      %v5080 = vadd.f32 0.0, %v5079
      %v5081 = vpop.f32.mrb[0].mxu0
      %v5082 = vadd.f32 0.0, %v5081
      %5083 = vmatprep.mubr.bf16.mxu0 0
      %5084 = vmatmul.mubr.bf16.gmra.mrb[0].mxu0 %v3403
      %v5085 = vpop.f32.mrb[0].mxu0
      %v5086 = vadd.f32 0.0, %v5085
      %v5087 = vpop.f32.mrb[0].mxu0
      %v5088 = vadd.f32 0.0, %v5087
      %v5089 = vpop.f32.mrb[0].mxu0
      %v5090 = vadd.f32 0.0, %v5089
      %v5091 = vpop.f32.mrb[0].mxu0
      %v5092 = vadd.f32 0.0, %v5091
      %5093 = vmatprep.mubr.bf16.mxu0 0
      %5094 = vmatmul.mubr.bf16.gmra.mrb[0].mxu0 %v3404
      %v5095 = vpop.f32.mrb[0].mxu0
      %v5096 = vadd.f32 0.0, %v5095
      %v5097 = vpop.f32.mrb[0].mxu0
      %v5098 = vadd.f32 0.0, %v5097
      %v5099 = vpop.f32.mrb[0].mxu0
      %v5100 = vadd.f32 0.0, %v5099
      %v5101 = vpop.f32.mrb[0].mxu0
      %v5102 = vadd.f32 0.0, %v5101
      %5103 = vmatprep.mubr.bf16.mxu0 0
      %5104 = vmatmul.mubr.bf16.gmra.mrb[0].mxu0 %v3405
      %v5105 = vpop.f32.mrb[0].mxu0
      %v5106 = vadd.f32 0.0, %v5105
      %v5107 = vpop.f32.mrb[0].mxu0
      %v5108 = vadd.f32 0.0, %v5107
      %v5109 = vpop.f32.mrb[0].mxu0
      %v5110 = vadd.f32 0.0, %v5109
      %v5111 = vpop.f32.mrb[0].mxu0
      %v5112 = vadd.f32 0.0, %v5111
      %5113 = vmatprep.mubr.bf16.mxu0 0
      %5114 = vmatmul.mubr.bf16.gmra.mrb[0].mxu0 %v3406
      %v5115 = vpop.f32.mrb[0].mxu0
      %v5116 = vadd.f32 0.0, %v5115
      %v5117 = vpop.f32.mrb[0].mxu0
      %v5118 = vadd.f32 0.0, %v5117
      %v5119 = vpop.f32.mrb[0].mxu0
      %v5120 = vadd.f32 0.0, %v5119
      %v5121 = vpop.f32.mrb[0].mxu0
      %v5122 = vadd.f32 0.0, %v5121
      %5123 = vmatprep.mubr.bf16.mxu0 0
      %5124 = vmatmul.mubr.bf16.gmra.mrb[0].mxu0 %v3407
      %v5125 = vpop.f32.mrb[0].mxu0
      %v5126 = vadd.f32 0.0, %v5125
      %v5127 = vpop.f32.mrb[0].mxu0
      %v5128 = vadd.f32 0.0, %v5127
      %v5129 = vpop.f32.mrb[0].mxu0
      %v5130 = vadd.f32 0.0, %v5129
      %v5131 = vpop.f32.mrb[0].mxu0
      %v5132 = vadd.f32 0.0, %v5131
      %5133 = vmatprep.mubr.bf16.mxu0 0
      %5134 = vmatmul.mubr.bf16.gmra.mrb[0].mxu0 %v3408
      %v5135 = vpop.f32.mrb[0].mxu0
      %v5136 = vadd.f32 0.0, %v5135
      %v5137 = vpop.f32.mrb[0].mxu0
      %v5138 = vadd.f32 0.0, %v5137
      %v5139 = vpop.f32.mrb[0].mxu0
      %v5140 = vadd.f32 0.0, %v5139
      %v5141 = vpop.f32.mrb[0].mxu0
      %v5142 = vadd.f32 0.0, %v5141
      %5143 = vmatprep.mubr.bf16.mxu0 0
      %5144 = vmatmul.mubr.bf16.gmra.mrb[0].mxu0 %v3409
      %v5145 = vpop.f32.mrb[0].mxu0
      %v5146 = vadd.f32 0.0, %v5145
      %v5147 = vpop.f32.mrb[0].mxu0
      %v5148 = vadd.f32 0.0, %v5147
      %v5149 = vpop.f32.mrb[0].mxu0
      %v5150 = vadd.f32 0.0, %v5149
      %v5151 = vpop.f32.mrb[0].mxu0
      %v5152 = vadd.f32 0.0, %v5151
      %5153 = vmatprep.mubr.bf16.mxu0 0
      %5154 = vmatmul.mubr.bf16.gmra.mrb[0].mxu0 %v3410
      %v5155 = vpop.f32.mrb[0].mxu0
      %v5156 = vadd.f32 0.0, %v5155
      %v5157 = vpop.f32.mrb[0].mxu0
      %v5158 = vadd.f32 0.0, %v5157
      %v5159 = vpop.f32.mrb[0].mxu0
      %v5160 = vadd.f32 0.0, %v5159
      %v5161 = vpop.f32.mrb[0].mxu0
      %v5162 = vadd.f32 0.0, %v5161
      %5163 = vdwg.mxu0
      %5164 = vmatprep.subr.bf16.mxu0 %v3158
      %5165 = vmatpush1.bf16.msra.mxu0 %v3157
      %5166 = vmatprep.subr.bf16.mxu0 %v3178
      %5167 = vmatpush1.bf16.msra.mxu0 %v3177
      %5168 = vmatprep.subr.bf16.mxu0 %v3198
      %5169 = vmatpush1.bf16.msra.mxu0 %v3197
      %5170 = vmatprep.subr.bf16.mxu0 %v3218
      %5171 = vmatpush1.bf16.msra.mxu0 %v3217
      %5172 = vmatprep.subr.bf16.mxu0 %v3238
      %5173 = vmatpush1.bf16.msra.mxu0 %v3237
      %5174 = vmatprep.subr.bf16.mxu0 %v3258
      %5175 = vmatpush1.bf16.msra.mxu0 %v3257
      %5176 = vmatprep.subr.bf16.mxu0 %v3278
      %5177 = vmatpush1.bf16.msra.mxu0 %v3277
      %5178 = vmatprep.subr.bf16.mxu0 %v3298
      %5179 = vmatpush1.bf16.msra.mxu0 %v3297
      %5180 = vmatprep.subr.bf16.mxu0 0
      %5181 = vmatpush1.bf16.msra.mxu0 0
      %5182 = vmatprep.subr.bf16.mxu0 0
      %5183 = vmatpush1.bf16.msra.mxu0 0
      %5184 = vmatprep.subr.bf16.mxu0 0
      %5185 = vmatpush1.bf16.msra.mxu0 0
      %5186 = vmatprep.subr.bf16.mxu0 0
      %5187 = vmatpush1.bf16.msra.mxu0 0
      %5188 = vmatprep.subr.bf16.mxu0 0
      %5189 = vmatpush1.bf16.msra.mxu0 0
      %5190 = vmatprep.subr.bf16.mxu0 0
      %5191 = vmatpush1.bf16.msra.mxu0 0
      %5192 = vmatprep.subr.bf16.mxu0 0
      %5193 = vmatpush1.bf16.msra.mxu0 0
      %5194 = vmatprep.subr.bf16.mxu0 0
      %5195 = vmatpush1.bf16.msra.mxu0 0
      %5196 = vmatprep.mubr.bf16.mxu0 0
      %5197 = vmatmul.mubr.bf16.gmra.mrb[0].mxu0 %v3395
      %v5198 = vpop.f32.mrb[0].mxu0
      %v5199 = vadd.f32 0.0, %v5198
      %v5200 = vpop.f32.mrb[0].mxu0
      %v5201 = vadd.f32 0.0, %v5200
      %v5202 = vpop.f32.mrb[0].mxu0
      %v5203 = vadd.f32 0.0, %v5202
      %v5204 = vpop.f32.mrb[0].mxu0
      %v5205 = vadd.f32 0.0, %v5204
      %5206 = vmatprep.mubr.bf16.mxu0 0
      %5207 = vmatmul.mubr.bf16.gmra.mrb[0].mxu0 %v3396
      %v5208 = vpop.f32.mrb[0].mxu0
      %v5209 = vadd.f32 0.0, %v5208
      %v5210 = vpop.f32.mrb[0].mxu0
      %v5211 = vadd.f32 0.0, %v5210
      %v5212 = vpop.f32.mrb[0].mxu0
      %v5213 = vadd.f32 0.0, %v5212
      %v5214 = vpop.f32.mrb[0].mxu0
      %v5215 = vadd.f32 0.0, %v5214
      %5216 = vmatprep.mubr.bf16.mxu0 0
      %5217 = vmatmul.mubr.bf16.gmra.mrb[0].mxu0 %v3397
      %v5218 = vpop.f32.mrb[0].mxu0
      %v5219 = vadd.f32 0.0, %v5218
      %v5220 = vpop.f32.mrb[0].mxu0
      %v5221 = vadd.f32 0.0, %v5220
      %v5222 = vpop.f32.mrb[0].mxu0
      %v5223 = vadd.f32 0.0, %v5222
      %v5224 = vpop.f32.mrb[0].mxu0
      %v5225 = vadd.f32 0.0, %v5224
      %5226 = vmatprep.mubr.bf16.mxu0 0
      %5227 = vmatmul.mubr.bf16.gmra.mrb[0].mxu0 %v3398
      %v5228 = vpop.f32.mrb[0].mxu0
      %v5229 = vadd.f32 0.0, %v5228
      %v5230 = vpop.f32.mrb[0].mxu0
      %v5231 = vadd.f32 0.0, %v5230
      %v5232 = vpop.f32.mrb[0].mxu0
      %v5233 = vadd.f32 0.0, %v5232
      %v5234 = vpop.f32.mrb[0].mxu0
      %v5235 = vadd.f32 0.0, %v5234
      %5236 = vmatprep.mubr.bf16.mxu0 0
      %5237 = vmatmul.mubr.bf16.gmra.mrb[0].mxu0 %v3399
      %v5238 = vpop.f32.mrb[0].mxu0
      %v5239 = vadd.f32 0.0, %v5238
      %v5240 = vpop.f32.mrb[0].mxu0
      %v5241 = vadd.f32 0.0, %v5240
      %v5242 = vpop.f32.mrb[0].mxu0
      %v5243 = vadd.f32 0.0, %v5242
      %v5244 = vpop.f32.mrb[0].mxu0
      %v5245 = vadd.f32 0.0, %v5244
      %5246 = vmatprep.mubr.bf16.mxu0 0
      %5247 = vmatmul.mubr.bf16.gmra.mrb[0].mxu0 %v3400
      %v5248 = vpop.f32.mrb[0].mxu0
      %v5249 = vadd.f32 0.0, %v5248
      %v5250 = vpop.f32.mrb[0].mxu0
      %v5251 = vadd.f32 0.0, %v5250
      %v5252 = vpop.f32.mrb[0].mxu0
      %v5253 = vadd.f32 0.0, %v5252
      %v5254 = vpop.f32.mrb[0].mxu0
      %v5255 = vadd.f32 0.0, %v5254
      %5256 = vmatprep.mubr.bf16.mxu0 0
      %5257 = vmatmul.mubr.bf16.gmra.mrb[0].mxu0 %v3401
      %v5258 = vpop.f32.mrb[0].mxu0
      %v5259 = vadd.f32 0.0, %v5258
      %v5260 = vpop.f32.mrb[0].mxu0
      %v5261 = vadd.f32 0.0, %v5260
      %v5262 = vpop.f32.mrb[0].mxu0
      %v5263 = vadd.f32 0.0, %v5262
      %v5264 = vpop.f32.mrb[0].mxu0
      %v5265 = vadd.f32 0.0, %v5264
      %5266 = vmatprep.mubr.bf16.mxu0 0
      %5267 = vmatmul.mubr.bf16.gmra.mrb[0].mxu0 %v3402
      %v5268 = vpop.f32.mrb[0].mxu0
      %v5269 = vadd.f32 0.0, %v5268
      %v5270 = vpop.f32.mrb[0].mxu0
      %v5271 = vadd.f32 0.0, %v5270
      %v5272 = vpop.f32.mrb[0].mxu0
      %v5273 = vadd.f32 0.0, %v5272
      %v5274 = vpop.f32.mrb[0].mxu0
      %v5275 = vadd.f32 0.0, %v5274
      %5276 = vmatprep.mubr.bf16.mxu0 0
      %5277 = vmatmul.mubr.bf16.gmra.mrb[0].mxu0 %v3403
      %v5278 = vpop.f32.mrb[0].mxu0
      %v5279 = vadd.f32 0.0, %v5278
      %v5280 = vpop.f32.mrb[0].mxu0
      %v5281 = vadd.f32 0.0, %v5280
      %v5282 = vpop.f32.mrb[0].mxu0
      %v5283 = vadd.f32 0.0, %v5282
      %v5284 = vpop.f32.mrb[0].mxu0
      %v5285 = vadd.f32 0.0, %v5284
      %5286 = vmatprep.mubr.bf16.mxu0 0
      %5287 = vmatmul.mubr.bf16.gmra.mrb[0].mxu0 %v3404
      %v5288 = vpop.f32.mrb[0].mxu0
      %v5289 = vadd.f32 0.0, %v5288
      %v5290 = vpop.f32.mrb[0].mxu0
      %v5291 = vadd.f32 0.0, %v5290
      %v5292 = vpop.f32.mrb[0].mxu0
      %v5293 = vadd.f32 0.0, %v5292
      %v5294 = vpop.f32.mrb[0].mxu0
      %v5295 = vadd.f32 0.0, %v5294
      %5296 = vmatprep.mubr.bf16.mxu0 0
      %5297 = vmatmul.mubr.bf16.gmra.mrb[0].mxu0 %v3405
      %v5298 = vpop.f32.mrb[0].mxu0
      %v5299 = vadd.f32 0.0, %v5298
      %v5300 = vpop.f32.mrb[0].mxu0
      %v5301 = vadd.f32 0.0, %v5300
      %v5302 = vpop.f32.mrb[0].mxu0
      %v5303 = vadd.f32 0.0, %v5302
      %v5304 = vpop.f32.mrb[0].mxu0
      %v5305 = vadd.f32 0.0, %v5304
      %5306 = vmatprep.mubr.bf16.mxu0 0
      %5307 = vmatmul.mubr.bf16.gmra.mrb[0].mxu0 %v3406
      %v5308 = vpop.f32.mrb[0].mxu0
      %v5309 = vadd.f32 0.0, %v5308
      %v5310 = vpop.f32.mrb[0].mxu0
      %v5311 = vadd.f32 0.0, %v5310
      %v5312 = vpop.f32.mrb[0].mxu0
      %v5313 = vadd.f32 0.0, %v5312
      %v5314 = vpop.f32.mrb[0].mxu0
      %v5315 = vadd.f32 0.0, %v5314
      %5316 = vmatprep.mubr.bf16.mxu0 0
      %5317 = vmatmul.mubr.bf16.gmra.mrb[0].mxu0 %v3407
      %v5318 = vpop.f32.mrb[0].mxu0
      %v5319 = vadd.f32 0.0, %v5318
      %v5320 = vpop.f32.mrb[0].mxu0
      %v5321 = vadd.f32 0.0, %v5320
      %v5322 = vpop.f32.mrb[0].mxu0
      %v5323 = vadd.f32 0.0, %v5322
      %v5324 = vpop.f32.mrb[0].mxu0
      %v5325 = vadd.f32 0.0, %v5324
      %5326 = vmatprep.mubr.bf16.mxu0 0
      %5327 = vmatmul.mubr.bf16.gmra.mrb[0].mxu0 %v3408
      %v5328 = vpop.f32.mrb[0].mxu0
      %v5329 = vadd.f32 0.0, %v5328
      %v5330 = vpop.f32.mrb[0].mxu0
      %v5331 = vadd.f32 0.0, %v5330
      %v5332 = vpop.f32.mrb[0].mxu0
      %v5333 = vadd.f32 0.0, %v5332
      %v5334 = vpop.f32.mrb[0].mxu0
      %v5335 = vadd.f32 0.0, %v5334
      %5336 = vmatprep.mubr.bf16.mxu0 0
      %5337 = vmatmul.mubr.bf16.gmra.mrb[0].mxu0 %v3409
      %v5338 = vpop.f32.mrb[0].mxu0
      %v5339 = vadd.f32 0.0, %v5338
      %v5340 = vpop.f32.mrb[0].mxu0
      %v5341 = vadd.f32 0.0, %v5340
      %v5342 = vpop.f32.mrb[0].mxu0
      %v5343 = vadd.f32 0.0, %v5342
      %v5344 = vpop.f32.mrb[0].mxu0
      %v5345 = vadd.f32 0.0, %v5344
      %5346 = vmatprep.mubr.bf16.mxu0 0
      %5347 = vmatmul.mubr.bf16.gmra.mrb[0].mxu0 %v3410
      %v5348 = vpop.f32.mrb[0].mxu0
      %v5349 = vadd.f32 0.0, %v5348
      %v5350 = vpop.f32.mrb[0].mxu0
      %v5351 = vadd.f32 0.0, %v5350
      %v5352 = vpop.f32.mrb[0].mxu0
      %v5353 = vadd.f32 0.0, %v5352
      %v5354 = vpop.f32.mrb[0].mxu0
      %v5355 = vadd.f32 0.0, %v5354
      %5356 = vdwg.mxu0
      %v5357 = vpack.c.bf16 %v3466, %v3462
      %v5358 = vpack.c.bf16 %v3468, %v3464
      %v5359 = vpack.c.bf16 %v3659, %v3655
      %v5360 = vpack.c.bf16 %v3661, %v3657
      %v5361 = vpack.c.bf16 %v3852, %v3848
      %v5362 = vpack.c.bf16 %v3854, %v3850
      %v5363 = vpack.c.bf16 %v4045, %v4041
      %v5364 = vpack.c.bf16 %v4047, %v4043
      %v5365 = vpack.c.bf16 %v4238, %v4234
      %v5366 = vpack.c.bf16 %v4240, %v4236
      %v5367 = vpack.c.bf16 %v4431, %v4427
      %v5368 = vpack.c.bf16 %v4433, %v4429
      %v5369 = vpack.c.bf16 %v4624, %v4620
      %v5370 = vpack.c.bf16 %v4626, %v4622
      %v5371 = vpack.c.bf16 %v4817, %v4813
      %v5372 = vpack.c.bf16 %v4819, %v4815
      %v5373 = vpack.c.bf16 %v5010, %v5006
      %v5374 = vpack.c.bf16 %v5012, %v5008
      %v5375 = vpack.c.bf16 %v5203, %v5199
      %v5376 = vpack.c.bf16 %v5205, %v5201
      %v5377 = vpack.c.bf16 %v3476, %v3472
      %v5378 = vpack.c.bf16 %v3478, %v3474
      %v5379 = vpack.c.bf16 %v3669, %v3665
      %v5380 = vpack.c.bf16 %v3671, %v3667
      %v5381 = vpack.c.bf16 %v3862, %v3858
      %v5382 = vpack.c.bf16 %v3864, %v3860
      %v5383 = vpack.c.bf16 %v4055, %v4051
      %v5384 = vpack.c.bf16 %v4057, %v4053
      %v5385 = vpack.c.bf16 %v4248, %v4244
      %v5386 = vpack.c.bf16 %v4250, %v4246
      %v5387 = vpack.c.bf16 %v4441, %v4437
      %v5388 = vpack.c.bf16 %v4443, %v4439
      %v5389 = vpack.c.bf16 %v4634, %v4630
      %v5390 = vpack.c.bf16 %v4636, %v4632
      %v5391 = vpack.c.bf16 %v4827, %v4823
      %v5392 = vpack.c.bf16 %v4829, %v4825
      %v5393 = vpack.c.bf16 %v5020, %v5016
      %v5394 = vpack.c.bf16 %v5022, %v5018
      %v5395 = vpack.c.bf16 %v5213, %v5209
      %v5396 = vpack.c.bf16 %v5215, %v5211
      %v5397 = vpack.c.bf16 %v3486, %v3482
      %v5398 = vpack.c.bf16 %v3488, %v3484
      %v5399 = vpack.c.bf16 %v3679, %v3675
      %v5400 = vpack.c.bf16 %v3681, %v3677
      %v5401 = vpack.c.bf16 %v3872, %v3868
      %v5402 = vpack.c.bf16 %v3874, %v3870
      %v5403 = vpack.c.bf16 %v4065, %v4061
      %v5404 = vpack.c.bf16 %v4067, %v4063
      %v5405 = vpack.c.bf16 %v4258, %v4254
      %v5406 = vpack.c.bf16 %v4260, %v4256
      %v5407 = vpack.c.bf16 %v4451, %v4447
      %v5408 = vpack.c.bf16 %v4453, %v4449
      %v5409 = vpack.c.bf16 %v4644, %v4640
      %v5410 = vpack.c.bf16 %v4646, %v4642
      %v5411 = vpack.c.bf16 %v4837, %v4833
      %v5412 = vpack.c.bf16 %v4839, %v4835
      %v5413 = vpack.c.bf16 %v5030, %v5026
      %v5414 = vpack.c.bf16 %v5032, %v5028
      %v5415 = vpack.c.bf16 %v5223, %v5219
      %v5416 = vpack.c.bf16 %v5225, %v5221
      %v5417 = vpack.c.bf16 %v3496, %v3492
      %v5418 = vpack.c.bf16 %v3498, %v3494
      %v5419 = vpack.c.bf16 %v3689, %v3685
      %v5420 = vpack.c.bf16 %v3691, %v3687
      %v5421 = vpack.c.bf16 %v3882, %v3878
      %v5422 = vpack.c.bf16 %v3884, %v3880
      %v5423 = vpack.c.bf16 %v4075, %v4071
      %v5424 = vpack.c.bf16 %v4077, %v4073
      %v5425 = vpack.c.bf16 %v4268, %v4264
      %v5426 = vpack.c.bf16 %v4270, %v4266
      %v5427 = vpack.c.bf16 %v4461, %v4457
      %v5428 = vpack.c.bf16 %v4463, %v4459
      %v5429 = vpack.c.bf16 %v4654, %v4650
      %v5430 = vpack.c.bf16 %v4656, %v4652
      %v5431 = vpack.c.bf16 %v4847, %v4843
      %v5432 = vpack.c.bf16 %v4849, %v4845
      %v5433 = vpack.c.bf16 %v5040, %v5036
      %v5434 = vpack.c.bf16 %v5042, %v5038
      %v5435 = vpack.c.bf16 %v5233, %v5229
      %v5436 = vpack.c.bf16 %v5235, %v5231
      %v5437 = vpack.c.bf16 %v3506, %v3502
      %v5438 = vpack.c.bf16 %v3508, %v3504
      %v5439 = vpack.c.bf16 %v3699, %v3695
      %v5440 = vpack.c.bf16 %v3701, %v3697
      %v5441 = vpack.c.bf16 %v3892, %v3888
      %v5442 = vpack.c.bf16 %v3894, %v3890
      %v5443 = vpack.c.bf16 %v4085, %v4081
      %v5444 = vpack.c.bf16 %v4087, %v4083
      %v5445 = vpack.c.bf16 %v4278, %v4274
      %v5446 = vpack.c.bf16 %v4280, %v4276
      %v5447 = vpack.c.bf16 %v4471, %v4467
      %v5448 = vpack.c.bf16 %v4473, %v4469
      %v5449 = vpack.c.bf16 %v4664, %v4660
      %v5450 = vpack.c.bf16 %v4666, %v4662
      %v5451 = vpack.c.bf16 %v4857, %v4853
      %v5452 = vpack.c.bf16 %v4859, %v4855
      %v5453 = vpack.c.bf16 %v5050, %v5046
      %v5454 = vpack.c.bf16 %v5052, %v5048
      %v5455 = vpack.c.bf16 %v5243, %v5239
      %v5456 = vpack.c.bf16 %v5245, %v5241
      %v5457 = vpack.c.bf16 %v3516, %v3512
      %v5458 = vpack.c.bf16 %v3518, %v3514
      %v5459 = vpack.c.bf16 %v3709, %v3705
      %v5460 = vpack.c.bf16 %v3711, %v3707
      %v5461 = vpack.c.bf16 %v3902, %v3898
      %v5462 = vpack.c.bf16 %v3904, %v3900
      %v5463 = vpack.c.bf16 %v4095, %v4091
      %v5464 = vpack.c.bf16 %v4097, %v4093
      %v5465 = vpack.c.bf16 %v4288, %v4284
      %v5466 = vpack.c.bf16 %v4290, %v4286
      %v5467 = vpack.c.bf16 %v4481, %v4477
      %v5468 = vpack.c.bf16 %v4483, %v4479
      %v5469 = vpack.c.bf16 %v4674, %v4670
      %v5470 = vpack.c.bf16 %v4676, %v4672
      %v5471 = vpack.c.bf16 %v4867, %v4863
      %v5472 = vpack.c.bf16 %v4869, %v4865
      %v5473 = vpack.c.bf16 %v5060, %v5056
      %v5474 = vpack.c.bf16 %v5062, %v5058
      %v5475 = vpack.c.bf16 %v5253, %v5249
      %v5476 = vpack.c.bf16 %v5255, %v5251
      %v5477 = vpack.c.bf16 %v3526, %v3522
      %v5478 = vpack.c.bf16 %v3528, %v3524
      %v5479 = vpack.c.bf16 %v3719, %v3715
      %v5480 = vpack.c.bf16 %v3721, %v3717
      %v5481 = vpack.c.bf16 %v3912, %v3908
      %v5482 = vpack.c.bf16 %v3914, %v3910
      %v5483 = vpack.c.bf16 %v4105, %v4101
      %v5484 = vpack.c.bf16 %v4107, %v4103
      %v5485 = vpack.c.bf16 %v4298, %v4294
      %v5486 = vpack.c.bf16 %v4300, %v4296
      %v5487 = vpack.c.bf16 %v4491, %v4487
      %v5488 = vpack.c.bf16 %v4493, %v4489
      %v5489 = vpack.c.bf16 %v4684, %v4680
      %v5490 = vpack.c.bf16 %v4686, %v4682
      %v5491 = vpack.c.bf16 %v4877, %v4873
      %v5492 = vpack.c.bf16 %v4879, %v4875
      %v5493 = vpack.c.bf16 %v5070, %v5066
      %v5494 = vpack.c.bf16 %v5072, %v5068
      %v5495 = vpack.c.bf16 %v5263, %v5259
      %v5496 = vpack.c.bf16 %v5265, %v5261
      %v5497 = vpack.c.bf16 %v3536, %v3532
      %v5498 = vpack.c.bf16 %v3538, %v3534
      %v5499 = vpack.c.bf16 %v3729, %v3725
      %v5500 = vpack.c.bf16 %v3731, %v3727
      %v5501 = vpack.c.bf16 %v3922, %v3918
      %v5502 = vpack.c.bf16 %v3924, %v3920
      %v5503 = vpack.c.bf16 %v4115, %v4111
      %v5504 = vpack.c.bf16 %v4117, %v4113
      %v5505 = vpack.c.bf16 %v4308, %v4304
      %v5506 = vpack.c.bf16 %v4310, %v4306
      %v5507 = vpack.c.bf16 %v4501, %v4497
      %v5508 = vpack.c.bf16 %v4503, %v4499
      %v5509 = vpack.c.bf16 %v4694, %v4690
      %v5510 = vpack.c.bf16 %v4696, %v4692
      %v5511 = vpack.c.bf16 %v4887, %v4883
      %v5512 = vpack.c.bf16 %v4889, %v4885
      %v5513 = vpack.c.bf16 %v5080, %v5076
      %v5514 = vpack.c.bf16 %v5082, %v5078
      %v5515 = vpack.c.bf16 %v5273, %v5269
      %v5516 = vpack.c.bf16 %v5275, %v5271
      %v5517 = vpack.c.bf16 %v3546, %v3542
      %v5518 = vpack.c.bf16 %v3548, %v3544
      %v5519 = vpack.c.bf16 %v3739, %v3735
      %v5520 = vpack.c.bf16 %v3741, %v3737
      %v5521 = vpack.c.bf16 %v3932, %v3928
      %v5522 = vpack.c.bf16 %v3934, %v3930
      %v5523 = vpack.c.bf16 %v4125, %v4121
      %v5524 = vpack.c.bf16 %v4127, %v4123
      %v5525 = vpack.c.bf16 %v4318, %v4314
      %v5526 = vpack.c.bf16 %v4320, %v4316
      %v5527 = vpack.c.bf16 %v4511, %v4507
      %v5528 = vpack.c.bf16 %v4513, %v4509
      %v5529 = vpack.c.bf16 %v4704, %v4700
      %v5530 = vpack.c.bf16 %v4706, %v4702
      %v5531 = vpack.c.bf16 %v4897, %v4893
      %v5532 = vpack.c.bf16 %v4899, %v4895
      %v5533 = vpack.c.bf16 %v5090, %v5086
      %v5534 = vpack.c.bf16 %v5092, %v5088
      %v5535 = vpack.c.bf16 %v5283, %v5279
      %v5536 = vpack.c.bf16 %v5285, %v5281
      %v5537 = vpack.c.bf16 %v3556, %v3552
      %v5538 = vpack.c.bf16 %v3558, %v3554
      %v5539 = vpack.c.bf16 %v3749, %v3745
      %v5540 = vpack.c.bf16 %v3751, %v3747
      %v5541 = vpack.c.bf16 %v3942, %v3938
      %v5542 = vpack.c.bf16 %v3944, %v3940
      %v5543 = vpack.c.bf16 %v4135, %v4131
      %v5544 = vpack.c.bf16 %v4137, %v4133
      %v5545 = vpack.c.bf16 %v4328, %v4324
      %v5546 = vpack.c.bf16 %v4330, %v4326
      %v5547 = vpack.c.bf16 %v4521, %v4517
      %v5548 = vpack.c.bf16 %v4523, %v4519
      %v5549 = vpack.c.bf16 %v4714, %v4710
      %v5550 = vpack.c.bf16 %v4716, %v4712
      %v5551 = vpack.c.bf16 %v4907, %v4903
      %v5552 = vpack.c.bf16 %v4909, %v4905
      %v5553 = vpack.c.bf16 %v5100, %v5096
      %v5554 = vpack.c.bf16 %v5102, %v5098
      %v5555 = vpack.c.bf16 %v5293, %v5289
      %v5556 = vpack.c.bf16 %v5295, %v5291
      %v5557 = vpack.c.bf16 %v3566, %v3562
      %v5558 = vpack.c.bf16 %v3568, %v3564
      %v5559 = vpack.c.bf16 %v3759, %v3755
      %v5560 = vpack.c.bf16 %v3761, %v3757
      %v5561 = vpack.c.bf16 %v3952, %v3948
      %v5562 = vpack.c.bf16 %v3954, %v3950
      %v5563 = vpack.c.bf16 %v4145, %v4141
      %v5564 = vpack.c.bf16 %v4147, %v4143
      %v5565 = vpack.c.bf16 %v4338, %v4334
      %v5566 = vpack.c.bf16 %v4340, %v4336
      %v5567 = vpack.c.bf16 %v4531, %v4527
      %v5568 = vpack.c.bf16 %v4533, %v4529
      %v5569 = vpack.c.bf16 %v4724, %v4720
      %v5570 = vpack.c.bf16 %v4726, %v4722
      %v5571 = vpack.c.bf16 %v4917, %v4913
      %v5572 = vpack.c.bf16 %v4919, %v4915
      %v5573 = vpack.c.bf16 %v5110, %v5106
      %v5574 = vpack.c.bf16 %v5112, %v5108
      %v5575 = vpack.c.bf16 %v5303, %v5299
      %v5576 = vpack.c.bf16 %v5305, %v5301
      %v5577 = vpack.c.bf16 %v3576, %v3572
      %v5578 = vpack.c.bf16 %v3578, %v3574
      %v5579 = vpack.c.bf16 %v3769, %v3765
      %v5580 = vpack.c.bf16 %v3771, %v3767
      %v5581 = vpack.c.bf16 %v3962, %v3958
      %v5582 = vpack.c.bf16 %v3964, %v3960
      %v5583 = vpack.c.bf16 %v4155, %v4151
      %v5584 = vpack.c.bf16 %v4157, %v4153
      %v5585 = vpack.c.bf16 %v4348, %v4344
      %v5586 = vpack.c.bf16 %v4350, %v4346
      %v5587 = vpack.c.bf16 %v4541, %v4537
      %v5588 = vpack.c.bf16 %v4543, %v4539
      %v5589 = vpack.c.bf16 %v4734, %v4730
      %v5590 = vpack.c.bf16 %v4736, %v4732
      %v5591 = vpack.c.bf16 %v4927, %v4923
      %v5592 = vpack.c.bf16 %v4929, %v4925
      %v5593 = vpack.c.bf16 %v5120, %v5116
      %v5594 = vpack.c.bf16 %v5122, %v5118
      %v5595 = vpack.c.bf16 %v5313, %v5309
      %v5596 = vpack.c.bf16 %v5315, %v5311
      %v5597 = vpack.c.bf16 %v3586, %v3582
      %v5598 = vpack.c.bf16 %v3588, %v3584
      %v5599 = vpack.c.bf16 %v3779, %v3775
      %v5600 = vpack.c.bf16 %v3781, %v3777
      %v5601 = vpack.c.bf16 %v3972, %v3968
      %v5602 = vpack.c.bf16 %v3974, %v3970
      %v5603 = vpack.c.bf16 %v4165, %v4161
      %v5604 = vpack.c.bf16 %v4167, %v4163
      %v5605 = vpack.c.bf16 %v4358, %v4354
      %v5606 = vpack.c.bf16 %v4360, %v4356
      %v5607 = vpack.c.bf16 %v4551, %v4547
      %v5608 = vpack.c.bf16 %v4553, %v4549
      %v5609 = vpack.c.bf16 %v4744, %v4740
      %v5610 = vpack.c.bf16 %v4746, %v4742
      %v5611 = vpack.c.bf16 %v4937, %v4933
      %v5612 = vpack.c.bf16 %v4939, %v4935
      %v5613 = vpack.c.bf16 %v5130, %v5126
      %v5614 = vpack.c.bf16 %v5132, %v5128
      %v5615 = vpack.c.bf16 %v5323, %v5319
      %v5616 = vpack.c.bf16 %v5325, %v5321
      %v5617 = vpack.c.bf16 %v3596, %v3592
      %v5618 = vpack.c.bf16 %v3598, %v3594
      %v5619 = vpack.c.bf16 %v3789, %v3785
      %v5620 = vpack.c.bf16 %v3791, %v3787
      %v5621 = vpack.c.bf16 %v3982, %v3978
      %v5622 = vpack.c.bf16 %v3984, %v3980
      %v5623 = vpack.c.bf16 %v4175, %v4171
      %v5624 = vpack.c.bf16 %v4177, %v4173
      %v5625 = vpack.c.bf16 %v4368, %v4364
      %v5626 = vpack.c.bf16 %v4370, %v4366
      %v5627 = vpack.c.bf16 %v4561, %v4557
      %v5628 = vpack.c.bf16 %v4563, %v4559
      %v5629 = vpack.c.bf16 %v4754, %v4750
      %v5630 = vpack.c.bf16 %v4756, %v4752
      %v5631 = vpack.c.bf16 %v4947, %v4943
      %v5632 = vpack.c.bf16 %v4949, %v4945
      %v5633 = vpack.c.bf16 %v5140, %v5136
      %v5634 = vpack.c.bf16 %v5142, %v5138
      %v5635 = vpack.c.bf16 %v5333, %v5329
      %v5636 = vpack.c.bf16 %v5335, %v5331
      %v5637 = vpack.c.bf16 %v3606, %v3602
      %v5638 = vpack.c.bf16 %v3608, %v3604
      %v5639 = vpack.c.bf16 %v3799, %v3795
      %v5640 = vpack.c.bf16 %v3801, %v3797
      %v5641 = vpack.c.bf16 %v3992, %v3988
      %v5642 = vpack.c.bf16 %v3994, %v3990
      %v5643 = vpack.c.bf16 %v4185, %v4181
      %v5644 = vpack.c.bf16 %v4187, %v4183
      %v5645 = vpack.c.bf16 %v4378, %v4374
      %v5646 = vpack.c.bf16 %v4380, %v4376
      %v5647 = vpack.c.bf16 %v4571, %v4567
      %v5648 = vpack.c.bf16 %v4573, %v4569
      %v5649 = vpack.c.bf16 %v4764, %v4760
      %v5650 = vpack.c.bf16 %v4766, %v4762
      %v5651 = vpack.c.bf16 %v4957, %v4953
      %v5652 = vpack.c.bf16 %v4959, %v4955
      %v5653 = vpack.c.bf16 %v5150, %v5146
      %v5654 = vpack.c.bf16 %v5152, %v5148
      %v5655 = vpack.c.bf16 %v5343, %v5339
      %v5656 = vpack.c.bf16 %v5345, %v5341
      %v5657 = vpack.c.bf16 %v3616, %v3612
      %v5658 = vpack.c.bf16 %v3618, %v3614
      %v5659 = vpack.c.bf16 %v3809, %v3805
      %v5660 = vpack.c.bf16 %v3811, %v3807
      %v5661 = vpack.c.bf16 %v4002, %v3998
      %v5662 = vpack.c.bf16 %v4004, %v4000
      %v5663 = vpack.c.bf16 %v4195, %v4191
      %v5664 = vpack.c.bf16 %v4197, %v4193
      %v5665 = vpack.c.bf16 %v4388, %v4384
      %v5666 = vpack.c.bf16 %v4390, %v4386
      %v5667 = vpack.c.bf16 %v4581, %v4577
      %v5668 = vpack.c.bf16 %v4583, %v4579
      %v5669 = vpack.c.bf16 %v4774, %v4770
      %v5670 = vpack.c.bf16 %v4776, %v4772
      %v5671 = vpack.c.bf16 %v4967, %v4963
      %v5672 = vpack.c.bf16 %v4969, %v4965
      %v5673 = vpack.c.bf16 %v5160, %v5156
      %v5674 = vpack.c.bf16 %v5162, %v5158
      %v5675 = vpack.c.bf16 %v5353, %v5349
      %v5676 = vpack.c.bf16 %v5355, %v5351
      %v5677 = vld [vmem:[%s6] sm:$0xff]
      %v5678 = vld [vmem:[%s6 + $0x8] sm:$0xff]
      %v5679 = vld [vmem:[%s6 + $0x10] sm:$0xff]
      %v5680 = vld [vmem:[%s6 + $0x18] sm:$0xff]
      %v5681 = vld [vmem:[%s6 + $0x20] sm:$0xff]
      %v5682 = vld [vmem:[%s6 + $0x28] sm:$0xff]
      %v5683 = vld [vmem:[%s6 + $0x30] sm:$0xff]
      %v5684 = vld [vmem:[%s6 + $0x38] sm:$0xff]
      %v5685 = vld [vmem:[%s6 + $0x40] sm:$0xff]
      %v5686 = vld [vmem:[%s6 + $0x48] sm:$0xff]
      %v5687 = vld [vmem:[%s6 + $0x50] sm:$0xff]
      %v5688 = vld [vmem:[%s6 + $0x58] sm:$0xff]
      %v5689 = vld [vmem:[%s6 + $0x60] sm:$0xff]
      %v5690 = vld [vmem:[%s6 + $0x68] sm:$0xff]
      %v5691 = vld [vmem:[%s6 + $0x70] sm:$0xff]
      %v5692 = vld [vmem:[%s6 + $0x78] sm:$0xff]
      %v5693 = vld [vmem:[%s6 + $0x80] sm:$0xff]
      %v5694 = vld [vmem:[%s6 + $0x88] sm:$0xff]
      %v5695 = vld [vmem:[%s6 + $0x90] sm:$0xff]
      %v5696 = vld [vmem:[%s6 + $0x98] sm:$0xff]
      %v5697 = vld [vmem:[%s6 + $0xa0] sm:$0xff]
      %v5698 = vld [vmem:[%s6 + $0xa8] sm:$0xff]
      %v5699 = vld [vmem:[%s6 + $0xb0] sm:$0xff]
      %v5700 = vld [vmem:[%s6 + $0xb8] sm:$0xff]
      %v5701 = vld [vmem:[%s6 + $0xc0] sm:$0xff]
      %v5702 = vld [vmem:[%s6 + $0xc8] sm:$0xff]
      %v5703 = vld [vmem:[%s6 + $0xd0] sm:$0xff]
      %v5704 = vld [vmem:[%s6 + $0xd8] sm:$0xff]
      %v5705 = vld [vmem:[%s6 + $0xe0] sm:$0xff]
      %v5706 = vld [vmem:[%s6 + $0xe8] sm:$0xff]
      %v5707 = vld [vmem:[%s6 + $0xf0] sm:$0xff]
      %v5708 = vld [vmem:[%s6 + $0xf8] sm:$0xff]
      %v5709 = vpack.c.bf16 %v5678, %v5677
      %v5710 = vpack.c.bf16 %v5680, %v5679
      %v5711 = vpack.c.bf16 %v5682, %v5681
      %v5712 = vpack.c.bf16 %v5684, %v5683
      %v5713 = vpack.c.bf16 %v5686, %v5685
      %v5714 = vpack.c.bf16 %v5688, %v5687
      %v5715 = vpack.c.bf16 %v5690, %v5689
      %v5716 = vpack.c.bf16 %v5692, %v5691
      %v5717 = vpack.c.bf16 %v5694, %v5693
      %v5718 = vpack.c.bf16 %v5696, %v5695
      %v5719 = vpack.c.bf16 %v5698, %v5697
      %v5720 = vpack.c.bf16 %v5700, %v5699
      %v5721 = vpack.c.bf16 %v5702, %v5701
      %v5722 = vpack.c.bf16 %v5704, %v5703
      %v5723 = vpack.c.bf16 %v5706, %v5705
      %v5724 = vpack.c.bf16 %v5708, %v5707
      %5726 = vset.pattern.permute.xlu0 0
      %5727 = vperm.xlu0 %5726, %v5709
      %v5728 = vpop.permute.xlu0 %5727
      %5731 = vset.pattern.permute.xlu0 0
      %5732 = vperm.xlu0 %5731, %v5710
      %v5733 = vpop.permute.xlu0 %5732
      %5736 = vset.pattern.permute.xlu0 0
      %5737 = vperm.xlu0 %5736, %v5711
      %v5738 = vpop.permute.xlu0 %5737
      %5741 = vset.pattern.permute.xlu0 0
      %5742 = vperm.xlu0 %5741, %v5712
      %v5743 = vpop.permute.xlu0 %5742
      %5746 = vset.pattern.permute.xlu0 0
      %5747 = vperm.xlu0 %5746, %v5713
      %v5748 = vpop.permute.xlu0 %5747
      %5751 = vset.pattern.permute.xlu0 0
      %5752 = vperm.xlu0 %5751, %v5714
      %v5753 = vpop.permute.xlu0 %5752
      %5756 = vset.pattern.permute.xlu0 0
      %5757 = vperm.xlu0 %5756, %v5715
      %v5758 = vpop.permute.xlu0 %5757
      %5761 = vset.pattern.permute.xlu0 0
      %5762 = vperm.xlu0 %5761, %v5716
      %v5763 = vpop.permute.xlu0 %5762
      %5766 = vset.pattern.permute.xlu0 0
      %5767 = vperm.xlu0 %5766, %v5717
      %v5768 = vpop.permute.xlu0 %5767
      %5771 = vset.pattern.permute.xlu0 0
      %5772 = vperm.xlu0 %5771, %v5718
      %v5773 = vpop.permute.xlu0 %5772
      %5776 = vset.pattern.permute.xlu0 0
      %5777 = vperm.xlu0 %5776, %v5719
      %v5778 = vpop.permute.xlu0 %5777
      %5781 = vset.pattern.permute.xlu0 0
      %5782 = vperm.xlu0 %5781, %v5720
      %v5783 = vpop.permute.xlu0 %5782
      %5786 = vset.pattern.permute.xlu0 0
      %5787 = vperm.xlu0 %5786, %v5721
      %v5788 = vpop.permute.xlu0 %5787
      %5791 = vset.pattern.permute.xlu0 0
      %5792 = vperm.xlu0 %5791, %v5722
      %v5793 = vpop.permute.xlu0 %5792
      %5796 = vset.pattern.permute.xlu0 0
      %5797 = vperm.xlu0 %5796, %v5723
      %v5798 = vpop.permute.xlu0 %5797
      %5801 = vset.pattern.permute.xlu0 0
      %5802 = vperm.xlu0 %5801, %v5724
      %v5803 = vpop.permute.xlu0 %5802
      %v5805 = vadd.bf16 %v5357, %v5728
      %v5806 = vadd.bf16 %v5358, %v5728
      %v5807 = vadd.bf16 %v5359, %v5728
      %v5808 = vadd.bf16 %v5360, %v5728
      %v5809 = vadd.bf16 %v5361, %v5728
      %v5810 = vadd.bf16 %v5362, %v5728
      %v5811 = vadd.bf16 %v5363, %v5728
      %v5812 = vadd.bf16 %v5364, %v5728
      %v5813 = vadd.bf16 %v5365, %v5728
      %v5814 = vadd.bf16 %v5366, %v5728
      %v5815 = vadd.bf16 %v5367, %v5728
      %v5816 = vadd.bf16 %v5368, %v5728
      %v5817 = vadd.bf16 %v5369, %v5728
      %v5818 = vadd.bf16 %v5370, %v5728
      %v5819 = vadd.bf16 %v5371, %v5728
      %v5820 = vadd.bf16 %v5372, %v5728
      %v5821 = vadd.bf16 %v5373, %v5728
      %v5822 = vadd.bf16 %v5374, %v5728
      %v5823 = vadd.bf16 %v5375, %v5728
      %v5824 = vadd.bf16 %v5376, %v5728
      %v5825 = vadd.bf16 %v5377, %v5733
      %v5826 = vadd.bf16 %v5378, %v5733
      %v5827 = vadd.bf16 %v5379, %v5733
      %v5828 = vadd.bf16 %v5380, %v5733
      %v5829 = vadd.bf16 %v5381, %v5733
      %v5830 = vadd.bf16 %v5382, %v5733
      %v5831 = vadd.bf16 %v5383, %v5733
      %v5832 = vadd.bf16 %v5384, %v5733
      %v5833 = vadd.bf16 %v5385, %v5733
      %v5834 = vadd.bf16 %v5386, %v5733
      %v5835 = vadd.bf16 %v5387, %v5733
      %v5836 = vadd.bf16 %v5388, %v5733
      %v5837 = vadd.bf16 %v5389, %v5733
      %v5838 = vadd.bf16 %v5390, %v5733
      %v5839 = vadd.bf16 %v5391, %v5733
      %v5840 = vadd.bf16 %v5392, %v5733
      %v5841 = vadd.bf16 %v5393, %v5733
      %v5842 = vadd.bf16 %v5394, %v5733
      %v5843 = vadd.bf16 %v5395, %v5733
      %v5844 = vadd.bf16 %v5396, %v5733
      %v5845 = vadd.bf16 %v5397, %v5738
      %v5846 = vadd.bf16 %v5398, %v5738
      %v5847 = vadd.bf16 %v5399, %v5738
      %v5848 = vadd.bf16 %v5400, %v5738
      %v5849 = vadd.bf16 %v5401, %v5738
      %v5850 = vadd.bf16 %v5402, %v5738
      %v5851 = vadd.bf16 %v5403, %v5738
      %v5852 = vadd.bf16 %v5404, %v5738
      %v5853 = vadd.bf16 %v5405, %v5738
      %v5854 = vadd.bf16 %v5406, %v5738
      %v5855 = vadd.bf16 %v5407, %v5738
      %v5856 = vadd.bf16 %v5408, %v5738
      %v5857 = vadd.bf16 %v5409, %v5738
      %v5858 = vadd.bf16 %v5410, %v5738
      %v5859 = vadd.bf16 %v5411, %v5738
      %v5860 = vadd.bf16 %v5412, %v5738
      %v5861 = vadd.bf16 %v5413, %v5738
      %v5862 = vadd.bf16 %v5414, %v5738
      %v5863 = vadd.bf16 %v5415, %v5738
      %v5864 = vadd.bf16 %v5416, %v5738
      %v5865 = vadd.bf16 %v5417, %v5743
      %v5866 = vadd.bf16 %v5418, %v5743
      %v5867 = vadd.bf16 %v5419, %v5743
      %v5868 = vadd.bf16 %v5420, %v5743
      %v5869 = vadd.bf16 %v5421, %v5743
      %v5870 = vadd.bf16 %v5422, %v5743
      %v5871 = vadd.bf16 %v5423, %v5743
      %v5872 = vadd.bf16 %v5424, %v5743
      %v5873 = vadd.bf16 %v5425, %v5743
      %v5874 = vadd.bf16 %v5426, %v5743
      %v5875 = vadd.bf16 %v5427, %v5743
      %v5876 = vadd.bf16 %v5428, %v5743
      %v5877 = vadd.bf16 %v5429, %v5743
      %v5878 = vadd.bf16 %v5430, %v5743
      %v5879 = vadd.bf16 %v5431, %v5743
      %v5880 = vadd.bf16 %v5432, %v5743
      %v5881 = vadd.bf16 %v5433, %v5743
      %v5882 = vadd.bf16 %v5434, %v5743
      %v5883 = vadd.bf16 %v5435, %v5743
      %v5884 = vadd.bf16 %v5436, %v5743
      %v5885 = vadd.bf16 %v5437, %v5748
      %v5886 = vadd.bf16 %v5438, %v5748
      %v5887 = vadd.bf16 %v5439, %v5748
      %v5888 = vadd.bf16 %v5440, %v5748
      %v5889 = vadd.bf16 %v5441, %v5748
      %v5890 = vadd.bf16 %v5442, %v5748
      %v5891 = vadd.bf16 %v5443, %v5748
      %v5892 = vadd.bf16 %v5444, %v5748
      %v5893 = vadd.bf16 %v5445, %v5748
      %v5894 = vadd.bf16 %v5446, %v5748
      %v5895 = vadd.bf16 %v5447, %v5748
      %v5896 = vadd.bf16 %v5448, %v5748
      %v5897 = vadd.bf16 %v5449, %v5748
      %v5898 = vadd.bf16 %v5450, %v5748
      %v5899 = vadd.bf16 %v5451, %v5748
      %v5900 = vadd.bf16 %v5452, %v5748
      %v5901 = vadd.bf16 %v5453, %v5748
      %v5902 = vadd.bf16 %v5454, %v5748
      %v5903 = vadd.bf16 %v5455, %v5748
      %v5904 = vadd.bf16 %v5456, %v5748
      %v5905 = vadd.bf16 %v5457, %v5753
      %v5906 = vadd.bf16 %v5458, %v5753
      %v5907 = vadd.bf16 %v5459, %v5753
      %v5908 = vadd.bf16 %v5460, %v5753
      %v5909 = vadd.bf16 %v5461, %v5753
      %v5910 = vadd.bf16 %v5462, %v5753
      %v5911 = vadd.bf16 %v5463, %v5753
      %v5912 = vadd.bf16 %v5464, %v5753
      %v5913 = vadd.bf16 %v5465, %v5753
      %v5914 = vadd.bf16 %v5466, %v5753
      %v5915 = vadd.bf16 %v5467, %v5753
      %v5916 = vadd.bf16 %v5468, %v5753
      %v5917 = vadd.bf16 %v5469, %v5753
      %v5918 = vadd.bf16 %v5470, %v5753
      %v5919 = vadd.bf16 %v5471, %v5753
      %v5920 = vadd.bf16 %v5472, %v5753
      %v5921 = vadd.bf16 %v5473, %v5753
      %v5922 = vadd.bf16 %v5474, %v5753
      %v5923 = vadd.bf16 %v5475, %v5753
      %v5924 = vadd.bf16 %v5476, %v5753
      %v5925 = vadd.bf16 %v5477, %v5758
      %v5926 = vadd.bf16 %v5478, %v5758
      %v5927 = vadd.bf16 %v5479, %v5758
      %v5928 = vadd.bf16 %v5480, %v5758
      %v5929 = vadd.bf16 %v5481, %v5758
      %v5930 = vadd.bf16 %v5482, %v5758
      %v5931 = vadd.bf16 %v5483, %v5758
      %v5932 = vadd.bf16 %v5484, %v5758
      %v5933 = vadd.bf16 %v5485, %v5758
      %v5934 = vadd.bf16 %v5486, %v5758
      %v5935 = vadd.bf16 %v5487, %v5758
      %v5936 = vadd.bf16 %v5488, %v5758
      %v5937 = vadd.bf16 %v5489, %v5758
      %v5938 = vadd.bf16 %v5490, %v5758
      %v5939 = vadd.bf16 %v5491, %v5758
      %v5940 = vadd.bf16 %v5492, %v5758
      %v5941 = vadd.bf16 %v5493, %v5758
      %v5942 = vadd.bf16 %v5494, %v5758
      %v5943 = vadd.bf16 %v5495, %v5758
      %v5944 = vadd.bf16 %v5496, %v5758
      %v5945 = vadd.bf16 %v5497, %v5763
      %v5946 = vadd.bf16 %v5498, %v5763
      %v5947 = vadd.bf16 %v5499, %v5763
      %v5948 = vadd.bf16 %v5500, %v5763
      %v5949 = vadd.bf16 %v5501, %v5763
      %v5950 = vadd.bf16 %v5502, %v5763
      %v5951 = vadd.bf16 %v5503, %v5763
      %v5952 = vadd.bf16 %v5504, %v5763
      %v5953 = vadd.bf16 %v5505, %v5763
      %v5954 = vadd.bf16 %v5506, %v5763
      %v5955 = vadd.bf16 %v5507, %v5763
      %v5956 = vadd.bf16 %v5508, %v5763
      %v5957 = vadd.bf16 %v5509, %v5763
      %v5958 = vadd.bf16 %v5510, %v5763
      %v5959 = vadd.bf16 %v5511, %v5763
      %v5960 = vadd.bf16 %v5512, %v5763
      %v5961 = vadd.bf16 %v5513, %v5763
      %v5962 = vadd.bf16 %v5514, %v5763
      %v5963 = vadd.bf16 %v5515, %v5763
      %v5964 = vadd.bf16 %v5516, %v5763
      %v5965 = vadd.bf16 %v5517, %v5768
      %v5966 = vadd.bf16 %v5518, %v5768
      %v5967 = vadd.bf16 %v5519, %v5768
      %v5968 = vadd.bf16 %v5520, %v5768
      %v5969 = vadd.bf16 %v5521, %v5768
      %v5970 = vadd.bf16 %v5522, %v5768
      %v5971 = vadd.bf16 %v5523, %v5768
      %v5972 = vadd.bf16 %v5524, %v5768
      %v5973 = vadd.bf16 %v5525, %v5768
      %v5974 = vadd.bf16 %v5526, %v5768
      %v5975 = vadd.bf16 %v5527, %v5768
      %v5976 = vadd.bf16 %v5528, %v5768
      %v5977 = vadd.bf16 %v5529, %v5768
      %v5978 = vadd.bf16 %v5530, %v5768
      %v5979 = vadd.bf16 %v5531, %v5768
      %v5980 = vadd.bf16 %v5532, %v5768
      %v5981 = vadd.bf16 %v5533, %v5768
      %v5982 = vadd.bf16 %v5534, %v5768
      %v5983 = vadd.bf16 %v5535, %v5768
      %v5984 = vadd.bf16 %v5536, %v5768
      %v5985 = vadd.bf16 %v5537, %v5773
      %v5986 = vadd.bf16 %v5538, %v5773
      %v5987 = vadd.bf16 %v5539, %v5773
      %v5988 = vadd.bf16 %v5540, %v5773
      %v5989 = vadd.bf16 %v5541, %v5773
      %v5990 = vadd.bf16 %v5542, %v5773
      %v5991 = vadd.bf16 %v5543, %v5773
      %v5992 = vadd.bf16 %v5544, %v5773
      %v5993 = vadd.bf16 %v5545, %v5773
      %v5994 = vadd.bf16 %v5546, %v5773
      %v5995 = vadd.bf16 %v5547, %v5773
      %v5996 = vadd.bf16 %v5548, %v5773
      %v5997 = vadd.bf16 %v5549, %v5773
      %v5998 = vadd.bf16 %v5550, %v5773
      %v5999 = vadd.bf16 %v5551, %v5773
      %v6000 = vadd.bf16 %v5552, %v5773
      %v6001 = vadd.bf16 %v5553, %v5773
      %v6002 = vadd.bf16 %v5554, %v5773
      %v6003 = vadd.bf16 %v5555, %v5773
      %v6004 = vadd.bf16 %v5556, %v5773
      %v6005 = vadd.bf16 %v5557, %v5778
      %v6006 = vadd.bf16 %v5558, %v5778
      %v6007 = vadd.bf16 %v5559, %v5778
      %v6008 = vadd.bf16 %v5560, %v5778
      %v6009 = vadd.bf16 %v5561, %v5778
      %v6010 = vadd.bf16 %v5562, %v5778
      %v6011 = vadd.bf16 %v5563, %v5778
      %v6012 = vadd.bf16 %v5564, %v5778
      %v6013 = vadd.bf16 %v5565, %v5778
      %v6014 = vadd.bf16 %v5566, %v5778
      %v6015 = vadd.bf16 %v5567, %v5778
      %v6016 = vadd.bf16 %v5568, %v5778
      %v6017 = vadd.bf16 %v5569, %v5778
      %v6018 = vadd.bf16 %v5570, %v5778
      %v6019 = vadd.bf16 %v5571, %v5778
      %v6020 = vadd.bf16 %v5572, %v5778
      %v6021 = vadd.bf16 %v5573, %v5778
      %v6022 = vadd.bf16 %v5574, %v5778
      %v6023 = vadd.bf16 %v5575, %v5778
      %v6024 = vadd.bf16 %v5576, %v5778
      %v6025 = vadd.bf16 %v5577, %v5783
      %v6026 = vadd.bf16 %v5578, %v5783
      %v6027 = vadd.bf16 %v5579, %v5783
      %v6028 = vadd.bf16 %v5580, %v5783
      %v6029 = vadd.bf16 %v5581, %v5783
      %v6030 = vadd.bf16 %v5582, %v5783
      %v6031 = vadd.bf16 %v5583, %v5783
      %v6032 = vadd.bf16 %v5584, %v5783
      %v6033 = vadd.bf16 %v5585, %v5783
      %v6034 = vadd.bf16 %v5586, %v5783
      %v6035 = vadd.bf16 %v5587, %v5783
      %v6036 = vadd.bf16 %v5588, %v5783
      %v6037 = vadd.bf16 %v5589, %v5783
      %v6038 = vadd.bf16 %v5590, %v5783
      %v6039 = vadd.bf16 %v5591, %v5783
      %v6040 = vadd.bf16 %v5592, %v5783
      %v6041 = vadd.bf16 %v5593, %v5783
      %v6042 = vadd.bf16 %v5594, %v5783
      %v6043 = vadd.bf16 %v5595, %v5783
      %v6044 = vadd.bf16 %v5596, %v5783
      %v6045 = vadd.bf16 %v5597, %v5788
      %v6046 = vadd.bf16 %v5598, %v5788
      %v6047 = vadd.bf16 %v5599, %v5788
      %v6048 = vadd.bf16 %v5600, %v5788
      %v6049 = vadd.bf16 %v5601, %v5788
      %v6050 = vadd.bf16 %v5602, %v5788
      %v6051 = vadd.bf16 %v5603, %v5788
      %v6052 = vadd.bf16 %v5604, %v5788
      %v6053 = vadd.bf16 %v5605, %v5788
      %v6054 = vadd.bf16 %v5606, %v5788
      %v6055 = vadd.bf16 %v5607, %v5788
      %v6056 = vadd.bf16 %v5608, %v5788
      %v6057 = vadd.bf16 %v5609, %v5788
      %v6058 = vadd.bf16 %v5610, %v5788
      %v6059 = vadd.bf16 %v5611, %v5788
      %v6060 = vadd.bf16 %v5612, %v5788
      %v6061 = vadd.bf16 %v5613, %v5788
      %v6062 = vadd.bf16 %v5614, %v5788
      %v6063 = vadd.bf16 %v5615, %v5788
      %v6064 = vadd.bf16 %v5616, %v5788
      %v6065 = vadd.bf16 %v5617, %v5793
      %v6066 = vadd.bf16 %v5618, %v5793
      %v6067 = vadd.bf16 %v5619, %v5793
      %v6068 = vadd.bf16 %v5620, %v5793
      %v6069 = vadd.bf16 %v5621, %v5793
      %v6070 = vadd.bf16 %v5622, %v5793
      %v6071 = vadd.bf16 %v5623, %v5793
      %v6072 = vadd.bf16 %v5624, %v5793
      %v6073 = vadd.bf16 %v5625, %v5793
      %v6074 = vadd.bf16 %v5626, %v5793
      %v6075 = vadd.bf16 %v5627, %v5793
      %v6076 = vadd.bf16 %v5628, %v5793
      %v6077 = vadd.bf16 %v5629, %v5793
      %v6078 = vadd.bf16 %v5630, %v5793
      %v6079 = vadd.bf16 %v5631, %v5793
      %v6080 = vadd.bf16 %v5632, %v5793
      %v6081 = vadd.bf16 %v5633, %v5793
      %v6082 = vadd.bf16 %v5634, %v5793
      %v6083 = vadd.bf16 %v5635, %v5793
      %v6084 = vadd.bf16 %v5636, %v5793
      %v6085 = vadd.bf16 %v5637, %v5798
      %v6086 = vadd.bf16 %v5638, %v5798
      %v6087 = vadd.bf16 %v5639, %v5798
      %v6088 = vadd.bf16 %v5640, %v5798
      %v6089 = vadd.bf16 %v5641, %v5798
      %v6090 = vadd.bf16 %v5642, %v5798
      %v6091 = vadd.bf16 %v5643, %v5798
      %v6092 = vadd.bf16 %v5644, %v5798
      %v6093 = vadd.bf16 %v5645, %v5798
      %v6094 = vadd.bf16 %v5646, %v5798
      %v6095 = vadd.bf16 %v5647, %v5798
      %v6096 = vadd.bf16 %v5648, %v5798
      %v6097 = vadd.bf16 %v5649, %v5798
      %v6098 = vadd.bf16 %v5650, %v5798
      %v6099 = vadd.bf16 %v5651, %v5798
      %v6100 = vadd.bf16 %v5652, %v5798
      %v6101 = vadd.bf16 %v5653, %v5798
      %v6102 = vadd.bf16 %v5654, %v5798
      %v6103 = vadd.bf16 %v5655, %v5798
      %v6104 = vadd.bf16 %v5656, %v5798
      %v6105 = vadd.bf16 %v5657, %v5803
      %v6106 = vadd.bf16 %v5658, %v5803
      %v6107 = vadd.bf16 %v5659, %v5803
      %v6108 = vadd.bf16 %v5660, %v5803
      %v6109 = vadd.bf16 %v5661, %v5803
      %v6110 = vadd.bf16 %v5662, %v5803
      %v6111 = vadd.bf16 %v5663, %v5803
      %v6112 = vadd.bf16 %v5664, %v5803
      %v6113 = vadd.bf16 %v5665, %v5803
      %v6114 = vadd.bf16 %v5666, %v5803
      %v6115 = vadd.bf16 %v5667, %v5803
      %v6116 = vadd.bf16 %v5668, %v5803
      %v6117 = vadd.bf16 %v5669, %v5803
      %v6118 = vadd.bf16 %v5670, %v5803
      %v6119 = vadd.bf16 %v5671, %v5803
      %v6120 = vadd.bf16 %v5672, %v5803
      %v6121 = vadd.bf16 %v5673, %v5803
      %v6122 = vadd.bf16 %v5674, %v5803
      %v6123 = vadd.bf16 %v5675, %v5803
      %v6124 = vadd.bf16 %v5676, %v5803
      %v6125 = vmax.bf16 %v5805, 0
      %v6126 = vmax.bf16 %v5806, 0
      %v6127 = vmax.bf16 %v5807, 0
      %v6128 = vmax.bf16 %v5808, 0
      %v6129 = vmax.bf16 %v5809, 0
      %v6130 = vmax.bf16 %v5810, 0
      %v6131 = vmax.bf16 %v5811, 0
      %v6132 = vmax.bf16 %v5812, 0
      %v6133 = vmax.bf16 %v5813, 0
      %v6134 = vmax.bf16 %v5814, 0
      %v6135 = vmax.bf16 %v5815, 0
      %v6136 = vmax.bf16 %v5816, 0
      %v6137 = vmax.bf16 %v5817, 0
      %v6138 = vmax.bf16 %v5818, 0
      %v6139 = vmax.bf16 %v5819, 0
      %v6140 = vmax.bf16 %v5820, 0
      %v6141 = vmax.bf16 %v5821, 0
      %v6142 = vmax.bf16 %v5822, 0
      %v6143 = vmax.bf16 %v5823, 0
      %v6144 = vmax.bf16 %v5824, 0
      %v6145 = vmax.bf16 %v5825, 0
      %v6146 = vmax.bf16 %v5826, 0
      %v6147 = vmax.bf16 %v5827, 0
      %v6148 = vmax.bf16 %v5828, 0
      %v6149 = vmax.bf16 %v5829, 0
      %v6150 = vmax.bf16 %v5830, 0
      %v6151 = vmax.bf16 %v5831, 0
      %v6152 = vmax.bf16 %v5832, 0
      %v6153 = vmax.bf16 %v5833, 0
      %v6154 = vmax.bf16 %v5834, 0
      %v6155 = vmax.bf16 %v5835, 0
      %v6156 = vmax.bf16 %v5836, 0
      %v6157 = vmax.bf16 %v5837, 0
      %v6158 = vmax.bf16 %v5838, 0
      %v6159 = vmax.bf16 %v5839, 0
      %v6160 = vmax.bf16 %v5840, 0
      %v6161 = vmax.bf16 %v5841, 0
      %v6162 = vmax.bf16 %v5842, 0
      %v6163 = vmax.bf16 %v5843, 0
      %v6164 = vmax.bf16 %v5844, 0
      %v6165 = vmax.bf16 %v5845, 0
      %v6166 = vmax.bf16 %v5846, 0
      %v6167 = vmax.bf16 %v5847, 0
      %v6168 = vmax.bf16 %v5848, 0
      %v6169 = vmax.bf16 %v5849, 0
      %v6170 = vmax.bf16 %v5850, 0
      %v6171 = vmax.bf16 %v5851, 0
      %v6172 = vmax.bf16 %v5852, 0
      %v6173 = vmax.bf16 %v5853, 0
      %v6174 = vmax.bf16 %v5854, 0
      %v6175 = vmax.bf16 %v5855, 0
      %v6176 = vmax.bf16 %v5856, 0
      %v6177 = vmax.bf16 %v5857, 0
      %v6178 = vmax.bf16 %v5858, 0
      %v6179 = vmax.bf16 %v5859, 0
      %v6180 = vmax.bf16 %v5860, 0
      %v6181 = vmax.bf16 %v5861, 0
      %v6182 = vmax.bf16 %v5862, 0
      %v6183 = vmax.bf16 %v5863, 0
      %v6184 = vmax.bf16 %v5864, 0
      %v6185 = vmax.bf16 %v5865, 0
      %v6186 = vmax.bf16 %v5866, 0
      %v6187 = vmax.bf16 %v5867, 0
      %v6188 = vmax.bf16 %v5868, 0
      %v6189 = vmax.bf16 %v5869, 0
      %v6190 = vmax.bf16 %v5870, 0
      %v6191 = vmax.bf16 %v5871, 0
      %v6192 = vmax.bf16 %v5872, 0
      %v6193 = vmax.bf16 %v5873, 0
      %v6194 = vmax.bf16 %v5874, 0
      %v6195 = vmax.bf16 %v5875, 0
      %v6196 = vmax.bf16 %v5876, 0
      %v6197 = vmax.bf16 %v5877, 0
      %v6198 = vmax.bf16 %v5878, 0
      %v6199 = vmax.bf16 %v5879, 0
      %v6200 = vmax.bf16 %v5880, 0
      %v6201 = vmax.bf16 %v5881, 0
      %v6202 = vmax.bf16 %v5882, 0
      %v6203 = vmax.bf16 %v5883, 0
      %v6204 = vmax.bf16 %v5884, 0
      %v6205 = vmax.bf16 %v5885, 0
      %v6206 = vmax.bf16 %v5886, 0
      %v6207 = vmax.bf16 %v5887, 0
      %v6208 = vmax.bf16 %v5888, 0
      %v6209 = vmax.bf16 %v5889, 0
      %v6210 = vmax.bf16 %v5890, 0
      %v6211 = vmax.bf16 %v5891, 0
      %v6212 = vmax.bf16 %v5892, 0
      %v6213 = vmax.bf16 %v5893, 0
      %v6214 = vmax.bf16 %v5894, 0
      %v6215 = vmax.bf16 %v5895, 0
      %v6216 = vmax.bf16 %v5896, 0
      %v6217 = vmax.bf16 %v5897, 0
      %v6218 = vmax.bf16 %v5898, 0
      %v6219 = vmax.bf16 %v5899, 0
      %v6220 = vmax.bf16 %v5900, 0
      %v6221 = vmax.bf16 %v5901, 0
      %v6222 = vmax.bf16 %v5902, 0
      %v6223 = vmax.bf16 %v5903, 0
      %v6224 = vmax.bf16 %v5904, 0
      %v6225 = vmax.bf16 %v5905, 0
      %v6226 = vmax.bf16 %v5906, 0
      %v6227 = vmax.bf16 %v5907, 0
      %v6228 = vmax.bf16 %v5908, 0
      %v6229 = vmax.bf16 %v5909, 0
      %v6230 = vmax.bf16 %v5910, 0
      %v6231 = vmax.bf16 %v5911, 0
      %v6232 = vmax.bf16 %v5912, 0
      %v6233 = vmax.bf16 %v5913, 0
      %v6234 = vmax.bf16 %v5914, 0
      %v6235 = vmax.bf16 %v5915, 0
      %v6236 = vmax.bf16 %v5916, 0
      %v6237 = vmax.bf16 %v5917, 0
      %v6238 = vmax.bf16 %v5918, 0
      %v6239 = vmax.bf16 %v5919, 0
      %v6240 = vmax.bf16 %v5920, 0
      %v6241 = vmax.bf16 %v5921, 0
      %v6242 = vmax.bf16 %v5922, 0
      %v6243 = vmax.bf16 %v5923, 0
      %v6244 = vmax.bf16 %v5924, 0
      %v6245 = vmax.bf16 %v5925, 0
      %v6246 = vmax.bf16 %v5926, 0
      %v6247 = vmax.bf16 %v5927, 0
      %v6248 = vmax.bf16 %v5928, 0
      %v6249 = vmax.bf16 %v5929, 0
      %v6250 = vmax.bf16 %v5930, 0
      %v6251 = vmax.bf16 %v5931, 0
      %v6252 = vmax.bf16 %v5932, 0
      %v6253 = vmax.bf16 %v5933, 0
      %v6254 = vmax.bf16 %v5934, 0
      %v6255 = vmax.bf16 %v5935, 0
      %v6256 = vmax.bf16 %v5936, 0
      %v6257 = vmax.bf16 %v5937, 0
      %v6258 = vmax.bf16 %v5938, 0
      %v6259 = vmax.bf16 %v5939, 0
      %v6260 = vmax.bf16 %v5940, 0
      %v6261 = vmax.bf16 %v5941, 0
      %v6262 = vmax.bf16 %v5942, 0
      %v6263 = vmax.bf16 %v5943, 0
      %v6264 = vmax.bf16 %v5944, 0
      %v6265 = vmax.bf16 %v5945, 0
      %v6266 = vmax.bf16 %v5946, 0
      %v6267 = vmax.bf16 %v5947, 0
      %v6268 = vmax.bf16 %v5948, 0
      %v6269 = vmax.bf16 %v5949, 0
      %v6270 = vmax.bf16 %v5950, 0
      %v6271 = vmax.bf16 %v5951, 0
      %v6272 = vmax.bf16 %v5952, 0
      %v6273 = vmax.bf16 %v5953, 0
      %v6274 = vmax.bf16 %v5954, 0
      %v6275 = vmax.bf16 %v5955, 0
      %v6276 = vmax.bf16 %v5956, 0
      %v6277 = vmax.bf16 %v5957, 0
      %v6278 = vmax.bf16 %v5958, 0
      %v6279 = vmax.bf16 %v5959, 0
      %v6280 = vmax.bf16 %v5960, 0
      %v6281 = vmax.bf16 %v5961, 0
      %v6282 = vmax.bf16 %v5962, 0
      %v6283 = vmax.bf16 %v5963, 0
      %v6284 = vmax.bf16 %v5964, 0
      %v6285 = vmax.bf16 %v5965, 0
      %v6286 = vmax.bf16 %v5966, 0
      %v6287 = vmax.bf16 %v5967, 0
      %v6288 = vmax.bf16 %v5968, 0
      %v6289 = vmax.bf16 %v5969, 0
      %v6290 = vmax.bf16 %v5970, 0
      %v6291 = vmax.bf16 %v5971, 0
      %v6292 = vmax.bf16 %v5972, 0
      %v6293 = vmax.bf16 %v5973, 0
      %v6294 = vmax.bf16 %v5974, 0
      %v6295 = vmax.bf16 %v5975, 0
      %v6296 = vmax.bf16 %v5976, 0
      %v6297 = vmax.bf16 %v5977, 0
      %v6298 = vmax.bf16 %v5978, 0
      %v6299 = vmax.bf16 %v5979, 0
      %v6300 = vmax.bf16 %v5980, 0
      %v6301 = vmax.bf16 %v5981, 0
      %v6302 = vmax.bf16 %v5982, 0
      %v6303 = vmax.bf16 %v5983, 0
      %v6304 = vmax.bf16 %v5984, 0
      %v6305 = vmax.bf16 %v5985, 0
      %v6306 = vmax.bf16 %v5986, 0
      %v6307 = vmax.bf16 %v5987, 0
      %v6308 = vmax.bf16 %v5988, 0
      %v6309 = vmax.bf16 %v5989, 0
      %v6310 = vmax.bf16 %v5990, 0
      %v6311 = vmax.bf16 %v5991, 0
      %v6312 = vmax.bf16 %v5992, 0
      %v6313 = vmax.bf16 %v5993, 0
      %v6314 = vmax.bf16 %v5994, 0
      %v6315 = vmax.bf16 %v5995, 0
      %v6316 = vmax.bf16 %v5996, 0
      %v6317 = vmax.bf16 %v5997, 0
      %v6318 = vmax.bf16 %v5998, 0
      %v6319 = vmax.bf16 %v5999, 0
      %v6320 = vmax.bf16 %v6000, 0
      %v6321 = vmax.bf16 %v6001, 0
      %v6322 = vmax.bf16 %v6002, 0
      %v6323 = vmax.bf16 %v6003, 0
      %v6324 = vmax.bf16 %v6004, 0
      %v6325 = vmax.bf16 %v6005, 0
      %v6326 = vmax.bf16 %v6006, 0
      %v6327 = vmax.bf16 %v6007, 0
      %v6328 = vmax.bf16 %v6008, 0
      %v6329 = vmax.bf16 %v6009, 0
      %v6330 = vmax.bf16 %v6010, 0
      %v6331 = vmax.bf16 %v6011, 0
      %v6332 = vmax.bf16 %v6012, 0
      %v6333 = vmax.bf16 %v6013, 0
      %v6334 = vmax.bf16 %v6014, 0
      %v6335 = vmax.bf16 %v6015, 0
      %v6336 = vmax.bf16 %v6016, 0
      %v6337 = vmax.bf16 %v6017, 0
      %v6338 = vmax.bf16 %v6018, 0
      %v6339 = vmax.bf16 %v6019, 0
      %v6340 = vmax.bf16 %v6020, 0
      %v6341 = vmax.bf16 %v6021, 0
      %v6342 = vmax.bf16 %v6022, 0
      %v6343 = vmax.bf16 %v6023, 0
      %v6344 = vmax.bf16 %v6024, 0
      %v6345 = vmax.bf16 %v6025, 0
      %v6346 = vmax.bf16 %v6026, 0
      %v6347 = vmax.bf16 %v6027, 0
      %v6348 = vmax.bf16 %v6028, 0
      %v6349 = vmax.bf16 %v6029, 0
      %v6350 = vmax.bf16 %v6030, 0
      %v6351 = vmax.bf16 %v6031, 0
      %v6352 = vmax.bf16 %v6032, 0
      %v6353 = vmax.bf16 %v6033, 0
      %v6354 = vmax.bf16 %v6034, 0
      %v6355 = vmax.bf16 %v6035, 0
      %v6356 = vmax.bf16 %v6036, 0
      %v6357 = vmax.bf16 %v6037, 0
      %v6358 = vmax.bf16 %v6038, 0
      %v6359 = vmax.bf16 %v6039, 0
      %v6360 = vmax.bf16 %v6040, 0
      %v6361 = vmax.bf16 %v6041, 0
      %v6362 = vmax.bf16 %v6042, 0
      %v6363 = vmax.bf16 %v6043, 0
      %v6364 = vmax.bf16 %v6044, 0
      %v6365 = vmax.bf16 %v6045, 0
      %v6366 = vmax.bf16 %v6046, 0
      %v6367 = vmax.bf16 %v6047, 0
      %v6368 = vmax.bf16 %v6048, 0
      %v6369 = vmax.bf16 %v6049, 0
      %v6370 = vmax.bf16 %v6050, 0
      %v6371 = vmax.bf16 %v6051, 0
      %v6372 = vmax.bf16 %v6052, 0
      %v6373 = vmax.bf16 %v6053, 0
      %v6374 = vmax.bf16 %v6054, 0
      %v6375 = vmax.bf16 %v6055, 0
      %v6376 = vmax.bf16 %v6056, 0
      %v6377 = vmax.bf16 %v6057, 0
      %v6378 = vmax.bf16 %v6058, 0
      %v6379 = vmax.bf16 %v6059, 0
      %v6380 = vmax.bf16 %v6060, 0
      %v6381 = vmax.bf16 %v6061, 0
      %v6382 = vmax.bf16 %v6062, 0
      %v6383 = vmax.bf16 %v6063, 0
      %v6384 = vmax.bf16 %v6064, 0
      %v6385 = vmax.bf16 %v6065, 0
      %v6386 = vmax.bf16 %v6066, 0
      %v6387 = vmax.bf16 %v6067, 0
      %v6388 = vmax.bf16 %v6068, 0
      %v6389 = vmax.bf16 %v6069, 0
      %v6390 = vmax.bf16 %v6070, 0
      %v6391 = vmax.bf16 %v6071, 0
      %v6392 = vmax.bf16 %v6072, 0
      %v6393 = vmax.bf16 %v6073, 0
      %v6394 = vmax.bf16 %v6074, 0
      %v6395 = vmax.bf16 %v6075, 0
      %v6396 = vmax.bf16 %v6076, 0
      %v6397 = vmax.bf16 %v6077, 0
      %v6398 = vmax.bf16 %v6078, 0
      %v6399 = vmax.bf16 %v6079, 0
      %v6400 = vmax.bf16 %v6080, 0
      %v6401 = vmax.bf16 %v6081, 0
      %v6402 = vmax.bf16 %v6082, 0
      %v6403 = vmax.bf16 %v6083, 0
      %v6404 = vmax.bf16 %v6084, 0
      %v6405 = vmax.bf16 %v6085, 0
      %v6406 = vmax.bf16 %v6086, 0
      %v6407 = vmax.bf16 %v6087, 0
      %v6408 = vmax.bf16 %v6088, 0
      %v6409 = vmax.bf16 %v6089, 0
      %v6410 = vmax.bf16 %v6090, 0
      %v6411 = vmax.bf16 %v6091, 0
      %v6412 = vmax.bf16 %v6092, 0
      %v6413 = vmax.bf16 %v6093, 0
      %v6414 = vmax.bf16 %v6094, 0
      %v6415 = vmax.bf16 %v6095, 0
      %v6416 = vmax.bf16 %v6096, 0
      %v6417 = vmax.bf16 %v6097, 0
      %v6418 = vmax.bf16 %v6098, 0
      %v6419 = vmax.bf16 %v6099, 0
      %v6420 = vmax.bf16 %v6100, 0
      %v6421 = vmax.bf16 %v6101, 0
      %v6422 = vmax.bf16 %v6102, 0
      %v6423 = vmax.bf16 %v6103, 0
      %v6424 = vmax.bf16 %v6104, 0
      %v6425 = vmax.bf16 %v6105, 0
      %v6426 = vmax.bf16 %v6106, 0
      %v6427 = vmax.bf16 %v6107, 0
      %v6428 = vmax.bf16 %v6108, 0
      %v6429 = vmax.bf16 %v6109, 0
      %v6430 = vmax.bf16 %v6110, 0
      %v6431 = vmax.bf16 %v6111, 0
      %v6432 = vmax.bf16 %v6112, 0
      %v6433 = vmax.bf16 %v6113, 0
      %v6434 = vmax.bf16 %v6114, 0
      %v6435 = vmax.bf16 %v6115, 0
      %v6436 = vmax.bf16 %v6116, 0
      %v6437 = vmax.bf16 %v6117, 0
      %v6438 = vmax.bf16 %v6118, 0
      %v6439 = vmax.bf16 %v6119, 0
      %v6440 = vmax.bf16 %v6120, 0
      %v6441 = vmax.bf16 %v6121, 0
      %v6442 = vmax.bf16 %v6122, 0
      %v6443 = vmax.bf16 %v6123, 0
      %v6444 = vmax.bf16 %v6124, 0
      %p6445 = scmp.lt.s32.totalorder %s27, 0
      // Predicated region
      $region65: #{est.1} parent=63 // pred_check
        %p6446 = pneg %p6445
      $region66: #{est.1} parent=63 // pred_check_branch
        %6448 = sbr.rel (%p6446) target = $region68
      $region67: #{est.1} parent=63 // pred_region
        %v6449 = vmax.bf16 %v6125, %v6126
        %v6450 = vmax.bf16 %v6449, %v6127
        %v6451 = vmax.bf16 %v6450, %v6128
        %v6452 = vmax.bf16 %v6451, %v6129
        %v6453 = vmax.bf16 %v6452, %v6130
        %v6454 = vmax.bf16 %v6453, %v6131
        %v6455 = vmax.bf16 %v6454, %v6132
        %v6456 = vmax.bf16 %v6455, %v6133
        %v6457 = vmax.bf16 %v6456, %v6134
        %v6458 = vmax.bf16 %v6457, %v6135
        %v6459 = vmax.bf16 %v6458, %v6136
        %v6460 = vmax.bf16 %v6459, %v6137
        %v6461 = vmax.bf16 %v6460, %v6138
        %v6462 = vmax.bf16 %v6461, %v6139
        %v6463 = vmax.bf16 %v6462, %v6140
        %v6464 = vmax.bf16 %v6463, %v6141
        %v6465 = vmax.bf16 %v6464, %v6142
        %v6466 = vmax.bf16 %v6465, %v6143
        %v6467 = vmax.bf16 %v6466, %v6144
        %6468 = vmax.xlane.bf16.xlu0 %v6467
        %v6469 = vpop.xlane.xlu0 %6468
        %v6470 = vmax.bf16 %v6145, %v6146
        %v6471 = vmax.bf16 %v6470, %v6147
        %v6472 = vmax.bf16 %v6471, %v6148
        %v6473 = vmax.bf16 %v6472, %v6149
        %v6474 = vmax.bf16 %v6473, %v6150
        %v6475 = vmax.bf16 %v6474, %v6151
        %v6476 = vmax.bf16 %v6475, %v6152
        %v6477 = vmax.bf16 %v6476, %v6153
        %v6478 = vmax.bf16 %v6477, %v6154
        %v6479 = vmax.bf16 %v6478, %v6155
        %v6480 = vmax.bf16 %v6479, %v6156
        %v6481 = vmax.bf16 %v6480, %v6157
        %v6482 = vmax.bf16 %v6481, %v6158
        %v6483 = vmax.bf16 %v6482, %v6159
        %v6484 = vmax.bf16 %v6483, %v6160
        %v6485 = vmax.bf16 %v6484, %v6161
        %v6486 = vmax.bf16 %v6485, %v6162
        %v6487 = vmax.bf16 %v6486, %v6163
        %v6488 = vmax.bf16 %v6487, %v6164
        %6489 = vmax.xlane.bf16.xlu0 %v6488
        %v6490 = vpop.xlane.xlu0 %6489
        %v6491 = vmax.bf16 %v6165, %v6166
        %v6492 = vmax.bf16 %v6491, %v6167
        %v6493 = vmax.bf16 %v6492, %v6168
        %v6494 = vmax.bf16 %v6493, %v6169
        %v6495 = vmax.bf16 %v6494, %v6170
        %v6496 = vmax.bf16 %v6495, %v6171
        %v6497 = vmax.bf16 %v6496, %v6172
        %v6498 = vmax.bf16 %v6497, %v6173
        %v6499 = vmax.bf16 %v6498, %v6174
        %v6500 = vmax.bf16 %v6499, %v6175
        %v6501 = vmax.bf16 %v6500, %v6176
        %v6502 = vmax.bf16 %v6501, %v6177
        %v6503 = vmax.bf16 %v6502, %v6178
        %v6504 = vmax.bf16 %v6503, %v6179
        %v6505 = vmax.bf16 %v6504, %v6180
        %v6506 = vmax.bf16 %v6505, %v6181
        %v6507 = vmax.bf16 %v6506, %v6182
        %v6508 = vmax.bf16 %v6507, %v6183
        %v6509 = vmax.bf16 %v6508, %v6184
        %6510 = vmax.xlane.bf16.xlu0 %v6509
        %v6511 = vpop.xlane.xlu0 %6510
        %v6512 = vmax.bf16 %v6185, %v6186
        %v6513 = vmax.bf16 %v6512, %v6187
        %v6514 = vmax.bf16 %v6513, %v6188
        %v6515 = vmax.bf16 %v6514, %v6189
        %v6516 = vmax.bf16 %v6515, %v6190
        %v6517 = vmax.bf16 %v6516, %v6191
        %v6518 = vmax.bf16 %v6517, %v6192
        %v6519 = vmax.bf16 %v6518, %v6193
        %v6520 = vmax.bf16 %v6519, %v6194
        %v6521 = vmax.bf16 %v6520, %v6195
        %v6522 = vmax.bf16 %v6521, %v6196
        %v6523 = vmax.bf16 %v6522, %v6197
        %v6524 = vmax.bf16 %v6523, %v6198
        %v6525 = vmax.bf16 %v6524, %v6199
        %v6526 = vmax.bf16 %v6525, %v6200
        %v6527 = vmax.bf16 %v6526, %v6201
        %v6528 = vmax.bf16 %v6527, %v6202
        %v6529 = vmax.bf16 %v6528, %v6203
        %v6530 = vmax.bf16 %v6529, %v6204
        %6531 = vmax.xlane.bf16.xlu0 %v6530
        %v6532 = vpop.xlane.xlu0 %6531
        %v6533 = vmax.bf16 %v6205, %v6206
        %v6534 = vmax.bf16 %v6533, %v6207
        %v6535 = vmax.bf16 %v6534, %v6208
        %v6536 = vmax.bf16 %v6535, %v6209
        %v6537 = vmax.bf16 %v6536, %v6210
        %v6538 = vmax.bf16 %v6537, %v6211
        %v6539 = vmax.bf16 %v6538, %v6212
        %v6540 = vmax.bf16 %v6539, %v6213
        %v6541 = vmax.bf16 %v6540, %v6214
        %v6542 = vmax.bf16 %v6541, %v6215
        %v6543 = vmax.bf16 %v6542, %v6216
        %v6544 = vmax.bf16 %v6543, %v6217
        %v6545 = vmax.bf16 %v6544, %v6218
        %v6546 = vmax.bf16 %v6545, %v6219
        %v6547 = vmax.bf16 %v6546, %v6220
        %v6548 = vmax.bf16 %v6547, %v6221
        %v6549 = vmax.bf16 %v6548, %v6222
        %v6550 = vmax.bf16 %v6549, %v6223
        %v6551 = vmax.bf16 %v6550, %v6224
        %6552 = vmax.xlane.bf16.xlu0 %v6551
        %v6553 = vpop.xlane.xlu0 %6552
        %v6554 = vmax.bf16 %v6225, %v6226
        %v6555 = vmax.bf16 %v6554, %v6227
        %v6556 = vmax.bf16 %v6555, %v6228
        %v6557 = vmax.bf16 %v6556, %v6229
        %v6558 = vmax.bf16 %v6557, %v6230
        %v6559 = vmax.bf16 %v6558, %v6231
        %v6560 = vmax.bf16 %v6559, %v6232
        %v6561 = vmax.bf16 %v6560, %v6233
        %v6562 = vmax.bf16 %v6561, %v6234
        %v6563 = vmax.bf16 %v6562, %v6235
        %v6564 = vmax.bf16 %v6563, %v6236
        %v6565 = vmax.bf16 %v6564, %v6237
        %v6566 = vmax.bf16 %v6565, %v6238
        %v6567 = vmax.bf16 %v6566, %v6239
        %v6568 = vmax.bf16 %v6567, %v6240
        %v6569 = vmax.bf16 %v6568, %v6241
        %v6570 = vmax.bf16 %v6569, %v6242
        %v6571 = vmax.bf16 %v6570, %v6243
        %v6572 = vmax.bf16 %v6571, %v6244
        %6573 = vmax.xlane.bf16.xlu0 %v6572
        %v6574 = vpop.xlane.xlu0 %6573
        %v6575 = vmax.bf16 %v6245, %v6246
        %v6576 = vmax.bf16 %v6575, %v6247
        %v6577 = vmax.bf16 %v6576, %v6248
        %v6578 = vmax.bf16 %v6577, %v6249
        %v6579 = vmax.bf16 %v6578, %v6250
        %v6580 = vmax.bf16 %v6579, %v6251
        %v6581 = vmax.bf16 %v6580, %v6252
        %v6582 = vmax.bf16 %v6581, %v6253
        %v6583 = vmax.bf16 %v6582, %v6254
        %v6584 = vmax.bf16 %v6583, %v6255
        %v6585 = vmax.bf16 %v6584, %v6256
        %v6586 = vmax.bf16 %v6585, %v6257
        %v6587 = vmax.bf16 %v6586, %v6258
        %v6588 = vmax.bf16 %v6587, %v6259
        %v6589 = vmax.bf16 %v6588, %v6260
        %v6590 = vmax.bf16 %v6589, %v6261
        %v6591 = vmax.bf16 %v6590, %v6262
        %v6592 = vmax.bf16 %v6591, %v6263
        %v6593 = vmax.bf16 %v6592, %v6264
        %6594 = vmax.xlane.bf16.xlu0 %v6593
        %v6595 = vpop.xlane.xlu0 %6594
        %v6596 = vmax.bf16 %v6265, %v6266
        %v6597 = vmax.bf16 %v6596, %v6267
        %v6598 = vmax.bf16 %v6597, %v6268
        %v6599 = vmax.bf16 %v6598, %v6269
        %v6600 = vmax.bf16 %v6599, %v6270
        %v6601 = vmax.bf16 %v6600, %v6271
        %v6602 = vmax.bf16 %v6601, %v6272
        %v6603 = vmax.bf16 %v6602, %v6273
        %v6604 = vmax.bf16 %v6603, %v6274
        %v6605 = vmax.bf16 %v6604, %v6275
        %v6606 = vmax.bf16 %v6605, %v6276
        %v6607 = vmax.bf16 %v6606, %v6277
        %v6608 = vmax.bf16 %v6607, %v6278
        %v6609 = vmax.bf16 %v6608, %v6279
        %v6610 = vmax.bf16 %v6609, %v6280
        %v6611 = vmax.bf16 %v6610, %v6281
        %v6612 = vmax.bf16 %v6611, %v6282
        %v6613 = vmax.bf16 %v6612, %v6283
        %v6614 = vmax.bf16 %v6613, %v6284
        %6615 = vmax.xlane.bf16.xlu0 %v6614
        %v6616 = vpop.xlane.xlu0 %6615
        %v6617 = vmax.bf16 %v6285, %v6286
        %v6618 = vmax.bf16 %v6617, %v6287
        %v6619 = vmax.bf16 %v6618, %v6288
        %v6620 = vmax.bf16 %v6619, %v6289
        %v6621 = vmax.bf16 %v6620, %v6290
        %v6622 = vmax.bf16 %v6621, %v6291
        %v6623 = vmax.bf16 %v6622, %v6292
        %v6624 = vmax.bf16 %v6623, %v6293
        %v6625 = vmax.bf16 %v6624, %v6294
        %v6626 = vmax.bf16 %v6625, %v6295
        %v6627 = vmax.bf16 %v6626, %v6296
        %v6628 = vmax.bf16 %v6627, %v6297
        %v6629 = vmax.bf16 %v6628, %v6298
        %v6630 = vmax.bf16 %v6629, %v6299
        %v6631 = vmax.bf16 %v6630, %v6300
        %v6632 = vmax.bf16 %v6631, %v6301
        %v6633 = vmax.bf16 %v6632, %v6302
        %v6634 = vmax.bf16 %v6633, %v6303
        %v6635 = vmax.bf16 %v6634, %v6304
        %6636 = vmax.xlane.bf16.xlu0 %v6635
        %v6637 = vpop.xlane.xlu0 %6636
        %v6638 = vmax.bf16 %v6305, %v6306
        %v6639 = vmax.bf16 %v6638, %v6307
        %v6640 = vmax.bf16 %v6639, %v6308
        %v6641 = vmax.bf16 %v6640, %v6309
        %v6642 = vmax.bf16 %v6641, %v6310
        %v6643 = vmax.bf16 %v6642, %v6311
        %v6644 = vmax.bf16 %v6643, %v6312
        %v6645 = vmax.bf16 %v6644, %v6313
        %v6646 = vmax.bf16 %v6645, %v6314
        %v6647 = vmax.bf16 %v6646, %v6315
        %v6648 = vmax.bf16 %v6647, %v6316
        %v6649 = vmax.bf16 %v6648, %v6317
        %v6650 = vmax.bf16 %v6649, %v6318
        %v6651 = vmax.bf16 %v6650, %v6319
        %v6652 = vmax.bf16 %v6651, %v6320
        %v6653 = vmax.bf16 %v6652, %v6321
        %v6654 = vmax.bf16 %v6653, %v6322
        %v6655 = vmax.bf16 %v6654, %v6323
        %v6656 = vmax.bf16 %v6655, %v6324
        %6657 = vmax.xlane.bf16.xlu0 %v6656
        %v6658 = vpop.xlane.xlu0 %6657
        %v6659 = vmax.bf16 %v6325, %v6326
        %v6660 = vmax.bf16 %v6659, %v6327
        %v6661 = vmax.bf16 %v6660, %v6328
        %v6662 = vmax.bf16 %v6661, %v6329
        %v6663 = vmax.bf16 %v6662, %v6330
        %v6664 = vmax.bf16 %v6663, %v6331
        %v6665 = vmax.bf16 %v6664, %v6332
        %v6666 = vmax.bf16 %v6665, %v6333
        %v6667 = vmax.bf16 %v6666, %v6334
        %v6668 = vmax.bf16 %v6667, %v6335
        %v6669 = vmax.bf16 %v6668, %v6336
        %v6670 = vmax.bf16 %v6669, %v6337
        %v6671 = vmax.bf16 %v6670, %v6338
        %v6672 = vmax.bf16 %v6671, %v6339
        %v6673 = vmax.bf16 %v6672, %v6340
        %v6674 = vmax.bf16 %v6673, %v6341
        %v6675 = vmax.bf16 %v6674, %v6342
        %v6676 = vmax.bf16 %v6675, %v6343
        %v6677 = vmax.bf16 %v6676, %v6344
        %6678 = vmax.xlane.bf16.xlu0 %v6677
        %v6679 = vpop.xlane.xlu0 %6678
        %v6680 = vmax.bf16 %v6345, %v6346
        %v6681 = vmax.bf16 %v6680, %v6347
        %v6682 = vmax.bf16 %v6681, %v6348
        %v6683 = vmax.bf16 %v6682, %v6349
        %v6684 = vmax.bf16 %v6683, %v6350
        %v6685 = vmax.bf16 %v6684, %v6351
        %v6686 = vmax.bf16 %v6685, %v6352
        %v6687 = vmax.bf16 %v6686, %v6353
        %v6688 = vmax.bf16 %v6687, %v6354
        %v6689 = vmax.bf16 %v6688, %v6355
        %v6690 = vmax.bf16 %v6689, %v6356
        %v6691 = vmax.bf16 %v6690, %v6357
        %v6692 = vmax.bf16 %v6691, %v6358
        %v6693 = vmax.bf16 %v6692, %v6359
        %v6694 = vmax.bf16 %v6693, %v6360
        %v6695 = vmax.bf16 %v6694, %v6361
        %v6696 = vmax.bf16 %v6695, %v6362
        %v6697 = vmax.bf16 %v6696, %v6363
        %v6698 = vmax.bf16 %v6697, %v6364
        %6699 = vmax.xlane.bf16.xlu0 %v6698
        %v6700 = vpop.xlane.xlu0 %6699
        %v6701 = vmax.bf16 %v6365, %v6366
        %v6702 = vmax.bf16 %v6701, %v6367
        %v6703 = vmax.bf16 %v6702, %v6368
        %v6704 = vmax.bf16 %v6703, %v6369
        %v6705 = vmax.bf16 %v6704, %v6370
        %v6706 = vmax.bf16 %v6705, %v6371
        %v6707 = vmax.bf16 %v6706, %v6372
        %v6708 = vmax.bf16 %v6707, %v6373
        %v6709 = vmax.bf16 %v6708, %v6374
        %v6710 = vmax.bf16 %v6709, %v6375
        %v6711 = vmax.bf16 %v6710, %v6376
        %v6712 = vmax.bf16 %v6711, %v6377
        %v6713 = vmax.bf16 %v6712, %v6378
        %v6714 = vmax.bf16 %v6713, %v6379
        %v6715 = vmax.bf16 %v6714, %v6380
        %v6716 = vmax.bf16 %v6715, %v6381
        %v6717 = vmax.bf16 %v6716, %v6382
        %v6718 = vmax.bf16 %v6717, %v6383
        %v6719 = vmax.bf16 %v6718, %v6384
        %6720 = vmax.xlane.bf16.xlu0 %v6719
        %v6721 = vpop.xlane.xlu0 %6720
        %v6722 = vmax.bf16 %v6385, %v6386
        %v6723 = vmax.bf16 %v6722, %v6387
        %v6724 = vmax.bf16 %v6723, %v6388
        %v6725 = vmax.bf16 %v6724, %v6389
        %v6726 = vmax.bf16 %v6725, %v6390
        %v6727 = vmax.bf16 %v6726, %v6391
        %v6728 = vmax.bf16 %v6727, %v6392
        %v6729 = vmax.bf16 %v6728, %v6393
        %v6730 = vmax.bf16 %v6729, %v6394
        %v6731 = vmax.bf16 %v6730, %v6395
        %v6732 = vmax.bf16 %v6731, %v6396
        %v6733 = vmax.bf16 %v6732, %v6397
        %v6734 = vmax.bf16 %v6733, %v6398
        %v6735 = vmax.bf16 %v6734, %v6399
        %v6736 = vmax.bf16 %v6735, %v6400
        %v6737 = vmax.bf16 %v6736, %v6401
        %v6738 = vmax.bf16 %v6737, %v6402
        %v6739 = vmax.bf16 %v6738, %v6403
        %v6740 = vmax.bf16 %v6739, %v6404
        %6741 = vmax.xlane.bf16.xlu0 %v6740
        %v6742 = vpop.xlane.xlu0 %6741
        %v6743 = vmax.bf16 %v6405, %v6406
        %v6744 = vmax.bf16 %v6743, %v6407
        %v6745 = vmax.bf16 %v6744, %v6408
        %v6746 = vmax.bf16 %v6745, %v6409
        %v6747 = vmax.bf16 %v6746, %v6410
        %v6748 = vmax.bf16 %v6747, %v6411
        %v6749 = vmax.bf16 %v6748, %v6412
        %v6750 = vmax.bf16 %v6749, %v6413
        %v6751 = vmax.bf16 %v6750, %v6414
        %v6752 = vmax.bf16 %v6751, %v6415
        %v6753 = vmax.bf16 %v6752, %v6416
        %v6754 = vmax.bf16 %v6753, %v6417
        %v6755 = vmax.bf16 %v6754, %v6418
        %v6756 = vmax.bf16 %v6755, %v6419
        %v6757 = vmax.bf16 %v6756, %v6420
        %v6758 = vmax.bf16 %v6757, %v6421
        %v6759 = vmax.bf16 %v6758, %v6422
        %v6760 = vmax.bf16 %v6759, %v6423
        %v6761 = vmax.bf16 %v6760, %v6424
        %6762 = vmax.xlane.bf16.xlu0 %v6761
        %v6763 = vpop.xlane.xlu0 %6762
        %v6764 = vmax.bf16 %v6425, %v6426
        %v6765 = vmax.bf16 %v6764, %v6427
        %v6766 = vmax.bf16 %v6765, %v6428
        %v6767 = vmax.bf16 %v6766, %v6429
        %v6768 = vmax.bf16 %v6767, %v6430
        %v6769 = vmax.bf16 %v6768, %v6431
        %v6770 = vmax.bf16 %v6769, %v6432
        %v6771 = vmax.bf16 %v6770, %v6433
        %v6772 = vmax.bf16 %v6771, %v6434
        %v6773 = vmax.bf16 %v6772, %v6435
        %v6774 = vmax.bf16 %v6773, %v6436
        %v6775 = vmax.bf16 %v6774, %v6437
        %v6776 = vmax.bf16 %v6775, %v6438
        %v6777 = vmax.bf16 %v6776, %v6439
        %v6778 = vmax.bf16 %v6777, %v6440
        %v6779 = vmax.bf16 %v6778, %v6441
        %v6780 = vmax.bf16 %v6779, %v6442
        %v6781 = vmax.bf16 %v6780, %v6443
        %v6782 = vmax.bf16 %v6781, %v6444
        %6783 = vmax.xlane.bf16.xlu0 %v6782
        %v6784 = vpop.xlane.xlu0 %6783
        %v6785 = vunpack.c.l.bf16 %v6469
        %v6786 = vunpack.c.h.bf16 %v6469
        %v6787 = vunpack.c.l.bf16 %v6490
        %v6788 = vunpack.c.h.bf16 %v6490
        %v6789 = vunpack.c.l.bf16 %v6511
        %v6790 = vunpack.c.h.bf16 %v6511
        %v6791 = vunpack.c.l.bf16 %v6532
        %v6792 = vunpack.c.h.bf16 %v6532
        %v6793 = vunpack.c.l.bf16 %v6553
        %v6794 = vunpack.c.h.bf16 %v6553
        %v6795 = vunpack.c.l.bf16 %v6574
        %v6796 = vunpack.c.h.bf16 %v6574
        %v6797 = vunpack.c.l.bf16 %v6595
        %v6798 = vunpack.c.h.bf16 %v6595
        %v6799 = vunpack.c.l.bf16 %v6616
        %v6800 = vunpack.c.h.bf16 %v6616
        %v6801 = vunpack.c.l.bf16 %v6637
        %v6802 = vunpack.c.h.bf16 %v6637
        %v6803 = vunpack.c.l.bf16 %v6658
        %v6804 = vunpack.c.h.bf16 %v6658
        %v6805 = vunpack.c.l.bf16 %v6679
        %v6806 = vunpack.c.h.bf16 %v6679
        %v6807 = vunpack.c.l.bf16 %v6700
        %v6808 = vunpack.c.h.bf16 %v6700
        %v6809 = vunpack.c.l.bf16 %v6721
        %v6810 = vunpack.c.h.bf16 %v6721
        %v6811 = vunpack.c.l.bf16 %v6742
        %v6812 = vunpack.c.h.bf16 %v6742
        %v6813 = vunpack.c.l.bf16 %v6763
        %v6814 = vunpack.c.h.bf16 %v6763
        %v6815 = vunpack.c.l.bf16 %v6784
        %v6816 = vunpack.c.h.bf16 %v6784
        %p6817 = scmp.eq.s32.totalorder %s27, 0
        // Predicated region
        $region69: #{est.1} parent=67 // pred_check
          %p6818 = pneg %p6817
        $region70: #{est.1} parent=67 // pred_check_branch
          %6820 = sbr.rel (%p6818) target = $region72
        $region71: #{est.1} parent=67 // pred_region
          %6821 = vst [vmem:[#allocation2] sm:$0xff] %v6785
          %6822 = vst [vmem:[#allocation2 + $0x8] sm:$0xff] %v6786
          %6823 = vst [vmem:[#allocation2 + $0x10] sm:$0xff] %v6787
          %6824 = vst [vmem:[#allocation2 + $0x18] sm:$0xff] %v6788
          %6825 = vst [vmem:[#allocation2 + $0x20] sm:$0xff] %v6789
          %6826 = vst [vmem:[#allocation2 + $0x28] sm:$0xff] %v6790
          %6827 = vst [vmem:[#allocation2 + $0x30] sm:$0xff] %v6791
          %6828 = vst [vmem:[#allocation2 + $0x38] sm:$0xff] %v6792
          %6829 = vst [vmem:[#allocation2 + $0x40] sm:$0xff] %v6793
          %6830 = vst [vmem:[#allocation2 + $0x48] sm:$0xff] %v6794
          %6831 = vst [vmem:[#allocation2 + $0x50] sm:$0xff] %v6795
          %6832 = vst [vmem:[#allocation2 + $0x58] sm:$0xff] %v6796
          %6833 = vst [vmem:[#allocation2 + $0x60] sm:$0xff] %v6797
          %6834 = vst [vmem:[#allocation2 + $0x68] sm:$0xff] %v6798
          %6835 = vst [vmem:[#allocation2 + $0x70] sm:$0xff] %v6799
          %6836 = vst [vmem:[#allocation2 + $0x78] sm:$0xff] %v6800
          %6837 = vst [vmem:[#allocation2 + $0x80] sm:$0xff] %v6801
          %6838 = vst [vmem:[#allocation2 + $0x88] sm:$0xff] %v6802
          %6839 = vst [vmem:[#allocation2 + $0x90] sm:$0xff] %v6803
          %6840 = vst [vmem:[#allocation2 + $0x98] sm:$0xff] %v6804
          %6841 = vst [vmem:[#allocation2 + $0xa0] sm:$0xff] %v6805
          %6842 = vst [vmem:[#allocation2 + $0xa8] sm:$0xff] %v6806
          %6843 = vst [vmem:[#allocation2 + $0xb0] sm:$0xff] %v6807
          %6844 = vst [vmem:[#allocation2 + $0xb8] sm:$0xff] %v6808
          %6845 = vst [vmem:[#allocation2 + $0xc0] sm:$0xff] %v6809
          %6846 = vst [vmem:[#allocation2 + $0xc8] sm:$0xff] %v6810
          %6847 = vst [vmem:[#allocation2 + $0xd0] sm:$0xff] %v6811
          %6848 = vst [vmem:[#allocation2 + $0xd8] sm:$0xff] %v6812
          %6849 = vst [vmem:[#allocation2 + $0xe0] sm:$0xff] %v6813
          %6850 = vst [vmem:[#allocation2 + $0xe8] sm:$0xff] %v6814
          %6851 = vst [vmem:[#allocation2 + $0xf0] sm:$0xff] %v6815
          %6852 = vst [vmem:[#allocation2 + $0xf8] sm:$0xff] %v6816
        $region72: #{est.1} parent=67 // pred_fallthru
          _
        %p6853 = scmp.gt.s32.totalorder %s27, 0
        // Predicated region
        $region73: #{est.1} parent=67 // pred_check
          %p6854 = pneg %p6853
        $region74: #{est.1} parent=67 // pred_check_branch
          %6856 = sbr.rel (%p6854) target = $region76
        $region75: #{est.1} parent=67 // pred_region
          %v6857 = vld [vmem:[#allocation2] sm:$0xff]
          %v6858 = vld [vmem:[#allocation2 + $0x8] sm:$0xff]
          %v6859 = vld [vmem:[#allocation2 + $0x10] sm:$0xff]
          %v6860 = vld [vmem:[#allocation2 + $0x18] sm:$0xff]
          %v6861 = vld [vmem:[#allocation2 + $0x20] sm:$0xff]
          %v6862 = vld [vmem:[#allocation2 + $0x28] sm:$0xff]
          %v6863 = vld [vmem:[#allocation2 + $0x30] sm:$0xff]
          %v6864 = vld [vmem:[#allocation2 + $0x38] sm:$0xff]
          %v6865 = vld [vmem:[#allocation2 + $0x40] sm:$0xff]
          %v6866 = vld [vmem:[#allocation2 + $0x48] sm:$0xff]
          %v6867 = vld [vmem:[#allocation2 + $0x50] sm:$0xff]
          %v6868 = vld [vmem:[#allocation2 + $0x58] sm:$0xff]
          %v6869 = vld [vmem:[#allocation2 + $0x60] sm:$0xff]
          %v6870 = vld [vmem:[#allocation2 + $0x68] sm:$0xff]
          %v6871 = vld [vmem:[#allocation2 + $0x70] sm:$0xff]
          %v6872 = vld [vmem:[#allocation2 + $0x78] sm:$0xff]
          %v6873 = vld [vmem:[#allocation2 + $0x80] sm:$0xff]
          %v6874 = vld [vmem:[#allocation2 + $0x88] sm:$0xff]
          %v6875 = vld [vmem:[#allocation2 + $0x90] sm:$0xff]
          %v6876 = vld [vmem:[#allocation2 + $0x98] sm:$0xff]
          %v6877 = vld [vmem:[#allocation2 + $0xa0] sm:$0xff]
          %v6878 = vld [vmem:[#allocation2 + $0xa8] sm:$0xff]
          %v6879 = vld [vmem:[#allocation2 + $0xb0] sm:$0xff]
          %v6880 = vld [vmem:[#allocation2 + $0xb8] sm:$0xff]
          %v6881 = vld [vmem:[#allocation2 + $0xc0] sm:$0xff]
          %v6882 = vld [vmem:[#allocation2 + $0xc8] sm:$0xff]
          %v6883 = vld [vmem:[#allocation2 + $0xd0] sm:$0xff]
          %v6884 = vld [vmem:[#allocation2 + $0xd8] sm:$0xff]
          %v6885 = vld [vmem:[#allocation2 + $0xe0] sm:$0xff]
          %v6886 = vld [vmem:[#allocation2 + $0xe8] sm:$0xff]
          %v6887 = vld [vmem:[#allocation2 + $0xf0] sm:$0xff]
          %v6888 = vld [vmem:[#allocation2 + $0xf8] sm:$0xff]
          %v6889 = vmax.f32 %v6857, %v6785
          %v6890 = vmax.f32 %v6858, %v6786
          %v6891 = vmax.f32 %v6859, %v6787
          %v6892 = vmax.f32 %v6860, %v6788
          %v6893 = vmax.f32 %v6861, %v6789
          %v6894 = vmax.f32 %v6862, %v6790
          %v6895 = vmax.f32 %v6863, %v6791
          %v6896 = vmax.f32 %v6864, %v6792
          %v6897 = vmax.f32 %v6865, %v6793
          %v6898 = vmax.f32 %v6866, %v6794
          %v6899 = vmax.f32 %v6867, %v6795
          %v6900 = vmax.f32 %v6868, %v6796
          %v6901 = vmax.f32 %v6869, %v6797
          %v6902 = vmax.f32 %v6870, %v6798
          %v6903 = vmax.f32 %v6871, %v6799
          %v6904 = vmax.f32 %v6872, %v6800
          %v6905 = vmax.f32 %v6873, %v6801
          %v6906 = vmax.f32 %v6874, %v6802
          %v6907 = vmax.f32 %v6875, %v6803
          %v6908 = vmax.f32 %v6876, %v6804
          %v6909 = vmax.f32 %v6877, %v6805
          %v6910 = vmax.f32 %v6878, %v6806
          %v6911 = vmax.f32 %v6879, %v6807
          %v6912 = vmax.f32 %v6880, %v6808
          %v6913 = vmax.f32 %v6881, %v6809
          %v6914 = vmax.f32 %v6882, %v6810
          %v6915 = vmax.f32 %v6883, %v6811
          %v6916 = vmax.f32 %v6884, %v6812
          %v6917 = vmax.f32 %v6885, %v6813
          %v6918 = vmax.f32 %v6886, %v6814
          %v6919 = vmax.f32 %v6887, %v6815
          %v6920 = vmax.f32 %v6888, %v6816
          %6921 = vst [vmem:[#allocation2] sm:$0xff] %v6889
          %6922 = vst [vmem:[#allocation2 + $0x8] sm:$0xff] %v6890
          %6923 = vst [vmem:[#allocation2 + $0x10] sm:$0xff] %v6891
          %6924 = vst [vmem:[#allocation2 + $0x18] sm:$0xff] %v6892
          %6925 = vst [vmem:[#allocation2 + $0x20] sm:$0xff] %v6893
          %6926 = vst [vmem:[#allocation2 + $0x28] sm:$0xff] %v6894
          %6927 = vst [vmem:[#allocation2 + $0x30] sm:$0xff] %v6895
          %6928 = vst [vmem:[#allocation2 + $0x38] sm:$0xff] %v6896
          %6929 = vst [vmem:[#allocation2 + $0x40] sm:$0xff] %v6897
          %6930 = vst [vmem:[#allocation2 + $0x48] sm:$0xff] %v6898
          %6931 = vst [vmem:[#allocation2 + $0x50] sm:$0xff] %v6899
          %6932 = vst [vmem:[#allocation2 + $0x58] sm:$0xff] %v6900
          %6933 = vst [vmem:[#allocation2 + $0x60] sm:$0xff] %v6901
          %6934 = vst [vmem:[#allocation2 + $0x68] sm:$0xff] %v6902
          %6935 = vst [vmem:[#allocation2 + $0x70] sm:$0xff] %v6903
          %6936 = vst [vmem:[#allocation2 + $0x78] sm:$0xff] %v6904
          %6937 = vst [vmem:[#allocation2 + $0x80] sm:$0xff] %v6905
          %6938 = vst [vmem:[#allocation2 + $0x88] sm:$0xff] %v6906
          %6939 = vst [vmem:[#allocation2 + $0x90] sm:$0xff] %v6907
          %6940 = vst [vmem:[#allocation2 + $0x98] sm:$0xff] %v6908
          %6941 = vst [vmem:[#allocation2 + $0xa0] sm:$0xff] %v6909
          %6942 = vst [vmem:[#allocation2 + $0xa8] sm:$0xff] %v6910
          %6943 = vst [vmem:[#allocation2 + $0xb0] sm:$0xff] %v6911
          %6944 = vst [vmem:[#allocation2 + $0xb8] sm:$0xff] %v6912
          %6945 = vst [vmem:[#allocation2 + $0xc0] sm:$0xff] %v6913
          %6946 = vst [vmem:[#allocation2 + $0xc8] sm:$0xff] %v6914
          %6947 = vst [vmem:[#allocation2 + $0xd0] sm:$0xff] %v6915
          %6948 = vst [vmem:[#allocation2 + $0xd8] sm:$0xff] %v6916
          %6949 = vst [vmem:[#allocation2 + $0xe0] sm:$0xff] %v6917
          %6950 = vst [vmem:[#allocation2 + $0xe8] sm:$0xff] %v6918
          %6951 = vst [vmem:[#allocation2 + $0xf0] sm:$0xff] %v6919
          %6952 = vst [vmem:[#allocation2 + $0xf8] sm:$0xff] %v6920
        $region76: #{est.1} parent=67 // pred_fallthru
          _
      $region68: #{est.1} parent=63 // pred_fallthru
        _
      %p6953 = scmp.eq.s32.totalorder %s27, 0
      // Predicated region
      $region77: #{est.1} parent=63 // pred_check
        %p6954 = pneg %p6953
      $region78: #{est.1} parent=63 // pred_check_branch
        %6956 = sbr.rel (%p6954) target = $region80
      $region79: #{est.1} parent=63 // pred_region
        %v6957 = vlaneseq
        %v6958 = vand.u32 %v6957, 127
        %v6959 = vadd.s32 %v6958, 128
        %v6960 = vadd.s32 %v6958, 256
        %v6961 = vadd.s32 %v6958, 384
        %v6962 = vadd.s32 %v6958, 512
        %v6963 = vadd.s32 %v6958, 640
        %v6964 = vadd.s32 %v6958, 768
        %v6965 = vadd.s32 %v6958, 896
        %v6966 = vadd.s32 %v6958, 1024
        %v6967 = vadd.s32 %v6958, 1152
        %v6968 = vadd.s32 %v6958, 1280
        %v6969 = vadd.s32 %v6958, 1408
        %v6970 = vadd.s32 %v6958, 1536
        %v6971 = vadd.s32 %v6958, 1664
        %v6972 = vadd.s32 %v6958, 1792
        %v6973 = vadd.s32 %v6958, 1920
        %v6974 = vadd.s32 %v6958, 2048
        %v6975 = vadd.s32 %v6958, 2176
        %v6976 = vadd.s32 %v6958, 2304
        %v6977 = vadd.s32 %v6958, 2432
        %vm6978 = vcmp.lt.s32.totalorder %v6958, 2500
        %vm6979 = vcmp.lt.s32.totalorder %v6959, 2500
        %vm6980 = vcmp.lt.s32.totalorder %v6960, 2500
        %vm6981 = vcmp.lt.s32.totalorder %v6961, 2500
        %vm6982 = vcmp.lt.s32.totalorder %v6962, 2500
        %vm6983 = vcmp.lt.s32.totalorder %v6963, 2500
        %vm6984 = vcmp.lt.s32.totalorder %v6964, 2500
        %vm6985 = vcmp.lt.s32.totalorder %v6965, 2500
        %vm6986 = vcmp.lt.s32.totalorder %v6966, 2500
        %vm6987 = vcmp.lt.s32.totalorder %v6967, 2500
        %vm6988 = vcmp.lt.s32.totalorder %v6968, 2500
        %vm6989 = vcmp.lt.s32.totalorder %v6969, 2500
        %vm6990 = vcmp.lt.s32.totalorder %v6970, 2500
        %vm6991 = vcmp.lt.s32.totalorder %v6971, 2500
        %vm6992 = vcmp.lt.s32.totalorder %v6972, 2500
        %vm6993 = vcmp.lt.s32.totalorder %v6973, 2500
        %vm6994 = vcmp.lt.s32.totalorder %v6974, 2500
        %vm6995 = vcmp.lt.s32.totalorder %v6975, 2500
        %vm6996 = vcmp.lt.s32.totalorder %v6976, 2500
        %vm6997 = vcmp.lt.s32.totalorder %v6977, 2500
        %v6998 = vsel %vm6978, 1, 0
        %v6999 = vsel %vm6979, 1, 0
        %v7000 = vsel %vm6980, 1, 0
        %v7001 = vsel %vm6981, 1, 0
        %v7002 = vsel %vm6982, 1, 0
        %v7003 = vsel %vm6983, 1, 0
        %v7004 = vsel %vm6984, 1, 0
        %v7005 = vsel %vm6985, 1, 0
        %v7006 = vsel %vm6986, 1, 0
        %v7007 = vsel %vm6987, 1, 0
        %v7008 = vsel %vm6988, 1, 0
        %v7009 = vsel %vm6989, 1, 0
        %v7010 = vsel %vm6990, 1, 0
        %v7011 = vsel %vm6991, 1, 0
        %v7012 = vsel %vm6992, 1, 0
        %v7013 = vsel %vm6993, 1, 0
        %v7014 = vsel %vm6994, 1, 0
        %v7015 = vsel %vm6995, 1, 0
        %v7016 = vsel %vm6996, 1, 0
        %v7017 = vsel %vm6997, 1, 0
        %vm7018 = vcmp.eq.s32.totalorder %v6998, 1
        %vm7019 = vcmp.eq.s32.totalorder %v6999, 1
        %vm7020 = vcmp.eq.s32.totalorder %v7000, 1
        %vm7021 = vcmp.eq.s32.totalorder %v7001, 1
        %vm7022 = vcmp.eq.s32.totalorder %v7002, 1
        %vm7023 = vcmp.eq.s32.totalorder %v7003, 1
        %vm7024 = vcmp.eq.s32.totalorder %v7004, 1
        %vm7025 = vcmp.eq.s32.totalorder %v7005, 1
        %vm7026 = vcmp.eq.s32.totalorder %v7006, 1
        %vm7027 = vcmp.eq.s32.totalorder %v7007, 1
        %vm7028 = vcmp.eq.s32.totalorder %v7008, 1
        %vm7029 = vcmp.eq.s32.totalorder %v7009, 1
        %vm7030 = vcmp.eq.s32.totalorder %v7010, 1
        %vm7031 = vcmp.eq.s32.totalorder %v7011, 1
        %vm7032 = vcmp.eq.s32.totalorder %v7012, 1
        %vm7033 = vcmp.eq.s32.totalorder %v7013, 1
        %vm7034 = vcmp.eq.s32.totalorder %v7014, 1
        %vm7035 = vcmp.eq.s32.totalorder %v7015, 1
        %vm7036 = vcmp.eq.s32.totalorder %v7016, 1
        %vm7037 = vcmp.eq.s32.totalorder %v7017, 1
        %vm7038 = vmpackc.low %vm7019, %vm7018
        %vm7039 = vmpackc.low %vm7021, %vm7020
        %vm7040 = vmpackc.low %vm7023, %vm7022
        %vm7041 = vmpackc.low %vm7025, %vm7024
        %vm7042 = vmpackc.low %vm7027, %vm7026
        %vm7043 = vmpackc.low %vm7029, %vm7028
        %vm7044 = vmpackc.low %vm7031, %vm7030
        %vm7045 = vmpackc.low %vm7033, %vm7032
        %vm7046 = vmpackc.low %vm7035, %vm7034
        %vm7047 = vmpackc.low %vm7037, %vm7036
        %v7048 = vsel %vm7038, 65537, 0
        %v7049 = vsel %vm7039, 65537, 0
        %v7050 = vsel %vm7040, 65537, 0
        %v7051 = vsel %vm7041, 65537, 0
        %v7052 = vsel %vm7042, 65537, 0
        %v7053 = vsel %vm7043, 65537, 0
        %v7054 = vsel %vm7044, 65537, 0
        %v7055 = vsel %vm7045, 65537, 0
        %v7056 = vsel %vm7046, 65537, 0
        %v7057 = vsel %vm7047, 65537, 0
        %v7058 = vlaneseq
        %v7059 = vshrl.u32 %v7058, 7
        %v7060 = vsub.s32 0, %v7059
        %v7061 = vrot.slane %v7048, %v7060
        %v7062 = vlaneseq
        %v7063 = vshrl.u32 %v7062, 7
        %v7064 = vsub.s32 4, %v7063
        %v7065 = vrot.slane %v7048, %v7064
        %v7066 = vlaneseq
        %v7067 = vshrl.u32 %v7066, 7
        %v7068 = vsub.s32 0, %v7067
        %v7069 = vrot.slane %v7049, %v7068
        %v7070 = vlaneseq
        %v7071 = vshrl.u32 %v7070, 7
        %v7072 = vsub.s32 4, %v7071
        %v7073 = vrot.slane %v7049, %v7072
        %v7074 = vlaneseq
        %v7075 = vshrl.u32 %v7074, 7
        %v7076 = vsub.s32 0, %v7075
        %v7077 = vrot.slane %v7050, %v7076
        %v7078 = vlaneseq
        %v7079 = vshrl.u32 %v7078, 7
        %v7080 = vsub.s32 4, %v7079
        %v7081 = vrot.slane %v7050, %v7080
        %v7082 = vlaneseq
        %v7083 = vshrl.u32 %v7082, 7
        %v7084 = vsub.s32 0, %v7083
        %v7085 = vrot.slane %v7051, %v7084
        %v7086 = vlaneseq
        %v7087 = vshrl.u32 %v7086, 7
        %v7088 = vsub.s32 4, %v7087
        %v7089 = vrot.slane %v7051, %v7088
        %v7090 = vlaneseq
        %v7091 = vshrl.u32 %v7090, 7
        %v7092 = vsub.s32 0, %v7091
        %v7093 = vrot.slane %v7052, %v7092
        %v7094 = vlaneseq
        %v7095 = vshrl.u32 %v7094, 7
        %v7096 = vsub.s32 4, %v7095
        %v7097 = vrot.slane %v7052, %v7096
        %v7098 = vlaneseq
        %v7099 = vshrl.u32 %v7098, 7
        %v7100 = vsub.s32 0, %v7099
        %v7101 = vrot.slane %v7053, %v7100
        %v7102 = vlaneseq
        %v7103 = vshrl.u32 %v7102, 7
        %v7104 = vsub.s32 4, %v7103
        %v7105 = vrot.slane %v7053, %v7104
        %v7106 = vlaneseq
        %v7107 = vshrl.u32 %v7106, 7
        %v7108 = vsub.s32 0, %v7107
        %v7109 = vrot.slane %v7054, %v7108
        %v7110 = vlaneseq
        %v7111 = vshrl.u32 %v7110, 7
        %v7112 = vsub.s32 4, %v7111
        %v7113 = vrot.slane %v7054, %v7112
        %v7114 = vlaneseq
        %v7115 = vshrl.u32 %v7114, 7
        %v7116 = vsub.s32 0, %v7115
        %v7117 = vrot.slane %v7055, %v7116
        %v7118 = vlaneseq
        %v7119 = vshrl.u32 %v7118, 7
        %v7120 = vsub.s32 4, %v7119
        %v7121 = vrot.slane %v7055, %v7120
        %v7122 = vlaneseq
        %v7123 = vshrl.u32 %v7122, 7
        %v7124 = vsub.s32 0, %v7123
        %v7125 = vrot.slane %v7056, %v7124
        %v7126 = vlaneseq
        %v7127 = vshrl.u32 %v7126, 7
        %v7128 = vsub.s32 4, %v7127
        %v7129 = vrot.slane %v7056, %v7128
        %v7130 = vlaneseq
        %v7131 = vshrl.u32 %v7130, 7
        %v7132 = vsub.s32 0, %v7131
        %v7133 = vrot.slane %v7057, %v7132
        %v7134 = vlaneseq
        %v7135 = vshrl.u32 %v7134, 7
        %v7136 = vsub.s32 4, %v7135
        %v7137 = vrot.slane %v7057, %v7136
        %vm7138 = vcmp.ne.s16.totalorder %v7061, 0
        %vm7139 = vcmp.ne.s16.totalorder %v7065, 0
        %vm7140 = vcmp.ne.s16.totalorder %v7069, 0
        %vm7141 = vcmp.ne.s16.totalorder %v7073, 0
        %vm7142 = vcmp.ne.s16.totalorder %v7077, 0
        %vm7143 = vcmp.ne.s16.totalorder %v7081, 0
        %vm7144 = vcmp.ne.s16.totalorder %v7085, 0
        %vm7145 = vcmp.ne.s16.totalorder %v7089, 0
        %vm7146 = vcmp.ne.s16.totalorder %v7093, 0
        %vm7147 = vcmp.ne.s16.totalorder %v7097, 0
        %vm7148 = vcmp.ne.s16.totalorder %v7101, 0
        %vm7149 = vcmp.ne.s16.totalorder %v7105, 0
        %vm7150 = vcmp.ne.s16.totalorder %v7109, 0
        %vm7151 = vcmp.ne.s16.totalorder %v7113, 0
        %vm7152 = vcmp.ne.s16.totalorder %v7117, 0
        %vm7153 = vcmp.ne.s16.totalorder %v7121, 0
        %vm7154 = vcmp.ne.s16.totalorder %v7125, 0
        %vm7155 = vcmp.ne.s16.totalorder %v7129, 0
        %vm7156 = vcmp.ne.s16.totalorder %v7133, 0
        %vm7157 = vcmp.ne.s16.totalorder %v7137, 0
        %v7158 = vsel %vm7138, %v6125, 0
        %v7159 = vsel %vm7139, %v6126, 0
        %v7160 = vsel %vm7140, %v6127, 0
        %v7161 = vsel %vm7141, %v6128, 0
        %v7162 = vsel %vm7142, %v6129, 0
        %v7163 = vsel %vm7143, %v6130, 0
        %v7164 = vsel %vm7144, %v6131, 0
        %v7165 = vsel %vm7145, %v6132, 0
        %v7166 = vsel %vm7146, %v6133, 0
        %v7167 = vsel %vm7147, %v6134, 0
        %v7168 = vsel %vm7148, %v6135, 0
        %v7169 = vsel %vm7149, %v6136, 0
        %v7170 = vsel %vm7150, %v6137, 0
        %v7171 = vsel %vm7151, %v6138, 0
        %v7172 = vsel %vm7152, %v6139, 0
        %v7173 = vsel %vm7153, %v6140, 0
        %v7174 = vsel %vm7154, %v6141, 0
        %v7175 = vsel %vm7155, %v6142, 0
        %v7176 = vsel %vm7156, %v6143, 0
        %v7177 = vsel %vm7157, %v6144, 0
        %v7178 = vsel %vm7138, %v6145, 0
        %v7179 = vsel %vm7139, %v6146, 0
        %v7180 = vsel %vm7140, %v6147, 0
        %v7181 = vsel %vm7141, %v6148, 0
        %v7182 = vsel %vm7142, %v6149, 0
        %v7183 = vsel %vm7143, %v6150, 0
        %v7184 = vsel %vm7144, %v6151, 0
        %v7185 = vsel %vm7145, %v6152, 0
        %v7186 = vsel %vm7146, %v6153, 0
        %v7187 = vsel %vm7147, %v6154, 0
        %v7188 = vsel %vm7148, %v6155, 0
        %v7189 = vsel %vm7149, %v6156, 0
        %v7190 = vsel %vm7150, %v6157, 0
        %v7191 = vsel %vm7151, %v6158, 0
        %v7192 = vsel %vm7152, %v6159, 0
        %v7193 = vsel %vm7153, %v6160, 0
        %v7194 = vsel %vm7154, %v6161, 0
        %v7195 = vsel %vm7155, %v6162, 0
        %v7196 = vsel %vm7156, %v6163, 0
        %v7197 = vsel %vm7157, %v6164, 0
        %v7198 = vsel %vm7138, %v6165, 0
        %v7199 = vsel %vm7139, %v6166, 0
        %v7200 = vsel %vm7140, %v6167, 0
        %v7201 = vsel %vm7141, %v6168, 0
        %v7202 = vsel %vm7142, %v6169, 0
        %v7203 = vsel %vm7143, %v6170, 0
        %v7204 = vsel %vm7144, %v6171, 0
        %v7205 = vsel %vm7145, %v6172, 0
        %v7206 = vsel %vm7146, %v6173, 0
        %v7207 = vsel %vm7147, %v6174, 0
        %v7208 = vsel %vm7148, %v6175, 0
        %v7209 = vsel %vm7149, %v6176, 0
        %v7210 = vsel %vm7150, %v6177, 0
        %v7211 = vsel %vm7151, %v6178, 0
        %v7212 = vsel %vm7152, %v6179, 0
        %v7213 = vsel %vm7153, %v6180, 0
        %v7214 = vsel %vm7154, %v6181, 0
        %v7215 = vsel %vm7155, %v6182, 0
        %v7216 = vsel %vm7156, %v6183, 0
        %v7217 = vsel %vm7157, %v6184, 0
        %v7218 = vsel %vm7138, %v6185, 0
        %v7219 = vsel %vm7139, %v6186, 0
        %v7220 = vsel %vm7140, %v6187, 0
        %v7221 = vsel %vm7141, %v6188, 0
        %v7222 = vsel %vm7142, %v6189, 0
        %v7223 = vsel %vm7143, %v6190, 0
        %v7224 = vsel %vm7144, %v6191, 0
        %v7225 = vsel %vm7145, %v6192, 0
        %v7226 = vsel %vm7146, %v6193, 0
        %v7227 = vsel %vm7147, %v6194, 0
        %v7228 = vsel %vm7148, %v6195, 0
        %v7229 = vsel %vm7149, %v6196, 0
        %v7230 = vsel %vm7150, %v6197, 0
        %v7231 = vsel %vm7151, %v6198, 0
        %v7232 = vsel %vm7152, %v6199, 0
        %v7233 = vsel %vm7153, %v6200, 0
        %v7234 = vsel %vm7154, %v6201, 0
        %v7235 = vsel %vm7155, %v6202, 0
        %v7236 = vsel %vm7156, %v6203, 0
        %v7237 = vsel %vm7157, %v6204, 0
        %v7238 = vsel %vm7138, %v6205, 0
        %v7239 = vsel %vm7139, %v6206, 0
        %v7240 = vsel %vm7140, %v6207, 0
        %v7241 = vsel %vm7141, %v6208, 0
        %v7242 = vsel %vm7142, %v6209, 0
        %v7243 = vsel %vm7143, %v6210, 0
        %v7244 = vsel %vm7144, %v6211, 0
        %v7245 = vsel %vm7145, %v6212, 0
        %v7246 = vsel %vm7146, %v6213, 0
        %v7247 = vsel %vm7147, %v6214, 0
        %v7248 = vsel %vm7148, %v6215, 0
        %v7249 = vsel %vm7149, %v6216, 0
        %v7250 = vsel %vm7150, %v6217, 0
        %v7251 = vsel %vm7151, %v6218, 0
        %v7252 = vsel %vm7152, %v6219, 0
        %v7253 = vsel %vm7153, %v6220, 0
        %v7254 = vsel %vm7154, %v6221, 0
        %v7255 = vsel %vm7155, %v6222, 0
        %v7256 = vsel %vm7156, %v6223, 0
        %v7257 = vsel %vm7157, %v6224, 0
        %v7258 = vsel %vm7138, %v6225, 0
        %v7259 = vsel %vm7139, %v6226, 0
        %v7260 = vsel %vm7140, %v6227, 0
        %v7261 = vsel %vm7141, %v6228, 0
        %v7262 = vsel %vm7142, %v6229, 0
        %v7263 = vsel %vm7143, %v6230, 0
        %v7264 = vsel %vm7144, %v6231, 0
        %v7265 = vsel %vm7145, %v6232, 0
        %v7266 = vsel %vm7146, %v6233, 0
        %v7267 = vsel %vm7147, %v6234, 0
        %v7268 = vsel %vm7148, %v6235, 0
        %v7269 = vsel %vm7149, %v6236, 0
        %v7270 = vsel %vm7150, %v6237, 0
        %v7271 = vsel %vm7151, %v6238, 0
        %v7272 = vsel %vm7152, %v6239, 0
        %v7273 = vsel %vm7153, %v6240, 0
        %v7274 = vsel %vm7154, %v6241, 0
        %v7275 = vsel %vm7155, %v6242, 0
        %v7276 = vsel %vm7156, %v6243, 0
        %v7277 = vsel %vm7157, %v6244, 0
        %v7278 = vsel %vm7138, %v6245, 0
        %v7279 = vsel %vm7139, %v6246, 0
        %v7280 = vsel %vm7140, %v6247, 0
        %v7281 = vsel %vm7141, %v6248, 0
        %v7282 = vsel %vm7142, %v6249, 0
        %v7283 = vsel %vm7143, %v6250, 0
        %v7284 = vsel %vm7144, %v6251, 0
        %v7285 = vsel %vm7145, %v6252, 0
        %v7286 = vsel %vm7146, %v6253, 0
        %v7287 = vsel %vm7147, %v6254, 0
        %v7288 = vsel %vm7148, %v6255, 0
        %v7289 = vsel %vm7149, %v6256, 0
        %v7290 = vsel %vm7150, %v6257, 0
        %v7291 = vsel %vm7151, %v6258, 0
        %v7292 = vsel %vm7152, %v6259, 0
        %v7293 = vsel %vm7153, %v6260, 0
        %v7294 = vsel %vm7154, %v6261, 0
        %v7295 = vsel %vm7155, %v6262, 0
        %v7296 = vsel %vm7156, %v6263, 0
        %v7297 = vsel %vm7157, %v6264, 0
        %v7298 = vsel %vm7138, %v6265, 0
        %v7299 = vsel %vm7139, %v6266, 0
        %v7300 = vsel %vm7140, %v6267, 0
        %v7301 = vsel %vm7141, %v6268, 0
        %v7302 = vsel %vm7142, %v6269, 0
        %v7303 = vsel %vm7143, %v6270, 0
        %v7304 = vsel %vm7144, %v6271, 0
        %v7305 = vsel %vm7145, %v6272, 0
        %v7306 = vsel %vm7146, %v6273, 0
        %v7307 = vsel %vm7147, %v6274, 0
        %v7308 = vsel %vm7148, %v6275, 0
        %v7309 = vsel %vm7149, %v6276, 0
        %v7310 = vsel %vm7150, %v6277, 0
        %v7311 = vsel %vm7151, %v6278, 0
        %v7312 = vsel %vm7152, %v6279, 0
        %v7313 = vsel %vm7153, %v6280, 0
        %v7314 = vsel %vm7154, %v6281, 0
        %v7315 = vsel %vm7155, %v6282, 0
        %v7316 = vsel %vm7156, %v6283, 0
        %v7317 = vsel %vm7157, %v6284, 0
        %v7318 = vsel %vm7138, %v6285, 0
        %v7319 = vsel %vm7139, %v6286, 0
        %v7320 = vsel %vm7140, %v6287, 0
        %v7321 = vsel %vm7141, %v6288, 0
        %v7322 = vsel %vm7142, %v6289, 0
        %v7323 = vsel %vm7143, %v6290, 0
        %v7324 = vsel %vm7144, %v6291, 0
        %v7325 = vsel %vm7145, %v6292, 0
        %v7326 = vsel %vm7146, %v6293, 0
        %v7327 = vsel %vm7147, %v6294, 0
        %v7328 = vsel %vm7148, %v6295, 0
        %v7329 = vsel %vm7149, %v6296, 0
        %v7330 = vsel %vm7150, %v6297, 0
        %v7331 = vsel %vm7151, %v6298, 0
        %v7332 = vsel %vm7152, %v6299, 0
        %v7333 = vsel %vm7153, %v6300, 0
        %v7334 = vsel %vm7154, %v6301, 0
        %v7335 = vsel %vm7155, %v6302, 0
        %v7336 = vsel %vm7156, %v6303, 0
        %v7337 = vsel %vm7157, %v6304, 0
        %v7338 = vsel %vm7138, %v6305, 0
        %v7339 = vsel %vm7139, %v6306, 0
        %v7340 = vsel %vm7140, %v6307, 0
        %v7341 = vsel %vm7141, %v6308, 0
        %v7342 = vsel %vm7142, %v6309, 0
        %v7343 = vsel %vm7143, %v6310, 0
        %v7344 = vsel %vm7144, %v6311, 0
        %v7345 = vsel %vm7145, %v6312, 0
        %v7346 = vsel %vm7146, %v6313, 0
        %v7347 = vsel %vm7147, %v6314, 0
        %v7348 = vsel %vm7148, %v6315, 0
        %v7349 = vsel %vm7149, %v6316, 0
        %v7350 = vsel %vm7150, %v6317, 0
        %v7351 = vsel %vm7151, %v6318, 0
        %v7352 = vsel %vm7152, %v6319, 0
        %v7353 = vsel %vm7153, %v6320, 0
        %v7354 = vsel %vm7154, %v6321, 0
        %v7355 = vsel %vm7155, %v6322, 0
        %v7356 = vsel %vm7156, %v6323, 0
        %v7357 = vsel %vm7157, %v6324, 0
        %v7358 = vsel %vm7138, %v6325, 0
        %v7359 = vsel %vm7139, %v6326, 0
        %v7360 = vsel %vm7140, %v6327, 0
        %v7361 = vsel %vm7141, %v6328, 0
        %v7362 = vsel %vm7142, %v6329, 0
        %v7363 = vsel %vm7143, %v6330, 0
        %v7364 = vsel %vm7144, %v6331, 0
        %v7365 = vsel %vm7145, %v6332, 0
        %v7366 = vsel %vm7146, %v6333, 0
        %v7367 = vsel %vm7147, %v6334, 0
        %v7368 = vsel %vm7148, %v6335, 0
        %v7369 = vsel %vm7149, %v6336, 0
        %v7370 = vsel %vm7150, %v6337, 0
        %v7371 = vsel %vm7151, %v6338, 0
        %v7372 = vsel %vm7152, %v6339, 0
        %v7373 = vsel %vm7153, %v6340, 0
        %v7374 = vsel %vm7154, %v6341, 0
        %v7375 = vsel %vm7155, %v6342, 0
        %v7376 = vsel %vm7156, %v6343, 0
        %v7377 = vsel %vm7157, %v6344, 0
        %v7378 = vsel %vm7138, %v6345, 0
        %v7379 = vsel %vm7139, %v6346, 0
        %v7380 = vsel %vm7140, %v6347, 0
        %v7381 = vsel %vm7141, %v6348, 0
        %v7382 = vsel %vm7142, %v6349, 0
        %v7383 = vsel %vm7143, %v6350, 0
        %v7384 = vsel %vm7144, %v6351, 0
        %v7385 = vsel %vm7145, %v6352, 0
        %v7386 = vsel %vm7146, %v6353, 0
        %v7387 = vsel %vm7147, %v6354, 0
        %v7388 = vsel %vm7148, %v6355, 0
        %v7389 = vsel %vm7149, %v6356, 0
        %v7390 = vsel %vm7150, %v6357, 0
        %v7391 = vsel %vm7151, %v6358, 0
        %v7392 = vsel %vm7152, %v6359, 0
        %v7393 = vsel %vm7153, %v6360, 0
        %v7394 = vsel %vm7154, %v6361, 0
        %v7395 = vsel %vm7155, %v6362, 0
        %v7396 = vsel %vm7156, %v6363, 0
        %v7397 = vsel %vm7157, %v6364, 0
        %v7398 = vsel %vm7138, %v6365, 0
        %v7399 = vsel %vm7139, %v6366, 0
        %v7400 = vsel %vm7140, %v6367, 0
        %v7401 = vsel %vm7141, %v6368, 0
        %v7402 = vsel %vm7142, %v6369, 0
        %v7403 = vsel %vm7143, %v6370, 0
        %v7404 = vsel %vm7144, %v6371, 0
        %v7405 = vsel %vm7145, %v6372, 0
        %v7406 = vsel %vm7146, %v6373, 0
        %v7407 = vsel %vm7147, %v6374, 0
        %v7408 = vsel %vm7148, %v6375, 0
        %v7409 = vsel %vm7149, %v6376, 0
        %v7410 = vsel %vm7150, %v6377, 0
        %v7411 = vsel %vm7151, %v6378, 0
        %v7412 = vsel %vm7152, %v6379, 0
        %v7413 = vsel %vm7153, %v6380, 0
        %v7414 = vsel %vm7154, %v6381, 0
        %v7415 = vsel %vm7155, %v6382, 0
        %v7416 = vsel %vm7156, %v6383, 0
        %v7417 = vsel %vm7157, %v6384, 0
        %v7418 = vsel %vm7138, %v6385, 0
        %v7419 = vsel %vm7139, %v6386, 0
        %v7420 = vsel %vm7140, %v6387, 0
        %v7421 = vsel %vm7141, %v6388, 0
        %v7422 = vsel %vm7142, %v6389, 0
        %v7423 = vsel %vm7143, %v6390, 0
        %v7424 = vsel %vm7144, %v6391, 0
        %v7425 = vsel %vm7145, %v6392, 0
        %v7426 = vsel %vm7146, %v6393, 0
        %v7427 = vsel %vm7147, %v6394, 0
        %v7428 = vsel %vm7148, %v6395, 0
        %v7429 = vsel %vm7149, %v6396, 0
        %v7430 = vsel %vm7150, %v6397, 0
        %v7431 = vsel %vm7151, %v6398, 0
        %v7432 = vsel %vm7152, %v6399, 0
        %v7433 = vsel %vm7153, %v6400, 0
        %v7434 = vsel %vm7154, %v6401, 0
        %v7435 = vsel %vm7155, %v6402, 0
        %v7436 = vsel %vm7156, %v6403, 0
        %v7437 = vsel %vm7157, %v6404, 0
        %v7438 = vsel %vm7138, %v6405, 0
        %v7439 = vsel %vm7139, %v6406, 0
        %v7440 = vsel %vm7140, %v6407, 0
        %v7441 = vsel %vm7141, %v6408, 0
        %v7442 = vsel %vm7142, %v6409, 0
        %v7443 = vsel %vm7143, %v6410, 0
        %v7444 = vsel %vm7144, %v6411, 0
        %v7445 = vsel %vm7145, %v6412, 0
        %v7446 = vsel %vm7146, %v6413, 0
        %v7447 = vsel %vm7147, %v6414, 0
        %v7448 = vsel %vm7148, %v6415, 0
        %v7449 = vsel %vm7149, %v6416, 0
        %v7450 = vsel %vm7150, %v6417, 0
        %v7451 = vsel %vm7151, %v6418, 0
        %v7452 = vsel %vm7152, %v6419, 0
        %v7453 = vsel %vm7153, %v6420, 0
        %v7454 = vsel %vm7154, %v6421, 0
        %v7455 = vsel %vm7155, %v6422, 0
        %v7456 = vsel %vm7156, %v6423, 0
        %v7457 = vsel %vm7157, %v6424, 0
        %v7458 = vsel %vm7138, %v6425, 0
        %v7459 = vsel %vm7139, %v6426, 0
        %v7460 = vsel %vm7140, %v6427, 0
        %v7461 = vsel %vm7141, %v6428, 0
        %v7462 = vsel %vm7142, %v6429, 0
        %v7463 = vsel %vm7143, %v6430, 0
        %v7464 = vsel %vm7144, %v6431, 0
        %v7465 = vsel %vm7145, %v6432, 0
        %v7466 = vsel %vm7146, %v6433, 0
        %v7467 = vsel %vm7147, %v6434, 0
        %v7468 = vsel %vm7148, %v6435, 0
        %v7469 = vsel %vm7149, %v6436, 0
        %v7470 = vsel %vm7150, %v6437, 0
        %v7471 = vsel %vm7151, %v6438, 0
        %v7472 = vsel %vm7152, %v6439, 0
        %v7473 = vsel %vm7153, %v6440, 0
        %v7474 = vsel %vm7154, %v6441, 0
        %v7475 = vsel %vm7155, %v6442, 0
        %v7476 = vsel %vm7156, %v6443, 0
        %v7477 = vsel %vm7157, %v6444, 0
        %v7478 = vmax.bf16 %v7158, %v7159
        %v7479 = vmax.bf16 %v7478, %v7160
        %v7480 = vmax.bf16 %v7479, %v7161
        %v7481 = vmax.bf16 %v7480, %v7162
        %v7482 = vmax.bf16 %v7481, %v7163
        %v7483 = vmax.bf16 %v7482, %v7164
        %v7484 = vmax.bf16 %v7483, %v7165
        %v7485 = vmax.bf16 %v7484, %v7166
        %v7486 = vmax.bf16 %v7485, %v7167
        %v7487 = vmax.bf16 %v7486, %v7168
        %v7488 = vmax.bf16 %v7487, %v7169
        %v7489 = vmax.bf16 %v7488, %v7170
        %v7490 = vmax.bf16 %v7489, %v7171
        %v7491 = vmax.bf16 %v7490, %v7172
        %v7492 = vmax.bf16 %v7491, %v7173
        %v7493 = vmax.bf16 %v7492, %v7174
        %v7494 = vmax.bf16 %v7493, %v7175
        %v7495 = vmax.bf16 %v7494, %v7176
        %v7496 = vmax.bf16 %v7495, %v7177
        %7497 = vmax.xlane.bf16.xlu0 %v7496
        %v7498 = vpop.xlane.xlu0 %7497
        %v7499 = vmax.bf16 %v7178, %v7179
        %v7500 = vmax.bf16 %v7499, %v7180
        %v7501 = vmax.bf16 %v7500, %v7181
        %v7502 = vmax.bf16 %v7501, %v7182
        %v7503 = vmax.bf16 %v7502, %v7183
        %v7504 = vmax.bf16 %v7503, %v7184
        %v7505 = vmax.bf16 %v7504, %v7185
        %v7506 = vmax.bf16 %v7505, %v7186
        %v7507 = vmax.bf16 %v7506, %v7187
        %v7508 = vmax.bf16 %v7507, %v7188
        %v7509 = vmax.bf16 %v7508, %v7189
        %v7510 = vmax.bf16 %v7509, %v7190
        %v7511 = vmax.bf16 %v7510, %v7191
        %v7512 = vmax.bf16 %v7511, %v7192
        %v7513 = vmax.bf16 %v7512, %v7193
        %v7514 = vmax.bf16 %v7513, %v7194
        %v7515 = vmax.bf16 %v7514, %v7195
        %v7516 = vmax.bf16 %v7515, %v7196
        %v7517 = vmax.bf16 %v7516, %v7197
        %7518 = vmax.xlane.bf16.xlu0 %v7517
        %v7519 = vpop.xlane.xlu0 %7518
        %v7520 = vmax.bf16 %v7198, %v7199
        %v7521 = vmax.bf16 %v7520, %v7200
        %v7522 = vmax.bf16 %v7521, %v7201
        %v7523 = vmax.bf16 %v7522, %v7202
        %v7524 = vmax.bf16 %v7523, %v7203
        %v7525 = vmax.bf16 %v7524, %v7204
        %v7526 = vmax.bf16 %v7525, %v7205
        %v7527 = vmax.bf16 %v7526, %v7206
        %v7528 = vmax.bf16 %v7527, %v7207
        %v7529 = vmax.bf16 %v7528, %v7208
        %v7530 = vmax.bf16 %v7529, %v7209
        %v7531 = vmax.bf16 %v7530, %v7210
        %v7532 = vmax.bf16 %v7531, %v7211
        %v7533 = vmax.bf16 %v7532, %v7212
        %v7534 = vmax.bf16 %v7533, %v7213
        %v7535 = vmax.bf16 %v7534, %v7214
        %v7536 = vmax.bf16 %v7535, %v7215
        %v7537 = vmax.bf16 %v7536, %v7216
        %v7538 = vmax.bf16 %v7537, %v7217
        %7539 = vmax.xlane.bf16.xlu0 %v7538
        %v7540 = vpop.xlane.xlu0 %7539
        %v7541 = vmax.bf16 %v7218, %v7219
        %v7542 = vmax.bf16 %v7541, %v7220
        %v7543 = vmax.bf16 %v7542, %v7221
        %v7544 = vmax.bf16 %v7543, %v7222
        %v7545 = vmax.bf16 %v7544, %v7223
        %v7546 = vmax.bf16 %v7545, %v7224
        %v7547 = vmax.bf16 %v7546, %v7225
        %v7548 = vmax.bf16 %v7547, %v7226
        %v7549 = vmax.bf16 %v7548, %v7227
        %v7550 = vmax.bf16 %v7549, %v7228
        %v7551 = vmax.bf16 %v7550, %v7229
        %v7552 = vmax.bf16 %v7551, %v7230
        %v7553 = vmax.bf16 %v7552, %v7231
        %v7554 = vmax.bf16 %v7553, %v7232
        %v7555 = vmax.bf16 %v7554, %v7233
        %v7556 = vmax.bf16 %v7555, %v7234
        %v7557 = vmax.bf16 %v7556, %v7235
        %v7558 = vmax.bf16 %v7557, %v7236
        %v7559 = vmax.bf16 %v7558, %v7237
        %7560 = vmax.xlane.bf16.xlu0 %v7559
        %v7561 = vpop.xlane.xlu0 %7560
        %v7562 = vmax.bf16 %v7238, %v7239
        %v7563 = vmax.bf16 %v7562, %v7240
        %v7564 = vmax.bf16 %v7563, %v7241
        %v7565 = vmax.bf16 %v7564, %v7242
        %v7566 = vmax.bf16 %v7565, %v7243
        %v7567 = vmax.bf16 %v7566, %v7244
        %v7568 = vmax.bf16 %v7567, %v7245
        %v7569 = vmax.bf16 %v7568, %v7246
        %v7570 = vmax.bf16 %v7569, %v7247
        %v7571 = vmax.bf16 %v7570, %v7248
        %v7572 = vmax.bf16 %v7571, %v7249
        %v7573 = vmax.bf16 %v7572, %v7250
        %v7574 = vmax.bf16 %v7573, %v7251
        %v7575 = vmax.bf16 %v7574, %v7252
        %v7576 = vmax.bf16 %v7575, %v7253
        %v7577 = vmax.bf16 %v7576, %v7254
        %v7578 = vmax.bf16 %v7577, %v7255
        %v7579 = vmax.bf16 %v7578, %v7256
        %v7580 = vmax.bf16 %v7579, %v7257
        %7581 = vmax.xlane.bf16.xlu0 %v7580
        %v7582 = vpop.xlane.xlu0 %7581
        %v7583 = vmax.bf16 %v7258, %v7259
        %v7584 = vmax.bf16 %v7583, %v7260
        %v7585 = vmax.bf16 %v7584, %v7261
        %v7586 = vmax.bf16 %v7585, %v7262
        %v7587 = vmax.bf16 %v7586, %v7263
        %v7588 = vmax.bf16 %v7587, %v7264
        %v7589 = vmax.bf16 %v7588, %v7265
        %v7590 = vmax.bf16 %v7589, %v7266
        %v7591 = vmax.bf16 %v7590, %v7267
        %v7592 = vmax.bf16 %v7591, %v7268
        %v7593 = vmax.bf16 %v7592, %v7269
        %v7594 = vmax.bf16 %v7593, %v7270
        %v7595 = vmax.bf16 %v7594, %v7271
        %v7596 = vmax.bf16 %v7595, %v7272
        %v7597 = vmax.bf16 %v7596, %v7273
        %v7598 = vmax.bf16 %v7597, %v7274
        %v7599 = vmax.bf16 %v7598, %v7275
        %v7600 = vmax.bf16 %v7599, %v7276
        %v7601 = vmax.bf16 %v7600, %v7277
        %7602 = vmax.xlane.bf16.xlu0 %v7601
        %v7603 = vpop.xlane.xlu0 %7602
        %v7604 = vmax.bf16 %v7278, %v7279
        %v7605 = vmax.bf16 %v7604, %v7280
        %v7606 = vmax.bf16 %v7605, %v7281
        %v7607 = vmax.bf16 %v7606, %v7282
        %v7608 = vmax.bf16 %v7607, %v7283
        %v7609 = vmax.bf16 %v7608, %v7284
        %v7610 = vmax.bf16 %v7609, %v7285
        %v7611 = vmax.bf16 %v7610, %v7286
        %v7612 = vmax.bf16 %v7611, %v7287
        %v7613 = vmax.bf16 %v7612, %v7288
        %v7614 = vmax.bf16 %v7613, %v7289
        %v7615 = vmax.bf16 %v7614, %v7290
        %v7616 = vmax.bf16 %v7615, %v7291
        %v7617 = vmax.bf16 %v7616, %v7292
        %v7618 = vmax.bf16 %v7617, %v7293
        %v7619 = vmax.bf16 %v7618, %v7294
        %v7620 = vmax.bf16 %v7619, %v7295
        %v7621 = vmax.bf16 %v7620, %v7296
        %v7622 = vmax.bf16 %v7621, %v7297
        %7623 = vmax.xlane.bf16.xlu0 %v7622
        %v7624 = vpop.xlane.xlu0 %7623
        %v7625 = vmax.bf16 %v7298, %v7299
        %v7626 = vmax.bf16 %v7625, %v7300
        %v7627 = vmax.bf16 %v7626, %v7301
        %v7628 = vmax.bf16 %v7627, %v7302
        %v7629 = vmax.bf16 %v7628, %v7303
        %v7630 = vmax.bf16 %v7629, %v7304
        %v7631 = vmax.bf16 %v7630, %v7305
        %v7632 = vmax.bf16 %v7631, %v7306
        %v7633 = vmax.bf16 %v7632, %v7307
        %v7634 = vmax.bf16 %v7633, %v7308
        %v7635 = vmax.bf16 %v7634, %v7309
        %v7636 = vmax.bf16 %v7635, %v7310
        %v7637 = vmax.bf16 %v7636, %v7311
        %v7638 = vmax.bf16 %v7637, %v7312
        %v7639 = vmax.bf16 %v7638, %v7313
        %v7640 = vmax.bf16 %v7639, %v7314
        %v7641 = vmax.bf16 %v7640, %v7315
        %v7642 = vmax.bf16 %v7641, %v7316
        %v7643 = vmax.bf16 %v7642, %v7317
        %7644 = vmax.xlane.bf16.xlu0 %v7643
        %v7645 = vpop.xlane.xlu0 %7644
        %v7646 = vmax.bf16 %v7318, %v7319
        %v7647 = vmax.bf16 %v7646, %v7320
        %v7648 = vmax.bf16 %v7647, %v7321
        %v7649 = vmax.bf16 %v7648, %v7322
        %v7650 = vmax.bf16 %v7649, %v7323
        %v7651 = vmax.bf16 %v7650, %v7324
        %v7652 = vmax.bf16 %v7651, %v7325
        %v7653 = vmax.bf16 %v7652, %v7326
        %v7654 = vmax.bf16 %v7653, %v7327
        %v7655 = vmax.bf16 %v7654, %v7328
        %v7656 = vmax.bf16 %v7655, %v7329
        %v7657 = vmax.bf16 %v7656, %v7330
        %v7658 = vmax.bf16 %v7657, %v7331
        %v7659 = vmax.bf16 %v7658, %v7332
        %v7660 = vmax.bf16 %v7659, %v7333
        %v7661 = vmax.bf16 %v7660, %v7334
        %v7662 = vmax.bf16 %v7661, %v7335
        %v7663 = vmax.bf16 %v7662, %v7336
        %v7664 = vmax.bf16 %v7663, %v7337
        %7665 = vmax.xlane.bf16.xlu0 %v7664
        %v7666 = vpop.xlane.xlu0 %7665
        %v7667 = vmax.bf16 %v7338, %v7339
        %v7668 = vmax.bf16 %v7667, %v7340
        %v7669 = vmax.bf16 %v7668, %v7341
        %v7670 = vmax.bf16 %v7669, %v7342
        %v7671 = vmax.bf16 %v7670, %v7343
        %v7672 = vmax.bf16 %v7671, %v7344
        %v7673 = vmax.bf16 %v7672, %v7345
        %v7674 = vmax.bf16 %v7673, %v7346
        %v7675 = vmax.bf16 %v7674, %v7347
        %v7676 = vmax.bf16 %v7675, %v7348
        %v7677 = vmax.bf16 %v7676, %v7349
        %v7678 = vmax.bf16 %v7677, %v7350
        %v7679 = vmax.bf16 %v7678, %v7351
        %v7680 = vmax.bf16 %v7679, %v7352
        %v7681 = vmax.bf16 %v7680, %v7353
        %v7682 = vmax.bf16 %v7681, %v7354
        %v7683 = vmax.bf16 %v7682, %v7355
        %v7684 = vmax.bf16 %v7683, %v7356
        %v7685 = vmax.bf16 %v7684, %v7357
        %7686 = vmax.xlane.bf16.xlu0 %v7685
        %v7687 = vpop.xlane.xlu0 %7686
        %v7688 = vmax.bf16 %v7358, %v7359
        %v7689 = vmax.bf16 %v7688, %v7360
        %v7690 = vmax.bf16 %v7689, %v7361
        %v7691 = vmax.bf16 %v7690, %v7362
        %v7692 = vmax.bf16 %v7691, %v7363
        %v7693 = vmax.bf16 %v7692, %v7364
        %v7694 = vmax.bf16 %v7693, %v7365
        %v7695 = vmax.bf16 %v7694, %v7366
        %v7696 = vmax.bf16 %v7695, %v7367
        %v7697 = vmax.bf16 %v7696, %v7368
        %v7698 = vmax.bf16 %v7697, %v7369
        %v7699 = vmax.bf16 %v7698, %v7370
        %v7700 = vmax.bf16 %v7699, %v7371
        %v7701 = vmax.bf16 %v7700, %v7372
        %v7702 = vmax.bf16 %v7701, %v7373
        %v7703 = vmax.bf16 %v7702, %v7374
        %v7704 = vmax.bf16 %v7703, %v7375
        %v7705 = vmax.bf16 %v7704, %v7376
        %v7706 = vmax.bf16 %v7705, %v7377
        %7707 = vmax.xlane.bf16.xlu0 %v7706
        %v7708 = vpop.xlane.xlu0 %7707
        %v7709 = vmax.bf16 %v7378, %v7379
        %v7710 = vmax.bf16 %v7709, %v7380
        %v7711 = vmax.bf16 %v7710, %v7381
        %v7712 = vmax.bf16 %v7711, %v7382
        %v7713 = vmax.bf16 %v7712, %v7383
        %v7714 = vmax.bf16 %v7713, %v7384
        %v7715 = vmax.bf16 %v7714, %v7385
        %v7716 = vmax.bf16 %v7715, %v7386
        %v7717 = vmax.bf16 %v7716, %v7387
        %v7718 = vmax.bf16 %v7717, %v7388
        %v7719 = vmax.bf16 %v7718, %v7389
        %v7720 = vmax.bf16 %v7719, %v7390
        %v7721 = vmax.bf16 %v7720, %v7391
        %v7722 = vmax.bf16 %v7721, %v7392
        %v7723 = vmax.bf16 %v7722, %v7393
        %v7724 = vmax.bf16 %v7723, %v7394
        %v7725 = vmax.bf16 %v7724, %v7395
        %v7726 = vmax.bf16 %v7725, %v7396
        %v7727 = vmax.bf16 %v7726, %v7397
        %7728 = vmax.xlane.bf16.xlu0 %v7727
        %v7729 = vpop.xlane.xlu0 %7728
        %v7730 = vmax.bf16 %v7398, %v7399
        %v7731 = vmax.bf16 %v7730, %v7400
        %v7732 = vmax.bf16 %v7731, %v7401
        %v7733 = vmax.bf16 %v7732, %v7402
        %v7734 = vmax.bf16 %v7733, %v7403
        %v7735 = vmax.bf16 %v7734, %v7404
        %v7736 = vmax.bf16 %v7735, %v7405
        %v7737 = vmax.bf16 %v7736, %v7406
        %v7738 = vmax.bf16 %v7737, %v7407
        %v7739 = vmax.bf16 %v7738, %v7408
        %v7740 = vmax.bf16 %v7739, %v7409
        %v7741 = vmax.bf16 %v7740, %v7410
        %v7742 = vmax.bf16 %v7741, %v7411
        %v7743 = vmax.bf16 %v7742, %v7412
        %v7744 = vmax.bf16 %v7743, %v7413
        %v7745 = vmax.bf16 %v7744, %v7414
        %v7746 = vmax.bf16 %v7745, %v7415
        %v7747 = vmax.bf16 %v7746, %v7416
        %v7748 = vmax.bf16 %v7747, %v7417
        %7749 = vmax.xlane.bf16.xlu0 %v7748
        %v7750 = vpop.xlane.xlu0 %7749
        %v7751 = vmax.bf16 %v7418, %v7419
        %v7752 = vmax.bf16 %v7751, %v7420
        %v7753 = vmax.bf16 %v7752, %v7421
        %v7754 = vmax.bf16 %v7753, %v7422
        %v7755 = vmax.bf16 %v7754, %v7423
        %v7756 = vmax.bf16 %v7755, %v7424
        %v7757 = vmax.bf16 %v7756, %v7425
        %v7758 = vmax.bf16 %v7757, %v7426
        %v7759 = vmax.bf16 %v7758, %v7427
        %v7760 = vmax.bf16 %v7759, %v7428
        %v7761 = vmax.bf16 %v7760, %v7429
        %v7762 = vmax.bf16 %v7761, %v7430
        %v7763 = vmax.bf16 %v7762, %v7431
        %v7764 = vmax.bf16 %v7763, %v7432
        %v7765 = vmax.bf16 %v7764, %v7433
        %v7766 = vmax.bf16 %v7765, %v7434
        %v7767 = vmax.bf16 %v7766, %v7435
        %v7768 = vmax.bf16 %v7767, %v7436
        %v7769 = vmax.bf16 %v7768, %v7437
        %7770 = vmax.xlane.bf16.xlu0 %v7769
        %v7771 = vpop.xlane.xlu0 %7770
        %v7772 = vmax.bf16 %v7438, %v7439
        %v7773 = vmax.bf16 %v7772, %v7440
        %v7774 = vmax.bf16 %v7773, %v7441
        %v7775 = vmax.bf16 %v7774, %v7442
        %v7776 = vmax.bf16 %v7775, %v7443
        %v7777 = vmax.bf16 %v7776, %v7444
        %v7778 = vmax.bf16 %v7777, %v7445
        %v7779 = vmax.bf16 %v7778, %v7446
        %v7780 = vmax.bf16 %v7779, %v7447
        %v7781 = vmax.bf16 %v7780, %v7448
        %v7782 = vmax.bf16 %v7781, %v7449
        %v7783 = vmax.bf16 %v7782, %v7450
        %v7784 = vmax.bf16 %v7783, %v7451
        %v7785 = vmax.bf16 %v7784, %v7452
        %v7786 = vmax.bf16 %v7785, %v7453
        %v7787 = vmax.bf16 %v7786, %v7454
        %v7788 = vmax.bf16 %v7787, %v7455
        %v7789 = vmax.bf16 %v7788, %v7456
        %v7790 = vmax.bf16 %v7789, %v7457
        %7791 = vmax.xlane.bf16.xlu0 %v7790
        %v7792 = vpop.xlane.xlu0 %7791
        %v7793 = vmax.bf16 %v7458, %v7459
        %v7794 = vmax.bf16 %v7793, %v7460
        %v7795 = vmax.bf16 %v7794, %v7461
        %v7796 = vmax.bf16 %v7795, %v7462
        %v7797 = vmax.bf16 %v7796, %v7463
        %v7798 = vmax.bf16 %v7797, %v7464
        %v7799 = vmax.bf16 %v7798, %v7465
        %v7800 = vmax.bf16 %v7799, %v7466
        %v7801 = vmax.bf16 %v7800, %v7467
        %v7802 = vmax.bf16 %v7801, %v7468
        %v7803 = vmax.bf16 %v7802, %v7469
        %v7804 = vmax.bf16 %v7803, %v7470
        %v7805 = vmax.bf16 %v7804, %v7471
        %v7806 = vmax.bf16 %v7805, %v7472
        %v7807 = vmax.bf16 %v7806, %v7473
        %v7808 = vmax.bf16 %v7807, %v7474
        %v7809 = vmax.bf16 %v7808, %v7475
        %v7810 = vmax.bf16 %v7809, %v7476
        %v7811 = vmax.bf16 %v7810, %v7477
        %7812 = vmax.xlane.bf16.xlu0 %v7811
        %v7813 = vpop.xlane.xlu0 %7812
        %v7814 = vunpack.c.l.bf16 %v7498
        %v7815 = vunpack.c.h.bf16 %v7498
        %v7816 = vunpack.c.l.bf16 %v7519
        %v7817 = vunpack.c.h.bf16 %v7519
        %v7818 = vunpack.c.l.bf16 %v7540
        %v7819 = vunpack.c.h.bf16 %v7540
        %v7820 = vunpack.c.l.bf16 %v7561
        %v7821 = vunpack.c.h.bf16 %v7561
        %v7822 = vunpack.c.l.bf16 %v7582
        %v7823 = vunpack.c.h.bf16 %v7582
        %v7824 = vunpack.c.l.bf16 %v7603
        %v7825 = vunpack.c.h.bf16 %v7603
        %v7826 = vunpack.c.l.bf16 %v7624
        %v7827 = vunpack.c.h.bf16 %v7624
        %v7828 = vunpack.c.l.bf16 %v7645
        %v7829 = vunpack.c.h.bf16 %v7645
        %v7830 = vunpack.c.l.bf16 %v7666
        %v7831 = vunpack.c.h.bf16 %v7666
        %v7832 = vunpack.c.l.bf16 %v7687
        %v7833 = vunpack.c.h.bf16 %v7687
        %v7834 = vunpack.c.l.bf16 %v7708
        %v7835 = vunpack.c.h.bf16 %v7708
        %v7836 = vunpack.c.l.bf16 %v7729
        %v7837 = vunpack.c.h.bf16 %v7729
        %v7838 = vunpack.c.l.bf16 %v7750
        %v7839 = vunpack.c.h.bf16 %v7750
        %v7840 = vunpack.c.l.bf16 %v7771
        %v7841 = vunpack.c.h.bf16 %v7771
        %v7842 = vunpack.c.l.bf16 %v7792
        %v7843 = vunpack.c.h.bf16 %v7792
        %v7844 = vunpack.c.l.bf16 %v7813
        %v7845 = vunpack.c.h.bf16 %v7813
        %7846 = vst [vmem:[#allocation2] sm:$0xff] %v7814
        %7847 = vst [vmem:[#allocation2 + $0x8] sm:$0xff] %v7815
        %7848 = vst [vmem:[#allocation2 + $0x10] sm:$0xff] %v7816
        %7849 = vst [vmem:[#allocation2 + $0x18] sm:$0xff] %v7817
        %7850 = vst [vmem:[#allocation2 + $0x20] sm:$0xff] %v7818
        %7851 = vst [vmem:[#allocation2 + $0x28] sm:$0xff] %v7819
        %7852 = vst [vmem:[#allocation2 + $0x30] sm:$0xff] %v7820
        %7853 = vst [vmem:[#allocation2 + $0x38] sm:$0xff] %v7821
        %7854 = vst [vmem:[#allocation2 + $0x40] sm:$0xff] %v7822
        %7855 = vst [vmem:[#allocation2 + $0x48] sm:$0xff] %v7823
        %7856 = vst [vmem:[#allocation2 + $0x50] sm:$0xff] %v7824
        %7857 = vst [vmem:[#allocation2 + $0x58] sm:$0xff] %v7825
        %7858 = vst [vmem:[#allocation2 + $0x60] sm:$0xff] %v7826
        %7859 = vst [vmem:[#allocation2 + $0x68] sm:$0xff] %v7827
        %7860 = vst [vmem:[#allocation2 + $0x70] sm:$0xff] %v7828
        %7861 = vst [vmem:[#allocation2 + $0x78] sm:$0xff] %v7829
        %7862 = vst [vmem:[#allocation2 + $0x80] sm:$0xff] %v7830
        %7863 = vst [vmem:[#allocation2 + $0x88] sm:$0xff] %v7831
        %7864 = vst [vmem:[#allocation2 + $0x90] sm:$0xff] %v7832
        %7865 = vst [vmem:[#allocation2 + $0x98] sm:$0xff] %v7833
        %7866 = vst [vmem:[#allocation2 + $0xa0] sm:$0xff] %v7834
        %7867 = vst [vmem:[#allocation2 + $0xa8] sm:$0xff] %v7835
        %7868 = vst [vmem:[#allocation2 + $0xb0] sm:$0xff] %v7836
        %7869 = vst [vmem:[#allocation2 + $0xb8] sm:$0xff] %v7837
        %7870 = vst [vmem:[#allocation2 + $0xc0] sm:$0xff] %v7838
        %7871 = vst [vmem:[#allocation2 + $0xc8] sm:$0xff] %v7839
        %7872 = vst [vmem:[#allocation2 + $0xd0] sm:$0xff] %v7840
        %7873 = vst [vmem:[#allocation2 + $0xd8] sm:$0xff] %v7841
        %7874 = vst [vmem:[#allocation2 + $0xe0] sm:$0xff] %v7842
        %7875 = vst [vmem:[#allocation2 + $0xe8] sm:$0xff] %v7843
        %7876 = vst [vmem:[#allocation2 + $0xf0] sm:$0xff] %v7844
        %7877 = vst [vmem:[#allocation2 + $0xf8] sm:$0xff] %v7845
        %p7878 = scmp.gt.s32.totalorder %s27, 0
        // Predicated region
        $region81: #{est.1} parent=79 // pred_check
          %p7879 = pneg %p7878
        $region82: #{est.1} parent=79 // pred_check_branch
          %7881 = sbr.rel (%p7879) target = $region84
        $region83: #{est.1} parent=79 // pred_region
          %v7882 = vld [vmem:[#allocation2] sm:$0xff]
          %v7883 = vld [vmem:[#allocation2 + $0x8] sm:$0xff]
          %v7884 = vld [vmem:[#allocation2 + $0x10] sm:$0xff]
          %v7885 = vld [vmem:[#allocation2 + $0x18] sm:$0xff]
          %v7886 = vld [vmem:[#allocation2 + $0x20] sm:$0xff]
          %v7887 = vld [vmem:[#allocation2 + $0x28] sm:$0xff]
          %v7888 = vld [vmem:[#allocation2 + $0x30] sm:$0xff]
          %v7889 = vld [vmem:[#allocation2 + $0x38] sm:$0xff]
          %v7890 = vld [vmem:[#allocation2 + $0x40] sm:$0xff]
          %v7891 = vld [vmem:[#allocation2 + $0x48] sm:$0xff]
          %v7892 = vld [vmem:[#allocation2 + $0x50] sm:$0xff]
          %v7893 = vld [vmem:[#allocation2 + $0x58] sm:$0xff]
          %v7894 = vld [vmem:[#allocation2 + $0x60] sm:$0xff]
          %v7895 = vld [vmem:[#allocation2 + $0x68] sm:$0xff]
          %v7896 = vld [vmem:[#allocation2 + $0x70] sm:$0xff]
          %v7897 = vld [vmem:[#allocation2 + $0x78] sm:$0xff]
          %v7898 = vld [vmem:[#allocation2 + $0x80] sm:$0xff]
          %v7899 = vld [vmem:[#allocation2 + $0x88] sm:$0xff]
          %v7900 = vld [vmem:[#allocation2 + $0x90] sm:$0xff]
          %v7901 = vld [vmem:[#allocation2 + $0x98] sm:$0xff]
          %v7902 = vld [vmem:[#allocation2 + $0xa0] sm:$0xff]
          %v7903 = vld [vmem:[#allocation2 + $0xa8] sm:$0xff]
          %v7904 = vld [vmem:[#allocation2 + $0xb0] sm:$0xff]
          %v7905 = vld [vmem:[#allocation2 + $0xb8] sm:$0xff]
          %v7906 = vld [vmem:[#allocation2 + $0xc0] sm:$0xff]
          %v7907 = vld [vmem:[#allocation2 + $0xc8] sm:$0xff]
          %v7908 = vld [vmem:[#allocation2 + $0xd0] sm:$0xff]
          %v7909 = vld [vmem:[#allocation2 + $0xd8] sm:$0xff]
          %v7910 = vld [vmem:[#allocation2 + $0xe0] sm:$0xff]
          %v7911 = vld [vmem:[#allocation2 + $0xe8] sm:$0xff]
          %v7912 = vld [vmem:[#allocation2 + $0xf0] sm:$0xff]
          %v7913 = vld [vmem:[#allocation2 + $0xf8] sm:$0xff]
          %v7914 = vmax.f32 %v7882, %v7814
          %v7915 = vmax.f32 %v7883, %v7815
          %v7916 = vmax.f32 %v7884, %v7816
          %v7917 = vmax.f32 %v7885, %v7817
          %v7918 = vmax.f32 %v7886, %v7818
          %v7919 = vmax.f32 %v7887, %v7819
          %v7920 = vmax.f32 %v7888, %v7820
          %v7921 = vmax.f32 %v7889, %v7821
          %v7922 = vmax.f32 %v7890, %v7822
          %v7923 = vmax.f32 %v7891, %v7823
          %v7924 = vmax.f32 %v7892, %v7824
          %v7925 = vmax.f32 %v7893, %v7825
          %v7926 = vmax.f32 %v7894, %v7826
          %v7927 = vmax.f32 %v7895, %v7827
          %v7928 = vmax.f32 %v7896, %v7828
          %v7929 = vmax.f32 %v7897, %v7829
          %v7930 = vmax.f32 %v7898, %v7830
          %v7931 = vmax.f32 %v7899, %v7831
          %v7932 = vmax.f32 %v7900, %v7832
          %v7933 = vmax.f32 %v7901, %v7833
          %v7934 = vmax.f32 %v7902, %v7834
          %v7935 = vmax.f32 %v7903, %v7835
          %v7936 = vmax.f32 %v7904, %v7836
          %v7937 = vmax.f32 %v7905, %v7837
          %v7938 = vmax.f32 %v7906, %v7838
          %v7939 = vmax.f32 %v7907, %v7839
          %v7940 = vmax.f32 %v7908, %v7840
          %v7941 = vmax.f32 %v7909, %v7841
          %v7942 = vmax.f32 %v7910, %v7842
          %v7943 = vmax.f32 %v7911, %v7843
          %v7944 = vmax.f32 %v7912, %v7844
          %v7945 = vmax.f32 %v7913, %v7845
          %7946 = vst [vmem:[#allocation2] sm:$0xff] %v7914
          %7947 = vst [vmem:[#allocation2 + $0x8] sm:$0xff] %v7915
          %7948 = vst [vmem:[#allocation2 + $0x10] sm:$0xff] %v7916
          %7949 = vst [vmem:[#allocation2 + $0x18] sm:$0xff] %v7917
          %7950 = vst [vmem:[#allocation2 + $0x20] sm:$0xff] %v7918
          %7951 = vst [vmem:[#allocation2 + $0x28] sm:$0xff] %v7919
          %7952 = vst [vmem:[#allocation2 + $0x30] sm:$0xff] %v7920
          %7953 = vst [vmem:[#allocation2 + $0x38] sm:$0xff] %v7921
          %7954 = vst [vmem:[#allocation2 + $0x40] sm:$0xff] %v7922
          %7955 = vst [vmem:[#allocation2 + $0x48] sm:$0xff] %v7923
          %7956 = vst [vmem:[#allocation2 + $0x50] sm:$0xff] %v7924
          %7957 = vst [vmem:[#allocation2 + $0x58] sm:$0xff] %v7925
          %7958 = vst [vmem:[#allocation2 + $0x60] sm:$0xff] %v7926
          %7959 = vst [vmem:[#allocation2 + $0x68] sm:$0xff] %v7927
          %7960 = vst [vmem:[#allocation2 + $0x70] sm:$0xff] %v7928
          %7961 = vst [vmem:[#allocation2 + $0x78] sm:$0xff] %v7929
          %7962 = vst [vmem:[#allocation2 + $0x80] sm:$0xff] %v7930
          %7963 = vst [vmem:[#allocation2 + $0x88] sm:$0xff] %v7931
          %7964 = vst [vmem:[#allocation2 + $0x90] sm:$0xff] %v7932
          %7965 = vst [vmem:[#allocation2 + $0x98] sm:$0xff] %v7933
          %7966 = vst [vmem:[#allocation2 + $0xa0] sm:$0xff] %v7934
          %7967 = vst [vmem:[#allocation2 + $0xa8] sm:$0xff] %v7935
          %7968 = vst [vmem:[#allocation2 + $0xb0] sm:$0xff] %v7936
          %7969 = vst [vmem:[#allocation2 + $0xb8] sm:$0xff] %v7937
          %7970 = vst [vmem:[#allocation2 + $0xc0] sm:$0xff] %v7938
          %7971 = vst [vmem:[#allocation2 + $0xc8] sm:$0xff] %v7939
          %7972 = vst [vmem:[#allocation2 + $0xd0] sm:$0xff] %v7940
          %7973 = vst [vmem:[#allocation2 + $0xd8] sm:$0xff] %v7941
          %7974 = vst [vmem:[#allocation2 + $0xe0] sm:$0xff] %v7942
          %7975 = vst [vmem:[#allocation2 + $0xe8] sm:$0xff] %v7943
          %7976 = vst [vmem:[#allocation2 + $0xf0] sm:$0xff] %v7944
          %7977 = vst [vmem:[#allocation2 + $0xf8] sm:$0xff] %v7945
        $region84: #{est.1} parent=79 // pred_fallthru
          _
        %v7978 = vld [vmem:[#allocation2] sm:$0xff]
        %v7979 = vld [vmem:[#allocation2 + $0x8] sm:$0xff]
        %v7980 = vld [vmem:[#allocation2 + $0x10] sm:$0xff]
        %v7981 = vld [vmem:[#allocation2 + $0x18] sm:$0xff]
        %v7982 = vld [vmem:[#allocation2 + $0x20] sm:$0xff]
        %v7983 = vld [vmem:[#allocation2 + $0x28] sm:$0xff]
        %v7984 = vld [vmem:[#allocation2 + $0x30] sm:$0xff]
        %v7985 = vld [vmem:[#allocation2 + $0x38] sm:$0xff]
        %v7986 = vld [vmem:[#allocation2 + $0x40] sm:$0xff]
        %v7987 = vld [vmem:[#allocation2 + $0x48] sm:$0xff]
        %v7988 = vld [vmem:[#allocation2 + $0x50] sm:$0xff]
        %v7989 = vld [vmem:[#allocation2 + $0x58] sm:$0xff]
        %v7990 = vld [vmem:[#allocation2 + $0x60] sm:$0xff]
        %v7991 = vld [vmem:[#allocation2 + $0x68] sm:$0xff]
        %v7992 = vld [vmem:[#allocation2 + $0x70] sm:$0xff]
        %v7993 = vld [vmem:[#allocation2 + $0x78] sm:$0xff]
        %v7994 = vld [vmem:[#allocation2 + $0x80] sm:$0xff]
        %v7995 = vld [vmem:[#allocation2 + $0x88] sm:$0xff]
        %v7996 = vld [vmem:[#allocation2 + $0x90] sm:$0xff]
        %v7997 = vld [vmem:[#allocation2 + $0x98] sm:$0xff]
        %v7998 = vld [vmem:[#allocation2 + $0xa0] sm:$0xff]
        %v7999 = vld [vmem:[#allocation2 + $0xa8] sm:$0xff]
        %v8000 = vld [vmem:[#allocation2 + $0xb0] sm:$0xff]
        %v8001 = vld [vmem:[#allocation2 + $0xb8] sm:$0xff]
        %v8002 = vld [vmem:[#allocation2 + $0xc0] sm:$0xff]
        %v8003 = vld [vmem:[#allocation2 + $0xc8] sm:$0xff]
        %v8004 = vld [vmem:[#allocation2 + $0xd0] sm:$0xff]
        %v8005 = vld [vmem:[#allocation2 + $0xd8] sm:$0xff]
        %v8006 = vld [vmem:[#allocation2 + $0xe0] sm:$0xff]
        %v8007 = vld [vmem:[#allocation2 + $0xe8] sm:$0xff]
        %v8008 = vld [vmem:[#allocation2 + $0xf0] sm:$0xff]
        %v8009 = vld [vmem:[#allocation2 + $0xf8] sm:$0xff]
        %v8010 = vld [vmem:[%s7] sm:$0xff]
        %v8011 = vld [vmem:[%s7 + $0x8] sm:$0xff]
        %v8012 = vld [vmem:[%s7 + $0x10] sm:$0xff]
        %v8013 = vld [vmem:[%s7 + $0x18] sm:$0xff]
        %v8014 = vld [vmem:[%s7 + $0x20] sm:$0xff]
        %v8015 = vld [vmem:[%s7 + $0x28] sm:$0xff]
        %v8016 = vld [vmem:[%s7 + $0x30] sm:$0xff]
        %v8017 = vld [vmem:[%s7 + $0x38] sm:$0xff]
        %v8018 = vld [vmem:[%s7 + $0x40] sm:$0xff]
        %v8019 = vld [vmem:[%s7 + $0x48] sm:$0xff]
        %v8020 = vld [vmem:[%s7 + $0x50] sm:$0xff]
        %v8021 = vld [vmem:[%s7 + $0x58] sm:$0xff]
        %v8022 = vld [vmem:[%s7 + $0x60] sm:$0xff]
        %v8023 = vld [vmem:[%s7 + $0x68] sm:$0xff]
        %v8024 = vld [vmem:[%s7 + $0x70] sm:$0xff]
        %v8025 = vld [vmem:[%s7 + $0x78] sm:$0xff]
        %v8026 = vld [vmem:[%s7 + $0x80] sm:$0xff]
        %v8027 = vld [vmem:[%s7 + $0x88] sm:$0xff]
        %v8028 = vld [vmem:[%s7 + $0x90] sm:$0xff]
        %v8029 = vld [vmem:[%s7 + $0x98] sm:$0xff]
        %v8030 = vld [vmem:[%s7 + $0xa0] sm:$0xff]
        %v8031 = vld [vmem:[%s7 + $0xa8] sm:$0xff]
        %v8032 = vld [vmem:[%s7 + $0xb0] sm:$0xff]
        %v8033 = vld [vmem:[%s7 + $0xb8] sm:$0xff]
        %v8034 = vld [vmem:[%s7 + $0xc0] sm:$0xff]
        %v8035 = vld [vmem:[%s7 + $0xc8] sm:$0xff]
        %v8036 = vld [vmem:[%s7 + $0xd0] sm:$0xff]
        %v8037 = vld [vmem:[%s7 + $0xd8] sm:$0xff]
        %v8038 = vld [vmem:[%s7 + $0xe0] sm:$0xff]
        %v8039 = vld [vmem:[%s7 + $0xe8] sm:$0xff]
        %v8040 = vld [vmem:[%s7 + $0xf0] sm:$0xff]
        %v8041 = vld [vmem:[%s7 + $0xf8] sm:$0xff]
        %8043 = vset.pattern.permute.xlu0 0
        %8044 = vperm.xlu0 %8043, %v7978
        %v8045 = vpop.permute.xlu0 %8044
        %8048 = vset.pattern.permute.xlu0 0
        %8049 = vperm.xlu0 %8048, %v7979
        %v8050 = vpop.permute.xlu0 %8049
        %8053 = vset.pattern.permute.xlu0 0
        %8054 = vperm.xlu0 %8053, %v7980
        %v8055 = vpop.permute.xlu0 %8054
        %8058 = vset.pattern.permute.xlu0 0
        %8059 = vperm.xlu0 %8058, %v7981
        %v8060 = vpop.permute.xlu0 %8059
        %8063 = vset.pattern.permute.xlu0 0
        %8064 = vperm.xlu0 %8063, %v7982
        %v8065 = vpop.permute.xlu0 %8064
        %8068 = vset.pattern.permute.xlu0 0
        %8069 = vperm.xlu0 %8068, %v7983
        %v8070 = vpop.permute.xlu0 %8069
        %8073 = vset.pattern.permute.xlu0 0
        %8074 = vperm.xlu0 %8073, %v7984
        %v8075 = vpop.permute.xlu0 %8074
        %8078 = vset.pattern.permute.xlu0 0
        %8079 = vperm.xlu0 %8078, %v7985
        %v8080 = vpop.permute.xlu0 %8079
        %8083 = vset.pattern.permute.xlu0 0
        %8084 = vperm.xlu0 %8083, %v7986
        %v8085 = vpop.permute.xlu0 %8084
        %8088 = vset.pattern.permute.xlu0 0
        %8089 = vperm.xlu0 %8088, %v7987
        %v8090 = vpop.permute.xlu0 %8089
        %8093 = vset.pattern.permute.xlu0 0
        %8094 = vperm.xlu0 %8093, %v7988
        %v8095 = vpop.permute.xlu0 %8094
        %8098 = vset.pattern.permute.xlu0 0
        %8099 = vperm.xlu0 %8098, %v7989
        %v8100 = vpop.permute.xlu0 %8099
        %8103 = vset.pattern.permute.xlu0 0
        %8104 = vperm.xlu0 %8103, %v7990
        %v8105 = vpop.permute.xlu0 %8104
        %8108 = vset.pattern.permute.xlu0 0
        %8109 = vperm.xlu0 %8108, %v7991
        %v8110 = vpop.permute.xlu0 %8109
        %8113 = vset.pattern.permute.xlu0 0
        %8114 = vperm.xlu0 %8113, %v7992
        %v8115 = vpop.permute.xlu0 %8114
        %8118 = vset.pattern.permute.xlu0 0
        %8119 = vperm.xlu0 %8118, %v7993
        %v8120 = vpop.permute.xlu0 %8119
        %8123 = vset.pattern.permute.xlu0 0
        %8124 = vperm.xlu0 %8123, %v7994
        %v8125 = vpop.permute.xlu0 %8124
        %8128 = vset.pattern.permute.xlu0 0
        %8129 = vperm.xlu0 %8128, %v7995
        %v8130 = vpop.permute.xlu0 %8129
        %8133 = vset.pattern.permute.xlu0 0
        %8134 = vperm.xlu0 %8133, %v7996
        %v8135 = vpop.permute.xlu0 %8134
        %8138 = vset.pattern.permute.xlu0 0
        %8139 = vperm.xlu0 %8138, %v7997
        %v8140 = vpop.permute.xlu0 %8139
        %8143 = vset.pattern.permute.xlu0 0
        %8144 = vperm.xlu0 %8143, %v7998
        %v8145 = vpop.permute.xlu0 %8144
        %8148 = vset.pattern.permute.xlu0 0
        %8149 = vperm.xlu0 %8148, %v7999
        %v8150 = vpop.permute.xlu0 %8149
        %8153 = vset.pattern.permute.xlu0 0
        %8154 = vperm.xlu0 %8153, %v8000
        %v8155 = vpop.permute.xlu0 %8154
        %8158 = vset.pattern.permute.xlu0 0
        %8159 = vperm.xlu0 %8158, %v8001
        %v8160 = vpop.permute.xlu0 %8159
        %8163 = vset.pattern.permute.xlu0 0
        %8164 = vperm.xlu0 %8163, %v8002
        %v8165 = vpop.permute.xlu0 %8164
        %8168 = vset.pattern.permute.xlu0 0
        %8169 = vperm.xlu0 %8168, %v8003
        %v8170 = vpop.permute.xlu0 %8169
        %8173 = vset.pattern.permute.xlu0 0
        %8174 = vperm.xlu0 %8173, %v8004
        %v8175 = vpop.permute.xlu0 %8174
        %8178 = vset.pattern.permute.xlu0 0
        %8179 = vperm.xlu0 %8178, %v8005
        %v8180 = vpop.permute.xlu0 %8179
        %8183 = vset.pattern.permute.xlu0 0
        %8184 = vperm.xlu0 %8183, %v8006
        %v8185 = vpop.permute.xlu0 %8184
        %8188 = vset.pattern.permute.xlu0 0
        %8189 = vperm.xlu0 %8188, %v8007
        %v8190 = vpop.permute.xlu0 %8189
        %8193 = vset.pattern.permute.xlu0 0
        %8194 = vperm.xlu0 %8193, %v8008
        %v8195 = vpop.permute.xlu0 %8194
        %8198 = vset.pattern.permute.xlu0 0
        %8199 = vperm.xlu0 %8198, %v8009
        %v8200 = vpop.permute.xlu0 %8199
        %v8202 = vmul.f32 %v8045, %v8010
        %v8203 = vmul.f32 %v8050, %v8011
        %v8204 = vmul.f32 %v8055, %v8012
        %v8205 = vmul.f32 %v8060, %v8013
        %v8206 = vmul.f32 %v8065, %v8014
        %v8207 = vmul.f32 %v8070, %v8015
        %v8208 = vmul.f32 %v8075, %v8016
        %v8209 = vmul.f32 %v8080, %v8017
        %v8210 = vmul.f32 %v8085, %v8018
        %v8211 = vmul.f32 %v8090, %v8019
        %v8212 = vmul.f32 %v8095, %v8020
        %v8213 = vmul.f32 %v8100, %v8021
        %v8214 = vmul.f32 %v8105, %v8022
        %v8215 = vmul.f32 %v8110, %v8023
        %v8216 = vmul.f32 %v8115, %v8024
        %v8217 = vmul.f32 %v8120, %v8025
        %v8218 = vmul.f32 %v8125, %v8026
        %v8219 = vmul.f32 %v8130, %v8027
        %v8220 = vmul.f32 %v8135, %v8028
        %v8221 = vmul.f32 %v8140, %v8029
        %v8222 = vmul.f32 %v8145, %v8030
        %v8223 = vmul.f32 %v8150, %v8031
        %v8224 = vmul.f32 %v8155, %v8032
        %v8225 = vmul.f32 %v8160, %v8033
        %v8226 = vmul.f32 %v8165, %v8034
        %v8227 = vmul.f32 %v8170, %v8035
        %v8228 = vmul.f32 %v8175, %v8036
        %v8229 = vmul.f32 %v8180, %v8037
        %v8230 = vmul.f32 %v8185, %v8038
        %v8231 = vmul.f32 %v8190, %v8039
        %v8232 = vmul.f32 %v8195, %v8040
        %v8233 = vmul.f32 %v8200, %v8041
        %v8234 = vadd.f32 %v8202, %v8203
        %v8235 = vadd.f32 %v8234, %v8204
        %v8236 = vadd.f32 %v8235, %v8205
        %v8237 = vadd.f32 %v8236, %v8206
        %v8238 = vadd.f32 %v8237, %v8207
        %v8239 = vadd.f32 %v8238, %v8208
        %v8240 = vadd.f32 %v8239, %v8209
        %v8241 = vadd.f32 %v8240, %v8210
        %v8242 = vadd.f32 %v8241, %v8211
        %v8243 = vadd.f32 %v8242, %v8212
        %v8244 = vadd.f32 %v8243, %v8213
        %v8245 = vadd.f32 %v8244, %v8214
        %v8246 = vadd.f32 %v8245, %v8215
        %v8247 = vadd.f32 %v8246, %v8216
        %v8248 = vadd.f32 %v8247, %v8217
        %v8249 = vadd.f32 %v8248, %v8218
        %v8250 = vadd.f32 %v8249, %v8219
        %v8251 = vadd.f32 %v8250, %v8220
        %v8252 = vadd.f32 %v8251, %v8221
        %v8253 = vadd.f32 %v8252, %v8222
        %v8254 = vadd.f32 %v8253, %v8223
        %v8255 = vadd.f32 %v8254, %v8224
        %v8256 = vadd.f32 %v8255, %v8225
        %v8257 = vadd.f32 %v8256, %v8226
        %v8258 = vadd.f32 %v8257, %v8227
        %v8259 = vadd.f32 %v8258, %v8228
        %v8260 = vadd.f32 %v8259, %v8229
        %v8261 = vadd.f32 %v8260, %v8230
        %v8262 = vadd.f32 %v8261, %v8231
        %v8263 = vadd.f32 %v8262, %v8232
        %v8264 = vadd.f32 %v8263, %v8233
        %v8265 = vrot.slane %v8264, 4
        %v8266 = vadd.f32 %v8264, %v8265
        %v8267 = vrot.slane %v8266, 2
        %v8268 = vadd.f32 %v8266, %v8267
        %v8269 = vrot.slane %v8268, 1
        %v8270 = vadd.f32 %v8268, %v8269
        %v8271 = vld [vmem:[%s8] sm:$0x1]
        %v8272 = vadd.f32 %v8270, %v8271
        %v8273 = vmax.f32 %v8272, 0.0
        %v8274 = vpack.c.bf16 %v8273, %v8273
        %v8275 = vld [vmem:[%s9] sm:$0xff]
        %v8276 = vld [vmem:[%s9 + $0x8] sm:$0xff]
        %v8277 = vld [vmem:[%s9 + $0x10] sm:$0xff]
        %v8278 = vld [vmem:[%s9 + $0x18] sm:$0xff]
        %v8279 = vld [vmem:[%s9 + $0x20] sm:$0xff]
        %v8280 = vld [vmem:[%s9 + $0x28] sm:$0xff]
        %v8281 = vld [vmem:[%s9 + $0x30] sm:$0xff]
        %v8282 = vld [vmem:[%s9 + $0x38] sm:$0xff]
        %v8283 = vld [vmem:[%s9 + $0x40] sm:$0xff]
        %v8284 = vld [vmem:[%s9 + $0x48] sm:$0xff]
        %v8285 = vld [vmem:[%s9 + $0x50] sm:$0xff]
        %v8286 = vld [vmem:[%s9 + $0x58] sm:$0xff]
        %v8287 = vld [vmem:[%s9 + $0x60] sm:$0xff]
        %v8288 = vld [vmem:[%s9 + $0x68] sm:$0xff]
        %v8289 = vld [vmem:[%s9 + $0x70] sm:$0xff]
        %v8290 = vld [vmem:[%s9 + $0x78] sm:$0xff]
        %v8291 = vpack.c.bf16 %v8276, %v8275
        %v8292 = vpack.c.bf16 %v8278, %v8277
        %v8293 = vpack.c.bf16 %v8280, %v8279
        %v8294 = vpack.c.bf16 %v8282, %v8281
        %v8295 = vpack.c.bf16 %v8284, %v8283
        %v8296 = vpack.c.bf16 %v8286, %v8285
        %v8297 = vpack.c.bf16 %v8288, %v8287
        %v8298 = vpack.c.bf16 %v8290, %v8289
        %v8299 = vld [vmem:[%s10] sm:$0x1]
        %8300 = vmatprep.subr.bf16.mxu0 0
        %8301 = vmatpush1.bf16.msra.mxu0 %v8291
        %8302 = vmatprep.subr.bf16.mxu0 0
        %8303 = vmatpush1.bf16.msra.mxu0 %v8292
        %8304 = vmatprep.subr.bf16.mxu0 0
        %8305 = vmatpush1.bf16.msra.mxu0 %v8293
        %8306 = vmatprep.subr.bf16.mxu0 0
        %8307 = vmatpush1.bf16.msra.mxu0 %v8294
        %8308 = vmatprep.subr.bf16.mxu0 0
        %8309 = vmatpush1.bf16.msra.mxu0 %v8295
        %8310 = vmatprep.subr.bf16.mxu0 0
        %8311 = vmatpush1.bf16.msra.mxu0 %v8296
        %8312 = vmatprep.subr.bf16.mxu0 0
        %8313 = vmatpush1.bf16.msra.mxu0 %v8297
        %8314 = vmatprep.subr.bf16.mxu0 0
        %8315 = vmatpush1.bf16.msra.mxu0 %v8298
        %8316 = vmatprep.subr.bf16.mxu0 0
        %8317 = vmatpush1.bf16.msra.mxu0 0
        %8318 = vmatprep.subr.bf16.mxu0 0
        %8319 = vmatpush1.bf16.msra.mxu0 0
        %8320 = vmatprep.subr.bf16.mxu0 0
        %8321 = vmatpush1.bf16.msra.mxu0 0
        %8322 = vmatprep.subr.bf16.mxu0 0
        %8323 = vmatpush1.bf16.msra.mxu0 0
        %8324 = vmatprep.subr.bf16.mxu0 0
        %8325 = vmatpush1.bf16.msra.mxu0 0
        %8326 = vmatprep.subr.bf16.mxu0 0
        %8327 = vmatpush1.bf16.msra.mxu0 0
        %8328 = vmatprep.subr.bf16.mxu0 0
        %8329 = vmatpush1.bf16.msra.mxu0 0
        %8330 = vmatprep.subr.bf16.mxu0 0
        %8331 = vmatpush1.bf16.msra.mxu0 0
        %8332 = vmatprep.mubr.bf16.mxu0 0
        %8333 = vmatmul.mubr.bf16.gmra.mrb[0].mxu0 %v8274
        %v8334 = vpop.f32.mrb[0].mxu0
        %v8335 = vadd.f32 %v8299, %v8334
        %v8336 = vpop.f32.mrb[0].mxu0
        %v8337 = vpop.f32.mrb[0].mxu0
        %v8338 = vpop.f32.mrb[0].mxu0
        %8339 = vdwg.mxu0
        %v8340 = vlaneseq
        %v8341 = vshrl.u32 %v8340, 7
        %v8342 = vsub.s32 0, %v8341
        %v8343 = vrot.slane %v8335, %v8342
        %8344 = vst [vmem:[%s412] sm:$0xff] %v8343
      $region80: #{est.1} parent=63 // pred_fallthru
        _
      %p8345 = scmp.lt.s32.totalorder %s26, 1
      %s8346 = scalar_select %p8345, %s26, 1
      %s8347 = smul.addr %s8346, 8
      %s8348 = scalar_lea.vmem %s11, %s8347
      // Predicated region
      $region85: #{est.1} parent=63 // pred_check
        %p8349 = pneg %p290
      $region86: #{est.1} parent=63 // pred_check_branch
        %8351 = sbr.rel (%p8349) target = $region88
      $region87: #{est.1} parent=63 // pred_region
        _
      $region88: #{est.1} parent=63 // pred_fallthru
        _
    $region64: #{est.1} parent=5 // pred_fallthru
      _
    %p8352 = scmp.le.s32.totalorder 2, %s17
    // Predicated region
    $region89: #{est.1} parent=5 // pred_check
      %p8353 = pneg %p8352
    $region90: #{est.1} parent=5 // pred_check_branch
      %8355 = sbr.rel (%p8353) target = $region92
    $region91: #{est.1} parent=5 // pred_region
      %s8356 = ssub.s32 %s17, 2
      // Predicated region
      $region93: #{est.1} parent=91 // pred_check
        %p8357 = pneg %p296
      $region94: #{est.1} parent=91 // pred_check_branch
        %8359 = sbr.rel (%p8357) target = $region96
      $region95: #{est.1} parent=91 // pred_region
        %p8360 = scmp.lt.s32.totalorder %s28, 1
        %s8361 = scalar_select %p8360, %s28, 1
        %s8362 = smul.addr %s8361, 8
        %s8363 = scalar_lea.vmem %s11, %s8362
      $region96: #{est.1} parent=91 // pred_fallthru
        _
    $region92: #{est.1} parent=5 // pred_fallthru
      _
  $region6: #{est.1} parent=0 // loop_footer
    %s21 = sadd.s32 1, %s17
  $region7: #{est.1} parent=0 // loop_footer_branch
    %16 = sbr.rel target = $region3
  $region8: #{est.1} parent=0 // loop_exit
    _

</llo_original>
